<compile_context>
chip_gen: v6e
topology: v6e:2x2x1
jax: 0.10.0
libtpu: 0.0.40
codegen_flags: <defaults>
</compile_context>

<pallas_src>
import functools

import jax
import jax.numpy as jnp
from jax.experimental import pallas as pl
from jax.experimental.pallas import tpu as pltpu


def _round_up(x, m):
    return (x + m - 1) // m * m


def _vmem_limit(footprint_bytes):
    # Size from the actual buffers with ~2x headroom; cap well below the
    # 64 MiB physical VMEM of a v7x TensorCore (also fine on v5e/v6e).
    return int(min(48 << 20, max(16 << 20, 2 * footprint_bytes + (4 << 20))))


def _resident_spec(block_shape, single_buffer):
    """Grid-invariant operand: constant index_map, optionally single-buffered."""
    zero_map = lambda *_: (0,) * len(block_shape)
    if single_buffer:
        # Never re-DMA'd, so double-buffering it only wastes VMEM (matters
        # most under v7x's 64 MiB budget).
        return pl.BlockSpec(block_shape, zero_map, pipeline_mode=pl.Buffered(1))
    return pl.BlockSpec(block_shape, zero_map)


# ---------------------------------------------------------------------------
# Kernel 1: LSTM recurrence, t_blk timesteps per grid iteration.
# ---------------------------------------------------------------------------
def _lstm_kernel(x_ref, wih_ref, whh_ref, b_ref, h_seq_ref, h_sc, c_sc, xg_sc,
                 *, hidden_size, t_blk, b_blk, unroll):
    """Runs t_blk timesteps of a single-layer LSTM for one batch block.

    x_ref:     (t_blk*b_blk, Ep)      bf16  rows ordered (t, b)
    wih_ref:   (Ep, 4*Hp)             bf16  input->gates weights (transposed)
    whh_ref:   (Hp, 4*Hp)             bf16  hidden->gates weights (transposed)
    b_ref:     (1, 4*Hp)              f32   b_ih + b_hh (gate-padded)
    h_seq_ref: (t_blk, b_blk, Hp)     bf16  per-step hidden states (output)
    h_sc,c_sc: (b_blk, Hp)            f32   state carried across time blocks
    xg_sc:     (t_blk*b_blk, 4*Hp)    f32   hoisted input gates
    """
    Hp = hidden_size

    @pl.when(pl.program_id(1) == 0)          # start of each batch block's sweep
    def _():
        h_sc[...] = jnp.zeros_like(h_sc)
        c_sc[...] = jnp.zeros_like(c_sc)

    # Hoisted input projection (+ bias) for the whole block: one well-shaped
    # MXU GEMM off the serial dependency chain; bias broadcast happens once.
    xg_sc[...] = (jnp.dot(x_ref[...], wih_ref[...],
                          preferred_element_type=jnp.float32)
                  + b_ref[...])

    def step(t, carry):
        h, c = carry                                   # f32 (b_blk, Hp)
        row0 = pl.multiple_of(t * b_blk, 8)
        # TODO(synk): on v5e/v6e the small recurrent matmul could keep W_hh
        # staged in the MXU via pltpu.matmul_push_rhs / matmul_acc_lhs.
        gates = (xg_sc[pl.ds(row0, b_blk), :]
                 + jnp.dot(h.astype(jnp.bfloat16), whh_ref[...],
                           preferred_element_type=jnp.float32))
        # PyTorch gate order [i, f, g, o]; Hp is a multiple of 128 so every
        # gate slice is a whole lane tile.
        i_g = jax.nn.sigmoid(gates[:, 0 * Hp:1 * Hp])
        f_g = jax.nn.sigmoid(gates[:, 1 * Hp:2 * Hp])
        g_g = jnp.tanh(gates[:, 2 * Hp:3 * Hp])
        o_g = jax.nn.sigmoid(gates[:, 3 * Hp:4 * Hp])
        c_new = f_g * c + i_g * g_g
        h_new = o_g * jnp.tanh(c_new)
        h_seq_ref[t] = h_new.astype(h_seq_ref.dtype)
        return h_new, c_new

    h_fin, c_fin = jax.lax.fori_loop(0, t_blk, step, (h_sc[...], c_sc[...]),
                                     unroll=unroll)
    h_sc[...] = h_fin
    c_sc[...] = c_fin


def lstm_forward(x_blocks, w_ih_t, w_hh_t, b_gates, *, t_blk, b_blk):
    """x_blocks: (n_b, nT, t_blk*b_blk, Ep) bf16 -> (n_b, nT, t_blk, b_blk, Hp)."""
    n_b, nT, R, Ep = x_blocks.shape
    assert R == t_blk * b_blk
    H4 = w_ih_t.shape[1]
    Hp = H4 // 4

    kernel = functools.partial(_lstm_kernel, hidden_size=Hp, t_blk=t_blk,
                               b_blk=b_blk, unroll=min(8, t_blk))

    footprint = (2 * ((Ep + Hp) * H4 * 2 + H4 * 4)   # weights+bias (worst: 2-buf)
                 + 2 * R * Ep * 2                     # x pipeline buffers
                 + 2 * R * Hp * 2                     # h_seq pipeline buffers
                 + 2 * b_blk * Hp * 4                 # h/c carry
                 + R * H4 * 4)                        # hoisted-gates scratch
    compiler_params = pltpu.CompilerParams(
        dimension_semantics=("parallel", "arbitrary"),   # batch || , time seq
        vmem_limit_bytes=_vmem_limit(footprint))

    def run(single_buffer_weights):
        return pl.pallas_call(
            kernel,
            out_shape=jax.ShapeDtypeStruct((n_b, nT, t_blk, b_blk, Hp),
                                           jnp.bfloat16),
            grid_spec=pltpu.PrefetchScalarGridSpec(
                num_scalar_prefetch=0,
                grid=(n_b, nT),
                in_specs=[
                    pl.BlockSpec((None, None, R, Ep),
                                 lambda b, t: (b, t, 0, 0)),            # x block
                    _resident_spec((Ep, H4), single_buffer_weights),    # W_ih^T
                    _resident_spec((Hp, H4), single_buffer_weights),    # W_hh^T
                    _resident_spec((1, H4), single_buffer_weights),     # bias
                ],
                out_specs=pl.BlockSpec((None, None, t_blk, b_blk, Hp),
                                       lambda b, t: (b, t, 0, 0, 0)),
                scratch_shapes=[
                    pltpu.VMEM((b_blk, Hp), jnp.float32),   # h carry
                    pltpu.VMEM((b_blk, Hp), jnp.float32),   # c carry
                    pltpu.VMEM((R, H4), jnp.float32),       # hoisted input gates
                ],
            ),
            compiler_params=compiler_params,
        )(x_blocks, w_ih_t, w_hh_t, b_gates)

    try:
        return run(True)       # single-buffer the grid-invariant weights
    except Exception:          # pl.Buffered(1) unsupported on this jax build
        return run(False)


# ---------------------------------------------------------------------------
# Kernel 2: fc projection; vocab axis outer so W_fc^T streams from HBM once.
# ---------------------------------------------------------------------------
def _fc_kernel(h_ref, w_ref, b_ref, out_ref):
    out_ref[...] = (jnp.dot(h_ref[...], w_ref[...],
                            preferred_element_type=jnp.float32)
                    + b_ref[...]).astype(out_ref.dtype)


def fc_forward(h_flat, w_fc_t, b_fc, *, out_dtype=jnp.float32):
    """h_flat: (M, Hp) bf16; w_fc_t: (Hp, Vp) bf16; b_fc: (1, Vp) f32."""
    M, Hp = h_flat.shape
    Vp = w_fc_t.shape[1]
    # Wide tiles: per-block compute is tiny vs the ~0.35us/step pipeline
    # overhead, and wide N gives long contiguous weight-DMA rows and
    # lane-dense unmasked stores.  For decoder shapes M = T*B is small, so
    # the whole M usually fits a single tile (W_fc then read exactly once).
    tile_n = next(n for n in (512, 256, 128) if Vp % n == 0)
    tile_m = next((m for m in (512, 256, 128) if M % m == 0), M)
    out_bytes = jnp.dtype(out_dtype).itemsize

    footprint = (2 * tile_m * Hp * 2 + 2 * Hp * tile_n * 2
                 + 2 * tile_n * 4 + 2 * tile_m * tile_n * out_bytes)
    compiler_params = pltpu.CompilerParams(
        dimension_semantics=("parallel", "parallel"),   # both TCs on v7x
        vmem_limit_bytes=_vmem_limit(footprint))

    # Vocab OUTER, M inner: the (Hp, tile_n) weight block index only changes
    # with j, so each weight tile is DMA'd once total (weight-BW bound GEMM).
    return pl.pallas_call(
        _fc_kernel,
        out_shape=jax.ShapeDtypeStruct((M, Vp), out_dtype),
        grid_spec=pltpu.PrefetchScalarGridSpec(
            num_scalar_prefetch=0,
            grid=(Vp // tile_n, M // tile_m),
            in_specs=[
                pl.BlockSpec((tile_m, Hp), lambda j, i: (i, 0)),    # h rows
                pl.BlockSpec((Hp, tile_n), lambda j, i: (0, j)),    # W_fc tile
                pl.BlockSpec((1, tile_n), lambda j, i: (0, j)),     # bias tile
            ],
            out_specs=pl.BlockSpec((tile_m, tile_n), lambda j, i: (i, j)),
        ),
        compiler_params=compiler_params,
    )(h_flat, w_fc_t, b_fc)


# ---------------------------------------------------------------------------
# Module wrapper matching torch DecoderRNN.forward (num_layers=1, batch_first)
# ---------------------------------------------------------------------------
class DecoderRNNPallas:
    LANE = 128
    SUBLANE = 8

    def __init__(self, embed_size, hidden_size, vocab_size, key):
        self.embed_size = embed_size
        self.hidden_size = hidden_size
        self.vocab_size = vocab_size
        # Keep f32 logits to match the PyTorch module's output dtype; set to
        # jnp.bfloat16 to halve the FC writeback traffic (or fuse the loss).
        self.logits_dtype = jnp.float32

        E, H, V = embed_size, hidden_size, vocab_size
        self.E_pad = _round_up(E, self.LANE)
        self.H_pad = _round_up(H, self.LANE)
        self.V_pad = _round_up(V, self.LANE)
        Ep, Hp, Vp = self.E_pad, self.H_pad, self.V_pad

        keys = jax.random.split(key, 6)
        scale = 0.1
        # Embedding table: (V, E)
        self.embedding = scale * jax.random.normal(keys[0], (V, E), jnp.float32)
        # LSTM weights stored transposed; gate order i,f,g,o (PyTorch).
        self.w_ih_t = scale * jax.random.normal(keys[1], (E, 4 * H), jnp.float32)
        self.w_hh_t = scale * jax.random.normal(keys[2], (H, 4 * H), jnp.float32)
        b_ih = scale * jax.random.normal(keys[3], (4 * H,), jnp.float32)
        b_hh = scale * jax.random.normal(keys[4], (4 * H,), jnp.float32)
        self.b_gates = (b_ih + b_hh).reshape(1, 4 * H)
        # fc: PyTorch weight (V, H) -> stored transposed (H, V)
        self.w_fc_t = scale * jax.random.normal(keys[5], (H, V), jnp.float32)
        self.b_fc = jnp.zeros((1, V), jnp.float32)

        # ---- padded / bf16 kernel-side parameters, built once ----
        def pad_gate_weight(w, rows_pad):
            # (rows, 4H) -> (rows_pad, 4*Hp), each gate block padded separately
            rows = w.shape[0]
            w4 = w.reshape(rows, 4, H)
            w4 = jnp.pad(w4, ((0, rows_pad - rows), (0, 0), (0, Hp - H)))
            return w4.reshape(rows_pad, 4 * Hp)

        self.w_ih_t_p = pad_gate_weight(self.w_ih_t, Ep).astype(jnp.bfloat16)
        self.w_hh_t_p = pad_gate_weight(self.w_hh_t, Hp).astype(jnp.bfloat16)
        b4 = self.b_gates.reshape(1, 4, H)
        self.b_gates_p = jnp.pad(
            b4, ((0, 0), (0, 0), (0, Hp - H))).reshape(1, 4 * Hp)  # f32
        self.w_fc_t_p = jnp.pad(
            self.w_fc_t, ((0, Hp - H), (0, Vp - V))).astype(jnp.bfloat16)
        self.b_fc_p = jnp.pad(self.b_fc, ((0, 0), (0, Vp - V)))     # f32

    def __call__(self, features, captions):
        """features: (B, E) f32; captions: (B, T_cap) int32 -> (B, T_cap, V)."""
        B = features.shape[0]
        E, V = self.embed_size, self.vocab_size
        Ep, Hp, Vp = self.E_pad, self.H_pad, self.V_pad

        # Plain-JAX glue: embedding gather + features/embeds concat.
        embeds = jnp.take(self.embedding, captions[:, :-1], axis=0)   # (B,T-1,E)
        combined = jnp.concatenate([features.reshape(B, 1, E), embeds], axis=1)
        T = combined.shape[1]

        Bp = _round_up(B, self.SUBLANE)
        # Batch-parallel grid axis (both v7x TensorCores) when Bp >= 16.
        n_b = 2 if (Bp >= 16 and Bp % 16 == 0) else 1
        b_blk = Bp // n_b
        # Timesteps per grid iteration: target >=256 rows for the hoisted
        # input-projection GEMM; amortizes the per-step pipeline overhead.
        t_blk = min(_round_up(T, 8), max(8, _round_up(256 // b_blk, 8)))
        Tp = _round_up(T, t_blk)
        nT = Tp // t_blk

        # Time-major, padded, bf16; reorder so every kernel block is a clean
        # lane/sublane-aligned 2-D (t_blk*b_blk, Ep) slab (rows = (t, b)).
        x = jnp.transpose(combined, (1, 0, 2))                        # (T,B,E)
        x = jnp.pad(x, ((0, Tp - T), (0, Bp - B), (0, Ep - E)))
        x = x.astype(jnp.bfloat16)
        x = x.reshape(Tp, n_b, b_blk, Ep).transpose(1, 0, 2, 3)
        x = x.reshape(n_b, nT, t_blk * b_blk, Ep)

        # LSTM recurrence -> hidden states (n_b, nT, t_blk, b_blk, Hp) bf16.
        h_seq = lstm_forward(x, self.w_ih_t_p, self.w_hh_t_p, self.b_gates_p,
                             t_blk=t_blk, b_blk=b_blk)

        # Unfused fc GEMM over all timesteps & batch rows; pure reshape, no
        # extra HBM pad/copy (M = Tp*Bp by construction).
        M = n_b * nT * t_blk * b_blk
        h_flat = h_seq.reshape(M, Hp)
        logits = fc_forward(h_flat, self.w_fc_t_p, self.b_fc_p,
                            out_dtype=self.logits_dtype)

        # Rows are ordered (b_block, t_chunk, t_in_chunk, b_in_block); one
        # transpose (the same one batch_first output needs anyway) restores
        # (B, T, V).
        logits = logits.reshape(n_b, nT, t_blk, b_blk, Vp)
        logits = logits.transpose(0, 3, 1, 2, 4).reshape(Bp, Tp, Vp)
        return logits[:B, :T, :V]

    # TODO(synk): DecoderRNN.sample (host-side greedy decode with a Python
    # while loop and .item()) is not implemented as a kernel.


# ---------------------------------------------------------------------------
# Pure-JAX reference (f32, lax.scan LSTM) for the correctness check.
# ---------------------------------------------------------------------------
def _reference_forward(model, features, captions):
    B = features.shape[0]
    H = model.hidden_size
    embeds = jnp.take(model.embedding, captions[:, :-1], axis=0)
    combined = jnp.concatenate(
        [features.reshape(B, 1, model.embed_size), embeds], axis=1)
    x_tbe = jnp.transpose(combined, (1, 0, 2))

    def step(carry, x):
        h, c = carry
        gates = x @ model.w_ih_t + h @ model.w_hh_t + model.b_gates
        i = jax.nn.sigmoid(gates[:, 0 * H:1 * H])
        f = jax.nn.sigmoid(gates[:, 1 * H:2 * H])
        g = jnp.tanh(gates[:, 2 * H:3 * H])
        o = jax.nn.sigmoid(gates[:, 3 * H:4 * H])
        c = f * c + i * g
        h = o * jnp.tanh(c)
        return (h, c), h @ model.w_fc_t + model.b_fc

    h0 = jnp.zeros((B, H), jnp.float32)
    c0 = jnp.zeros((B, H), jnp.float32)
    _, out = jax.lax.scan(step, (h0, c0), x_tbe)
    return jnp.transpose(out, (1, 0, 2))


if __name__ == "__main__":
    key = jax.random.PRNGKey(0)
    k_model, k_feat, k_cap = jax.random.split(key, 3)

    batch = 2
    embed_size = 32
    hidden_size = 32
    vocab_size = 64
    cap_len = 8   # LSTM sequence length = 1 + (cap_len - 1) = 8

    model = DecoderRNNPallas(embed_size, hidden_size, vocab_size, k_model)

    features = jax.random.normal(k_feat, (batch, embed_size), jnp.float32)
    captions = jax.random.randint(k_cap, (batch, cap_len), 0, vocab_size,
                                  dtype=jnp.int32)

    out = model(features, captions)
    out = jax.block_until_ready(out)

    ref = jax.block_until_ready(_reference_forward(model, features, captions))
    assert out.shape == (batch, cap_len, vocab_size)
    # Loose tolerance: kernel matmul operands are bf16 (f32 accumulate).
    assert jnp.allclose(out, ref, atol=2e-2, rtol=2e-2), "mismatch vs reference"

    print("KERNEL_OK")
</pallas_src>

<mosaic_0001>
module attributes {stable_mosaic.version = 11 : i64} {
  func.func @_lstm_kernel(%arg0: i32, %arg1: i32, %arg2: memref<1x1x64x128xbf16, #tpu.memory_space<vmem>>, %arg3: memref<128x512xbf16, #tpu.memory_space<vmem>>, %arg4: memref<128x512xbf16, #tpu.memory_space<vmem>>, %arg5: memref<1x512xf32, #tpu.memory_space<vmem>>, %arg6: memref<1x1x8x8x128xbf16, #tpu.memory_space<vmem>>, %arg7: memref<8x128xf32, #tpu.memory_space<vmem>>, %arg8: memref<8x128xf32, #tpu.memory_space<vmem>>, %arg9: memref<64x512xf32, #tpu.memory_space<vmem>>) attributes {dimension_semantics = [#tpu.dimension_semantics<parallel>, #tpu.dimension_semantics<arbitrary>], iteration_bounds = array<i64: 1, 1>, scalar_prefetch = 0 : i64, scratch_operands = 3 : i64, tpu.core_type = #tpu.core_type<tc>, window_params = [{transform_indices = @transform_0, window_bounds = array<i64: 1, 1, 64, 128>}, {pipeline_mode = #tpu.pipeline_mode<synchronous>, transform_indices = @transform_1, window_bounds = array<i64: 128, 512>}, {pipeline_mode = #tpu.pipeline_mode<synchronous>, transform_indices = @transform_2, window_bounds = array<i64: 128, 512>}, {pipeline_mode = #tpu.pipeline_mode<synchronous>, transform_indices = @transform_3, window_bounds = array<i64: 1, 512>}, {transform_indices = @transform_4, window_bounds = array<i64: 1, 1, 8, 8, 128>}]} {
    %c0_i32 = arith.constant 0 : i32
    %0 = arith.cmpi eq, %arg1, %c0_i32 : i32
    %1 = arith.extui %0 : i1 to i32
    %c0_i32_0 = arith.constant 0 : i32
    %2 = arith.cmpi ne, %1, %c0_i32_0 : i32
    scf.if %2 {
      %cst_115 = arith.constant 0.000000e+00 : f32
      %319 = vector.broadcast %cst_115 : f32 to vector<8x128xf32>
      %c0_116 = arith.constant 0 : index
      %c0_117 = arith.constant 0 : index
      %320 = vector.load %arg7[%c0_116, %c0_117] : memref<8x128xf32, #tpu.memory_space<vmem>>, vector<8x128xf32>
      tpu.vector_store %arg7[%c0_116, %c0_117], %319 {strides = array<i32>} : memref<8x128xf32, #tpu.memory_space<vmem>>, vector<8x128xf32>,
      %cst_118 = arith.constant 0.000000e+00 : f32
      %321 = vector.broadcast %cst_118 : f32 to vector<8x128xf32>
      %c0_119 = arith.constant 0 : index
      %c0_120 = arith.constant 0 : index
      %322 = vector.load %arg8[%c0_119, %c0_120] : memref<8x128xf32, #tpu.memory_space<vmem>>, vector<8x128xf32>
      tpu.vector_store %arg8[%c0_119, %c0_120], %321 {strides = array<i32>} : memref<8x128xf32, #tpu.memory_space<vmem>>, vector<8x128xf32>,
    } else {
    }
    %c0 = arith.constant 0 : index
    %c0_1 = arith.constant 0 : index
    %c0_2 = arith.constant 0 : index
    %c0_3 = arith.constant 0 : index
    %3 = vector.load %arg2[%c0, %c0_1, %c0_2, %c0_3] : memref<1x1x64x128xbf16, #tpu.memory_space<vmem>>, vector<1x1x64x128xbf16>
    %4 = vector.shape_cast %3 : vector<1x1x64x128xbf16> to vector<64x128xbf16>
    %c0_4 = arith.constant 0 : index
    %c0_5 = arith.constant 0 : index
    %5 = vector.load %arg3[%c0_4, %c0_5] : memref<128x512xbf16, #tpu.memory_space<vmem>>, vector<128x512xbf16>
    %cst = arith.constant dense<0.000000e+00> : vector<64x512xf32>
    %6 = tpu.matmul %4, %5, %cst {dimension_numbers = #tpu.dot_dimension_numbers<[1], [0], [0], [1], [0, 0, 1, 1], [], []>} : vector<64x128xbf16>, vector<128x512xbf16>, vector<64x512xf32> -> vector<64x512xf32>
    %c0_6 = arith.constant 0 : index
    %c0_7 = arith.constant 0 : index
    %7 = vector.load %arg5[%c0_6, %c0_7] : memref<1x512xf32, #tpu.memory_space<vmem>>, vector<1x512xf32>
    %8 = vector.broadcast %7 : vector<1x512xf32> to vector<64x512xf32>
    %9 = arith.addf %6, %8 : vector<64x512xf32>
    %c0_8 = arith.constant 0 : index
    %c0_9 = arith.constant 0 : index
    %10 = vector.load %arg9[%c0_8, %c0_9] : memref<64x512xf32, #tpu.memory_space<vmem>>, vector<64x512xf32>
    tpu.vector_store %arg9[%c0_8, %c0_9], %9 {strides = array<i32>} : memref<64x512xf32, #tpu.memory_space<vmem>>, vector<64x512xf32>,
    %c0_10 = arith.constant 0 : index
    %c0_11 = arith.constant 0 : index
    %11 = vector.load %arg7[%c0_10, %c0_11] : memref<8x128xf32, #tpu.memory_space<vmem>>, vector<8x128xf32>
    %c0_12 = arith.constant 0 : index
    %c0_13 = arith.constant 0 : index
    %12 = vector.load %arg8[%c0_12, %c0_13] : memref<8x128xf32, #tpu.memory_space<vmem>>, vector<8x128xf32>
    %c0_i32_14 = arith.constant 0 : i32
    %c8_i32 = arith.constant 8 : i32
    %13 = arith.muli %c0_i32_14, %c8_i32 : i32
    %14 = tpu.assume_multiple %13, 8 : i32
    %15 = arith.index_cast %14 : i32 to index
    %c0_15 = arith.constant 0 : index
    %16 = vector.load %arg9[%15, %c0_15] : memref<64x512xf32, #tpu.memory_space<vmem>>, vector<8x512xf32>
    %17 = arith.truncf %11 : vector<8x128xf32> to vector<8x128xbf16>
    %c0_16 = arith.constant 0 : index
    %c0_17 = arith.constant 0 : index
    %18 = vector.load %arg4[%c0_16, %c0_17] : memref<128x512xbf16, #tpu.memory_space<vmem>>, vector<128x512xbf16>
    %cst_18 = arith.constant dense<0.000000e+00> : vector<8x512xf32>
    %19 = tpu.matmul %17, %18, %cst_18 {dimension_numbers = #tpu.dot_dimension_numbers<[1], [0], [0], [1], [0, 0, 1, 1], [], []>} : vector<8x128xbf16>, vector<128x512xbf16>, vector<8x512xf32> -> vector<8x512xf32>
    %20 = arith.addf %16, %19 : vector<8x512xf32>
    %21 = vector.extract_strided_slice %20 {offsets = [0, 0], sizes = [8, 128], strides = [1, 1]} : vector<8x512xf32> to vector<8x128xf32>
    %22 = arith.negf %21 : vector<8x128xf32>
    %23 = math.exp %22 : vector<8x128xf32>
    %cst_19 = arith.constant 1.000000e+00 : f32
    %24 = vector.broadcast %cst_19 : f32 to vector<8x128xf32>
    %25 = arith.addf %24, %23 : vector<8x128xf32>
    %26 = arith.divf %24, %25 : vector<8x128xf32>
    %27 = vector.extract_strided_slice %20 {offsets = [0, 128], sizes = [8, 128], strides = [1, 1]} : vector<8x512xf32> to vector<8x128xf32>
    %28 = arith.negf %27 : vector<8x128xf32>
    %29 = math.exp %28 : vector<8x128xf32>
    %cst_20 = arith.constant 1.000000e+00 : f32
    %30 = vector.broadcast %cst_20 : f32 to vector<8x128xf32>
    %31 = arith.addf %30, %29 : vector<8x128xf32>
    %32 = arith.divf %30, %31 : vector<8x128xf32>
    %33 = vector.extract_strided_slice %20 {offsets = [0, 256], sizes = [8, 128], strides = [1, 1]} : vector<8x512xf32> to vector<8x128xf32>
    %34 = math.tanh %33 : vector<8x128xf32>
    %35 = vector.extract_strided_slice %20 {offsets = [0, 384], sizes = [8, 128], strides = [1, 1]} : vector<8x512xf32> to vector<8x128xf32>
    %36 = arith.negf %35 : vector<8x128xf32>
    %37 = math.exp %36 : vector<8x128xf32>
    %cst_21 = arith.constant 1.000000e+00 : f32
    %38 = vector.broadcast %cst_21 : f32 to vector<8x128xf32>
    %39 = arith.addf %38, %37 : vector<8x128xf32>
    %40 = arith.divf %38, %39 : vector<8x128xf32>
    %41 = arith.mulf %32, %12 : vector<8x128xf32>
    %42 = arith.mulf %26, %34 : vector<8x128xf32>
    %43 = arith.addf %41, %42 : vector<8x128xf32>
    %44 = math.tanh %43 : vector<8x128xf32>
    %45 = arith.mulf %40, %44 : vector<8x128xf32>
    %46 = arith.truncf %45 : vector<8x128xf32> to vector<8x128xbf16>
    %c0_22 = arith.constant 0 : index
    %c0_23 = arith.constant 0 : index
    %47 = arith.index_cast %c0_i32_14 : i32 to index
    %c0_24 = arith.constant 0 : index
    %c0_25 = arith.constant 0 : index
    %48 = vector.load %arg6[%c0_22, %c0_23, %47, %c0_24, %c0_25] : memref<1x1x8x8x128xbf16, #tpu.memory_space<vmem>>, vector<1x1x1x8x128xbf16>
    %49 = vector.shape_cast %48 : vector<1x1x1x8x128xbf16> to vector<8x128xbf16>
    %50 = vector.shape_cast %46 : vector<8x128xbf16> to vector<1x1x1x8x128xbf16>
    tpu.vector_store %arg6[%c0_22, %c0_23, %47, %c0_24, %c0_25], %50 {strides = array<i32>} : memref<1x1x8x8x128xbf16, #tpu.memory_space<vmem>>, vector<1x1x1x8x128xbf16>,
    %c1_i32 = arith.constant 1 : i32
    %c8_i32_26 = arith.constant 8 : i32
    %51 = arith.muli %c1_i32, %c8_i32_26 : i32
    %52 = tpu.assume_multiple %51, 8 : i32
    %53 = arith.index_cast %52 : i32 to index
    %c0_27 = arith.constant 0 : index
    %54 = vector.load %arg9[%53, %c0_27] : memref<64x512xf32, #tpu.memory_space<vmem>>, vector<8x512xf32>
    %55 = arith.truncf %45 : vector<8x128xf32> to vector<8x128xbf16>
    %c0_28 = arith.constant 0 : index
    %c0_29 = arith.constant 0 : index
    %56 = vector.load %arg4[%c0_28, %c0_29] : memref<128x512xbf16, #tpu.memory_space<vmem>>, vector<128x512xbf16>
    %cst_30 = arith.constant dense<0.000000e+00> : vector<8x512xf32>
    %57 = tpu.matmul %55, %56, %cst_30 {dimension_numbers = #tpu.dot_dimension_numbers<[1], [0], [0], [1], [0, 0, 1, 1], [], []>} : vector<8x128xbf16>, vector<128x512xbf16>, vector<8x512xf32> -> vector<8x512xf32>
    %58 = arith.addf %54, %57 : vector<8x512xf32>
    %59 = vector.extract_strided_slice %58 {offsets = [0, 0], sizes = [8, 128], strides = [1, 1]} : vector<8x512xf32> to vector<8x128xf32>
    %60 = arith.negf %59 : vector<8x128xf32>
    %61 = math.exp %60 : vector<8x128xf32>
    %cst_31 = arith.constant 1.000000e+00 : f32
    %62 = vector.broadcast %cst_31 : f32 to vector<8x128xf32>
    %63 = arith.addf %62, %61 : vector<8x128xf32>
    %64 = arith.divf %62, %63 : vector<8x128xf32>
    %65 = vector.extract_strided_slice %58 {offsets = [0, 128], sizes = [8, 128], strides = [1, 1]} : vector<8x512xf32> to vector<8x128xf32>
    %66 = arith.negf %65 : vector<8x128xf32>
    %67 = math.exp %66 : vector<8x128xf32>
    %cst_32 = arith.constant 1.000000e+00 : f32
    %68 = vector.broadcast %cst_32 : f32 to vector<8x128xf32>
    %69 = arith.addf %68, %67 : vector<8x128xf32>
    %70 = arith.divf %68, %69 : vector<8x128xf32>
    %71 = vector.extract_strided_slice %58 {offsets = [0, 256], sizes = [8, 128], strides = [1, 1]} : vector<8x512xf32> to vector<8x128xf32>
    %72 = math.tanh %71 : vector<8x128xf32>
    %73 = vector.extract_strided_slice %58 {offsets = [0, 384], sizes = [8, 128], strides = [1, 1]} : vector<8x512xf32> to vector<8x128xf32>
    %74 = arith.negf %73 : vector<8x128xf32>
    %75 = math.exp %74 : vector<8x128xf32>
    %cst_33 = arith.constant 1.000000e+00 : f32
    %76 = vector.broadcast %cst_33 : f32 to vector<8x128xf32>
    %77 = arith.addf %76, %75 : vector<8x128xf32>
    %78 = arith.divf %76, %77 : vector<8x128xf32>
    %79 = arith.mulf %70, %43 : vector<8x128xf32>
    %80 = arith.mulf %64, %72 : vector<8x128xf32>
    %81 = arith.addf %79, %80 : vector<8x128xf32>
    %82 = math.tanh %81 : vector<8x128xf32>
    %83 = arith.mulf %78, %82 : vector<8x128xf32>
    %84 = arith.truncf %83 : vector<8x128xf32> to vector<8x128xbf16>
    %c0_34 = arith.constant 0 : index
    %c0_35 = arith.constant 0 : index
    %85 = arith.index_cast %c1_i32 : i32 to index
    %c0_36 = arith.constant 0 : index
    %c0_37 = arith.constant 0 : index
    %86 = vector.load %arg6[%c0_34, %c0_35, %85, %c0_36, %c0_37] : memref<1x1x8x8x128xbf16, #tpu.memory_space<vmem>>, vector<1x1x1x8x128xbf16>
    %87 = vector.shape_cast %86 : vector<1x1x1x8x128xbf16> to vector<8x128xbf16>
    %88 = vector.shape_cast %84 : vector<8x128xbf16> to vector<1x1x1x8x128xbf16>
    tpu.vector_store %arg6[%c0_34, %c0_35, %85, %c0_36, %c0_37], %88 {strides = array<i32>} : memref<1x1x8x8x128xbf16, #tpu.memory_space<vmem>>, vector<1x1x1x8x128xbf16>,
    %c2_i32 = arith.constant 2 : i32
    %c8_i32_38 = arith.constant 8 : i32
    %89 = arith.muli %c2_i32, %c8_i32_38 : i32
    %90 = tpu.assume_multiple %89, 8 : i32
    %91 = arith.index_cast %90 : i32 to index
    %c0_39 = arith.constant 0 : index
    %92 = vector.load %arg9[%91, %c0_39] : memref<64x512xf32, #tpu.memory_space<vmem>>, vector<8x512xf32>
    %93 = arith.truncf %83 : vector<8x128xf32> to vector<8x128xbf16>
    %c0_40 = arith.constant 0 : index
    %c0_41 = arith.constant 0 : index
    %94 = vector.load %arg4[%c0_40, %c0_41] : memref<128x512xbf16, #tpu.memory_space<vmem>>, vector<128x512xbf16>
    %cst_42 = arith.constant dense<0.000000e+00> : vector<8x512xf32>
    %95 = tpu.matmul %93, %94, %cst_42 {dimension_numbers = #tpu.dot_dimension_numbers<[1], [0], [0], [1], [0, 0, 1, 1], [], []>} : vector<8x128xbf16>, vector<128x512xbf16>, vector<8x512xf32> -> vector<8x512xf32>
    %96 = arith.addf %92, %95 : vector<8x512xf32>
    %97 = vector.extract_strided_slice %96 {offsets = [0, 0], sizes = [8, 128], strides = [1, 1]} : vector<8x512xf32> to vector<8x128xf32>
    %98 = arith.negf %97 : vector<8x128xf32>
    %99 = math.exp %98 : vector<8x128xf32>
    %cst_43 = arith.constant 1.000000e+00 : f32
    %100 = vector.broadcast %cst_43 : f32 to vector<8x128xf32>
    %101 = arith.addf %100, %99 : vector<8x128xf32>
    %102 = arith.divf %100, %101 : vector<8x128xf32>
    %103 = vector.extract_strided_slice %96 {offsets = [0, 128], sizes = [8, 128], strides = [1, 1]} : vector<8x512xf32> to vector<8x128xf32>
    %104 = arith.negf %103 : vector<8x128xf32>
    %105 = math.exp %104 : vector<8x128xf32>
    %cst_44 = arith.constant 1.000000e+00 : f32
    %106 = vector.broadcast %cst_44 : f32 to vector<8x128xf32>
    %107 = arith.addf %106, %105 : vector<8x128xf32>
    %108 = arith.divf %106, %107 : vector<8x128xf32>
    %109 = vector.extract_strided_slice %96 {offsets = [0, 256], sizes = [8, 128], strides = [1, 1]} : vector<8x512xf32> to vector<8x128xf32>
    %110 = math.tanh %109 : vector<8x128xf32>
    %111 = vector.extract_strided_slice %96 {offsets = [0, 384], sizes = [8, 128], strides = [1, 1]} : vector<8x512xf32> to vector<8x128xf32>
    %112 = arith.negf %111 : vector<8x128xf32>
    %113 = math.exp %112 : vector<8x128xf32>
    %cst_45 = arith.constant 1.000000e+00 : f32
    %114 = vector.broadcast %cst_45 : f32 to vector<8x128xf32>
    %115 = arith.addf %114, %113 : vector<8x128xf32>
    %116 = arith.divf %114, %115 : vector<8x128xf32>
    %117 = arith.mulf %108, %81 : vector<8x128xf32>
    %118 = arith.mulf %102, %110 : vector<8x128xf32>
    %119 = arith.addf %117, %118 : vector<8x128xf32>
    %120 = math.tanh %119 : vector<8x128xf32>
    %121 = arith.mulf %116, %120 : vector<8x128xf32>
    %122 = arith.truncf %121 : vector<8x128xf32> to vector<8x128xbf16>
    %c0_46 = arith.constant 0 : index
    %c0_47 = arith.constant 0 : index
    %123 = arith.index_cast %c2_i32 : i32 to index
    %c0_48 = arith.constant 0 : index
    %c0_49 = arith.constant 0 : index
    %124 = vector.load %arg6[%c0_46, %c0_47, %123, %c0_48, %c0_49] : memref<1x1x8x8x128xbf16, #tpu.memory_space<vmem>>, vector<1x1x1x8x128xbf16>
    %125 = vector.shape_cast %124 : vector<1x1x1x8x128xbf16> to vector<8x128xbf16>
    %126 = vector.shape_cast %122 : vector<8x128xbf16> to vector<1x1x1x8x128xbf16>
    tpu.vector_store %arg6[%c0_46, %c0_47, %123, %c0_48, %c0_49], %126 {strides = array<i32>} : memref<1x1x8x8x128xbf16, #tpu.memory_space<vmem>>, vector<1x1x1x8x128xbf16>,
    %c3_i32 = arith.constant 3 : i32
    %c8_i32_50 = arith.constant 8 : i32
    %127 = arith.muli %c3_i32, %c8_i32_50 : i32
    %128 = tpu.assume_multiple %127, 8 : i32
    %129 = arith.index_cast %128 : i32 to index
    %c0_51 = arith.constant 0 : index
    %130 = vector.load %arg9[%129, %c0_51] : memref<64x512xf32, #tpu.memory_space<vmem>>, vector<8x512xf32>
    %131 = arith.truncf %121 : vector<8x128xf32> to vector<8x128xbf16>
    %c0_52 = arith.constant 0 : index
    %c0_53 = arith.constant 0 : index
    %132 = vector.load %arg4[%c0_52, %c0_53] : memref<128x512xbf16, #tpu.memory_space<vmem>>, vector<128x512xbf16>
    %cst_54 = arith.constant dense<0.000000e+00> : vector<8x512xf32>
    %133 = tpu.matmul %131, %132, %cst_54 {dimension_numbers = #tpu.dot_dimension_numbers<[1], [0], [0], [1], [0, 0, 1, 1], [], []>} : vector<8x128xbf16>, vector<128x512xbf16>, vector<8x512xf32> -> vector<8x512xf32>
    %134 = arith.addf %130, %133 : vector<8x512xf32>
    %135 = vector.extract_strided_slice %134 {offsets = [0, 0], sizes = [8, 128], strides = [1, 1]} : vector<8x512xf32> to vector<8x128xf32>
    %136 = arith.negf %135 : vector<8x128xf32>
    %137 = math.exp %136 : vector<8x128xf32>
    %cst_55 = arith.constant 1.000000e+00 : f32
    %138 = vector.broadcast %cst_55 : f32 to vector<8x128xf32>
    %139 = arith.addf %138, %137 : vector<8x128xf32>
    %140 = arith.divf %138, %139 : vector<8x128xf32>
    %141 = vector.extract_strided_slice %134 {offsets = [0, 128], sizes = [8, 128], strides = [1, 1]} : vector<8x512xf32> to vector<8x128xf32>
    %142 = arith.negf %141 : vector<8x128xf32>
    %143 = math.exp %142 : vector<8x128xf32>
    %cst_56 = arith.constant 1.000000e+00 : f32
    %144 = vector.broadcast %cst_56 : f32 to vector<8x128xf32>
    %145 = arith.addf %144, %143 : vector<8x128xf32>
    %146 = arith.divf %144, %145 : vector<8x128xf32>
    %147 = vector.extract_strided_slice %134 {offsets = [0, 256], sizes = [8, 128], strides = [1, 1]} : vector<8x512xf32> to vector<8x128xf32>
    %148 = math.tanh %147 : vector<8x128xf32>
    %149 = vector.extract_strided_slice %134 {offsets = [0, 384], sizes = [8, 128], strides = [1, 1]} : vector<8x512xf32> to vector<8x128xf32>
    %150 = arith.negf %149 : vector<8x128xf32>
    %151 = math.exp %150 : vector<8x128xf32>
    %cst_57 = arith.constant 1.000000e+00 : f32
    %152 = vector.broadcast %cst_57 : f32 to vector<8x128xf32>
    %153 = arith.addf %152, %151 : vector<8x128xf32>
    %154 = arith.divf %152, %153 : vector<8x128xf32>
    %155 = arith.mulf %146, %119 : vector<8x128xf32>
    %156 = arith.mulf %140, %148 : vector<8x128xf32>
    %157 = arith.addf %155, %156 : vector<8x128xf32>
    %158 = math.tanh %157 : vector<8x128xf32>
    %159 = arith.mulf %154, %158 : vector<8x128xf32>
    %160 = arith.truncf %159 : vector<8x128xf32> to vector<8x128xbf16>
    %c0_58 = arith.constant 0 : index
    %c0_59 = arith.constant 0 : index
    %161 = arith.index_cast %c3_i32 : i32 to index
    %c0_60 = arith.constant 0 : index
    %c0_61 = arith.constant 0 : index
    %162 = vector.load %arg6[%c0_58, %c0_59, %161, %c0_60, %c0_61] : memref<1x1x8x8x128xbf16, #tpu.memory_space<vmem>>, vector<1x1x1x8x128xbf16>
    %163 = vector.shape_cast %162 : vector<1x1x1x8x128xbf16> to vector<8x128xbf16>
    %164 = vector.shape_cast %160 : vector<8x128xbf16> to vector<1x1x1x8x128xbf16>
    tpu.vector_store %arg6[%c0_58, %c0_59, %161, %c0_60, %c0_61], %164 {strides = array<i32>} : memref<1x1x8x8x128xbf16, #tpu.memory_space<vmem>>, vector<1x1x1x8x128xbf16>,
    %c4_i32 = arith.constant 4 : i32
    %c8_i32_62 = arith.constant 8 : i32
    %165 = arith.muli %c4_i32, %c8_i32_62 : i32
    %166 = tpu.assume_multiple %165, 8 : i32
    %167 = arith.index_cast %166 : i32 to index
    %c0_63 = arith.constant 0 : index
    %168 = vector.load %arg9[%167, %c0_63] : memref<64x512xf32, #tpu.memory_space<vmem>>, vector<8x512xf32>
    %169 = arith.truncf %159 : vector<8x128xf32> to vector<8x128xbf16>
    %c0_64 = arith.constant 0 : index
    %c0_65 = arith.constant 0 : index
    %170 = vector.load %arg4[%c0_64, %c0_65] : memref<128x512xbf16, #tpu.memory_space<vmem>>, vector<128x512xbf16>
    %cst_66 = arith.constant dense<0.000000e+00> : vector<8x512xf32>
    %171 = tpu.matmul %169, %170, %cst_66 {dimension_numbers = #tpu.dot_dimension_numbers<[1], [0], [0], [1], [0, 0, 1, 1], [], []>} : vector<8x128xbf16>, vector<128x512xbf16>, vector<8x512xf32> -> vector<8x512xf32>
    %172 = arith.addf %168, %171 : vector<8x512xf32>
    %173 = vector.extract_strided_slice %172 {offsets = [0, 0], sizes = [8, 128], strides = [1, 1]} : vector<8x512xf32> to vector<8x128xf32>
    %174 = arith.negf %173 : vector<8x128xf32>
    %175 = math.exp %174 : vector<8x128xf32>
    %cst_67 = arith.constant 1.000000e+00 : f32
    %176 = vector.broadcast %cst_67 : f32 to vector<8x128xf32>
    %177 = arith.addf %176, %175 : vector<8x128xf32>
    %178 = arith.divf %176, %177 : vector<8x128xf32>
    %179 = vector.extract_strided_slice %172 {offsets = [0, 128], sizes = [8, 128], strides = [1, 1]} : vector<8x512xf32> to vector<8x128xf32>
    %180 = arith.negf %179 : vector<8x128xf32>
    %181 = math.exp %180 : vector<8x128xf32>
    %cst_68 = arith.constant 1.000000e+00 : f32
    %182 = vector.broadcast %cst_68 : f32 to vector<8x128xf32>
    %183 = arith.addf %182, %181 : vector<8x128xf32>
    %184 = arith.divf %182, %183 : vector<8x128xf32>
    %185 = vector.extract_strided_slice %172 {offsets = [0, 256], sizes = [8, 128], strides = [1, 1]} : vector<8x512xf32> to vector<8x128xf32>
    %186 = math.tanh %185 : vector<8x128xf32>
    %187 = vector.extract_strided_slice %172 {offsets = [0, 384], sizes = [8, 128], strides = [1, 1]} : vector<8x512xf32> to vector<8x128xf32>
    %188 = arith.negf %187 : vector<8x128xf32>
    %189 = math.exp %188 : vector<8x128xf32>
    %cst_69 = arith.constant 1.000000e+00 : f32
    %190 = vector.broadcast %cst_69 : f32 to vector<8x128xf32>
    %191 = arith.addf %190, %189 : vector<8x128xf32>
    %192 = arith.divf %190, %191 : vector<8x128xf32>
    %193 = arith.mulf %184, %157 : vector<8x128xf32>
    %194 = arith.mulf %178, %186 : vector<8x128xf32>
    %195 = arith.addf %193, %194 : vector<8x128xf32>
    %196 = math.tanh %195 : vector<8x128xf32>
    %197 = arith.mulf %192, %196 : vector<8x128xf32>
    %198 = arith.truncf %197 : vector<8x128xf32> to vector<8x128xbf16>
    %c0_70 = arith.constant 0 : index
    %c0_71 = arith.constant 0 : index
    %199 = arith.index_cast %c4_i32 : i32 to index
    %c0_72 = arith.constant 0 : index
    %c0_73 = arith.constant 0 : index
    %200 = vector.load %arg6[%c0_70, %c0_71, %199, %c0_72, %c0_73] : memref<1x1x8x8x128xbf16, #tpu.memory_space<vmem>>, vector<1x1x1x8x128xbf16>
    %201 = vector.shape_cast %200 : vector<1x1x1x8x128xbf16> to vector<8x128xbf16>
    %202 = vector.shape_cast %198 : vector<8x128xbf16> to vector<1x1x1x8x128xbf16>
    tpu.vector_store %arg6[%c0_70, %c0_71, %199, %c0_72, %c0_73], %202 {strides = array<i32>} : memref<1x1x8x8x128xbf16, #tpu.memory_space<vmem>>, vector<1x1x1x8x128xbf16>,
    %c5_i32 = arith.constant 5 : i32
    %c8_i32_74 = arith.constant 8 : i32
    %203 = arith.muli %c5_i32, %c8_i32_74 : i32
    %204 = tpu.assume_multiple %203, 8 : i32
    %205 = arith.index_cast %204 : i32 to index
    %c0_75 = arith.constant 0 : index
    %206 = vector.load %arg9[%205, %c0_75] : memref<64x512xf32, #tpu.memory_space<vmem>>, vector<8x512xf32>
    %207 = arith.truncf %197 : vector<8x128xf32> to vector<8x128xbf16>
    %c0_76 = arith.constant 0 : index
    %c0_77 = arith.constant 0 : index
    %208 = vector.load %arg4[%c0_76, %c0_77] : memref<128x512xbf16, #tpu.memory_space<vmem>>, vector<128x512xbf16>
    %cst_78 = arith.constant dense<0.000000e+00> : vector<8x512xf32>
    %209 = tpu.matmul %207, %208, %cst_78 {dimension_numbers = #tpu.dot_dimension_numbers<[1], [0], [0], [1], [0, 0, 1, 1], [], []>} : vector<8x128xbf16>, vector<128x512xbf16>, vector<8x512xf32> -> vector<8x512xf32>
    %210 = arith.addf %206, %209 : vector<8x512xf32>
    %211 = vector.extract_strided_slice %210 {offsets = [0, 0], sizes = [8, 128], strides = [1, 1]} : vector<8x512xf32> to vector<8x128xf32>
    %212 = arith.negf %211 : vector<8x128xf32>
    %213 = math.exp %212 : vector<8x128xf32>
    %cst_79 = arith.constant 1.000000e+00 : f32
    %214 = vector.broadcast %cst_79 : f32 to vector<8x128xf32>
    %215 = arith.addf %214, %213 : vector<8x128xf32>
    %216 = arith.divf %214, %215 : vector<8x128xf32>
    %217 = vector.extract_strided_slice %210 {offsets = [0, 128], sizes = [8, 128], strides = [1, 1]} : vector<8x512xf32> to vector<8x128xf32>
    %218 = arith.negf %217 : vector<8x128xf32>
    %219 = math.exp %218 : vector<8x128xf32>
    %cst_80 = arith.constant 1.000000e+00 : f32
    %220 = vector.broadcast %cst_80 : f32 to vector<8x128xf32>
    %221 = arith.addf %220, %219 : vector<8x128xf32>
    %222 = arith.divf %220, %221 : vector<8x128xf32>
    %223 = vector.extract_strided_slice %210 {offsets = [0, 256], sizes = [8, 128], strides = [1, 1]} : vector<8x512xf32> to vector<8x128xf32>
    %224 = math.tanh %223 : vector<8x128xf32>
    %225 = vector.extract_strided_slice %210 {offsets = [0, 384], sizes = [8, 128], strides = [1, 1]} : vector<8x512xf32> to vector<8x128xf32>
    %226 = arith.negf %225 : vector<8x128xf32>
    %227 = math.exp %226 : vector<8x128xf32>
    %cst_81 = arith.constant 1.000000e+00 : f32
    %228 = vector.broadcast %cst_81 : f32 to vector<8x128xf32>
    %229 = arith.addf %228, %227 : vector<8x128xf32>
    %230 = arith.divf %228, %229 : vector<8x128xf32>
    %231 = arith.mulf %222, %195 : vector<8x128xf32>
    %232 = arith.mulf %216, %224 : vector<8x128xf32>
    %233 = arith.addf %231, %232 : vector<8x128xf32>
    %234 = math.tanh %233 : vector<8x128xf32>
    %235 = arith.mulf %230, %234 : vector<8x128xf32>
    %236 = arith.truncf %235 : vector<8x128xf32> to vector<8x128xbf16>
    %c0_82 = arith.constant 0 : index
    %c0_83 = arith.constant 0 : index
    %237 = arith.index_cast %c5_i32 : i32 to index
    %c0_84 = arith.constant 0 : index
    %c0_85 = arith.constant 0 : index
    %238 = vector.load %arg6[%c0_82, %c0_83, %237, %c0_84, %c0_85] : memref<1x1x8x8x128xbf16, #tpu.memory_space<vmem>>, vector<1x1x1x8x128xbf16>
    %239 = vector.shape_cast %238 : vector<1x1x1x8x128xbf16> to vector<8x128xbf16>
    %240 = vector.shape_cast %236 : vector<8x128xbf16> to vector<1x1x1x8x128xbf16>
    tpu.vector_store %arg6[%c0_82, %c0_83, %237, %c0_84, %c0_85], %240 {strides = array<i32>} : memref<1x1x8x8x128xbf16, #tpu.memory_space<vmem>>, vector<1x1x1x8x128xbf16>,
    %c6_i32 = arith.constant 6 : i32
    %c8_i32_86 = arith.constant 8 : i32
    %241 = arith.muli %c6_i32, %c8_i32_86 : i32
    %242 = tpu.assume_multiple %241, 8 : i32
    %243 = arith.index_cast %242 : i32 to index
    %c0_87 = arith.constant 0 : index
    %244 = vector.load %arg9[%243, %c0_87] : memref<64x512xf32, #tpu.memory_space<vmem>>, vector<8x512xf32>
    %245 = arith.truncf %235 : vector<8x128xf32> to vector<8x128xbf16>
    %c0_88 = arith.constant 0 : index
    %c0_89 = arith.constant 0 : index
    %246 = vector.load %arg4[%c0_88, %c0_89] : memref<128x512xbf16, #tpu.memory_space<vmem>>, vector<128x512xbf16>
    %cst_90 = arith.constant dense<0.000000e+00> : vector<8x512xf32>
    %247 = tpu.matmul %245, %246, %cst_90 {dimension_numbers = #tpu.dot_dimension_numbers<[1], [0], [0], [1], [0, 0, 1, 1], [], []>} : vector<8x128xbf16>, vector<128x512xbf16>, vector<8x512xf32> -> vector<8x512xf32>
    %248 = arith.addf %244, %247 : vector<8x512xf32>
    %249 = vector.extract_strided_slice %248 {offsets = [0, 0], sizes = [8, 128], strides = [1, 1]} : vector<8x512xf32> to vector<8x128xf32>
    %250 = arith.negf %249 : vector<8x128xf32>
    %251 = math.exp %250 : vector<8x128xf32>
    %cst_91 = arith.constant 1.000000e+00 : f32
    %252 = vector.broadcast %cst_91 : f32 to vector<8x128xf32>
    %253 = arith.addf %252, %251 : vector<8x128xf32>
    %254 = arith.divf %252, %253 : vector<8x128xf32>
    %255 = vector.extract_strided_slice %248 {offsets = [0, 128], sizes = [8, 128], strides = [1, 1]} : vector<8x512xf32> to vector<8x128xf32>
    %256 = arith.negf %255 : vector<8x128xf32>
    %257 = math.exp %256 : vector<8x128xf32>
    %cst_92 = arith.constant 1.000000e+00 : f32
    %258 = vector.broadcast %cst_92 : f32 to vector<8x128xf32>
    %259 = arith.addf %258, %257 : vector<8x128xf32>
    %260 = arith.divf %258, %259 : vector<8x128xf32>
    %261 = vector.extract_strided_slice %248 {offsets = [0, 256], sizes = [8, 128], strides = [1, 1]} : vector<8x512xf32> to vector<8x128xf32>
    %262 = math.tanh %261 : vector<8x128xf32>
    %263 = vector.extract_strided_slice %248 {offsets = [0, 384], sizes = [8, 128], strides = [1, 1]} : vector<8x512xf32> to vector<8x128xf32>
    %264 = arith.negf %263 : vector<8x128xf32>
    %265 = math.exp %264 : vector<8x128xf32>
    %cst_93 = arith.constant 1.000000e+00 : f32
    %266 = vector.broadcast %cst_93 : f32 to vector<8x128xf32>
    %267 = arith.addf %266, %265 : vector<8x128xf32>
    %268 = arith.divf %266, %267 : vector<8x128xf32>
    %269 = arith.mulf %260, %233 : vector<8x128xf32>
    %270 = arith.mulf %254, %262 : vector<8x128xf32>
    %271 = arith.addf %269, %270 : vector<8x128xf32>
    %272 = math.tanh %271 : vector<8x128xf32>
    %273 = arith.mulf %268, %272 : vector<8x128xf32>
    %274 = arith.truncf %273 : vector<8x128xf32> to vector<8x128xbf16>
    %c0_94 = arith.constant 0 : index
    %c0_95 = arith.constant 0 : index
    %275 = arith.index_cast %c6_i32 : i32 to index
    %c0_96 = arith.constant 0 : index
    %c0_97 = arith.constant 0 : index
    %276 = vector.load %arg6[%c0_94, %c0_95, %275, %c0_96, %c0_97] : memref<1x1x8x8x128xbf16, #tpu.memory_space<vmem>>, vector<1x1x1x8x128xbf16>
    %277 = vector.shape_cast %276 : vector<1x1x1x8x128xbf16> to vector<8x128xbf16>
    %278 = vector.shape_cast %274 : vector<8x128xbf16> to vector<1x1x1x8x128xbf16>
    tpu.vector_store %arg6[%c0_94, %c0_95, %275, %c0_96, %c0_97], %278 {strides = array<i32>} : memref<1x1x8x8x128xbf16, #tpu.memory_space<vmem>>, vector<1x1x1x8x128xbf16>,
    %c7_i32 = arith.constant 7 : i32
    %c8_i32_98 = arith.constant 8 : i32
    %279 = arith.muli %c7_i32, %c8_i32_98 : i32
    %280 = tpu.assume_multiple %279, 8 : i32
    %281 = arith.index_cast %280 : i32 to index
    %c0_99 = arith.constant 0 : index
    %282 = vector.load %arg9[%281, %c0_99] : memref<64x512xf32, #tpu.memory_space<vmem>>, vector<8x512xf32>
    %283 = arith.truncf %273 : vector<8x128xf32> to vector<8x128xbf16>
    %c0_100 = arith.constant 0 : index
    %c0_101 = arith.constant 0 : index
    %284 = vector.load %arg4[%c0_100, %c0_101] : memref<128x512xbf16, #tpu.memory_space<vmem>>, vector<128x512xbf16>
    %cst_102 = arith.constant dense<0.000000e+00> : vector<8x512xf32>
    %285 = tpu.matmul %283, %284, %cst_102 {dimension_numbers = #tpu.dot_dimension_numbers<[1], [0], [0], [1], [0, 0, 1, 1], [], []>} : vector<8x128xbf16>, vector<128x512xbf16>, vector<8x512xf32> -> vector<8x512xf32>
    %286 = arith.addf %282, %285 : vector<8x512xf32>
    %287 = vector.extract_strided_slice %286 {offsets = [0, 0], sizes = [8, 128], strides = [1, 1]} : vector<8x512xf32> to vector<8x128xf32>
    %288 = arith.negf %287 : vector<8x128xf32>
    %289 = math.exp %288 : vector<8x128xf32>
    %cst_103 = arith.constant 1.000000e+00 : f32
    %290 = vector.broadcast %cst_103 : f32 to vector<8x128xf32>
    %291 = arith.addf %290, %289 : vector<8x128xf32>
    %292 = arith.divf %290, %291 : vector<8x128xf32>
    %293 = vector.extract_strided_slice %286 {offsets = [0, 128], sizes = [8, 128], strides = [1, 1]} : vector<8x512xf32> to vector<8x128xf32>
    %294 = arith.negf %293 : vector<8x128xf32>
    %295 = math.exp %294 : vector<8x128xf32>
    %cst_104 = arith.constant 1.000000e+00 : f32
    %296 = vector.broadcast %cst_104 : f32 to vector<8x128xf32>
    %297 = arith.addf %296, %295 : vector<8x128xf32>
    %298 = arith.divf %296, %297 : vector<8x128xf32>
    %299 = vector.extract_strided_slice %286 {offsets = [0, 256], sizes = [8, 128], strides = [1, 1]} : vector<8x512xf32> to vector<8x128xf32>
    %300 = math.tanh %299 : vector<8x128xf32>
    %301 = vector.extract_strided_slice %286 {offsets = [0, 384], sizes = [8, 128], strides = [1, 1]} : vector<8x512xf32> to vector<8x128xf32>
    %302 = arith.negf %301 : vector<8x128xf32>
    %303 = math.exp %302 : vector<8x128xf32>
    %cst_105 = arith.constant 1.000000e+00 : f32
    %304 = vector.broadcast %cst_105 : f32 to vector<8x128xf32>
    %305 = arith.addf %304, %303 : vector<8x128xf32>
    %306 = arith.divf %304, %305 : vector<8x128xf32>
    %307 = arith.mulf %298, %271 : vector<8x128xf32>
    %308 = arith.mulf %292, %300 : vector<8x128xf32>
    %309 = arith.addf %307, %308 : vector<8x128xf32>
    %310 = math.tanh %309 : vector<8x128xf32>
    %311 = arith.mulf %306, %310 : vector<8x128xf32>
    %312 = arith.truncf %311 : vector<8x128xf32> to vector<8x128xbf16>
    %c0_106 = arith.constant 0 : index
    %c0_107 = arith.constant 0 : index
    %313 = arith.index_cast %c7_i32 : i32 to index
    %c0_108 = arith.constant 0 : index
    %c0_109 = arith.constant 0 : index
    %314 = vector.load %arg6[%c0_106, %c0_107, %313, %c0_108, %c0_109] : memref<1x1x8x8x128xbf16, #tpu.memory_space<vmem>>, vector<1x1x1x8x128xbf16>
    %315 = vector.shape_cast %314 : vector<1x1x1x8x128xbf16> to vector<8x128xbf16>
    %316 = vector.shape_cast %312 : vector<8x128xbf16> to vector<1x1x1x8x128xbf16>
    tpu.vector_store %arg6[%c0_106, %c0_107, %313, %c0_108, %c0_109], %316 {strides = array<i32>} : memref<1x1x8x8x128xbf16, #tpu.memory_space<vmem>>, vector<1x1x1x8x128xbf16>,
    %c8_i32_110 = arith.constant 8 : i32
    %c0_111 = arith.constant 0 : index
    %c0_112 = arith.constant 0 : index
    %317 = vector.load %arg7[%c0_111, %c0_112] : memref<8x128xf32, #tpu.memory_space<vmem>>, vector<8x128xf32>
    tpu.vector_store %arg7[%c0_111, %c0_112], %311 {strides = array<i32>} : memref<8x128xf32, #tpu.memory_space<vmem>>, vector<8x128xf32>,
    %c0_113 = arith.constant 0 : index
    %c0_114 = arith.constant 0 : index
    %318 = vector.load %arg8[%c0_113, %c0_114] : memref<8x128xf32, #tpu.memory_space<vmem>>, vector<8x128xf32>
    tpu.vector_store %arg8[%c0_113, %c0_114], %309 {strides = array<i32>} : memref<8x128xf32, #tpu.memory_space<vmem>>, vector<8x128xf32>,
    return
  }
  func.func @transform_0(%arg0: i32, %arg1: i32) -> (i32, i32, i32, i32) {
    %c0_i32 = arith.constant 0 : i32
    %c0_i32_0 = arith.constant 0 : i32
    %c0_i32_1 = arith.constant 0 : i32
    return %arg0, %arg1, %c0_i32, %c0_i32_0 : i32, i32, i32, i32
  }
  func.func @transform_1(%arg0: i32, %arg1: i32) -> (i32, i32) {
    %c0_i32 = arith.constant 0 : i32
    %c0_i32_0 = arith.constant 0 : i32
    %c0_i32_1 = arith.constant 0 : i32
    return %c0_i32, %c0_i32_0 : i32, i32
  }
  func.func @transform_2(%arg0: i32, %arg1: i32) -> (i32, i32) {
    %c0_i32 = arith.constant 0 : i32
    %c0_i32_0 = arith.constant 0 : i32
    %c0_i32_1 = arith.constant 0 : i32
    return %c0_i32, %c0_i32_0 : i32, i32
  }
  func.func @transform_3(%arg0: i32, %arg1: i32) -> (i32, i32) {
    %c0_i32 = arith.constant 0 : i32
    %c0_i32_0 = arith.constant 0 : i32
    %c0_i32_1 = arith.constant 0 : i32
    return %c0_i32, %c0_i32_0 : i32, i32
  }
  func.func @transform_4(%arg0: i32, %arg1: i32) -> (i32, i32, i32, i32, i32) {
    %c0_i32 = arith.constant 0 : i32
    %c0_i32_0 = arith.constant 0 : i32
    %c0_i32_1 = arith.constant 0 : i32
    %c0_i32_2 = arith.constant 0 : i32
    return %arg0, %arg1, %c0_i32, %c0_i32_0, %c0_i32_1 : i32, i32, i32, i32, i32
  }
}

module attributes {stable_mosaic.version = 11 : i64} {
  func.func @_lstm_kernel(%arg0: i32, %arg1: i32, %arg2: memref<1x1x64x128xbf16, #tpu.memory_space<vmem>>, %arg3: memref<128x512xbf16, #tpu.memory_space<vmem>>, %arg4: memref<128x512xbf16, #tpu.memory_space<vmem>>, %arg5: memref<1x512xf32, #tpu.memory_space<vmem>>, %arg6: memref<1x1x8x8x128xbf16, #tpu.memory_space<vmem>>, %arg7: memref<8x128xf32, #tpu.memory_space<vmem>>, %arg8: memref<8x128xf32, #tpu.memory_space<vmem>>, %arg9: memref<64x512xf32, #tpu.memory_space<vmem>>) attributes {dimension_semantics = [#tpu.dimension_semantics<parallel>, #tpu.dimension_semantics<arbitrary>], iteration_bounds = array<i64: 1, 1>, scalar_prefetch = 0 : i64, scratch_operands = 3 : i64, tpu.core_type = #tpu.core_type<tc>, window_params = [{transform_indices = @transform_0, window_bounds = array<i64: 1, 1, 64, 128>}, {pipeline_mode = #tpu.pipeline_mode<synchronous>, transform_indices = @transform_1, window_bounds = array<i64: 128, 512>}, {pipeline_mode = #tpu.pipeline_mode<synchronous>, transform_indices = @transform_2, window_bounds = array<i64: 128, 512>}, {pipeline_mode = #tpu.pipeline_mode<synchronous>, transform_indices = @transform_3, window_bounds = array<i64: 1, 512>}, {transform_indices = @transform_4, window_bounds = array<i64: 1, 1, 8, 8, 128>}]} {
    %c0_i32 = arith.constant 0 : i32
    %0 = arith.cmpi eq, %arg1, %c0_i32 : i32
    %1 = arith.extui %0 : i1 to i32
    %c0_i32_0 = arith.constant 0 : i32
    %2 = arith.cmpi ne, %1, %c0_i32_0 : i32
    scf.if %2 {
      %cst_115 = arith.constant 0.000000e+00 : f32
      %319 = vector.broadcast %cst_115 : f32 to vector<8x128xf32>
      %c0_116 = arith.constant 0 : index
      %c0_117 = arith.constant 0 : index
      %320 = vector.load %arg7[%c0_116, %c0_117] : memref<8x128xf32, #tpu.memory_space<vmem>>, vector<8x128xf32>
      tpu.vector_store %arg7[%c0_116, %c0_117], %319 {strides = array<i32>} : memref<8x128xf32, #tpu.memory_space<vmem>>, vector<8x128xf32>,
      %cst_118 = arith.constant 0.000000e+00 : f32
      %321 = vector.broadcast %cst_118 : f32 to vector<8x128xf32>
      %c0_119 = arith.constant 0 : index
      %c0_120 = arith.constant 0 : index
      %322 = vector.load %arg8[%c0_119, %c0_120] : memref<8x128xf32, #tpu.memory_space<vmem>>, vector<8x128xf32>
      tpu.vector_store %arg8[%c0_119, %c0_120], %321 {strides = array<i32>} : memref<8x128xf32, #tpu.memory_space<vmem>>, vector<8x128xf32>,
    } else {
    }
    %c0 = arith.constant 0 : index
    %c0_1 = arith.constant 0 : index
    %c0_2 = arith.constant 0 : index
    %c0_3 = arith.constant 0 : index
    %3 = vector.load %arg2[%c0, %c0_1, %c0_2, %c0_3] : memref<1x1x64x128xbf16, #tpu.memory_space<vmem>>, vector<1x1x64x128xbf16>
    %4 = vector.shape_cast %3 : vector<1x1x64x128xbf16> to vector<64x128xbf16>
    %c0_4 = arith.constant 0 : index
    %c0_5 = arith.constant 0 : index
    %5 = vector.load %arg3[%c0_4, %c0_5] : memref<128x512xbf16, #tpu.memory_space<vmem>>, vector<128x512xbf16>
    %cst = arith.constant dense<0.000000e+00> : vector<64x512xf32>
    %6 = tpu.matmul %4, %5, %cst {dimension_numbers = #tpu.dot_dimension_numbers<[1], [0], [0], [1], [0, 0, 1, 1], [], []>} : vector<64x128xbf16>, vector<128x512xbf16>, vector<64x512xf32> -> vector<64x512xf32>
    %c0_6 = arith.constant 0 : index
    %c0_7 = arith.constant 0 : index
    %7 = vector.load %arg5[%c0_6, %c0_7] : memref<1x512xf32, #tpu.memory_space<vmem>>, vector<1x512xf32>
    %8 = vector.broadcast %7 : vector<1x512xf32> to vector<64x512xf32>
    %9 = arith.addf %6, %8 : vector<64x512xf32>
    %c0_8 = arith.constant 0 : index
    %c0_9 = arith.constant 0 : index
    %10 = vector.load %arg9[%c0_8, %c0_9] : memref<64x512xf32, #tpu.memory_space<vmem>>, vector<64x512xf32>
    tpu.vector_store %arg9[%c0_8, %c0_9], %9 {strides = array<i32>} : memref<64x512xf32, #tpu.memory_space<vmem>>, vector<64x512xf32>,
    %c0_10 = arith.constant 0 : index
    %c0_11 = arith.constant 0 : index
    %11 = vector.load %arg7[%c0_10, %c0_11] : memref<8x128xf32, #tpu.memory_space<vmem>>, vector<8x128xf32>
    %c0_12 = arith.constant 0 : index
    %c0_13 = arith.constant 0 : index
    %12 = vector.load %arg8[%c0_12, %c0_13] : memref<8x128xf32, #tpu.memory_space<vmem>>, vector<8x128xf32>
    %c0_i32_14 = arith.constant 0 : i32
    %c8_i32 = arith.constant 8 : i32
    %13 = arith.muli %c0_i32_14, %c8_i32 : i32
    %14 = tpu.assume_multiple %13, 8 : i32
    %15 = arith.index_cast %14 : i32 to index
    %c0_15 = arith.constant 0 : index
    %16 = vector.load %arg9[%15, %c0_15] : memref<64x512xf32, #tpu.memory_space<vmem>>, vector<8x512xf32>
    %17 = arith.truncf %11 : vector<8x128xf32> to vector<8x128xbf16>
    %c0_16 = arith.constant 0 : index
    %c0_17 = arith.constant 0 : index
    %18 = vector.load %arg4[%c0_16, %c0_17] : memref<128x512xbf16, #tpu.memory_space<vmem>>, vector<128x512xbf16>
    %cst_18 = arith.constant dense<0.000000e+00> : vector<8x512xf32>
    %19 = tpu.matmul %17, %18, %cst_18 {dimension_numbers = #tpu.dot_dimension_numbers<[1], [0], [0], [1], [0, 0, 1, 1], [], []>} : vector<8x128xbf16>, vector<128x512xbf16>, vector<8x512xf32> -> vector<8x512xf32>
    %20 = arith.addf %16, %19 : vector<8x512xf32>
    %21 = vector.extract_strided_slice %20 {offsets = [0, 0], sizes = [8, 128], strides = [1, 1]} : vector<8x512xf32> to vector<8x128xf32>
    %22 = arith.negf %21 : vector<8x128xf32>
    %23 = math.exp %22 : vector<8x128xf32>
    %cst_19 = arith.constant 1.000000e+00 : f32
    %24 = vector.broadcast %cst_19 : f32 to vector<8x128xf32>
    %25 = arith.addf %24, %23 : vector<8x128xf32>
    %26 = arith.divf %24, %25 : vector<8x128xf32>
    %27 = vector.extract_strided_slice %20 {offsets = [0, 128], sizes = [8, 128], strides = [1, 1]} : vector<8x512xf32> to vector<8x128xf32>
    %28 = arith.negf %27 : vector<8x128xf32>
    %29 = math.exp %28 : vector<8x128xf32>
    %cst_20 = arith.constant 1.000000e+00 : f32
    %30 = vector.broadcast %cst_20 : f32 to vector<8x128xf32>
    %31 = arith.addf %30, %29 : vector<8x128xf32>
    %32 = arith.divf %30, %31 : vector<8x128xf32>
    %33 = vector.extract_strided_slice %20 {offsets = [0, 256], sizes = [8, 128], strides = [1, 1]} : vector<8x512xf32> to vector<8x128xf32>
    %34 = math.tanh %33 : vector<8x128xf32>
    %35 = vector.extract_strided_slice %20 {offsets = [0, 384], sizes = [8, 128], strides = [1, 1]} : vector<8x512xf32> to vector<8x128xf32>
    %36 = arith.negf %35 : vector<8x128xf32>
    %37 = math.exp %36 : vector<8x128xf32>
    %cst_21 = arith.constant 1.000000e+00 : f32
    %38 = vector.broadcast %cst_21 : f32 to vector<8x128xf32>
    %39 = arith.addf %38, %37 : vector<8x128xf32>
    %40 = arith.divf %38, %39 : vector<8x128xf32>
    %41 = arith.mulf %32, %12 : vector<8x128xf32>
    %42 = arith.mulf %26, %34 : vector<8x128xf32>
    %43 = arith.addf %41, %42 : vector<8x128xf32>
    %44 = math.tanh %43 : vector<8x128xf32>
    %45 = arith.mulf %40, %44 : vector<8x128xf32>
    %46 = arith.truncf %45 : vector<8x128xf32> to vector<8x128xbf16>
    %c0_22 = arith.constant 0 : index
    %c0_23 = arith.constant 0 : index
    %47 = arith.index_cast %c0_i32_14 : i32 to index
    %c0_24 = arith.constant 0 : index
    %c0_25 = arith.constant 0 : index
    %48 = vector.load %arg6[%c0_22, %c0_23, %47, %c0_24, %c0_25] : memref<1x1x8x8x128xbf16, #tpu.memory_space<vmem>>, vector<1x1x1x8x128xbf16>
    %49 = vector.shape_cast %48 : vector<1x1x1x8x128xbf16> to vector<8x128xbf16>
    %50 = vector.shape_cast %46 : vector<8x128xbf16> to vector<1x1x1x8x128xbf16>
    tpu.vector_store %arg6[%c0_22, %c0_23, %47, %c0_24, %c0_25], %50 {strides = array<i32>} : memref<1x1x8x8x128xbf16, #tpu.memory_space<vmem>>, vector<1x1x1x8x128xbf16>,
    %c1_i32 = arith.constant 1 : i32
    %c8_i32_26 = arith.constant 8 : i32
    %51 = arith.muli %c1_i32, %c8_i32_26 : i32
    %52 = tpu.assume_multiple %51, 8 : i32
    %53 = arith.index_cast %52 : i32 to index
    %c0_27 = arith.constant 0 : index
    %54 = vector.load %arg9[%53, %c0_27] : memref<64x512xf32, #tpu.memory_space<vmem>>, vector<8x512xf32>
    %55 = arith.truncf %45 : vector<8x128xf32> to vector<8x128xbf16>
    %c0_28 = arith.constant 0 : index
    %c0_29 = arith.constant 0 : index
    %56 = vector.load %arg4[%c0_28, %c0_29] : memref<128x512xbf16, #tpu.memory_space<vmem>>, vector<128x512xbf16>
    %cst_30 = arith.constant dense<0.000000e+00> : vector<8x512xf32>
    %57 = tpu.matmul %55, %56, %cst_30 {dimension_numbers = #tpu.dot_dimension_numbers<[1], [0], [0], [1], [0, 0, 1, 1], [], []>} : vector<8x128xbf16>, vector<128x512xbf16>, vector<8x512xf32> -> vector<8x512xf32>
    %58 = arith.addf %54, %57 : vector<8x512xf32>
    %59 = vector.extract_strided_slice %58 {offsets = [0, 0], sizes = [8, 128], strides = [1, 1]} : vector<8x512xf32> to vector<8x128xf32>
    %60 = arith.negf %59 : vector<8x128xf32>
    %61 = math.exp %60 : vector<8x128xf32>
    %cst_31 = arith.constant 1.000000e+00 : f32
    %62 = vector.broadcast %cst_31 : f32 to vector<8x128xf32>
    %63 = arith.addf %62, %61 : vector<8x128xf32>
    %64 = arith.divf %62, %63 : vector<8x128xf32>
    %65 = vector.extract_strided_slice %58 {offsets = [0, 128], sizes = [8, 128], strides = [1, 1]} : vector<8x512xf32> to vector<8x128xf32>
    %66 = arith.negf %65 : vector<8x128xf32>
    %67 = math.exp %66 : vector<8x128xf32>
    %cst_32 = arith.constant 1.000000e+00 : f32
    %68 = vector.broadcast %cst_32 : f32 to vector<8x128xf32>
    %69 = arith.addf %68, %67 : vector<8x128xf32>
    %70 = arith.divf %68, %69 : vector<8x128xf32>
    %71 = vector.extract_strided_slice %58 {offsets = [0, 256], sizes = [8, 128], strides = [1, 1]} : vector<8x512xf32> to vector<8x128xf32>
    %72 = math.tanh %71 : vector<8x128xf32>
    %73 = vector.extract_strided_slice %58 {offsets = [0, 384], sizes = [8, 128], strides = [1, 1]} : vector<8x512xf32> to vector<8x128xf32>
    %74 = arith.negf %73 : vector<8x128xf32>
    %75 = math.exp %74 : vector<8x128xf32>
    %cst_33 = arith.constant 1.000000e+00 : f32
    %76 = vector.broadcast %cst_33 : f32 to vector<8x128xf32>
    %77 = arith.addf %76, %75 : vector<8x128xf32>
    %78 = arith.divf %76, %77 : vector<8x128xf32>
    %79 = arith.mulf %70, %43 : vector<8x128xf32>
    %80 = arith.mulf %64, %72 : vector<8x128xf32>
    %81 = arith.addf %79, %80 : vector<8x128xf32>
    %82 = math.tanh %81 : vector<8x128xf32>
    %83 = arith.mulf %78, %82 : vector<8x128xf32>
    %84 = arith.truncf %83 : vector<8x128xf32> to vector<8x128xbf16>
    %c0_34 = arith.constant 0 : index
    %c0_35 = arith.constant 0 : index
    %85 = arith.index_cast %c1_i32 : i32 to index
    %c0_36 = arith.constant 0 : index
    %c0_37 = arith.constant 0 : index
    %86 = vector.load %arg6[%c0_34, %c0_35, %85, %c0_36, %c0_37] : memref<1x1x8x8x128xbf16, #tpu.memory_space<vmem>>, vector<1x1x1x8x128xbf16>
    %87 = vector.shape_cast %86 : vector<1x1x1x8x128xbf16> to vector<8x128xbf16>
    %88 = vector.shape_cast %84 : vector<8x128xbf16> to vector<1x1x1x8x128xbf16>
    tpu.vector_store %arg6[%c0_34, %c0_35, %85, %c0_36, %c0_37], %88 {strides = array<i32>} : memref<1x1x8x8x128xbf16, #tpu.memory_space<vmem>>, vector<1x1x1x8x128xbf16>,
    %c2_i32 = arith.constant 2 : i32
    %c8_i32_38 = arith.constant 8 : i32
    %89 = arith.muli %c2_i32, %c8_i32_38 : i32
    %90 = tpu.assume_multiple %89, 8 : i32
    %91 = arith.index_cast %90 : i32 to index
    %c0_39 = arith.constant 0 : index
    %92 = vector.load %arg9[%91, %c0_39] : memref<64x512xf32, #tpu.memory_space<vmem>>, vector<8x512xf32>
    %93 = arith.truncf %83 : vector<8x128xf32> to vector<8x128xbf16>
    %c0_40 = arith.constant 0 : index
    %c0_41 = arith.constant 0 : index
    %94 = vector.load %arg4[%c0_40, %c0_41] : memref<128x512xbf16, #tpu.memory_space<vmem>>, vector<128x512xbf16>
    %cst_42 = arith.constant dense<0.000000e+00> : vector<8x512xf32>
    %95 = tpu.matmul %93, %94, %cst_42 {dimension_numbers = #tpu.dot_dimension_numbers<[1], [0], [0], [1], [0, 0, 1, 1], [], []>} : vector<8x128xbf16>, vector<128x512xbf16>, vector<8x512xf32> -> vector<8x512xf32>
    %96 = arith.addf %92, %95 : vector<8x512xf32>
    %97 = vector.extract_strided_slice %96 {offsets = [0, 0], sizes = [8, 128], strides = [1, 1]} : vector<8x512xf32> to vector<8x128xf32>
    %98 = arith.negf %97 : vector<8x128xf32>
    %99 = math.exp %98 : vector<8x128xf32>
    %cst_43 = arith.constant 1.000000e+00 : f32
    %100 = vector.broadcast %cst_43 : f32 to vector<8x128xf32>
    %101 = arith.addf %100, %99 : vector<8x128xf32>
    %102 = arith.divf %100, %101 : vector<8x128xf32>
    %103 = vector.extract_strided_slice %96 {offsets = [0, 128], sizes = [8, 128], strides = [1, 1]} : vector<8x512xf32> to vector<8x128xf32>
    %104 = arith.negf %103 : vector<8x128xf32>
    %105 = math.exp %104 : vector<8x128xf32>
    %cst_44 = arith.constant 1.000000e+00 : f32
    %106 = vector.broadcast %cst_44 : f32 to vector<8x128xf32>
    %107 = arith.addf %106, %105 : vector<8x128xf32>
    %108 = arith.divf %106, %107 : vector<8x128xf32>
    %109 = vector.extract_strided_slice %96 {offsets = [0, 256], sizes = [8, 128], strides = [1, 1]} : vector<8x512xf32> to vector<8x128xf32>
    %110 = math.tanh %109 : vector<8x128xf32>
    %111 = vector.extract_strided_slice %96 {offsets = [0, 384], sizes = [8, 128], strides = [1, 1]} : vector<8x512xf32> to vector<8x128xf32>
    %112 = arith.negf %111 : vector<8x128xf32>
    %113 = math.exp %112 : vector<8x128xf32>
    %cst_45 = arith.constant 1.000000e+00 : f32
    %114 = vector.broadcast %cst_45 : f32 to vector<8x128xf32>
    %115 = arith.addf %114, %113 : vector<8x128xf32>
    %116 = arith.divf %114, %115 : vector<8x128xf32>
    %117 = arith.mulf %108, %81 : vector<8x128xf32>
    %118 = arith.mulf %102, %110 : vector<8x128xf32>
    %119 = arith.addf %117, %118 : vector<8x128xf32>
    %120 = math.tanh %119 : vector<8x128xf32>
    %121 = arith.mulf %116, %120 : vector<8x128xf32>
    %122 = arith.truncf %121 : vector<8x128xf32> to vector<8x128xbf16>
    %c0_46 = arith.constant 0 : index
    %c0_47 = arith.constant 0 : index
    %123 = arith.index_cast %c2_i32 : i32 to index
    %c0_48 = arith.constant 0 : index
    %c0_49 = arith.constant 0 : index
    %124 = vector.load %arg6[%c0_46, %c0_47, %123, %c0_48, %c0_49] : memref<1x1x8x8x128xbf16, #tpu.memory_space<vmem>>, vector<1x1x1x8x128xbf16>
    %125 = vector.shape_cast %124 : vector<1x1x1x8x128xbf16> to vector<8x128xbf16>
    %126 = vector.shape_cast %122 : vector<8x128xbf16> to vector<1x1x1x8x128xbf16>
    tpu.vector_store %arg6[%c0_46, %c0_47, %123, %c0_48, %c0_49], %126 {strides = array<i32>} : memref<1x1x8x8x128xbf16, #tpu.memory_space<vmem>>, vector<1x1x1x8x128xbf16>,
    %c3_i32 = arith.constant 3 : i32
    %c8_i32_50 = arith.constant 8 : i32
    %127 = arith.muli %c3_i32, %c8_i32_50 : i32
    %128 = tpu.assume_multiple %127, 8 : i32
    %129 = arith.index_cast %128 : i32 to index
    %c0_51 = arith.constant 0 : index
    %130 = vector.load %arg9[%129, %c0_51] : memref<64x512xf32, #tpu.memory_space<vmem>>, vector<8x512xf32>
    %131 = arith.truncf %121 : vector<8x128xf32> to vector<8x128xbf16>
    %c0_52 = arith.constant 0 : index
    %c0_53 = arith.constant 0 : index
    %132 = vector.load %arg4[%c0_52, %c0_53] : memref<128x512xbf16, #tpu.memory_space<vmem>>, vector<128x512xbf16>
    %cst_54 = arith.constant dense<0.000000e+00> : vector<8x512xf32>
    %133 = tpu.matmul %131, %132, %cst_54 {dimension_numbers = #tpu.dot_dimension_numbers<[1], [0], [0], [1], [0, 0, 1, 1], [], []>} : vector<8x128xbf16>, vector<128x512xbf16>, vector<8x512xf32> -> vector<8x512xf32>
    %134 = arith.addf %130, %133 : vector<8x512xf32>
    %135 = vector.extract_strided_slice %134 {offsets = [0, 0], sizes = [8, 128], strides = [1, 1]} : vector<8x512xf32> to vector<8x128xf32>
    %136 = arith.negf %135 : vector<8x128xf32>
    %137 = math.exp %136 : vector<8x128xf32>
    %cst_55 = arith.constant 1.000000e+00 : f32
    %138 = vector.broadcast %cst_55 : f32 to vector<8x128xf32>
    %139 = arith.addf %138, %137 : vector<8x128xf32>
    %140 = arith.divf %138, %139 : vector<8x128xf32>
    %141 = vector.extract_strided_slice %134 {offsets = [0, 128], sizes = [8, 128], strides = [1, 1]} : vector<8x512xf32> to vector<8x128xf32>
    %142 = arith.negf %141 : vector<8x128xf32>
    %143 = math.exp %142 : vector<8x128xf32>
    %cst_56 = arith.constant 1.000000e+00 : f32
    %144 = vector.broadcast %cst_56 : f32 to vector<8x128xf32>
    %145 = arith.addf %144, %143 : vector<8x128xf32>
    %146 = arith.divf %144, %145 : vector<8x128xf32>
    %147 = vector.extract_strided_slice %134 {offsets = [0, 256], sizes = [8, 128], strides = [1, 1]} : vector<8x512xf32> to vector<8x128xf32>
    %148 = math.tanh %147 : vector<8x128xf32>
    %149 = vector.extract_strided_slice %134 {offsets = [0, 384], sizes = [8, 128], strides = [1, 1]} : vector<8x512xf32> to vector<8x128xf32>
    %150 = arith.negf %149 : vector<8x128xf32>
    %151 = math.exp %150 : vector<8x128xf32>
    %cst_57 = arith.constant 1.000000e+00 : f32
    %152 = vector.broadcast %cst_57 : f32 to vector<8x128xf32>
    %153 = arith.addf %152, %151 : vector<8x128xf32>
    %154 = arith.divf %152, %153 : vector<8x128xf32>
    %155 = arith.mulf %146, %119 : vector<8x128xf32>
    %156 = arith.mulf %140, %148 : vector<8x128xf32>
    %157 = arith.addf %155, %156 : vector<8x128xf32>
    %158 = math.tanh %157 : vector<8x128xf32>
    %159 = arith.mulf %154, %158 : vector<8x128xf32>
    %160 = arith.truncf %159 : vector<8x128xf32> to vector<8x128xbf16>
    %c0_58 = arith.constant 0 : index
    %c0_59 = arith.constant 0 : index
    %161 = arith.index_cast %c3_i32 : i32 to index
    %c0_60 = arith.constant 0 : index
    %c0_61 = arith.constant 0 : index
    %162 = vector.load %arg6[%c0_58, %c0_59, %161, %c0_60, %c0_61] : memref<1x1x8x8x128xbf16, #tpu.memory_space<vmem>>, vector<1x1x1x8x128xbf16>
    %163 = vector.shape_cast %162 : vector<1x1x1x8x128xbf16> to vector<8x128xbf16>
    %164 = vector.shape_cast %160 : vector<8x128xbf16> to vector<1x1x1x8x128xbf16>
    tpu.vector_store %arg6[%c0_58, %c0_59, %161, %c0_60, %c0_61], %164 {strides = array<i32>} : memref<1x1x8x8x128xbf16, #tpu.memory_space<vmem>>, vector<1x1x1x8x128xbf16>,
    %c4_i32 = arith.constant 4 : i32
    %c8_i32_62 = arith.constant 8 : i32
    %165 = arith.muli %c4_i32, %c8_i32_62 : i32
    %166 = tpu.assume_multiple %165, 8 : i32
    %167 = arith.index_cast %166 : i32 to index
    %c0_63 = arith.constant 0 : index
    %168 = vector.load %arg9[%167, %c0_63] : memref<64x512xf32, #tpu.memory_space<vmem>>, vector<8x512xf32>
    %169 = arith.truncf %159 : vector<8x128xf32> to vector<8x128xbf16>
    %c0_64 = arith.constant 0 : index
    %c0_65 = arith.constant 0 : index
    %170 = vector.load %arg4[%c0_64, %c0_65] : memref<128x512xbf16, #tpu.memory_space<vmem>>, vector<128x512xbf16>
    %cst_66 = arith.constant dense<0.000000e+00> : vector<8x512xf32>
    %171 = tpu.matmul %169, %170, %cst_66 {dimension_numbers = #tpu.dot_dimension_numbers<[1], [0], [0], [1], [0, 0, 1, 1], [], []>} : vector<8x128xbf16>, vector<128x512xbf16>, vector<8x512xf32> -> vector<8x512xf32>
    %172 = arith.addf %168, %171 : vector<8x512xf32>
    %173 = vector.extract_strided_slice %172 {offsets = [0, 0], sizes = [8, 128], strides = [1, 1]} : vector<8x512xf32> to vector<8x128xf32>
    %174 = arith.negf %173 : vector<8x128xf32>
    %175 = math.exp %174 : vector<8x128xf32>
    %cst_67 = arith.constant 1.000000e+00 : f32
    %176 = vector.broadcast %cst_67 : f32 to vector<8x128xf32>
    %177 = arith.addf %176, %175 : vector<8x128xf32>
    %178 = arith.divf %176, %177 : vector<8x128xf32>
    %179 = vector.extract_strided_slice %172 {offsets = [0, 128], sizes = [8, 128], strides = [1, 1]} : vector<8x512xf32> to vector<8x128xf32>
    %180 = arith.negf %179 : vector<8x128xf32>
    %181 = math.exp %180 : vector<8x128xf32>
    %cst_68 = arith.constant 1.000000e+00 : f32
    %182 = vector.broadcast %cst_68 : f32 to vector<8x128xf32>
    %183 = arith.addf %182, %181 : vector<8x128xf32>
    %184 = arith.divf %182, %183 : vector<8x128xf32>
    %185 = vector.extract_strided_slice %172 {offsets = [0, 256], sizes = [8, 128], strides = [1, 1]} : vector<8x512xf32> to vector<8x128xf32>
    %186 = math.tanh %185 : vector<8x128xf32>
    %187 = vector.extract_strided_slice %172 {offsets = [0, 384], sizes = [8, 128], strides = [1, 1]} : vector<8x512xf32> to vector<8x128xf32>
    %188 = arith.negf %187 : vector<8x128xf32>
    %189 = math.exp %188 : vector<8x128xf32>
    %cst_69 = arith.constant 1.000000e+00 : f32
    %190 = vector.broadcast %cst_69 : f32 to vector<8x128xf32>
    %191 = arith.addf %190, %189 : vector<8x128xf32>
    %192 = arith.divf %190, %191 : vector<8x128xf32>
    %193 = arith.mulf %184, %157 : vector<8x128xf32>
    %194 = arith.mulf %178, %186 : vector<8x128xf32>
    %195 = arith.addf %193, %194 : vector<8x128xf32>
    %196 = math.tanh %195 : vector<8x128xf32>
    %197 = arith.mulf %192, %196 : vector<8x128xf32>
    %198 = arith.truncf %197 : vector<8x128xf32> to vector<8x128xbf16>
    %c0_70 = arith.constant 0 : index
    %c0_71 = arith.constant 0 : index
    %199 = arith.index_cast %c4_i32 : i32 to index
    %c0_72 = arith.constant 0 : index
    %c0_73 = arith.constant 0 : index
    %200 = vector.load %arg6[%c0_70, %c0_71, %199, %c0_72, %c0_73] : memref<1x1x8x8x128xbf16, #tpu.memory_space<vmem>>, vector<1x1x1x8x128xbf16>
    %201 = vector.shape_cast %200 : vector<1x1x1x8x128xbf16> to vector<8x128xbf16>
    %202 = vector.shape_cast %198 : vector<8x128xbf16> to vector<1x1x1x8x128xbf16>
    tpu.vector_store %arg6[%c0_70, %c0_71, %199, %c0_72, %c0_73], %202 {strides = array<i32>} : memref<1x1x8x8x128xbf16, #tpu.memory_space<vmem>>, vector<1x1x1x8x128xbf16>,
    %c5_i32 = arith.constant 5 : i32
    %c8_i32_74 = arith.constant 8 : i32
    %203 = arith.muli %c5_i32, %c8_i32_74 : i32
    %204 = tpu.assume_multiple %203, 8 : i32
    %205 = arith.index_cast %204 : i32 to index
    %c0_75 = arith.constant 0 : index
    %206 = vector.load %arg9[%205, %c0_75] : memref<64x512xf32, #tpu.memory_space<vmem>>, vector<8x512xf32>
    %207 = arith.truncf %197 : vector<8x128xf32> to vector<8x128xbf16>
    %c0_76 = arith.constant 0 : index
    %c0_77 = arith.constant 0 : index
    %208 = vector.load %arg4[%c0_76, %c0_77] : memref<128x512xbf16, #tpu.memory_space<vmem>>, vector<128x512xbf16>
    %cst_78 = arith.constant dense<0.000000e+00> : vector<8x512xf32>
    %209 = tpu.matmul %207, %208, %cst_78 {dimension_numbers = #tpu.dot_dimension_numbers<[1], [0], [0], [1], [0, 0, 1, 1], [], []>} : vector<8x128xbf16>, vector<128x512xbf16>, vector<8x512xf32> -> vector<8x512xf32>
    %210 = arith.addf %206, %209 : vector<8x512xf32>
    %211 = vector.extract_strided_slice %210 {offsets = [0, 0], sizes = [8, 128], strides = [1, 1]} : vector<8x512xf32> to vector<8x128xf32>
    %212 = arith.negf %211 : vector<8x128xf32>
    %213 = math.exp %212 : vector<8x128xf32>
    %cst_79 = arith.constant 1.000000e+00 : f32
    %214 = vector.broadcast %cst_79 : f32 to vector<8x128xf32>
    %215 = arith.addf %214, %213 : vector<8x128xf32>
    %216 = arith.divf %214, %215 : vector<8x128xf32>
    %217 = vector.extract_strided_slice %210 {offsets = [0, 128], sizes = [8, 128], strides = [1, 1]} : vector<8x512xf32> to vector<8x128xf32>
    %218 = arith.negf %217 : vector<8x128xf32>
    %219 = math.exp %218 : vector<8x128xf32>
    %cst_80 = arith.constant 1.000000e+00 : f32
    %220 = vector.broadcast %cst_80 : f32 to vector<8x128xf32>
    %221 = arith.addf %220, %219 : vector<8x128xf32>
    %222 = arith.divf %220, %221 : vector<8x128xf32>
    %223 = vector.extract_strided_slice %210 {offsets = [0, 256], sizes = [8, 128], strides = [1, 1]} : vector<8x512xf32> to vector<8x128xf32>
    %224 = math.tanh %223 : vector<8x128xf32>
    %225 = vector.extract_strided_slice %210 {offsets = [0, 384], sizes = [8, 128], strides = [1, 1]} : vector<8x512xf32> to vector<8x128xf32>
    %226 = arith.negf %225 : vector<8x128xf32>
    %227 = math.exp %226 : vector<8x128xf32>
    %cst_81 = arith.constant 1.000000e+00 : f32
    %228 = vector.broadcast %cst_81 : f32 to vector<8x128xf32>
    %229 = arith.addf %228, %227 : vector<8x128xf32>
    %230 = arith.divf %228, %229 : vector<8x128xf32>
    %231 = arith.mulf %222, %195 : vector<8x128xf32>
    %232 = arith.mulf %216, %224 : vector<8x128xf32>
    %233 = arith.addf %231, %232 : vector<8x128xf32>
    %234 = math.tanh %233 : vector<8x128xf32>
    %235 = arith.mulf %230, %234 : vector<8x128xf32>
    %236 = arith.truncf %235 : vector<8x128xf32> to vector<8x128xbf16>
    %c0_82 = arith.constant 0 : index
    %c0_83 = arith.constant 0 : index
    %237 = arith.index_cast %c5_i32 : i32 to index
    %c0_84 = arith.constant 0 : index
    %c0_85 = arith.constant 0 : index
    %238 = vector.load %arg6[%c0_82, %c0_83, %237, %c0_84, %c0_85] : memref<1x1x8x8x128xbf16, #tpu.memory_space<vmem>>, vector<1x1x1x8x128xbf16>
    %239 = vector.shape_cast %238 : vector<1x1x1x8x128xbf16> to vector<8x128xbf16>
    %240 = vector.shape_cast %236 : vector<8x128xbf16> to vector<1x1x1x8x128xbf16>
    tpu.vector_store %arg6[%c0_82, %c0_83, %237, %c0_84, %c0_85], %240 {strides = array<i32>} : memref<1x1x8x8x128xbf16, #tpu.memory_space<vmem>>, vector<1x1x1x8x128xbf16>,
    %c6_i32 = arith.constant 6 : i32
    %c8_i32_86 = arith.constant 8 : i32
    %241 = arith.muli %c6_i32, %c8_i32_86 : i32
    %242 = tpu.assume_multiple %241, 8 : i32
    %243 = arith.index_cast %242 : i32 to index
    %c0_87 = arith.constant 0 : index
    %244 = vector.load %arg9[%243, %c0_87] : memref<64x512xf32, #tpu.memory_space<vmem>>, vector<8x512xf32>
    %245 = arith.truncf %235 : vector<8x128xf32> to vector<8x128xbf16>
    %c0_88 = arith.constant 0 : index
    %c0_89 = arith.constant 0 : index
    %246 = vector.load %arg4[%c0_88, %c0_89] : memref<128x512xbf16, #tpu.memory_space<vmem>>, vector<128x512xbf16>
    %cst_90 = arith.constant dense<0.000000e+00> : vector<8x512xf32>
    %247 = tpu.matmul %245, %246, %cst_90 {dimension_numbers = #tpu.dot_dimension_numbers<[1], [0], [0], [1], [0, 0, 1, 1], [], []>} : vector<8x128xbf16>, vector<128x512xbf16>, vector<8x512xf32> -> vector<8x512xf32>
    %248 = arith.addf %244, %247 : vector<8x512xf32>
    %249 = vector.extract_strided_slice %248 {offsets = [0, 0], sizes = [8, 128], strides = [1, 1]} : vector<8x512xf32> to vector<8x128xf32>
    %250 = arith.negf %249 : vector<8x128xf32>
    %251 = math.exp %250 : vector<8x128xf32>
    %cst_91 = arith.constant 1.000000e+00 : f32
    %252 = vector.broadcast %cst_91 : f32 to vector<8x128xf32>
    %253 = arith.addf %252, %251 : vector<8x128xf32>
    %254 = arith.divf %252, %253 : vector<8x128xf32>
    %255 = vector.extract_strided_slice %248 {offsets = [0, 128], sizes = [8, 128], strides = [1, 1]} : vector<8x512xf32> to vector<8x128xf32>
    %256 = arith.negf %255 : vector<8x128xf32>
    %257 = math.exp %256 : vector<8x128xf32>
    %cst_92 = arith.constant 1.000000e+00 : f32
    %258 = vector.broadcast %cst_92 : f32 to vector<8x128xf32>
    %259 = arith.addf %258, %257 : vector<8x128xf32>
    %260 = arith.divf %258, %259 : vector<8x128xf32>
    %261 = vector.extract_strided_slice %248 {offsets = [0, 256], sizes = [8, 128], strides = [1, 1]} : vector<8x512xf32> to vector<8x128xf32>
    %262 = math.tanh %261 : vector<8x128xf32>
    %263 = vector.extract_strided_slice %248 {offsets = [0, 384], sizes = [8, 128], strides = [1, 1]} : vector<8x512xf32> to vector<8x128xf32>
    %264 = arith.negf %263 : vector<8x128xf32>
    %265 = math.exp %264 : vector<8x128xf32>
    %cst_93 = arith.constant 1.000000e+00 : f32
    %266 = vector.broadcast %cst_93 : f32 to vector<8x128xf32>
    %267 = arith.addf %266, %265 : vector<8x128xf32>
    %268 = arith.divf %266, %267 : vector<8x128xf32>
    %269 = arith.mulf %260, %233 : vector<8x128xf32>
    %270 = arith.mulf %254, %262 : vector<8x128xf32>
    %271 = arith.addf %269, %270 : vector<8x128xf32>
    %272 = math.tanh %271 : vector<8x128xf32>
    %273 = arith.mulf %268, %272 : vector<8x128xf32>
    %274 = arith.truncf %273 : vector<8x128xf32> to vector<8x128xbf16>
    %c0_94 = arith.constant 0 : index
    %c0_95 = arith.constant 0 : index
    %275 = arith.index_cast %c6_i32 : i32 to index
    %c0_96 = arith.constant 0 : index
    %c0_97 = arith.constant 0 : index
    %276 = vector.load %arg6[%c0_94, %c0_95, %275, %c0_96, %c0_97] : memref<1x1x8x8x128xbf16, #tpu.memory_space<vmem>>, vector<1x1x1x8x128xbf16>
    %277 = vector.shape_cast %276 : vector<1x1x1x8x128xbf16> to vector<8x128xbf16>
    %278 = vector.shape_cast %274 : vector<8x128xbf16> to vector<1x1x1x8x128xbf16>
    tpu.vector_store %arg6[%c0_94, %c0_95, %275, %c0_96, %c0_97], %278 {strides = array<i32>} : memref<1x1x8x8x128xbf16, #tpu.memory_space<vmem>>, vector<1x1x1x8x128xbf16>,
    %c7_i32 = arith.constant 7 : i32
    %c8_i32_98 = arith.constant 8 : i32
    %279 = arith.muli %c7_i32, %c8_i32_98 : i32
    %280 = tpu.assume_multiple %279, 8 : i32
    %281 = arith.index_cast %280 : i32 to index
    %c0_99 = arith.constant 0 : index
    %282 = vector.load %arg9[%281, %c0_99] : memref<64x512xf32, #tpu.memory_space<vmem>>, vector<8x512xf32>
    %283 = arith.truncf %273 : vector<8x128xf32> to vector<8x128xbf16>
    %c0_100 = arith.constant 0 : index
    %c0_101 = arith.constant 0 : index
    %284 = vector.load %arg4[%c0_100, %c0_101] : memref<128x512xbf16, #tpu.memory_space<vmem>>, vector<128x512xbf16>
    %cst_102 = arith.constant dense<0.000000e+00> : vector<8x512xf32>
    %285 = tpu.matmul %283, %284, %cst_102 {dimension_numbers = #tpu.dot_dimension_numbers<[1], [0], [0], [1], [0, 0, 1, 1], [], []>} : vector<8x128xbf16>, vector<128x512xbf16>, vector<8x512xf32> -> vector<8x512xf32>
    %286 = arith.addf %282, %285 : vector<8x512xf32>
    %287 = vector.extract_strided_slice %286 {offsets = [0, 0], sizes = [8, 128], strides = [1, 1]} : vector<8x512xf32> to vector<8x128xf32>
    %288 = arith.negf %287 : vector<8x128xf32>
    %289 = math.exp %288 : vector<8x128xf32>
    %cst_103 = arith.constant 1.000000e+00 : f32
    %290 = vector.broadcast %cst_103 : f32 to vector<8x128xf32>
    %291 = arith.addf %290, %289 : vector<8x128xf32>
    %292 = arith.divf %290, %291 : vector<8x128xf32>
    %293 = vector.extract_strided_slice %286 {offsets = [0, 128], sizes = [8, 128], strides = [1, 1]} : vector<8x512xf32> to vector<8x128xf32>
    %294 = arith.negf %293 : vector<8x128xf32>
    %295 = math.exp %294 : vector<8x128xf32>
    %cst_104 = arith.constant 1.000000e+00 : f32
    %296 = vector.broadcast %cst_104 : f32 to vector<8x128xf32>
    %297 = arith.addf %296, %295 : vector<8x128xf32>
    %298 = arith.divf %296, %297 : vector<8x128xf32>
    %299 = vector.extract_strided_slice %286 {offsets = [0, 256], sizes = [8, 128], strides = [1, 1]} : vector<8x512xf32> to vector<8x128xf32>
    %300 = math.tanh %299 : vector<8x128xf32>
    %301 = vector.extract_strided_slice %286 {offsets = [0, 384], sizes = [8, 128], strides = [1, 1]} : vector<8x512xf32> to vector<8x128xf32>
    %302 = arith.negf %301 : vector<8x128xf32>
    %303 = math.exp %302 : vector<8x128xf32>
    %cst_105 = arith.constant 1.000000e+00 : f32
    %304 = vector.broadcast %cst_105 : f32 to vector<8x128xf32>
    %305 = arith.addf %304, %303 : vector<8x128xf32>
    %306 = arith.divf %304, %305 : vector<8x128xf32>
    %307 = arith.mulf %298, %271 : vector<8x128xf32>
    %308 = arith.mulf %292, %300 : vector<8x128xf32>
    %309 = arith.addf %307, %308 : vector<8x128xf32>
    %310 = math.tanh %309 : vector<8x128xf32>
    %311 = arith.mulf %306, %310 : vector<8x128xf32>
    %312 = arith.truncf %311 : vector<8x128xf32> to vector<8x128xbf16>
    %c0_106 = arith.constant 0 : index
    %c0_107 = arith.constant 0 : index
    %313 = arith.index_cast %c7_i32 : i32 to index
    %c0_108 = arith.constant 0 : index
    %c0_109 = arith.constant 0 : index
    %314 = vector.load %arg6[%c0_106, %c0_107, %313, %c0_108, %c0_109] : memref<1x1x8x8x128xbf16, #tpu.memory_space<vmem>>, vector<1x1x1x8x128xbf16>
    %315 = vector.shape_cast %314 : vector<1x1x1x8x128xbf16> to vector<8x128xbf16>
    %316 = vector.shape_cast %312 : vector<8x128xbf16> to vector<1x1x1x8x128xbf16>
    tpu.vector_store %arg6[%c0_106, %c0_107, %313, %c0_108, %c0_109], %316 {strides = array<i32>} : memref<1x1x8x8x128xbf16, #tpu.memory_space<vmem>>, vector<1x1x1x8x128xbf16>,
    %c8_i32_110 = arith.constant 8 : i32
    %c0_111 = arith.constant 0 : index
    %c0_112 = arith.constant 0 : index
    %317 = vector.load %arg7[%c0_111, %c0_112] : memref<8x128xf32, #tpu.memory_space<vmem>>, vector<8x128xf32>
    tpu.vector_store %arg7[%c0_111, %c0_112], %311 {strides = array<i32>} : memref<8x128xf32, #tpu.memory_space<vmem>>, vector<8x128xf32>,
    %c0_113 = arith.constant 0 : index
    %c0_114 = arith.constant 0 : index
    %318 = vector.load %arg8[%c0_113, %c0_114] : memref<8x128xf32, #tpu.memory_space<vmem>>, vector<8x128xf32>
    tpu.vector_store %arg8[%c0_113, %c0_114], %309 {strides = array<i32>} : memref<8x128xf32, #tpu.memory_space<vmem>>, vector<8x128xf32>,
    return
  }
  func.func @transform_0(%arg0: i32, %arg1: i32) -> (i32, i32, i32, i32) {
    %c0_i32 = arith.constant 0 : i32
    %c0_i32_0 = arith.constant 0 : i32
    %c0_i32_1 = arith.constant 0 : i32
    return %arg0, %arg1, %c0_i32, %c0_i32_0 : i32, i32, i32, i32
  }
  func.func @transform_1(%arg0: i32, %arg1: i32) -> (i32, i32) {
    %c0_i32 = arith.constant 0 : i32
    %c0_i32_0 = arith.constant 0 : i32
    %c0_i32_1 = arith.constant 0 : i32
    return %c0_i32, %c0_i32_0 : i32, i32
  }
  func.func @transform_2(%arg0: i32, %arg1: i32) -> (i32, i32) {
    %c0_i32 = arith.constant 0 : i32
    %c0_i32_0 = arith.constant 0 : i32
    %c0_i32_1 = arith.constant 0 : i32
    return %c0_i32, %c0_i32_0 : i32, i32
  }
  func.func @transform_3(%arg0: i32, %arg1: i32) -> (i32, i32) {
    %c0_i32 = arith.constant 0 : i32
    %c0_i32_0 = arith.constant 0 : i32
    %c0_i32_1 = arith.constant 0 : i32
    return %c0_i32, %c0_i32_0 : i32, i32
  }
  func.func @transform_4(%arg0: i32, %arg1: i32) -> (i32, i32, i32, i32, i32) {
    %c0_i32 = arith.constant 0 : i32
    %c0_i32_0 = arith.constant 0 : i32
    %c0_i32_1 = arith.constant 0 : i32
    %c0_i32_2 = arith.constant 0 : i32
    return %arg0, %arg1, %c0_i32, %c0_i32_0, %c0_i32_1 : i32, i32, i32, i32, i32
  }
}

</mosaic_0001>

<llo_original>
// kernel: tpu_custom_call.1
$region0: #{tpu_custom_call.1}
  #allocation0 [shape = 'u32[]', space=smem, size = 0x4, offset = 0x4, fixed_abs, tag = 'smem constant byte address 0x4 - core index']
  #allocation1 [shape = 'u32[144,128]{1,0:T(1,128)}', space=vmem, size = 0x12000, scoped, tag = 'internal scratch']
  #allocation2 [shape = 'f32[8,128]{1,0:T(8,128)}', space=vmem, size = 0x1000, scoped, tag = 'scratch operand']
  #allocation3 [shape = 'f32[8,128]{1,0:T(8,128)}', space=vmem, size = 0x1000, scoped, tag = 'scratch operand']
  #allocation4 [shape = 'f32[64,512]{1,0:T(8,128)}', space=vmem, size = 0x20000, scoped, tag = 'scratch operand']
  %s0 = inlined_call_operand.hbm [shape: bf16[1,1,64,128], index: 0, kind: input, shape index: {}]
  %s1 = inlined_call_operand.hbm [shape: bf16[128,512], index: 1, kind: input, shape index: {}]
  %s2 = inlined_call_operand.hbm [shape: bf16[128,512], index: 2, kind: input, shape index: {}]
  %s3 = inlined_call_operand.vmem [shape: f32[1,512], index: 3, kind: input, shape index: {}]
  %s4 = inlined_call_operand.hbm [shape: bf16[1,1,8,8,128], index: 4, kind: output, shape index: {}]
  %s5 = sld [smem:[#allocation0]]
  $region42: #{tpu_custom_call.1} parent=0
    _
  %s7 = ssub.s32 1, %s5
  %s8 = scalar_select 0, %s7, %s5
  $region1: #{tpu_custom_call.1} parent=0
    #allocation5 [shape = 'u8[16384]{0}', space=vmem, size = 0x4000, scoped, tag = 'input window, operand 0, single buffered']
    #allocation6 [shape = 's32[1]{0}', space=sflag, size = 0x4, scoped, tag = 'scoped memory for tpu_custom_call.1']
    #allocation7 [shape = 's32[1]{0}', space=sflag, size = 0x4, scoped, tag = 'scoped memory for tpu_custom_call.1']
    #allocation8 [shape = 'u8[131072]{0}', space=vmem, size = 0x20000, scoped, tag = 'input window, operand 1, single buffered']
    #allocation9 [shape = 's32[1]{0}', space=sflag, size = 0x4, scoped, tag = 'scoped memory for tpu_custom_call.1']
    #allocation10 [shape = 'u8[131072]{0}', space=vmem, size = 0x20000, scoped, tag = 'input window, operand 2, single buffered']
    #allocation11 [shape = 'u8[16384]{0}', space=vmem, size = 0x4000, scoped, tag = 'output window, operand 0, single buffered']
    %9 = vsyncpa [#allocation6], 0
    %10 = vsyncpa [#allocation9], 0
    %11 = vsyncpa [#allocation7], 0
    // Predicated region
    $region2: #{tpu_custom_call.1} parent=1 // pred_check
      _
    $region3: #{tpu_custom_call.1} parent=1 // pred_check_branch
      %13 = sbr.rel (0) target = $region5
    $region4: #{tpu_custom_call.1} parent=1 // pred_region
      %s15 = ssub.s32 512, 512
      %16 = vsyncadd [#allocation6], %s15
      %s17 = sshll.u32 [#allocation5], 4
      %s18 = int_to_ptr.vmem [resolvable:$true] %s17
      %23 = dma.hbm_to_vmem [thread:$0]  %s0, 512, %s18, [#allocation6], 64, 64, 4
    $region5: #{tpu_custom_call.1} parent=1 // pred_fallthru
      _
    // Predicated region
    $region6: #{tpu_custom_call.1} parent=1 // pred_check
      _
    $region7: #{tpu_custom_call.1} parent=1 // pred_check_branch
      %25 = sbr.rel (0) target = $region9
    $region8: #{tpu_custom_call.1} parent=1 // pred_region
      %s27 = ssub.s32 4096, 4096
      %28 = vsyncadd [#allocation9], %s27
      %s29 = sshll.u32 [#allocation8], 4
      %s30 = int_to_ptr.vmem [resolvable:$true] %s29
      %35 = dma.hbm_to_vmem [thread:$0]  %s1, 4096, %s30, [#allocation9], 256, 256, 16
    $region9: #{tpu_custom_call.1} parent=1 // pred_fallthru
      _
    // Predicated region
    $region10: #{tpu_custom_call.1} parent=1 // pred_check
      _
    $region11: #{tpu_custom_call.1} parent=1 // pred_check_branch
      %37 = sbr.rel (0) target = $region13
    $region12: #{tpu_custom_call.1} parent=1 // pred_region
      %s39 = ssub.s32 4096, 4096
      %40 = vsyncadd [#allocation9], %s39
      %s41 = sshll.u32 [#allocation10], 4
      %s42 = int_to_ptr.vmem [resolvable:$true] %s41
      %47 = dma.hbm_to_vmem [thread:$0]  %s2, 4096, %s42, [#allocation9], 256, 256, 16
    $region13: #{tpu_custom_call.1} parent=1 // pred_fallthru
      _
    // Predicated region
    $region14: #{tpu_custom_call.1} parent=1 // pred_check
      _
    $region15: #{tpu_custom_call.1} parent=1 // pred_check_branch
      %49 = sbr.rel (0) target = $region17
    $region16: #{tpu_custom_call.1} parent=1 // pred_region
      _
    $region17: #{tpu_custom_call.1} parent=1 // pred_fallthru
      _
    // Predicated region
    $region18: #{tpu_custom_call.1} parent=1 // pred_check
      _
    $region19: #{tpu_custom_call.1} parent=1 // pred_check_branch
      %51 = sbr.rel (0) target = $region21
    $region20: #{tpu_custom_call.1} parent=1 // pred_region
      %52 = dma.done [#allocation6], 512
    $region21: #{tpu_custom_call.1} parent=1 // pred_fallthru
      _
    // Predicated region
    $region22: #{tpu_custom_call.1} parent=1 // pred_check
      _
    $region23: #{tpu_custom_call.1} parent=1 // pred_check_branch
      %54 = sbr.rel (0) target = $region25
    $region24: #{tpu_custom_call.1} parent=1 // pred_region
      %55 = dma.done [#allocation9], 4096
    $region25: #{tpu_custom_call.1} parent=1 // pred_fallthru
      _
    // Predicated region
    $region26: #{tpu_custom_call.1} parent=1 // pred_check
      _
    $region27: #{tpu_custom_call.1} parent=1 // pred_check_branch
      %57 = sbr.rel (0) target = $region29
    $region28: #{tpu_custom_call.1} parent=1 // pred_region
      %58 = dma.done [#allocation9], 4096
    $region29: #{tpu_custom_call.1} parent=1 // pred_fallthru
      _
    %p60 = scmp.eq.s32.totalorder 0, 0
    // Predicated region
    $region30: #{tpu_custom_call.1} parent=1 // pred_check
      %p61 = pneg %p60
    $region31: #{tpu_custom_call.1} parent=1 // pred_check_branch
      %63 = sbr.rel (%p61) target = $region33
    $region32: #{tpu_custom_call.1} parent=1 // pred_region
      %64 = vst [vmem:[#allocation2] sm:$0xff] 0.0
      %65 = vst [vmem:[#allocation3] sm:$0xff] 0.0
    $region33: #{tpu_custom_call.1} parent=1 // pred_fallthru
      _
    %v66 = vld [vmem:[#allocation5] sm:$0xf]
    %v67 = vld [vmem:[#allocation5 + $0x4] sm:$0xf]
    %v68 = vld [vmem:[#allocation5 + $0x8] sm:$0xf]
    %v69 = vld [vmem:[#allocation5 + $0xc] sm:$0xf]
    %v70 = vld [vmem:[#allocation5 + $0x10] sm:$0xf]
    %v71 = vld [vmem:[#allocation5 + $0x14] sm:$0xf]
    %v72 = vld [vmem:[#allocation5 + $0x18] sm:$0xf]
    %v73 = vld [vmem:[#allocation5 + $0x1c] sm:$0xf]
    %v74 = vld [vmem:[#allocation8] sm:$0xff]
    %v75 = vld [vmem:[#allocation8 + $0x8] sm:$0xff]
    %v76 = vld [vmem:[#allocation8 + $0x10] sm:$0xff]
    %v77 = vld [vmem:[#allocation8 + $0x18] sm:$0xff]
    %v78 = vld [vmem:[#allocation8 + $0x20] sm:$0xff]
    %v79 = vld [vmem:[#allocation8 + $0x28] sm:$0xff]
    %v80 = vld [vmem:[#allocation8 + $0x30] sm:$0xff]
    %v81 = vld [vmem:[#allocation8 + $0x38] sm:$0xff]
    %v82 = vld [vmem:[#allocation8 + $0x40] sm:$0xff]
    %v83 = vld [vmem:[#allocation8 + $0x48] sm:$0xff]
    %v84 = vld [vmem:[#allocation8 + $0x50] sm:$0xff]
    %v85 = vld [vmem:[#allocation8 + $0x58] sm:$0xff]
    %v86 = vld [vmem:[#allocation8 + $0x60] sm:$0xff]
    %v87 = vld [vmem:[#allocation8 + $0x68] sm:$0xff]
    %v88 = vld [vmem:[#allocation8 + $0x70] sm:$0xff]
    %v89 = vld [vmem:[#allocation8 + $0x78] sm:$0xff]
    %v90 = vld [vmem:[#allocation8 + $0x80] sm:$0xff]
    %v91 = vld [vmem:[#allocation8 + $0x88] sm:$0xff]
    %v92 = vld [vmem:[#allocation8 + $0x90] sm:$0xff]
    %v93 = vld [vmem:[#allocation8 + $0x98] sm:$0xff]
    %v94 = vld [vmem:[#allocation8 + $0xa0] sm:$0xff]
    %v95 = vld [vmem:[#allocation8 + $0xa8] sm:$0xff]
    %v96 = vld [vmem:[#allocation8 + $0xb0] sm:$0xff]
    %v97 = vld [vmem:[#allocation8 + $0xb8] sm:$0xff]
    %v98 = vld [vmem:[#allocation8 + $0xc0] sm:$0xff]
    %v99 = vld [vmem:[#allocation8 + $0xc8] sm:$0xff]
    %v100 = vld [vmem:[#allocation8 + $0xd0] sm:$0xff]
    %v101 = vld [vmem:[#allocation8 + $0xd8] sm:$0xff]
    %v102 = vld [vmem:[#allocation8 + $0xe0] sm:$0xff]
    %v103 = vld [vmem:[#allocation8 + $0xe8] sm:$0xff]
    %v104 = vld [vmem:[#allocation8 + $0xf0] sm:$0xff]
    %v105 = vld [vmem:[#allocation8 + $0xf8] sm:$0xff]
    %v106 = vld [vmem:[%s3] sm:$0xf]
    %v108 = vlaneseq
    %v109 = vshrl.u32 %v108, 7
    %v110 = vsub.s32 0, %v109
    %v111 = vrot.slane %v106, %v110
    %v112 = vlaneseq
    %v113 = vshrl.u32 %v112, 7
    %v114 = vsub.s32 1, %v113
    %v115 = vrot.slane %v106, %v114
    %v116 = vlaneseq
    %v117 = vshrl.u32 %v116, 7
    %v118 = vsub.s32 2, %v117
    %v119 = vrot.slane %v106, %v118
    %v120 = vlaneseq
    %v121 = vshrl.u32 %v120, 7
    %v122 = vsub.s32 3, %v121
    %v123 = vrot.slane %v106, %v122
    %v136 = vunpack.c.l.b16 %v66
    %v137 = vunpack.c.l.b16 %v67
    %v138 = vunpack.c.l.b16 %v68
    %v139 = vunpack.c.l.b16 %v69
    %v140 = vunpack.c.l.b16 %v70
    %v141 = vunpack.c.l.b16 %v71
    %v142 = vunpack.c.l.b16 %v72
    %v143 = vunpack.c.l.b16 %v73
    %v144 = vpack.c.b16 %v137, %v136
    %v145 = vpack.c.b16 %v139, %v138
    %v146 = vpack.c.b16 %v141, %v140
    %v147 = vpack.c.b16 %v143, %v142
    %v184 = vunpack.c.l.b16 %v74
    %v185 = vunpack.c.h.b16 %v74
    %v186 = vunpack.c.l.b16 %v75
    %v187 = vunpack.c.h.b16 %v75
    %v188 = vunpack.c.l.b16 %v76
    %v189 = vunpack.c.h.b16 %v76
    %v190 = vunpack.c.l.b16 %v77
    %v191 = vunpack.c.h.b16 %v77
    %v192 = vunpack.c.l.b16 %v78
    %v193 = vunpack.c.h.b16 %v78
    %v194 = vunpack.c.l.b16 %v79
    %v195 = vunpack.c.h.b16 %v79
    %v196 = vunpack.c.l.b16 %v80
    %v197 = vunpack.c.h.b16 %v80
    %v198 = vunpack.c.l.b16 %v81
    %v199 = vunpack.c.h.b16 %v81
    %v200 = vunpack.c.l.b16 %v82
    %v201 = vunpack.c.h.b16 %v82
    %v202 = vunpack.c.l.b16 %v83
    %v203 = vunpack.c.h.b16 %v83
    %v204 = vunpack.c.l.b16 %v84
    %v205 = vunpack.c.h.b16 %v84
    %v206 = vunpack.c.l.b16 %v85
    %v207 = vunpack.c.h.b16 %v85
    %v208 = vunpack.c.l.b16 %v86
    %v209 = vunpack.c.h.b16 %v86
    %v210 = vunpack.c.l.b16 %v87
    %v211 = vunpack.c.h.b16 %v87
    %v212 = vunpack.c.l.b16 %v88
    %v213 = vunpack.c.h.b16 %v88
    %v214 = vunpack.c.l.b16 %v89
    %v215 = vunpack.c.h.b16 %v89
    %v216 = vunpack.c.l.b16 %v90
    %v217 = vunpack.c.h.b16 %v90
    %v218 = vunpack.c.l.b16 %v91
    %v219 = vunpack.c.h.b16 %v91
    %v220 = vunpack.c.l.b16 %v92
    %v221 = vunpack.c.h.b16 %v92
    %v222 = vunpack.c.l.b16 %v93
    %v223 = vunpack.c.h.b16 %v93
    %v224 = vunpack.c.l.b16 %v94
    %v225 = vunpack.c.h.b16 %v94
    %v226 = vunpack.c.l.b16 %v95
    %v227 = vunpack.c.h.b16 %v95
    %v228 = vunpack.c.l.b16 %v96
    %v229 = vunpack.c.h.b16 %v96
    %v230 = vunpack.c.l.b16 %v97
    %v231 = vunpack.c.h.b16 %v97
    %v232 = vunpack.c.l.b16 %v98
    %v233 = vunpack.c.h.b16 %v98
    %v234 = vunpack.c.l.b16 %v99
    %v235 = vunpack.c.h.b16 %v99
    %v236 = vunpack.c.l.b16 %v100
    %v237 = vunpack.c.h.b16 %v100
    %v238 = vunpack.c.l.b16 %v101
    %v239 = vunpack.c.h.b16 %v101
    %v240 = vunpack.c.l.b16 %v102
    %v241 = vunpack.c.h.b16 %v102
    %v242 = vunpack.c.l.b16 %v103
    %v243 = vunpack.c.h.b16 %v103
    %v244 = vunpack.c.l.b16 %v104
    %v245 = vunpack.c.h.b16 %v104
    %v246 = vunpack.c.l.b16 %v105
    %v247 = vunpack.c.h.b16 %v105
    %v248 = vpack.c.b16 %v188, %v184
    %v249 = vpack.c.b16 %v189, %v185
    %v250 = vpack.c.b16 %v190, %v186
    %v251 = vpack.c.b16 %v191, %v187
    %v252 = vpack.c.b16 %v196, %v192
    %v253 = vpack.c.b16 %v197, %v193
    %v254 = vpack.c.b16 %v198, %v194
    %v255 = vpack.c.b16 %v199, %v195
    %v256 = vpack.c.b16 %v204, %v200
    %v257 = vpack.c.b16 %v205, %v201
    %v258 = vpack.c.b16 %v206, %v202
    %v259 = vpack.c.b16 %v207, %v203
    %v260 = vpack.c.b16 %v212, %v208
    %v261 = vpack.c.b16 %v213, %v209
    %v262 = vpack.c.b16 %v214, %v210
    %v263 = vpack.c.b16 %v215, %v211
    %v264 = vpack.c.b16 %v220, %v216
    %v265 = vpack.c.b16 %v221, %v217
    %v266 = vpack.c.b16 %v222, %v218
    %v267 = vpack.c.b16 %v223, %v219
    %v268 = vpack.c.b16 %v228, %v224
    %v269 = vpack.c.b16 %v229, %v225
    %v270 = vpack.c.b16 %v230, %v226
    %v271 = vpack.c.b16 %v231, %v227
    %v272 = vpack.c.b16 %v236, %v232
    %v273 = vpack.c.b16 %v237, %v233
    %v274 = vpack.c.b16 %v238, %v234
    %v275 = vpack.c.b16 %v239, %v235
    %v276 = vpack.c.b16 %v244, %v240
    %v277 = vpack.c.b16 %v245, %v241
    %v278 = vpack.c.b16 %v246, %v242
    %v279 = vpack.c.b16 %v247, %v243
    %312 = vmatprep.subr.bf16.mxu0 %v277
    %313 = vmatpush1.bf16.msra.mxu0 %v276
    %314 = vmatprep.subr.bf16.mxu0 %v273
    %315 = vmatpush1.bf16.msra.mxu0 %v272
    %316 = vmatprep.subr.bf16.mxu0 %v269
    %317 = vmatpush1.bf16.msra.mxu0 %v268
    %318 = vmatprep.subr.bf16.mxu0 %v265
    %319 = vmatpush1.bf16.msra.mxu0 %v264
    %320 = vmatprep.subr.bf16.mxu0 %v261
    %321 = vmatpush1.bf16.msra.mxu0 %v260
    %322 = vmatprep.subr.bf16.mxu0 %v257
    %323 = vmatpush1.bf16.msra.mxu0 %v256
    %324 = vmatprep.subr.bf16.mxu0 %v253
    %325 = vmatpush1.bf16.msra.mxu0 %v252
    %326 = vmatprep.subr.bf16.mxu0 %v249
    %327 = vmatpush1.bf16.msra.mxu0 %v248
    %328 = vmatprep.subr.bf16.mxu0 0
    %329 = vmatpush2.bf16.msra.mxu0 0
    %330 = vmatprep.subr.bf16.mxu0 0
    %331 = vmatpush2.bf16.msra.mxu0 0
    %332 = vmatprep.subr.bf16.mxu0 0
    %333 = vmatpush2.bf16.msra.mxu0 0
    %334 = vmatprep.subr.bf16.mxu0 0
    %335 = vmatpush2.bf16.msra.mxu0 0
    %336 = vmatprep.subr.bf16.mxu0 0
    %337 = vmatpush2.bf16.msra.mxu0 0
    %338 = vmatprep.subr.bf16.mxu0 0
    %339 = vmatpush2.bf16.msra.mxu0 0
    %340 = vmatprep.subr.bf16.mxu0 0
    %341 = vmatpush2.bf16.msra.mxu0 0
    %342 = vmatprep.subr.bf16.mxu0 0
    %343 = vmatpush2.bf16.msra.mxu0 0
    %344 = vmatprep.mubr.bf16.mxu0 0
    %345 = vmatmul.mubr.bf16.gmra.mxu0 %v144
    %v346 = vpop.f32.mrf.mxu0
    %v347 = vadd.f32 %v111, %v346
    %v348 = vpop.f32.mrf.mxu0
    %v349 = vadd.f32 %v115, %v348
    %v350 = vpop.f32.mrf.mxu0
    %v351 = vadd.f32 %v111, %v350
    %v352 = vpop.f32.mrf.mxu0
    %v353 = vadd.f32 %v115, %v352
    %354 = vmatprep.mubr.bf16.mxu0 0
    %355 = vmatmul.mubr.bf16.gmra.mxu0 %v145
    %v356 = vpop.f32.mrf.mxu0
    %v357 = vadd.f32 %v111, %v356
    %v358 = vpop.f32.mrf.mxu0
    %v359 = vadd.f32 %v115, %v358
    %v360 = vpop.f32.mrf.mxu0
    %v361 = vadd.f32 %v111, %v360
    %v362 = vpop.f32.mrf.mxu0
    %v363 = vadd.f32 %v115, %v362
    %364 = vmatprep.mubr.bf16.mxu0 0
    %365 = vmatmul.mubr.bf16.gmra.mxu0 %v146
    %v366 = vpop.f32.mrf.mxu0
    %v367 = vadd.f32 %v111, %v366
    %v368 = vpop.f32.mrf.mxu0
    %v369 = vadd.f32 %v115, %v368
    %v370 = vpop.f32.mrf.mxu0
    %v371 = vadd.f32 %v111, %v370
    %v372 = vpop.f32.mrf.mxu0
    %v373 = vadd.f32 %v115, %v372
    %374 = vmatprep.mubr.bf16.mxu0 0
    %375 = vmatmul.mubr.bf16.gmra.mxu0 %v147
    %v376 = vpop.f32.mrf.mxu0
    %v377 = vadd.f32 %v111, %v376
    %v378 = vpop.f32.mrf.mxu0
    %v379 = vadd.f32 %v115, %v378
    %v380 = vpop.f32.mrf.mxu0
    %v381 = vadd.f32 %v111, %v380
    %v382 = vpop.f32.mrf.mxu0
    %v383 = vadd.f32 %v115, %v382
    %384 = vdwg.mxu0
    %385 = vmatprep.subr.bf16.mxu0 %v279
    %386 = vmatpush1.bf16.msra.mxu0 %v278
    %387 = vmatprep.subr.bf16.mxu0 %v275
    %388 = vmatpush1.bf16.msra.mxu0 %v274
    %389 = vmatprep.subr.bf16.mxu0 %v271
    %390 = vmatpush1.bf16.msra.mxu0 %v270
    %391 = vmatprep.subr.bf16.mxu0 %v267
    %392 = vmatpush1.bf16.msra.mxu0 %v266
    %393 = vmatprep.subr.bf16.mxu0 %v263
    %394 = vmatpush1.bf16.msra.mxu0 %v262
    %395 = vmatprep.subr.bf16.mxu0 %v259
    %396 = vmatpush1.bf16.msra.mxu0 %v258
    %397 = vmatprep.subr.bf16.mxu0 %v255
    %398 = vmatpush1.bf16.msra.mxu0 %v254
    %399 = vmatprep.subr.bf16.mxu0 %v251
    %400 = vmatpush1.bf16.msra.mxu0 %v250
    %401 = vmatprep.subr.bf16.mxu0 0
    %402 = vmatpush2.bf16.msra.mxu0 0
    %403 = vmatprep.subr.bf16.mxu0 0
    %404 = vmatpush2.bf16.msra.mxu0 0
    %405 = vmatprep.subr.bf16.mxu0 0
    %406 = vmatpush2.bf16.msra.mxu0 0
    %407 = vmatprep.subr.bf16.mxu0 0
    %408 = vmatpush2.bf16.msra.mxu0 0
    %409 = vmatprep.subr.bf16.mxu0 0
    %410 = vmatpush2.bf16.msra.mxu0 0
    %411 = vmatprep.subr.bf16.mxu0 0
    %412 = vmatpush2.bf16.msra.mxu0 0
    %413 = vmatprep.subr.bf16.mxu0 0
    %414 = vmatpush2.bf16.msra.mxu0 0
    %415 = vmatprep.subr.bf16.mxu0 0
    %416 = vmatpush2.bf16.msra.mxu0 0
    %417 = vmatprep.mubr.bf16.mxu0 0
    %418 = vmatmul.mubr.bf16.gmra.mxu0 %v144
    %v419 = vpop.f32.mrf.mxu0
    %v420 = vadd.f32 %v119, %v419
    %v421 = vpop.f32.mrf.mxu0
    %v422 = vadd.f32 %v123, %v421
    %v423 = vpop.f32.mrf.mxu0
    %v424 = vadd.f32 %v119, %v423
    %v425 = vpop.f32.mrf.mxu0
    %v426 = vadd.f32 %v123, %v425
    %427 = vmatprep.mubr.bf16.mxu0 0
    %428 = vmatmul.mubr.bf16.gmra.mxu0 %v145
    %v429 = vpop.f32.mrf.mxu0
    %v430 = vadd.f32 %v119, %v429
    %v431 = vpop.f32.mrf.mxu0
    %v432 = vadd.f32 %v123, %v431
    %v433 = vpop.f32.mrf.mxu0
    %v434 = vadd.f32 %v119, %v433
    %v435 = vpop.f32.mrf.mxu0
    %v436 = vadd.f32 %v123, %v435
    %437 = vmatprep.mubr.bf16.mxu0 0
    %438 = vmatmul.mubr.bf16.gmra.mxu0 %v146
    %v439 = vpop.f32.mrf.mxu0
    %v440 = vadd.f32 %v119, %v439
    %v441 = vpop.f32.mrf.mxu0
    %v442 = vadd.f32 %v123, %v441
    %v443 = vpop.f32.mrf.mxu0
    %v444 = vadd.f32 %v119, %v443
    %v445 = vpop.f32.mrf.mxu0
    %v446 = vadd.f32 %v123, %v445
    %447 = vmatprep.mubr.bf16.mxu0 0
    %448 = vmatmul.mubr.bf16.gmra.mxu0 %v147
    %v449 = vpop.f32.mrf.mxu0
    %v450 = vadd.f32 %v119, %v449
    %v451 = vpop.f32.mrf.mxu0
    %v452 = vadd.f32 %v123, %v451
    %v453 = vpop.f32.mrf.mxu0
    %v454 = vadd.f32 %v119, %v453
    %v455 = vpop.f32.mrf.mxu0
    %v456 = vadd.f32 %v123, %v455
    %457 = vdwg.mxu0
    %458 = vst [vmem:[#allocation4] sm:$0xff] %v347
    %459 = vst [vmem:[#allocation4 + $0x8] sm:$0xff] %v349
    %460 = vst [vmem:[#allocation4 + $0x10] sm:$0xff] %v420
    %461 = vst [vmem:[#allocation4 + $0x18] sm:$0xff] %v422
    %462 = vst [vmem:[#allocation4 + $0x20] sm:$0xff] %v351
    %463 = vst [vmem:[#allocation4 + $0x28] sm:$0xff] %v353
    %464 = vst [vmem:[#allocation4 + $0x30] sm:$0xff] %v424
    %465 = vst [vmem:[#allocation4 + $0x38] sm:$0xff] %v426
    %466 = vst [vmem:[#allocation4 + $0x40] sm:$0xff] %v357
    %467 = vst [vmem:[#allocation4 + $0x48] sm:$0xff] %v359
    %468 = vst [vmem:[#allocation4 + $0x50] sm:$0xff] %v430
    %469 = vst [vmem:[#allocation4 + $0x58] sm:$0xff] %v432
    %470 = vst [vmem:[#allocation4 + $0x60] sm:$0xff] %v361
    %471 = vst [vmem:[#allocation4 + $0x68] sm:$0xff] %v363
    %472 = vst [vmem:[#allocation4 + $0x70] sm:$0xff] %v434
    %473 = vst [vmem:[#allocation4 + $0x78] sm:$0xff] %v436
    %474 = vst [vmem:[#allocation4 + $0x80] sm:$0xff] %v367
    %475 = vst [vmem:[#allocation4 + $0x88] sm:$0xff] %v369
    %476 = vst [vmem:[#allocation4 + $0x90] sm:$0xff] %v440
    %477 = vst [vmem:[#allocation4 + $0x98] sm:$0xff] %v442
    %478 = vst [vmem:[#allocation4 + $0xa0] sm:$0xff] %v371
    %479 = vst [vmem:[#allocation4 + $0xa8] sm:$0xff] %v373
    %480 = vst [vmem:[#allocation4 + $0xb0] sm:$0xff] %v444
    %481 = vst [vmem:[#allocation4 + $0xb8] sm:$0xff] %v446
    %482 = vst [vmem:[#allocation4 + $0xc0] sm:$0xff] %v377
    %483 = vst [vmem:[#allocation4 + $0xc8] sm:$0xff] %v379
    %484 = vst [vmem:[#allocation4 + $0xd0] sm:$0xff] %v450
    %485 = vst [vmem:[#allocation4 + $0xd8] sm:$0xff] %v452
    %486 = vst [vmem:[#allocation4 + $0xe0] sm:$0xff] %v381
    %487 = vst [vmem:[#allocation4 + $0xe8] sm:$0xff] %v383
    %488 = vst [vmem:[#allocation4 + $0xf0] sm:$0xff] %v454
    %489 = vst [vmem:[#allocation4 + $0xf8] sm:$0xff] %v456
    %v490 = vld [vmem:[#allocation2] sm:$0xff]
    %v491 = vld [vmem:[#allocation3] sm:$0xff]
    %s492 = smul.u32 0, 4
    %s493 = smul.addr %s492, 8
    %s494 = scalar_lea.vmem [#allocation4], %s493
    %v495 = vld [vmem:[%s494] sm:$0xff]
    %v496 = vld [vmem:[%s494 + $0x8] sm:$0xff]
    %v497 = vld [vmem:[%s494 + $0x10] sm:$0xff]
    %v498 = vld [vmem:[%s494 + $0x18] sm:$0xff]
    %v499 = vpack.c.bf16 %v490, %v490
    %v500 = vld [vmem:[#allocation10] sm:$0xff]
    %v501 = vld [vmem:[#allocation10 + $0x8] sm:$0xff]
    %v502 = vld [vmem:[#allocation10 + $0x10] sm:$0xff]
    %v503 = vld [vmem:[#allocation10 + $0x18] sm:$0xff]
    %v504 = vld [vmem:[#allocation10 + $0x20] sm:$0xff]
    %v505 = vld [vmem:[#allocation10 + $0x28] sm:$0xff]
    %v506 = vld [vmem:[#allocation10 + $0x30] sm:$0xff]
    %v507 = vld [vmem:[#allocation10 + $0x38] sm:$0xff]
    %v508 = vld [vmem:[#allocation10 + $0x40] sm:$0xff]
    %v509 = vld [vmem:[#allocation10 + $0x48] sm:$0xff]
    %v510 = vld [vmem:[#allocation10 + $0x50] sm:$0xff]
    %v511 = vld [vmem:[#allocation10 + $0x58] sm:$0xff]
    %v512 = vld [vmem:[#allocation10 + $0x60] sm:$0xff]
    %v513 = vld [vmem:[#allocation10 + $0x68] sm:$0xff]
    %v514 = vld [vmem:[#allocation10 + $0x70] sm:$0xff]
    %v515 = vld [vmem:[#allocation10 + $0x78] sm:$0xff]
    %v516 = vld [vmem:[#allocation10 + $0x80] sm:$0xff]
    %v517 = vld [vmem:[#allocation10 + $0x88] sm:$0xff]
    %v518 = vld [vmem:[#allocation10 + $0x90] sm:$0xff]
    %v519 = vld [vmem:[#allocation10 + $0x98] sm:$0xff]
    %v520 = vld [vmem:[#allocation10 + $0xa0] sm:$0xff]
    %v521 = vld [vmem:[#allocation10 + $0xa8] sm:$0xff]
    %v522 = vld [vmem:[#allocation10 + $0xb0] sm:$0xff]
    %v523 = vld [vmem:[#allocation10 + $0xb8] sm:$0xff]
    %v524 = vld [vmem:[#allocation10 + $0xc0] sm:$0xff]
    %v525 = vld [vmem:[#allocation10 + $0xc8] sm:$0xff]
    %v526 = vld [vmem:[#allocation10 + $0xd0] sm:$0xff]
    %v527 = vld [vmem:[#allocation10 + $0xd8] sm:$0xff]
    %v528 = vld [vmem:[#allocation10 + $0xe0] sm:$0xff]
    %v529 = vld [vmem:[#allocation10 + $0xe8] sm:$0xff]
    %v530 = vld [vmem:[#allocation10 + $0xf0] sm:$0xff]
    %v531 = vld [vmem:[#allocation10 + $0xf8] sm:$0xff]
    %v564 = vunpack.c.l.b16 %v500
    %v565 = vunpack.c.h.b16 %v500
    %v566 = vunpack.c.l.b16 %v501
    %v567 = vunpack.c.h.b16 %v501
    %v568 = vunpack.c.l.b16 %v502
    %v569 = vunpack.c.h.b16 %v502
    %v570 = vunpack.c.l.b16 %v503
    %v571 = vunpack.c.h.b16 %v503
    %v572 = vunpack.c.l.b16 %v504
    %v573 = vunpack.c.h.b16 %v504
    %v574 = vunpack.c.l.b16 %v505
    %v575 = vunpack.c.h.b16 %v505
    %v576 = vunpack.c.l.b16 %v506
    %v577 = vunpack.c.h.b16 %v506
    %v578 = vunpack.c.l.b16 %v507
    %v579 = vunpack.c.h.b16 %v507
    %v580 = vunpack.c.l.b16 %v508
    %v581 = vunpack.c.h.b16 %v508
    %v582 = vunpack.c.l.b16 %v509
    %v583 = vunpack.c.h.b16 %v509
    %v584 = vunpack.c.l.b16 %v510
    %v585 = vunpack.c.h.b16 %v510
    %v586 = vunpack.c.l.b16 %v511
    %v587 = vunpack.c.h.b16 %v511
    %v588 = vunpack.c.l.b16 %v512
    %v589 = vunpack.c.h.b16 %v512
    %v590 = vunpack.c.l.b16 %v513
    %v591 = vunpack.c.h.b16 %v513
    %v592 = vunpack.c.l.b16 %v514
    %v593 = vunpack.c.h.b16 %v514
    %v594 = vunpack.c.l.b16 %v515
    %v595 = vunpack.c.h.b16 %v515
    %v596 = vunpack.c.l.b16 %v516
    %v597 = vunpack.c.h.b16 %v516
    %v598 = vunpack.c.l.b16 %v517
    %v599 = vunpack.c.h.b16 %v517
    %v600 = vunpack.c.l.b16 %v518
    %v601 = vunpack.c.h.b16 %v518
    %v602 = vunpack.c.l.b16 %v519
    %v603 = vunpack.c.h.b16 %v519
    %v604 = vunpack.c.l.b16 %v520
    %v605 = vunpack.c.h.b16 %v520
    %v606 = vunpack.c.l.b16 %v521
    %v607 = vunpack.c.h.b16 %v521
    %v608 = vunpack.c.l.b16 %v522
    %v609 = vunpack.c.h.b16 %v522
    %v610 = vunpack.c.l.b16 %v523
    %v611 = vunpack.c.h.b16 %v523
    %v612 = vunpack.c.l.b16 %v524
    %v613 = vunpack.c.h.b16 %v524
    %v614 = vunpack.c.l.b16 %v525
    %v615 = vunpack.c.h.b16 %v525
    %v616 = vunpack.c.l.b16 %v526
    %v617 = vunpack.c.h.b16 %v526
    %v618 = vunpack.c.l.b16 %v527
    %v619 = vunpack.c.h.b16 %v527
    %v620 = vunpack.c.l.b16 %v528
    %v621 = vunpack.c.h.b16 %v528
    %v622 = vunpack.c.l.b16 %v529
    %v623 = vunpack.c.h.b16 %v529
    %v624 = vunpack.c.l.b16 %v530
    %v625 = vunpack.c.h.b16 %v530
    %v626 = vunpack.c.l.b16 %v531
    %v627 = vunpack.c.h.b16 %v531
    %v628 = vpack.c.b16 %v568, %v564
    %v629 = vpack.c.b16 %v569, %v565
    %v630 = vpack.c.b16 %v570, %v566
    %v631 = vpack.c.b16 %v571, %v567
    %v632 = vpack.c.b16 %v576, %v572
    %v633 = vpack.c.b16 %v577, %v573
    %v634 = vpack.c.b16 %v578, %v574
    %v635 = vpack.c.b16 %v579, %v575
    %v636 = vpack.c.b16 %v584, %v580
    %v637 = vpack.c.b16 %v585, %v581
    %v638 = vpack.c.b16 %v586, %v582
    %v639 = vpack.c.b16 %v587, %v583
    %v640 = vpack.c.b16 %v592, %v588
    %v641 = vpack.c.b16 %v593, %v589
    %v642 = vpack.c.b16 %v594, %v590
    %v643 = vpack.c.b16 %v595, %v591
    %v644 = vpack.c.b16 %v600, %v596
    %v645 = vpack.c.b16 %v601, %v597
    %v646 = vpack.c.b16 %v602, %v598
    %v647 = vpack.c.b16 %v603, %v599
    %v648 = vpack.c.b16 %v608, %v604
    %v649 = vpack.c.b16 %v609, %v605
    %v650 = vpack.c.b16 %v610, %v606
    %v651 = vpack.c.b16 %v611, %v607
    %v652 = vpack.c.b16 %v616, %v612
    %v653 = vpack.c.b16 %v617, %v613
    %v654 = vpack.c.b16 %v618, %v614
    %v655 = vpack.c.b16 %v619, %v615
    %v656 = vpack.c.b16 %v624, %v620
    %v657 = vpack.c.b16 %v625, %v621
    %v658 = vpack.c.b16 %v626, %v622
    %v659 = vpack.c.b16 %v627, %v623
    %692 = vmatprep.subr.bf16.mxu0 %v657
    %693 = vmatpush1.bf16.msra.mxu0 %v656
    %694 = vmatprep.subr.bf16.mxu0 %v653
    %695 = vmatpush1.bf16.msra.mxu0 %v652
    %696 = vmatprep.subr.bf16.mxu0 %v649
    %697 = vmatpush1.bf16.msra.mxu0 %v648
    %698 = vmatprep.subr.bf16.mxu0 %v645
    %699 = vmatpush1.bf16.msra.mxu0 %v644
    %700 = vmatprep.subr.bf16.mxu0 %v641
    %701 = vmatpush1.bf16.msra.mxu0 %v640
    %702 = vmatprep.subr.bf16.mxu0 %v637
    %703 = vmatpush1.bf16.msra.mxu0 %v636
    %704 = vmatprep.subr.bf16.mxu0 %v633
    %705 = vmatpush1.bf16.msra.mxu0 %v632
    %706 = vmatprep.subr.bf16.mxu0 %v629
    %707 = vmatpush1.bf16.msra.mxu0 %v628
    %708 = vmatprep.subr.bf16.mxu0 0
    %709 = vmatpush2.bf16.msra.mxu0 0
    %710 = vmatprep.subr.bf16.mxu0 0
    %711 = vmatpush2.bf16.msra.mxu0 0
    %712 = vmatprep.subr.bf16.mxu0 0
    %713 = vmatpush2.bf16.msra.mxu0 0
    %714 = vmatprep.subr.bf16.mxu0 0
    %715 = vmatpush2.bf16.msra.mxu0 0
    %716 = vmatprep.subr.bf16.mxu0 0
    %717 = vmatpush2.bf16.msra.mxu0 0
    %718 = vmatprep.subr.bf16.mxu0 0
    %719 = vmatpush2.bf16.msra.mxu0 0
    %720 = vmatprep.subr.bf16.mxu0 0
    %721 = vmatpush2.bf16.msra.mxu0 0
    %722 = vmatprep.subr.bf16.mxu0 0
    %723 = vmatpush2.bf16.msra.mxu0 0
    %724 = vmatprep.mubr.bf16.mxu0 0
    %725 = vmatmul.mubr.bf16.gmra.mxu0 %v499
    %v726 = vpop.f32.mrf.mxu0
    %v727 = vadd.f32 0.0, %v726
    %v728 = vpop.f32.mrf.mxu0
    %v729 = vadd.f32 0.0, %v728
    %v730 = vpop.f32.mrf.mxu0
    %v731 = vpop.f32.mrf.mxu0
    %732 = vdwg.mxu0
    %733 = vmatprep.subr.bf16.mxu0 %v659
    %734 = vmatpush1.bf16.msra.mxu0 %v658
    %735 = vmatprep.subr.bf16.mxu0 %v655
    %736 = vmatpush1.bf16.msra.mxu0 %v654
    %737 = vmatprep.subr.bf16.mxu0 %v651
    %738 = vmatpush1.bf16.msra.mxu0 %v650
    %739 = vmatprep.subr.bf16.mxu0 %v647
    %740 = vmatpush1.bf16.msra.mxu0 %v646
    %741 = vmatprep.subr.bf16.mxu0 %v643
    %742 = vmatpush1.bf16.msra.mxu0 %v642
    %743 = vmatprep.subr.bf16.mxu0 %v639
    %744 = vmatpush1.bf16.msra.mxu0 %v638
    %745 = vmatprep.subr.bf16.mxu0 %v635
    %746 = vmatpush1.bf16.msra.mxu0 %v634
    %747 = vmatprep.subr.bf16.mxu0 %v631
    %748 = vmatpush1.bf16.msra.mxu0 %v630
    %749 = vmatprep.subr.bf16.mxu0 0
    %750 = vmatpush2.bf16.msra.mxu0 0
    %751 = vmatprep.subr.bf16.mxu0 0
    %752 = vmatpush2.bf16.msra.mxu0 0
    %753 = vmatprep.subr.bf16.mxu0 0
    %754 = vmatpush2.bf16.msra.mxu0 0
    %755 = vmatprep.subr.bf16.mxu0 0
    %756 = vmatpush2.bf16.msra.mxu0 0
    %757 = vmatprep.subr.bf16.mxu0 0
    %758 = vmatpush2.bf16.msra.mxu0 0
    %759 = vmatprep.subr.bf16.mxu0 0
    %760 = vmatpush2.bf16.msra.mxu0 0
    %761 = vmatprep.subr.bf16.mxu0 0
    %762 = vmatpush2.bf16.msra.mxu0 0
    %763 = vmatprep.subr.bf16.mxu0 0
    %764 = vmatpush2.bf16.msra.mxu0 0
    %765 = vmatprep.mubr.bf16.mxu0 0
    %766 = vmatmul.mubr.bf16.gmra.mxu0 %v499
    %v767 = vpop.f32.mrf.mxu0
    %v768 = vadd.f32 0.0, %v767
    %v769 = vpop.f32.mrf.mxu0
    %v770 = vadd.f32 0.0, %v769
    %v771 = vpop.f32.mrf.mxu0
    %v772 = vpop.f32.mrf.mxu0
    %773 = vdwg.mxu0
    %v774 = vadd.f32 %v495, %v727
    %v775 = vadd.f32 %v496, %v729
    %v776 = vadd.f32 %v497, %v768
    %v777 = vadd.f32 %v498, %v770
    %v778 = vxor.u32 %v774, 2147483648
    %v779 = vmul.f32 %v778, 1.442695
    %v780 = vpow.pop %v779
    %v781 = vadd.f32 %v780, 1.0
    %v782 = vrcp.pop %v781
    %v783 = vmul.f32 1.0, %v782
    %v784 = vxor.u32 %v775, 2147483648
    %v785 = vmul.f32 %v784, 1.442695
    %v786 = vpow.pop %v785
    %v787 = vadd.f32 %v786, 1.0
    %v788 = vrcp.pop %v787
    %v789 = vmul.f32 1.0, %v788
    %v790 = vtanh.pop %v776
    %v791 = vxor.u32 %v777, 2147483648
    %v792 = vmul.f32 %v791, 1.442695
    %v793 = vpow.pop %v792
    %v794 = vadd.f32 %v793, 1.0
    %v795 = vrcp.pop %v794
    %v796 = vmul.f32 1.0, %v795
    %v797 = vmul.f32 %v789, %v491
    %v798 = vmul.f32 %v783, %v790
    %v799 = vadd.f32 %v797, %v798
    %v800 = vtanh.pop %v799
    %v801 = vmul.f32 %v796, %v800
    %v802 = vpack.c.bf16 %v801, %v801
    %803 = vst [vmem:[#allocation11] sm:$0xf] %v802
    %s804 = smul.u32 1, 4
    %s805 = smul.addr %s804, 8
    %s806 = scalar_lea.vmem [#allocation4], %s805
    %v807 = vld [vmem:[%s806] sm:$0xff]
    %v808 = vld [vmem:[%s806 + $0x8] sm:$0xff]
    %v809 = vld [vmem:[%s806 + $0x10] sm:$0xff]
    %v810 = vld [vmem:[%s806 + $0x18] sm:$0xff]
    %v811 = vld [vmem:[#allocation10] sm:$0xff]
    %v812 = vld [vmem:[#allocation10 + $0x8] sm:$0xff]
    %v813 = vld [vmem:[#allocation10 + $0x10] sm:$0xff]
    %v814 = vld [vmem:[#allocation10 + $0x18] sm:$0xff]
    %v815 = vld [vmem:[#allocation10 + $0x20] sm:$0xff]
    %v816 = vld [vmem:[#allocation10 + $0x28] sm:$0xff]
    %v817 = vld [vmem:[#allocation10 + $0x30] sm:$0xff]
    %v818 = vld [vmem:[#allocation10 + $0x38] sm:$0xff]
    %v819 = vld [vmem:[#allocation10 + $0x40] sm:$0xff]
    %v820 = vld [vmem:[#allocation10 + $0x48] sm:$0xff]
    %v821 = vld [vmem:[#allocation10 + $0x50] sm:$0xff]
    %v822 = vld [vmem:[#allocation10 + $0x58] sm:$0xff]
    %v823 = vld [vmem:[#allocation10 + $0x60] sm:$0xff]
    %v824 = vld [vmem:[#allocation10 + $0x68] sm:$0xff]
    %v825 = vld [vmem:[#allocation10 + $0x70] sm:$0xff]
    %v826 = vld [vmem:[#allocation10 + $0x78] sm:$0xff]
    %v827 = vld [vmem:[#allocation10 + $0x80] sm:$0xff]
    %v828 = vld [vmem:[#allocation10 + $0x88] sm:$0xff]
    %v829 = vld [vmem:[#allocation10 + $0x90] sm:$0xff]
    %v830 = vld [vmem:[#allocation10 + $0x98] sm:$0xff]
    %v831 = vld [vmem:[#allocation10 + $0xa0] sm:$0xff]
    %v832 = vld [vmem:[#allocation10 + $0xa8] sm:$0xff]
    %v833 = vld [vmem:[#allocation10 + $0xb0] sm:$0xff]
    %v834 = vld [vmem:[#allocation10 + $0xb8] sm:$0xff]
    %v835 = vld [vmem:[#allocation10 + $0xc0] sm:$0xff]
    %v836 = vld [vmem:[#allocation10 + $0xc8] sm:$0xff]
    %v837 = vld [vmem:[#allocation10 + $0xd0] sm:$0xff]
    %v838 = vld [vmem:[#allocation10 + $0xd8] sm:$0xff]
    %v839 = vld [vmem:[#allocation10 + $0xe0] sm:$0xff]
    %v840 = vld [vmem:[#allocation10 + $0xe8] sm:$0xff]
    %v841 = vld [vmem:[#allocation10 + $0xf0] sm:$0xff]
    %v842 = vld [vmem:[#allocation10 + $0xf8] sm:$0xff]
    %v875 = vunpack.c.l.b16 %v811
    %v876 = vunpack.c.h.b16 %v811
    %v877 = vunpack.c.l.b16 %v812
    %v878 = vunpack.c.h.b16 %v812
    %v879 = vunpack.c.l.b16 %v813
    %v880 = vunpack.c.h.b16 %v813
    %v881 = vunpack.c.l.b16 %v814
    %v882 = vunpack.c.h.b16 %v814
    %v883 = vunpack.c.l.b16 %v815
    %v884 = vunpack.c.h.b16 %v815
    %v885 = vunpack.c.l.b16 %v816
    %v886 = vunpack.c.h.b16 %v816
    %v887 = vunpack.c.l.b16 %v817
    %v888 = vunpack.c.h.b16 %v817
    %v889 = vunpack.c.l.b16 %v818
    %v890 = vunpack.c.h.b16 %v818
    %v891 = vunpack.c.l.b16 %v819
    %v892 = vunpack.c.h.b16 %v819
    %v893 = vunpack.c.l.b16 %v820
    %v894 = vunpack.c.h.b16 %v820
    %v895 = vunpack.c.l.b16 %v821
    %v896 = vunpack.c.h.b16 %v821
    %v897 = vunpack.c.l.b16 %v822
    %v898 = vunpack.c.h.b16 %v822
    %v899 = vunpack.c.l.b16 %v823
    %v900 = vunpack.c.h.b16 %v823
    %v901 = vunpack.c.l.b16 %v824
    %v902 = vunpack.c.h.b16 %v824
    %v903 = vunpack.c.l.b16 %v825
    %v904 = vunpack.c.h.b16 %v825
    %v905 = vunpack.c.l.b16 %v826
    %v906 = vunpack.c.h.b16 %v826
    %v907 = vunpack.c.l.b16 %v827
    %v908 = vunpack.c.h.b16 %v827
    %v909 = vunpack.c.l.b16 %v828
    %v910 = vunpack.c.h.b16 %v828
    %v911 = vunpack.c.l.b16 %v829
    %v912 = vunpack.c.h.b16 %v829
    %v913 = vunpack.c.l.b16 %v830
    %v914 = vunpack.c.h.b16 %v830
    %v915 = vunpack.c.l.b16 %v831
    %v916 = vunpack.c.h.b16 %v831
    %v917 = vunpack.c.l.b16 %v832
    %v918 = vunpack.c.h.b16 %v832
    %v919 = vunpack.c.l.b16 %v833
    %v920 = vunpack.c.h.b16 %v833
    %v921 = vunpack.c.l.b16 %v834
    %v922 = vunpack.c.h.b16 %v834
    %v923 = vunpack.c.l.b16 %v835
    %v924 = vunpack.c.h.b16 %v835
    %v925 = vunpack.c.l.b16 %v836
    %v926 = vunpack.c.h.b16 %v836
    %v927 = vunpack.c.l.b16 %v837
    %v928 = vunpack.c.h.b16 %v837
    %v929 = vunpack.c.l.b16 %v838
    %v930 = vunpack.c.h.b16 %v838
    %v931 = vunpack.c.l.b16 %v839
    %v932 = vunpack.c.h.b16 %v839
    %v933 = vunpack.c.l.b16 %v840
    %v934 = vunpack.c.h.b16 %v840
    %v935 = vunpack.c.l.b16 %v841
    %v936 = vunpack.c.h.b16 %v841
    %v937 = vunpack.c.l.b16 %v842
    %v938 = vunpack.c.h.b16 %v842
    %v939 = vpack.c.b16 %v879, %v875
    %v940 = vpack.c.b16 %v880, %v876
    %v941 = vpack.c.b16 %v881, %v877
    %v942 = vpack.c.b16 %v882, %v878
    %v943 = vpack.c.b16 %v887, %v883
    %v944 = vpack.c.b16 %v888, %v884
    %v945 = vpack.c.b16 %v889, %v885
    %v946 = vpack.c.b16 %v890, %v886
    %v947 = vpack.c.b16 %v895, %v891
    %v948 = vpack.c.b16 %v896, %v892
    %v949 = vpack.c.b16 %v897, %v893
    %v950 = vpack.c.b16 %v898, %v894
    %v951 = vpack.c.b16 %v903, %v899
    %v952 = vpack.c.b16 %v904, %v900
    %v953 = vpack.c.b16 %v905, %v901
    %v954 = vpack.c.b16 %v906, %v902
    %v955 = vpack.c.b16 %v911, %v907
    %v956 = vpack.c.b16 %v912, %v908
    %v957 = vpack.c.b16 %v913, %v909
    %v958 = vpack.c.b16 %v914, %v910
    %v959 = vpack.c.b16 %v919, %v915
    %v960 = vpack.c.b16 %v920, %v916
    %v961 = vpack.c.b16 %v921, %v917
    %v962 = vpack.c.b16 %v922, %v918
    %v963 = vpack.c.b16 %v927, %v923
    %v964 = vpack.c.b16 %v928, %v924
    %v965 = vpack.c.b16 %v929, %v925
    %v966 = vpack.c.b16 %v930, %v926
    %v967 = vpack.c.b16 %v935, %v931
    %v968 = vpack.c.b16 %v936, %v932
    %v969 = vpack.c.b16 %v937, %v933
    %v970 = vpack.c.b16 %v938, %v934
    %1003 = vmatprep.subr.bf16.mxu0 %v968
    %1004 = vmatpush1.bf16.msra.mxu0 %v967
    %1005 = vmatprep.subr.bf16.mxu0 %v964
    %1006 = vmatpush1.bf16.msra.mxu0 %v963
    %1007 = vmatprep.subr.bf16.mxu0 %v960
    %1008 = vmatpush1.bf16.msra.mxu0 %v959
    %1009 = vmatprep.subr.bf16.mxu0 %v956
    %1010 = vmatpush1.bf16.msra.mxu0 %v955
    %1011 = vmatprep.subr.bf16.mxu0 %v952
    %1012 = vmatpush1.bf16.msra.mxu0 %v951
    %1013 = vmatprep.subr.bf16.mxu0 %v948
    %1014 = vmatpush1.bf16.msra.mxu0 %v947
    %1015 = vmatprep.subr.bf16.mxu0 %v944
    %1016 = vmatpush1.bf16.msra.mxu0 %v943
    %1017 = vmatprep.subr.bf16.mxu0 %v940
    %1018 = vmatpush1.bf16.msra.mxu0 %v939
    %1019 = vmatprep.subr.bf16.mxu0 0
    %1020 = vmatpush2.bf16.msra.mxu0 0
    %1021 = vmatprep.subr.bf16.mxu0 0
    %1022 = vmatpush2.bf16.msra.mxu0 0
    %1023 = vmatprep.subr.bf16.mxu0 0
    %1024 = vmatpush2.bf16.msra.mxu0 0
    %1025 = vmatprep.subr.bf16.mxu0 0
    %1026 = vmatpush2.bf16.msra.mxu0 0
    %1027 = vmatprep.subr.bf16.mxu0 0
    %1028 = vmatpush2.bf16.msra.mxu0 0
    %1029 = vmatprep.subr.bf16.mxu0 0
    %1030 = vmatpush2.bf16.msra.mxu0 0
    %1031 = vmatprep.subr.bf16.mxu0 0
    %1032 = vmatpush2.bf16.msra.mxu0 0
    %1033 = vmatprep.subr.bf16.mxu0 0
    %1034 = vmatpush2.bf16.msra.mxu0 0
    %1035 = vmatprep.mubr.bf16.mxu0 0
    %1036 = vmatmul.mubr.bf16.gmra.mxu0 %v802
    %v1037 = vpop.f32.mrf.mxu0
    %v1038 = vadd.f32 0.0, %v1037
    %v1039 = vpop.f32.mrf.mxu0
    %v1040 = vadd.f32 0.0, %v1039
    %v1041 = vpop.f32.mrf.mxu0
    %v1042 = vpop.f32.mrf.mxu0
    %1043 = vdwg.mxu0
    %1044 = vmatprep.subr.bf16.mxu0 %v970
    %1045 = vmatpush1.bf16.msra.mxu0 %v969
    %1046 = vmatprep.subr.bf16.mxu0 %v966
    %1047 = vmatpush1.bf16.msra.mxu0 %v965
    %1048 = vmatprep.subr.bf16.mxu0 %v962
    %1049 = vmatpush1.bf16.msra.mxu0 %v961
    %1050 = vmatprep.subr.bf16.mxu0 %v958
    %1051 = vmatpush1.bf16.msra.mxu0 %v957
    %1052 = vmatprep.subr.bf16.mxu0 %v954
    %1053 = vmatpush1.bf16.msra.mxu0 %v953
    %1054 = vmatprep.subr.bf16.mxu0 %v950
    %1055 = vmatpush1.bf16.msra.mxu0 %v949
    %1056 = vmatprep.subr.bf16.mxu0 %v946
    %1057 = vmatpush1.bf16.msra.mxu0 %v945
    %1058 = vmatprep.subr.bf16.mxu0 %v942
    %1059 = vmatpush1.bf16.msra.mxu0 %v941
    %1060 = vmatprep.subr.bf16.mxu0 0
    %1061 = vmatpush2.bf16.msra.mxu0 0
    %1062 = vmatprep.subr.bf16.mxu0 0
    %1063 = vmatpush2.bf16.msra.mxu0 0
    %1064 = vmatprep.subr.bf16.mxu0 0
    %1065 = vmatpush2.bf16.msra.mxu0 0
    %1066 = vmatprep.subr.bf16.mxu0 0
    %1067 = vmatpush2.bf16.msra.mxu0 0
    %1068 = vmatprep.subr.bf16.mxu0 0
    %1069 = vmatpush2.bf16.msra.mxu0 0
    %1070 = vmatprep.subr.bf16.mxu0 0
    %1071 = vmatpush2.bf16.msra.mxu0 0
    %1072 = vmatprep.subr.bf16.mxu0 0
    %1073 = vmatpush2.bf16.msra.mxu0 0
    %1074 = vmatprep.subr.bf16.mxu0 0
    %1075 = vmatpush2.bf16.msra.mxu0 0
    %1076 = vmatprep.mubr.bf16.mxu0 0
    %1077 = vmatmul.mubr.bf16.gmra.mxu0 %v802
    %v1078 = vpop.f32.mrf.mxu0
    %v1079 = vadd.f32 0.0, %v1078
    %v1080 = vpop.f32.mrf.mxu0
    %v1081 = vadd.f32 0.0, %v1080
    %v1082 = vpop.f32.mrf.mxu0
    %v1083 = vpop.f32.mrf.mxu0
    %1084 = vdwg.mxu0
    %v1085 = vadd.f32 %v807, %v1038
    %v1086 = vadd.f32 %v808, %v1040
    %v1087 = vadd.f32 %v809, %v1079
    %v1088 = vadd.f32 %v810, %v1081
    %v1089 = vxor.u32 %v1085, 2147483648
    %v1090 = vmul.f32 %v1089, 1.442695
    %v1091 = vpow.pop %v1090
    %v1092 = vadd.f32 %v1091, 1.0
    %v1093 = vrcp.pop %v1092
    %v1094 = vmul.f32 1.0, %v1093
    %v1095 = vxor.u32 %v1086, 2147483648
    %v1096 = vmul.f32 %v1095, 1.442695
    %v1097 = vpow.pop %v1096
    %v1098 = vadd.f32 %v1097, 1.0
    %v1099 = vrcp.pop %v1098
    %v1100 = vmul.f32 1.0, %v1099
    %v1101 = vtanh.pop %v1087
    %v1102 = vxor.u32 %v1088, 2147483648
    %v1103 = vmul.f32 %v1102, 1.442695
    %v1104 = vpow.pop %v1103
    %v1105 = vadd.f32 %v1104, 1.0
    %v1106 = vrcp.pop %v1105
    %v1107 = vmul.f32 1.0, %v1106
    %v1108 = vmul.f32 %v1100, %v799
    %v1109 = vmul.f32 %v1094, %v1101
    %v1110 = vadd.f32 %v1108, %v1109
    %v1111 = vtanh.pop %v1110
    %v1112 = vmul.f32 %v1107, %v1111
    %v1113 = vpack.c.bf16 %v1112, %v1112
    %s1114 = scalar_lea.vmem [#allocation11], 4
    %1115 = vst [vmem:[%s1114] sm:$0xf] %v1113
    %s1116 = smul.u32 2, 4
    %s1117 = smul.addr %s1116, 8
    %s1118 = scalar_lea.vmem [#allocation4], %s1117
    %v1119 = vld [vmem:[%s1118] sm:$0xff]
    %v1120 = vld [vmem:[%s1118 + $0x8] sm:$0xff]
    %v1121 = vld [vmem:[%s1118 + $0x10] sm:$0xff]
    %v1122 = vld [vmem:[%s1118 + $0x18] sm:$0xff]
    %v1123 = vld [vmem:[#allocation10] sm:$0xff]
    %v1124 = vld [vmem:[#allocation10 + $0x8] sm:$0xff]
    %v1125 = vld [vmem:[#allocation10 + $0x10] sm:$0xff]
    %v1126 = vld [vmem:[#allocation10 + $0x18] sm:$0xff]
    %v1127 = vld [vmem:[#allocation10 + $0x20] sm:$0xff]
    %v1128 = vld [vmem:[#allocation10 + $0x28] sm:$0xff]
    %v1129 = vld [vmem:[#allocation10 + $0x30] sm:$0xff]
    %v1130 = vld [vmem:[#allocation10 + $0x38] sm:$0xff]
    %v1131 = vld [vmem:[#allocation10 + $0x40] sm:$0xff]
    %v1132 = vld [vmem:[#allocation10 + $0x48] sm:$0xff]
    %v1133 = vld [vmem:[#allocation10 + $0x50] sm:$0xff]
    %v1134 = vld [vmem:[#allocation10 + $0x58] sm:$0xff]
    %v1135 = vld [vmem:[#allocation10 + $0x60] sm:$0xff]
    %v1136 = vld [vmem:[#allocation10 + $0x68] sm:$0xff]
    %v1137 = vld [vmem:[#allocation10 + $0x70] sm:$0xff]
    %v1138 = vld [vmem:[#allocation10 + $0x78] sm:$0xff]
    %v1139 = vld [vmem:[#allocation10 + $0x80] sm:$0xff]
    %v1140 = vld [vmem:[#allocation10 + $0x88] sm:$0xff]
    %v1141 = vld [vmem:[#allocation10 + $0x90] sm:$0xff]
    %v1142 = vld [vmem:[#allocation10 + $0x98] sm:$0xff]
    %v1143 = vld [vmem:[#allocation10 + $0xa0] sm:$0xff]
    %v1144 = vld [vmem:[#allocation10 + $0xa8] sm:$0xff]
    %v1145 = vld [vmem:[#allocation10 + $0xb0] sm:$0xff]
    %v1146 = vld [vmem:[#allocation10 + $0xb8] sm:$0xff]
    %v1147 = vld [vmem:[#allocation10 + $0xc0] sm:$0xff]
    %v1148 = vld [vmem:[#allocation10 + $0xc8] sm:$0xff]
    %v1149 = vld [vmem:[#allocation10 + $0xd0] sm:$0xff]
    %v1150 = vld [vmem:[#allocation10 + $0xd8] sm:$0xff]
    %v1151 = vld [vmem:[#allocation10 + $0xe0] sm:$0xff]
    %v1152 = vld [vmem:[#allocation10 + $0xe8] sm:$0xff]
    %v1153 = vld [vmem:[#allocation10 + $0xf0] sm:$0xff]
    %v1154 = vld [vmem:[#allocation10 + $0xf8] sm:$0xff]
    %v1187 = vunpack.c.l.b16 %v1123
    %v1188 = vunpack.c.h.b16 %v1123
    %v1189 = vunpack.c.l.b16 %v1124
    %v1190 = vunpack.c.h.b16 %v1124
    %v1191 = vunpack.c.l.b16 %v1125
    %v1192 = vunpack.c.h.b16 %v1125
    %v1193 = vunpack.c.l.b16 %v1126
    %v1194 = vunpack.c.h.b16 %v1126
    %v1195 = vunpack.c.l.b16 %v1127
    %v1196 = vunpack.c.h.b16 %v1127
    %v1197 = vunpack.c.l.b16 %v1128
    %v1198 = vunpack.c.h.b16 %v1128
    %v1199 = vunpack.c.l.b16 %v1129
    %v1200 = vunpack.c.h.b16 %v1129
    %v1201 = vunpack.c.l.b16 %v1130
    %v1202 = vunpack.c.h.b16 %v1130
    %v1203 = vunpack.c.l.b16 %v1131
    %v1204 = vunpack.c.h.b16 %v1131
    %v1205 = vunpack.c.l.b16 %v1132
    %v1206 = vunpack.c.h.b16 %v1132
    %v1207 = vunpack.c.l.b16 %v1133
    %v1208 = vunpack.c.h.b16 %v1133
    %v1209 = vunpack.c.l.b16 %v1134
    %v1210 = vunpack.c.h.b16 %v1134
    %v1211 = vunpack.c.l.b16 %v1135
    %v1212 = vunpack.c.h.b16 %v1135
    %v1213 = vunpack.c.l.b16 %v1136
    %v1214 = vunpack.c.h.b16 %v1136
    %v1215 = vunpack.c.l.b16 %v1137
    %v1216 = vunpack.c.h.b16 %v1137
    %v1217 = vunpack.c.l.b16 %v1138
    %v1218 = vunpack.c.h.b16 %v1138
    %v1219 = vunpack.c.l.b16 %v1139
    %v1220 = vunpack.c.h.b16 %v1139
    %v1221 = vunpack.c.l.b16 %v1140
    %v1222 = vunpack.c.h.b16 %v1140
    %v1223 = vunpack.c.l.b16 %v1141
    %v1224 = vunpack.c.h.b16 %v1141
    %v1225 = vunpack.c.l.b16 %v1142
    %v1226 = vunpack.c.h.b16 %v1142
    %v1227 = vunpack.c.l.b16 %v1143
    %v1228 = vunpack.c.h.b16 %v1143
    %v1229 = vunpack.c.l.b16 %v1144
    %v1230 = vunpack.c.h.b16 %v1144
    %v1231 = vunpack.c.l.b16 %v1145
    %v1232 = vunpack.c.h.b16 %v1145
    %v1233 = vunpack.c.l.b16 %v1146
    %v1234 = vunpack.c.h.b16 %v1146
    %v1235 = vunpack.c.l.b16 %v1147
    %v1236 = vunpack.c.h.b16 %v1147
    %v1237 = vunpack.c.l.b16 %v1148
    %v1238 = vunpack.c.h.b16 %v1148
    %v1239 = vunpack.c.l.b16 %v1149
    %v1240 = vunpack.c.h.b16 %v1149
    %v1241 = vunpack.c.l.b16 %v1150
    %v1242 = vunpack.c.h.b16 %v1150
    %v1243 = vunpack.c.l.b16 %v1151
    %v1244 = vunpack.c.h.b16 %v1151
    %v1245 = vunpack.c.l.b16 %v1152
    %v1246 = vunpack.c.h.b16 %v1152
    %v1247 = vunpack.c.l.b16 %v1153
    %v1248 = vunpack.c.h.b16 %v1153
    %v1249 = vunpack.c.l.b16 %v1154
    %v1250 = vunpack.c.h.b16 %v1154
    %v1251 = vpack.c.b16 %v1191, %v1187
    %v1252 = vpack.c.b16 %v1192, %v1188
    %v1253 = vpack.c.b16 %v1193, %v1189
    %v1254 = vpack.c.b16 %v1194, %v1190
    %v1255 = vpack.c.b16 %v1199, %v1195
    %v1256 = vpack.c.b16 %v1200, %v1196
    %v1257 = vpack.c.b16 %v1201, %v1197
    %v1258 = vpack.c.b16 %v1202, %v1198
    %v1259 = vpack.c.b16 %v1207, %v1203
    %v1260 = vpack.c.b16 %v1208, %v1204
    %v1261 = vpack.c.b16 %v1209, %v1205
    %v1262 = vpack.c.b16 %v1210, %v1206
    %v1263 = vpack.c.b16 %v1215, %v1211
    %v1264 = vpack.c.b16 %v1216, %v1212
    %v1265 = vpack.c.b16 %v1217, %v1213
    %v1266 = vpack.c.b16 %v1218, %v1214
    %v1267 = vpack.c.b16 %v1223, %v1219
    %v1268 = vpack.c.b16 %v1224, %v1220
    %v1269 = vpack.c.b16 %v1225, %v1221
    %v1270 = vpack.c.b16 %v1226, %v1222
    %v1271 = vpack.c.b16 %v1231, %v1227
    %v1272 = vpack.c.b16 %v1232, %v1228
    %v1273 = vpack.c.b16 %v1233, %v1229
    %v1274 = vpack.c.b16 %v1234, %v1230
    %v1275 = vpack.c.b16 %v1239, %v1235
    %v1276 = vpack.c.b16 %v1240, %v1236
    %v1277 = vpack.c.b16 %v1241, %v1237
    %v1278 = vpack.c.b16 %v1242, %v1238
    %v1279 = vpack.c.b16 %v1247, %v1243
    %v1280 = vpack.c.b16 %v1248, %v1244
    %v1281 = vpack.c.b16 %v1249, %v1245
    %v1282 = vpack.c.b16 %v1250, %v1246
    %1315 = vmatprep.subr.bf16.mxu0 %v1280
    %1316 = vmatpush1.bf16.msra.mxu0 %v1279
    %1317 = vmatprep.subr.bf16.mxu0 %v1276
    %1318 = vmatpush1.bf16.msra.mxu0 %v1275
    %1319 = vmatprep.subr.bf16.mxu0 %v1272
    %1320 = vmatpush1.bf16.msra.mxu0 %v1271
    %1321 = vmatprep.subr.bf16.mxu0 %v1268
    %1322 = vmatpush1.bf16.msra.mxu0 %v1267
    %1323 = vmatprep.subr.bf16.mxu0 %v1264
    %1324 = vmatpush1.bf16.msra.mxu0 %v1263
    %1325 = vmatprep.subr.bf16.mxu0 %v1260
    %1326 = vmatpush1.bf16.msra.mxu0 %v1259
    %1327 = vmatprep.subr.bf16.mxu0 %v1256
    %1328 = vmatpush1.bf16.msra.mxu0 %v1255
    %1329 = vmatprep.subr.bf16.mxu0 %v1252
    %1330 = vmatpush1.bf16.msra.mxu0 %v1251
    %1331 = vmatprep.subr.bf16.mxu0 0
    %1332 = vmatpush2.bf16.msra.mxu0 0
    %1333 = vmatprep.subr.bf16.mxu0 0
    %1334 = vmatpush2.bf16.msra.mxu0 0
    %1335 = vmatprep.subr.bf16.mxu0 0
    %1336 = vmatpush2.bf16.msra.mxu0 0
    %1337 = vmatprep.subr.bf16.mxu0 0
    %1338 = vmatpush2.bf16.msra.mxu0 0
    %1339 = vmatprep.subr.bf16.mxu0 0
    %1340 = vmatpush2.bf16.msra.mxu0 0
    %1341 = vmatprep.subr.bf16.mxu0 0
    %1342 = vmatpush2.bf16.msra.mxu0 0
    %1343 = vmatprep.subr.bf16.mxu0 0
    %1344 = vmatpush2.bf16.msra.mxu0 0
    %1345 = vmatprep.subr.bf16.mxu0 0
    %1346 = vmatpush2.bf16.msra.mxu0 0
    %1347 = vmatprep.mubr.bf16.mxu0 0
    %1348 = vmatmul.mubr.bf16.gmra.mxu0 %v1113
    %v1349 = vpop.f32.mrf.mxu0
    %v1350 = vadd.f32 0.0, %v1349
    %v1351 = vpop.f32.mrf.mxu0
    %v1352 = vadd.f32 0.0, %v1351
    %v1353 = vpop.f32.mrf.mxu0
    %v1354 = vpop.f32.mrf.mxu0
    %1355 = vdwg.mxu0
    %1356 = vmatprep.subr.bf16.mxu0 %v1282
    %1357 = vmatpush1.bf16.msra.mxu0 %v1281
    %1358 = vmatprep.subr.bf16.mxu0 %v1278
    %1359 = vmatpush1.bf16.msra.mxu0 %v1277
    %1360 = vmatprep.subr.bf16.mxu0 %v1274
    %1361 = vmatpush1.bf16.msra.mxu0 %v1273
    %1362 = vmatprep.subr.bf16.mxu0 %v1270
    %1363 = vmatpush1.bf16.msra.mxu0 %v1269
    %1364 = vmatprep.subr.bf16.mxu0 %v1266
    %1365 = vmatpush1.bf16.msra.mxu0 %v1265
    %1366 = vmatprep.subr.bf16.mxu0 %v1262
    %1367 = vmatpush1.bf16.msra.mxu0 %v1261
    %1368 = vmatprep.subr.bf16.mxu0 %v1258
    %1369 = vmatpush1.bf16.msra.mxu0 %v1257
    %1370 = vmatprep.subr.bf16.mxu0 %v1254
    %1371 = vmatpush1.bf16.msra.mxu0 %v1253
    %1372 = vmatprep.subr.bf16.mxu0 0
    %1373 = vmatpush2.bf16.msra.mxu0 0
    %1374 = vmatprep.subr.bf16.mxu0 0
    %1375 = vmatpush2.bf16.msra.mxu0 0
    %1376 = vmatprep.subr.bf16.mxu0 0
    %1377 = vmatpush2.bf16.msra.mxu0 0
    %1378 = vmatprep.subr.bf16.mxu0 0
    %1379 = vmatpush2.bf16.msra.mxu0 0
    %1380 = vmatprep.subr.bf16.mxu0 0
    %1381 = vmatpush2.bf16.msra.mxu0 0
    %1382 = vmatprep.subr.bf16.mxu0 0
    %1383 = vmatpush2.bf16.msra.mxu0 0
    %1384 = vmatprep.subr.bf16.mxu0 0
    %1385 = vmatpush2.bf16.msra.mxu0 0
    %1386 = vmatprep.subr.bf16.mxu0 0
    %1387 = vmatpush2.bf16.msra.mxu0 0
    %1388 = vmatprep.mubr.bf16.mxu0 0
    %1389 = vmatmul.mubr.bf16.gmra.mxu0 %v1113
    %v1390 = vpop.f32.mrf.mxu0
    %v1391 = vadd.f32 0.0, %v1390
    %v1392 = vpop.f32.mrf.mxu0
    %v1393 = vadd.f32 0.0, %v1392
    %v1394 = vpop.f32.mrf.mxu0
    %v1395 = vpop.f32.mrf.mxu0
    %1396 = vdwg.mxu0
    %v1397 = vadd.f32 %v1119, %v1350
    %v1398 = vadd.f32 %v1120, %v1352
    %v1399 = vadd.f32 %v1121, %v1391
    %v1400 = vadd.f32 %v1122, %v1393
    %v1401 = vxor.u32 %v1397, 2147483648
    %v1402 = vmul.f32 %v1401, 1.442695
    %v1403 = vpow.pop %v1402
    %v1404 = vadd.f32 %v1403, 1.0
    %v1405 = vrcp.pop %v1404
    %v1406 = vmul.f32 1.0, %v1405
    %v1407 = vxor.u32 %v1398, 2147483648
    %v1408 = vmul.f32 %v1407, 1.442695
    %v1409 = vpow.pop %v1408
    %v1410 = vadd.f32 %v1409, 1.0
    %v1411 = vrcp.pop %v1410
    %v1412 = vmul.f32 1.0, %v1411
    %v1413 = vtanh.pop %v1399
    %v1414 = vxor.u32 %v1400, 2147483648
    %v1415 = vmul.f32 %v1414, 1.442695
    %v1416 = vpow.pop %v1415
    %v1417 = vadd.f32 %v1416, 1.0
    %v1418 = vrcp.pop %v1417
    %v1419 = vmul.f32 1.0, %v1418
    %v1420 = vmul.f32 %v1412, %v1110
    %v1421 = vmul.f32 %v1406, %v1413
    %v1422 = vadd.f32 %v1420, %v1421
    %v1423 = vtanh.pop %v1422
    %v1424 = vmul.f32 %v1419, %v1423
    %v1425 = vpack.c.bf16 %v1424, %v1424
    %s1426 = scalar_lea.vmem [#allocation11], 8
    %1427 = vst [vmem:[%s1426] sm:$0xf] %v1425
    %s1428 = smul.u32 3, 4
    %s1429 = smul.addr %s1428, 8
    %s1430 = scalar_lea.vmem [#allocation4], %s1429
    %v1431 = vld [vmem:[%s1430] sm:$0xff]
    %v1432 = vld [vmem:[%s1430 + $0x8] sm:$0xff]
    %v1433 = vld [vmem:[%s1430 + $0x10] sm:$0xff]
    %v1434 = vld [vmem:[%s1430 + $0x18] sm:$0xff]
    %v1435 = vld [vmem:[#allocation10] sm:$0xff]
    %v1436 = vld [vmem:[#allocation10 + $0x8] sm:$0xff]
    %v1437 = vld [vmem:[#allocation10 + $0x10] sm:$0xff]
    %v1438 = vld [vmem:[#allocation10 + $0x18] sm:$0xff]
    %v1439 = vld [vmem:[#allocation10 + $0x20] sm:$0xff]
    %v1440 = vld [vmem:[#allocation10 + $0x28] sm:$0xff]
    %v1441 = vld [vmem:[#allocation10 + $0x30] sm:$0xff]
    %v1442 = vld [vmem:[#allocation10 + $0x38] sm:$0xff]
    %v1443 = vld [vmem:[#allocation10 + $0x40] sm:$0xff]
    %v1444 = vld [vmem:[#allocation10 + $0x48] sm:$0xff]
    %v1445 = vld [vmem:[#allocation10 + $0x50] sm:$0xff]
    %v1446 = vld [vmem:[#allocation10 + $0x58] sm:$0xff]
    %v1447 = vld [vmem:[#allocation10 + $0x60] sm:$0xff]
    %v1448 = vld [vmem:[#allocation10 + $0x68] sm:$0xff]
    %v1449 = vld [vmem:[#allocation10 + $0x70] sm:$0xff]
    %v1450 = vld [vmem:[#allocation10 + $0x78] sm:$0xff]
    %v1451 = vld [vmem:[#allocation10 + $0x80] sm:$0xff]
    %v1452 = vld [vmem:[#allocation10 + $0x88] sm:$0xff]
    %v1453 = vld [vmem:[#allocation10 + $0x90] sm:$0xff]
    %v1454 = vld [vmem:[#allocation10 + $0x98] sm:$0xff]
    %v1455 = vld [vmem:[#allocation10 + $0xa0] sm:$0xff]
    %v1456 = vld [vmem:[#allocation10 + $0xa8] sm:$0xff]
    %v1457 = vld [vmem:[#allocation10 + $0xb0] sm:$0xff]
    %v1458 = vld [vmem:[#allocation10 + $0xb8] sm:$0xff]
    %v1459 = vld [vmem:[#allocation10 + $0xc0] sm:$0xff]
    %v1460 = vld [vmem:[#allocation10 + $0xc8] sm:$0xff]
    %v1461 = vld [vmem:[#allocation10 + $0xd0] sm:$0xff]
    %v1462 = vld [vmem:[#allocation10 + $0xd8] sm:$0xff]
    %v1463 = vld [vmem:[#allocation10 + $0xe0] sm:$0xff]
    %v1464 = vld [vmem:[#allocation10 + $0xe8] sm:$0xff]
    %v1465 = vld [vmem:[#allocation10 + $0xf0] sm:$0xff]
    %v1466 = vld [vmem:[#allocation10 + $0xf8] sm:$0xff]
    %v1499 = vunpack.c.l.b16 %v1435
    %v1500 = vunpack.c.h.b16 %v1435
    %v1501 = vunpack.c.l.b16 %v1436
    %v1502 = vunpack.c.h.b16 %v1436
    %v1503 = vunpack.c.l.b16 %v1437
    %v1504 = vunpack.c.h.b16 %v1437
    %v1505 = vunpack.c.l.b16 %v1438
    %v1506 = vunpack.c.h.b16 %v1438
    %v1507 = vunpack.c.l.b16 %v1439
    %v1508 = vunpack.c.h.b16 %v1439
    %v1509 = vunpack.c.l.b16 %v1440
    %v1510 = vunpack.c.h.b16 %v1440
    %v1511 = vunpack.c.l.b16 %v1441
    %v1512 = vunpack.c.h.b16 %v1441
    %v1513 = vunpack.c.l.b16 %v1442
    %v1514 = vunpack.c.h.b16 %v1442
    %v1515 = vunpack.c.l.b16 %v1443
    %v1516 = vunpack.c.h.b16 %v1443
    %v1517 = vunpack.c.l.b16 %v1444
    %v1518 = vunpack.c.h.b16 %v1444
    %v1519 = vunpack.c.l.b16 %v1445
    %v1520 = vunpack.c.h.b16 %v1445
    %v1521 = vunpack.c.l.b16 %v1446
    %v1522 = vunpack.c.h.b16 %v1446
    %v1523 = vunpack.c.l.b16 %v1447
    %v1524 = vunpack.c.h.b16 %v1447
    %v1525 = vunpack.c.l.b16 %v1448
    %v1526 = vunpack.c.h.b16 %v1448
    %v1527 = vunpack.c.l.b16 %v1449
    %v1528 = vunpack.c.h.b16 %v1449
    %v1529 = vunpack.c.l.b16 %v1450
    %v1530 = vunpack.c.h.b16 %v1450
    %v1531 = vunpack.c.l.b16 %v1451
    %v1532 = vunpack.c.h.b16 %v1451
    %v1533 = vunpack.c.l.b16 %v1452
    %v1534 = vunpack.c.h.b16 %v1452
    %v1535 = vunpack.c.l.b16 %v1453
    %v1536 = vunpack.c.h.b16 %v1453
    %v1537 = vunpack.c.l.b16 %v1454
    %v1538 = vunpack.c.h.b16 %v1454
    %v1539 = vunpack.c.l.b16 %v1455
    %v1540 = vunpack.c.h.b16 %v1455
    %v1541 = vunpack.c.l.b16 %v1456
    %v1542 = vunpack.c.h.b16 %v1456
    %v1543 = vunpack.c.l.b16 %v1457
    %v1544 = vunpack.c.h.b16 %v1457
    %v1545 = vunpack.c.l.b16 %v1458
    %v1546 = vunpack.c.h.b16 %v1458
    %v1547 = vunpack.c.l.b16 %v1459
    %v1548 = vunpack.c.h.b16 %v1459
    %v1549 = vunpack.c.l.b16 %v1460
    %v1550 = vunpack.c.h.b16 %v1460
    %v1551 = vunpack.c.l.b16 %v1461
    %v1552 = vunpack.c.h.b16 %v1461
    %v1553 = vunpack.c.l.b16 %v1462
    %v1554 = vunpack.c.h.b16 %v1462
    %v1555 = vunpack.c.l.b16 %v1463
    %v1556 = vunpack.c.h.b16 %v1463
    %v1557 = vunpack.c.l.b16 %v1464
    %v1558 = vunpack.c.h.b16 %v1464
    %v1559 = vunpack.c.l.b16 %v1465
    %v1560 = vunpack.c.h.b16 %v1465
    %v1561 = vunpack.c.l.b16 %v1466
    %v1562 = vunpack.c.h.b16 %v1466
    %v1563 = vpack.c.b16 %v1503, %v1499
    %v1564 = vpack.c.b16 %v1504, %v1500
    %v1565 = vpack.c.b16 %v1505, %v1501
    %v1566 = vpack.c.b16 %v1506, %v1502
    %v1567 = vpack.c.b16 %v1511, %v1507
    %v1568 = vpack.c.b16 %v1512, %v1508
    %v1569 = vpack.c.b16 %v1513, %v1509
    %v1570 = vpack.c.b16 %v1514, %v1510
    %v1571 = vpack.c.b16 %v1519, %v1515
    %v1572 = vpack.c.b16 %v1520, %v1516
    %v1573 = vpack.c.b16 %v1521, %v1517
    %v1574 = vpack.c.b16 %v1522, %v1518
    %v1575 = vpack.c.b16 %v1527, %v1523
    %v1576 = vpack.c.b16 %v1528, %v1524
    %v1577 = vpack.c.b16 %v1529, %v1525
    %v1578 = vpack.c.b16 %v1530, %v1526
    %v1579 = vpack.c.b16 %v1535, %v1531
    %v1580 = vpack.c.b16 %v1536, %v1532
    %v1581 = vpack.c.b16 %v1537, %v1533
    %v1582 = vpack.c.b16 %v1538, %v1534
    %v1583 = vpack.c.b16 %v1543, %v1539
    %v1584 = vpack.c.b16 %v1544, %v1540
    %v1585 = vpack.c.b16 %v1545, %v1541
    %v1586 = vpack.c.b16 %v1546, %v1542
    %v1587 = vpack.c.b16 %v1551, %v1547
    %v1588 = vpack.c.b16 %v1552, %v1548
    %v1589 = vpack.c.b16 %v1553, %v1549
    %v1590 = vpack.c.b16 %v1554, %v1550
    %v1591 = vpack.c.b16 %v1559, %v1555
    %v1592 = vpack.c.b16 %v1560, %v1556
    %v1593 = vpack.c.b16 %v1561, %v1557
    %v1594 = vpack.c.b16 %v1562, %v1558
    %1627 = vmatprep.subr.bf16.mxu0 %v1592
    %1628 = vmatpush1.bf16.msra.mxu0 %v1591
    %1629 = vmatprep.subr.bf16.mxu0 %v1588
    %1630 = vmatpush1.bf16.msra.mxu0 %v1587
    %1631 = vmatprep.subr.bf16.mxu0 %v1584
    %1632 = vmatpush1.bf16.msra.mxu0 %v1583
    %1633 = vmatprep.subr.bf16.mxu0 %v1580
    %1634 = vmatpush1.bf16.msra.mxu0 %v1579
    %1635 = vmatprep.subr.bf16.mxu0 %v1576
    %1636 = vmatpush1.bf16.msra.mxu0 %v1575
    %1637 = vmatprep.subr.bf16.mxu0 %v1572
    %1638 = vmatpush1.bf16.msra.mxu0 %v1571
    %1639 = vmatprep.subr.bf16.mxu0 %v1568
    %1640 = vmatpush1.bf16.msra.mxu0 %v1567
    %1641 = vmatprep.subr.bf16.mxu0 %v1564
    %1642 = vmatpush1.bf16.msra.mxu0 %v1563
    %1643 = vmatprep.subr.bf16.mxu0 0
    %1644 = vmatpush2.bf16.msra.mxu0 0
    %1645 = vmatprep.subr.bf16.mxu0 0
    %1646 = vmatpush2.bf16.msra.mxu0 0
    %1647 = vmatprep.subr.bf16.mxu0 0
    %1648 = vmatpush2.bf16.msra.mxu0 0
    %1649 = vmatprep.subr.bf16.mxu0 0
    %1650 = vmatpush2.bf16.msra.mxu0 0
    %1651 = vmatprep.subr.bf16.mxu0 0
    %1652 = vmatpush2.bf16.msra.mxu0 0
    %1653 = vmatprep.subr.bf16.mxu0 0
    %1654 = vmatpush2.bf16.msra.mxu0 0
    %1655 = vmatprep.subr.bf16.mxu0 0
    %1656 = vmatpush2.bf16.msra.mxu0 0
    %1657 = vmatprep.subr.bf16.mxu0 0
    %1658 = vmatpush2.bf16.msra.mxu0 0
    %1659 = vmatprep.mubr.bf16.mxu0 0
    %1660 = vmatmul.mubr.bf16.gmra.mxu0 %v1425
    %v1661 = vpop.f32.mrf.mxu0
    %v1662 = vadd.f32 0.0, %v1661
    %v1663 = vpop.f32.mrf.mxu0
    %v1664 = vadd.f32 0.0, %v1663
    %v1665 = vpop.f32.mrf.mxu0
    %v1666 = vpop.f32.mrf.mxu0
    %1667 = vdwg.mxu0
    %1668 = vmatprep.subr.bf16.mxu0 %v1594
    %1669 = vmatpush1.bf16.msra.mxu0 %v1593
    %1670 = vmatprep.subr.bf16.mxu0 %v1590
    %1671 = vmatpush1.bf16.msra.mxu0 %v1589
    %1672 = vmatprep.subr.bf16.mxu0 %v1586
    %1673 = vmatpush1.bf16.msra.mxu0 %v1585
    %1674 = vmatprep.subr.bf16.mxu0 %v1582
    %1675 = vmatpush1.bf16.msra.mxu0 %v1581
    %1676 = vmatprep.subr.bf16.mxu0 %v1578
    %1677 = vmatpush1.bf16.msra.mxu0 %v1577
    %1678 = vmatprep.subr.bf16.mxu0 %v1574
    %1679 = vmatpush1.bf16.msra.mxu0 %v1573
    %1680 = vmatprep.subr.bf16.mxu0 %v1570
    %1681 = vmatpush1.bf16.msra.mxu0 %v1569
    %1682 = vmatprep.subr.bf16.mxu0 %v1566
    %1683 = vmatpush1.bf16.msra.mxu0 %v1565
    %1684 = vmatprep.subr.bf16.mxu0 0
    %1685 = vmatpush2.bf16.msra.mxu0 0
    %1686 = vmatprep.subr.bf16.mxu0 0
    %1687 = vmatpush2.bf16.msra.mxu0 0
    %1688 = vmatprep.subr.bf16.mxu0 0
    %1689 = vmatpush2.bf16.msra.mxu0 0
    %1690 = vmatprep.subr.bf16.mxu0 0
    %1691 = vmatpush2.bf16.msra.mxu0 0
    %1692 = vmatprep.subr.bf16.mxu0 0
    %1693 = vmatpush2.bf16.msra.mxu0 0
    %1694 = vmatprep.subr.bf16.mxu0 0
    %1695 = vmatpush2.bf16.msra.mxu0 0
    %1696 = vmatprep.subr.bf16.mxu0 0
    %1697 = vmatpush2.bf16.msra.mxu0 0
    %1698 = vmatprep.subr.bf16.mxu0 0
    %1699 = vmatpush2.bf16.msra.mxu0 0
    %1700 = vmatprep.mubr.bf16.mxu0 0
    %1701 = vmatmul.mubr.bf16.gmra.mxu0 %v1425
    %v1702 = vpop.f32.mrf.mxu0
    %v1703 = vadd.f32 0.0, %v1702
    %v1704 = vpop.f32.mrf.mxu0
    %v1705 = vadd.f32 0.0, %v1704
    %v1706 = vpop.f32.mrf.mxu0
    %v1707 = vpop.f32.mrf.mxu0
    %1708 = vdwg.mxu0
    %v1709 = vadd.f32 %v1431, %v1662
    %v1710 = vadd.f32 %v1432, %v1664
    %v1711 = vadd.f32 %v1433, %v1703
    %v1712 = vadd.f32 %v1434, %v1705
    %v1713 = vxor.u32 %v1709, 2147483648
    %v1714 = vmul.f32 %v1713, 1.442695
    %v1715 = vpow.pop %v1714
    %v1716 = vadd.f32 %v1715, 1.0
    %v1717 = vrcp.pop %v1716
    %v1718 = vmul.f32 1.0, %v1717
    %v1719 = vxor.u32 %v1710, 2147483648
    %v1720 = vmul.f32 %v1719, 1.442695
    %v1721 = vpow.pop %v1720
    %v1722 = vadd.f32 %v1721, 1.0
    %v1723 = vrcp.pop %v1722
    %v1724 = vmul.f32 1.0, %v1723
    %v1725 = vtanh.pop %v1711
    %v1726 = vxor.u32 %v1712, 2147483648
    %v1727 = vmul.f32 %v1726, 1.442695
    %v1728 = vpow.pop %v1727
    %v1729 = vadd.f32 %v1728, 1.0
    %v1730 = vrcp.pop %v1729
    %v1731 = vmul.f32 1.0, %v1730
    %v1732 = vmul.f32 %v1724, %v1422
    %v1733 = vmul.f32 %v1718, %v1725
    %v1734 = vadd.f32 %v1732, %v1733
    %v1735 = vtanh.pop %v1734
    %v1736 = vmul.f32 %v1731, %v1735
    %v1737 = vpack.c.bf16 %v1736, %v1736
    %s1738 = scalar_lea.vmem [#allocation11], 12
    %1739 = vst [vmem:[%s1738] sm:$0xf] %v1737
    %s1740 = smul.u32 4, 4
    %s1741 = smul.addr %s1740, 8
    %s1742 = scalar_lea.vmem [#allocation4], %s1741
    %v1743 = vld [vmem:[%s1742] sm:$0xff]
    %v1744 = vld [vmem:[%s1742 + $0x8] sm:$0xff]
    %v1745 = vld [vmem:[%s1742 + $0x10] sm:$0xff]
    %v1746 = vld [vmem:[%s1742 + $0x18] sm:$0xff]
    %v1747 = vld [vmem:[#allocation10] sm:$0xff]
    %v1748 = vld [vmem:[#allocation10 + $0x8] sm:$0xff]
    %v1749 = vld [vmem:[#allocation10 + $0x10] sm:$0xff]
    %v1750 = vld [vmem:[#allocation10 + $0x18] sm:$0xff]
    %v1751 = vld [vmem:[#allocation10 + $0x20] sm:$0xff]
    %v1752 = vld [vmem:[#allocation10 + $0x28] sm:$0xff]
    %v1753 = vld [vmem:[#allocation10 + $0x30] sm:$0xff]
    %v1754 = vld [vmem:[#allocation10 + $0x38] sm:$0xff]
    %v1755 = vld [vmem:[#allocation10 + $0x40] sm:$0xff]
    %v1756 = vld [vmem:[#allocation10 + $0x48] sm:$0xff]
    %v1757 = vld [vmem:[#allocation10 + $0x50] sm:$0xff]
    %v1758 = vld [vmem:[#allocation10 + $0x58] sm:$0xff]
    %v1759 = vld [vmem:[#allocation10 + $0x60] sm:$0xff]
    %v1760 = vld [vmem:[#allocation10 + $0x68] sm:$0xff]
    %v1761 = vld [vmem:[#allocation10 + $0x70] sm:$0xff]
    %v1762 = vld [vmem:[#allocation10 + $0x78] sm:$0xff]
    %v1763 = vld [vmem:[#allocation10 + $0x80] sm:$0xff]
    %v1764 = vld [vmem:[#allocation10 + $0x88] sm:$0xff]
    %v1765 = vld [vmem:[#allocation10 + $0x90] sm:$0xff]
    %v1766 = vld [vmem:[#allocation10 + $0x98] sm:$0xff]
    %v1767 = vld [vmem:[#allocation10 + $0xa0] sm:$0xff]
    %v1768 = vld [vmem:[#allocation10 + $0xa8] sm:$0xff]
    %v1769 = vld [vmem:[#allocation10 + $0xb0] sm:$0xff]
    %v1770 = vld [vmem:[#allocation10 + $0xb8] sm:$0xff]
    %v1771 = vld [vmem:[#allocation10 + $0xc0] sm:$0xff]
    %v1772 = vld [vmem:[#allocation10 + $0xc8] sm:$0xff]
    %v1773 = vld [vmem:[#allocation10 + $0xd0] sm:$0xff]
    %v1774 = vld [vmem:[#allocation10 + $0xd8] sm:$0xff]
    %v1775 = vld [vmem:[#allocation10 + $0xe0] sm:$0xff]
    %v1776 = vld [vmem:[#allocation10 + $0xe8] sm:$0xff]
    %v1777 = vld [vmem:[#allocation10 + $0xf0] sm:$0xff]
    %v1778 = vld [vmem:[#allocation10 + $0xf8] sm:$0xff]
    %v1811 = vunpack.c.l.b16 %v1747
    %v1812 = vunpack.c.h.b16 %v1747
    %v1813 = vunpack.c.l.b16 %v1748
    %v1814 = vunpack.c.h.b16 %v1748
    %v1815 = vunpack.c.l.b16 %v1749
    %v1816 = vunpack.c.h.b16 %v1749
    %v1817 = vunpack.c.l.b16 %v1750
    %v1818 = vunpack.c.h.b16 %v1750
    %v1819 = vunpack.c.l.b16 %v1751
    %v1820 = vunpack.c.h.b16 %v1751
    %v1821 = vunpack.c.l.b16 %v1752
    %v1822 = vunpack.c.h.b16 %v1752
    %v1823 = vunpack.c.l.b16 %v1753
    %v1824 = vunpack.c.h.b16 %v1753
    %v1825 = vunpack.c.l.b16 %v1754
    %v1826 = vunpack.c.h.b16 %v1754
    %v1827 = vunpack.c.l.b16 %v1755
    %v1828 = vunpack.c.h.b16 %v1755
    %v1829 = vunpack.c.l.b16 %v1756
    %v1830 = vunpack.c.h.b16 %v1756
    %v1831 = vunpack.c.l.b16 %v1757
    %v1832 = vunpack.c.h.b16 %v1757
    %v1833 = vunpack.c.l.b16 %v1758
    %v1834 = vunpack.c.h.b16 %v1758
    %v1835 = vunpack.c.l.b16 %v1759
    %v1836 = vunpack.c.h.b16 %v1759
    %v1837 = vunpack.c.l.b16 %v1760
    %v1838 = vunpack.c.h.b16 %v1760
    %v1839 = vunpack.c.l.b16 %v1761
    %v1840 = vunpack.c.h.b16 %v1761
    %v1841 = vunpack.c.l.b16 %v1762
    %v1842 = vunpack.c.h.b16 %v1762
    %v1843 = vunpack.c.l.b16 %v1763
    %v1844 = vunpack.c.h.b16 %v1763
    %v1845 = vunpack.c.l.b16 %v1764
    %v1846 = vunpack.c.h.b16 %v1764
    %v1847 = vunpack.c.l.b16 %v1765
    %v1848 = vunpack.c.h.b16 %v1765
    %v1849 = vunpack.c.l.b16 %v1766
    %v1850 = vunpack.c.h.b16 %v1766
    %v1851 = vunpack.c.l.b16 %v1767
    %v1852 = vunpack.c.h.b16 %v1767
    %v1853 = vunpack.c.l.b16 %v1768
    %v1854 = vunpack.c.h.b16 %v1768
    %v1855 = vunpack.c.l.b16 %v1769
    %v1856 = vunpack.c.h.b16 %v1769
    %v1857 = vunpack.c.l.b16 %v1770
    %v1858 = vunpack.c.h.b16 %v1770
    %v1859 = vunpack.c.l.b16 %v1771
    %v1860 = vunpack.c.h.b16 %v1771
    %v1861 = vunpack.c.l.b16 %v1772
    %v1862 = vunpack.c.h.b16 %v1772
    %v1863 = vunpack.c.l.b16 %v1773
    %v1864 = vunpack.c.h.b16 %v1773
    %v1865 = vunpack.c.l.b16 %v1774
    %v1866 = vunpack.c.h.b16 %v1774
    %v1867 = vunpack.c.l.b16 %v1775
    %v1868 = vunpack.c.h.b16 %v1775
    %v1869 = vunpack.c.l.b16 %v1776
    %v1870 = vunpack.c.h.b16 %v1776
    %v1871 = vunpack.c.l.b16 %v1777
    %v1872 = vunpack.c.h.b16 %v1777
    %v1873 = vunpack.c.l.b16 %v1778
    %v1874 = vunpack.c.h.b16 %v1778
    %v1875 = vpack.c.b16 %v1815, %v1811
    %v1876 = vpack.c.b16 %v1816, %v1812
    %v1877 = vpack.c.b16 %v1817, %v1813
    %v1878 = vpack.c.b16 %v1818, %v1814
    %v1879 = vpack.c.b16 %v1823, %v1819
    %v1880 = vpack.c.b16 %v1824, %v1820
    %v1881 = vpack.c.b16 %v1825, %v1821
    %v1882 = vpack.c.b16 %v1826, %v1822
    %v1883 = vpack.c.b16 %v1831, %v1827
    %v1884 = vpack.c.b16 %v1832, %v1828
    %v1885 = vpack.c.b16 %v1833, %v1829
    %v1886 = vpack.c.b16 %v1834, %v1830
    %v1887 = vpack.c.b16 %v1839, %v1835
    %v1888 = vpack.c.b16 %v1840, %v1836
    %v1889 = vpack.c.b16 %v1841, %v1837
    %v1890 = vpack.c.b16 %v1842, %v1838
    %v1891 = vpack.c.b16 %v1847, %v1843
    %v1892 = vpack.c.b16 %v1848, %v1844
    %v1893 = vpack.c.b16 %v1849, %v1845
    %v1894 = vpack.c.b16 %v1850, %v1846
    %v1895 = vpack.c.b16 %v1855, %v1851
    %v1896 = vpack.c.b16 %v1856, %v1852
    %v1897 = vpack.c.b16 %v1857, %v1853
    %v1898 = vpack.c.b16 %v1858, %v1854
    %v1899 = vpack.c.b16 %v1863, %v1859
    %v1900 = vpack.c.b16 %v1864, %v1860
    %v1901 = vpack.c.b16 %v1865, %v1861
    %v1902 = vpack.c.b16 %v1866, %v1862
    %v1903 = vpack.c.b16 %v1871, %v1867
    %v1904 = vpack.c.b16 %v1872, %v1868
    %v1905 = vpack.c.b16 %v1873, %v1869
    %v1906 = vpack.c.b16 %v1874, %v1870
    %1939 = vmatprep.subr.bf16.mxu0 %v1904
    %1940 = vmatpush1.bf16.msra.mxu0 %v1903
    %1941 = vmatprep.subr.bf16.mxu0 %v1900
    %1942 = vmatpush1.bf16.msra.mxu0 %v1899
    %1943 = vmatprep.subr.bf16.mxu0 %v1896
    %1944 = vmatpush1.bf16.msra.mxu0 %v1895
    %1945 = vmatprep.subr.bf16.mxu0 %v1892
    %1946 = vmatpush1.bf16.msra.mxu0 %v1891
    %1947 = vmatprep.subr.bf16.mxu0 %v1888
    %1948 = vmatpush1.bf16.msra.mxu0 %v1887
    %1949 = vmatprep.subr.bf16.mxu0 %v1884
    %1950 = vmatpush1.bf16.msra.mxu0 %v1883
    %1951 = vmatprep.subr.bf16.mxu0 %v1880
    %1952 = vmatpush1.bf16.msra.mxu0 %v1879
    %1953 = vmatprep.subr.bf16.mxu0 %v1876
    %1954 = vmatpush1.bf16.msra.mxu0 %v1875
    %1955 = vmatprep.subr.bf16.mxu0 0
    %1956 = vmatpush2.bf16.msra.mxu0 0
    %1957 = vmatprep.subr.bf16.mxu0 0
    %1958 = vmatpush2.bf16.msra.mxu0 0
    %1959 = vmatprep.subr.bf16.mxu0 0
    %1960 = vmatpush2.bf16.msra.mxu0 0
    %1961 = vmatprep.subr.bf16.mxu0 0
    %1962 = vmatpush2.bf16.msra.mxu0 0
    %1963 = vmatprep.subr.bf16.mxu0 0
    %1964 = vmatpush2.bf16.msra.mxu0 0
    %1965 = vmatprep.subr.bf16.mxu0 0
    %1966 = vmatpush2.bf16.msra.mxu0 0
    %1967 = vmatprep.subr.bf16.mxu0 0
    %1968 = vmatpush2.bf16.msra.mxu0 0
    %1969 = vmatprep.subr.bf16.mxu0 0
    %1970 = vmatpush2.bf16.msra.mxu0 0
    %1971 = vmatprep.mubr.bf16.mxu0 0
    %1972 = vmatmul.mubr.bf16.gmra.mxu0 %v1737
    %v1973 = vpop.f32.mrf.mxu0
    %v1974 = vadd.f32 0.0, %v1973
    %v1975 = vpop.f32.mrf.mxu0
    %v1976 = vadd.f32 0.0, %v1975
    %v1977 = vpop.f32.mrf.mxu0
    %v1978 = vpop.f32.mrf.mxu0
    %1979 = vdwg.mxu0
    %1980 = vmatprep.subr.bf16.mxu0 %v1906
    %1981 = vmatpush1.bf16.msra.mxu0 %v1905
    %1982 = vmatprep.subr.bf16.mxu0 %v1902
    %1983 = vmatpush1.bf16.msra.mxu0 %v1901
    %1984 = vmatprep.subr.bf16.mxu0 %v1898
    %1985 = vmatpush1.bf16.msra.mxu0 %v1897
    %1986 = vmatprep.subr.bf16.mxu0 %v1894
    %1987 = vmatpush1.bf16.msra.mxu0 %v1893
    %1988 = vmatprep.subr.bf16.mxu0 %v1890
    %1989 = vmatpush1.bf16.msra.mxu0 %v1889
    %1990 = vmatprep.subr.bf16.mxu0 %v1886
    %1991 = vmatpush1.bf16.msra.mxu0 %v1885
    %1992 = vmatprep.subr.bf16.mxu0 %v1882
    %1993 = vmatpush1.bf16.msra.mxu0 %v1881
    %1994 = vmatprep.subr.bf16.mxu0 %v1878
    %1995 = vmatpush1.bf16.msra.mxu0 %v1877
    %1996 = vmatprep.subr.bf16.mxu0 0
    %1997 = vmatpush2.bf16.msra.mxu0 0
    %1998 = vmatprep.subr.bf16.mxu0 0
    %1999 = vmatpush2.bf16.msra.mxu0 0
    %2000 = vmatprep.subr.bf16.mxu0 0
    %2001 = vmatpush2.bf16.msra.mxu0 0
    %2002 = vmatprep.subr.bf16.mxu0 0
    %2003 = vmatpush2.bf16.msra.mxu0 0
    %2004 = vmatprep.subr.bf16.mxu0 0
    %2005 = vmatpush2.bf16.msra.mxu0 0
    %2006 = vmatprep.subr.bf16.mxu0 0
    %2007 = vmatpush2.bf16.msra.mxu0 0
    %2008 = vmatprep.subr.bf16.mxu0 0
    %2009 = vmatpush2.bf16.msra.mxu0 0
    %2010 = vmatprep.subr.bf16.mxu0 0
    %2011 = vmatpush2.bf16.msra.mxu0 0
    %2012 = vmatprep.mubr.bf16.mxu0 0
    %2013 = vmatmul.mubr.bf16.gmra.mxu0 %v1737
    %v2014 = vpop.f32.mrf.mxu0
    %v2015 = vadd.f32 0.0, %v2014
    %v2016 = vpop.f32.mrf.mxu0
    %v2017 = vadd.f32 0.0, %v2016
    %v2018 = vpop.f32.mrf.mxu0
    %v2019 = vpop.f32.mrf.mxu0
    %2020 = vdwg.mxu0
    %v2021 = vadd.f32 %v1743, %v1974
    %v2022 = vadd.f32 %v1744, %v1976
    %v2023 = vadd.f32 %v1745, %v2015
    %v2024 = vadd.f32 %v1746, %v2017
    %v2025 = vxor.u32 %v2021, 2147483648
    %v2026 = vmul.f32 %v2025, 1.442695
    %v2027 = vpow.pop %v2026
    %v2028 = vadd.f32 %v2027, 1.0
    %v2029 = vrcp.pop %v2028
    %v2030 = vmul.f32 1.0, %v2029
    %v2031 = vxor.u32 %v2022, 2147483648
    %v2032 = vmul.f32 %v2031, 1.442695
    %v2033 = vpow.pop %v2032
    %v2034 = vadd.f32 %v2033, 1.0
    %v2035 = vrcp.pop %v2034
    %v2036 = vmul.f32 1.0, %v2035
    %v2037 = vtanh.pop %v2023
    %v2038 = vxor.u32 %v2024, 2147483648
    %v2039 = vmul.f32 %v2038, 1.442695
    %v2040 = vpow.pop %v2039
    %v2041 = vadd.f32 %v2040, 1.0
    %v2042 = vrcp.pop %v2041
    %v2043 = vmul.f32 1.0, %v2042
    %v2044 = vmul.f32 %v2036, %v1734
    %v2045 = vmul.f32 %v2030, %v2037
    %v2046 = vadd.f32 %v2044, %v2045
    %v2047 = vtanh.pop %v2046
    %v2048 = vmul.f32 %v2043, %v2047
    %v2049 = vpack.c.bf16 %v2048, %v2048
    %s2050 = scalar_lea.vmem [#allocation11], 16
    %2051 = vst [vmem:[%s2050] sm:$0xf] %v2049
    %s2052 = smul.u32 5, 4
    %s2053 = smul.addr %s2052, 8
    %s2054 = scalar_lea.vmem [#allocation4], %s2053
    %v2055 = vld [vmem:[%s2054] sm:$0xff]
    %v2056 = vld [vmem:[%s2054 + $0x8] sm:$0xff]
    %v2057 = vld [vmem:[%s2054 + $0x10] sm:$0xff]
    %v2058 = vld [vmem:[%s2054 + $0x18] sm:$0xff]
    %v2059 = vld [vmem:[#allocation10] sm:$0xff]
    %v2060 = vld [vmem:[#allocation10 + $0x8] sm:$0xff]
    %v2061 = vld [vmem:[#allocation10 + $0x10] sm:$0xff]
    %v2062 = vld [vmem:[#allocation10 + $0x18] sm:$0xff]
    %v2063 = vld [vmem:[#allocation10 + $0x20] sm:$0xff]
    %v2064 = vld [vmem:[#allocation10 + $0x28] sm:$0xff]
    %v2065 = vld [vmem:[#allocation10 + $0x30] sm:$0xff]
    %v2066 = vld [vmem:[#allocation10 + $0x38] sm:$0xff]
    %v2067 = vld [vmem:[#allocation10 + $0x40] sm:$0xff]
    %v2068 = vld [vmem:[#allocation10 + $0x48] sm:$0xff]
    %v2069 = vld [vmem:[#allocation10 + $0x50] sm:$0xff]
    %v2070 = vld [vmem:[#allocation10 + $0x58] sm:$0xff]
    %v2071 = vld [vmem:[#allocation10 + $0x60] sm:$0xff]
    %v2072 = vld [vmem:[#allocation10 + $0x68] sm:$0xff]
    %v2073 = vld [vmem:[#allocation10 + $0x70] sm:$0xff]
    %v2074 = vld [vmem:[#allocation10 + $0x78] sm:$0xff]
    %v2075 = vld [vmem:[#allocation10 + $0x80] sm:$0xff]
    %v2076 = vld [vmem:[#allocation10 + $0x88] sm:$0xff]
    %v2077 = vld [vmem:[#allocation10 + $0x90] sm:$0xff]
    %v2078 = vld [vmem:[#allocation10 + $0x98] sm:$0xff]
    %v2079 = vld [vmem:[#allocation10 + $0xa0] sm:$0xff]
    %v2080 = vld [vmem:[#allocation10 + $0xa8] sm:$0xff]
    %v2081 = vld [vmem:[#allocation10 + $0xb0] sm:$0xff]
    %v2082 = vld [vmem:[#allocation10 + $0xb8] sm:$0xff]
    %v2083 = vld [vmem:[#allocation10 + $0xc0] sm:$0xff]
    %v2084 = vld [vmem:[#allocation10 + $0xc8] sm:$0xff]
    %v2085 = vld [vmem:[#allocation10 + $0xd0] sm:$0xff]
    %v2086 = vld [vmem:[#allocation10 + $0xd8] sm:$0xff]
    %v2087 = vld [vmem:[#allocation10 + $0xe0] sm:$0xff]
    %v2088 = vld [vmem:[#allocation10 + $0xe8] sm:$0xff]
    %v2089 = vld [vmem:[#allocation10 + $0xf0] sm:$0xff]
    %v2090 = vld [vmem:[#allocation10 + $0xf8] sm:$0xff]
    %v2123 = vunpack.c.l.b16 %v2059
    %v2124 = vunpack.c.h.b16 %v2059
    %v2125 = vunpack.c.l.b16 %v2060
    %v2126 = vunpack.c.h.b16 %v2060
    %v2127 = vunpack.c.l.b16 %v2061
    %v2128 = vunpack.c.h.b16 %v2061
    %v2129 = vunpack.c.l.b16 %v2062
    %v2130 = vunpack.c.h.b16 %v2062
    %v2131 = vunpack.c.l.b16 %v2063
    %v2132 = vunpack.c.h.b16 %v2063
    %v2133 = vunpack.c.l.b16 %v2064
    %v2134 = vunpack.c.h.b16 %v2064
    %v2135 = vunpack.c.l.b16 %v2065
    %v2136 = vunpack.c.h.b16 %v2065
    %v2137 = vunpack.c.l.b16 %v2066
    %v2138 = vunpack.c.h.b16 %v2066
    %v2139 = vunpack.c.l.b16 %v2067
    %v2140 = vunpack.c.h.b16 %v2067
    %v2141 = vunpack.c.l.b16 %v2068
    %v2142 = vunpack.c.h.b16 %v2068
    %v2143 = vunpack.c.l.b16 %v2069
    %v2144 = vunpack.c.h.b16 %v2069
    %v2145 = vunpack.c.l.b16 %v2070
    %v2146 = vunpack.c.h.b16 %v2070
    %v2147 = vunpack.c.l.b16 %v2071
    %v2148 = vunpack.c.h.b16 %v2071
    %v2149 = vunpack.c.l.b16 %v2072
    %v2150 = vunpack.c.h.b16 %v2072
    %v2151 = vunpack.c.l.b16 %v2073
    %v2152 = vunpack.c.h.b16 %v2073
    %v2153 = vunpack.c.l.b16 %v2074
    %v2154 = vunpack.c.h.b16 %v2074
    %v2155 = vunpack.c.l.b16 %v2075
    %v2156 = vunpack.c.h.b16 %v2075
    %v2157 = vunpack.c.l.b16 %v2076
    %v2158 = vunpack.c.h.b16 %v2076
    %v2159 = vunpack.c.l.b16 %v2077
    %v2160 = vunpack.c.h.b16 %v2077
    %v2161 = vunpack.c.l.b16 %v2078
    %v2162 = vunpack.c.h.b16 %v2078
    %v2163 = vunpack.c.l.b16 %v2079
    %v2164 = vunpack.c.h.b16 %v2079
    %v2165 = vunpack.c.l.b16 %v2080
    %v2166 = vunpack.c.h.b16 %v2080
    %v2167 = vunpack.c.l.b16 %v2081
    %v2168 = vunpack.c.h.b16 %v2081
    %v2169 = vunpack.c.l.b16 %v2082
    %v2170 = vunpack.c.h.b16 %v2082
    %v2171 = vunpack.c.l.b16 %v2083
    %v2172 = vunpack.c.h.b16 %v2083
    %v2173 = vunpack.c.l.b16 %v2084
    %v2174 = vunpack.c.h.b16 %v2084
    %v2175 = vunpack.c.l.b16 %v2085
    %v2176 = vunpack.c.h.b16 %v2085
    %v2177 = vunpack.c.l.b16 %v2086
    %v2178 = vunpack.c.h.b16 %v2086
    %v2179 = vunpack.c.l.b16 %v2087
    %v2180 = vunpack.c.h.b16 %v2087
    %v2181 = vunpack.c.l.b16 %v2088
    %v2182 = vunpack.c.h.b16 %v2088
    %v2183 = vunpack.c.l.b16 %v2089
    %v2184 = vunpack.c.h.b16 %v2089
    %v2185 = vunpack.c.l.b16 %v2090
    %v2186 = vunpack.c.h.b16 %v2090
    %v2187 = vpack.c.b16 %v2127, %v2123
    %v2188 = vpack.c.b16 %v2128, %v2124
    %v2189 = vpack.c.b16 %v2129, %v2125
    %v2190 = vpack.c.b16 %v2130, %v2126
    %v2191 = vpack.c.b16 %v2135, %v2131
    %v2192 = vpack.c.b16 %v2136, %v2132
    %v2193 = vpack.c.b16 %v2137, %v2133
    %v2194 = vpack.c.b16 %v2138, %v2134
    %v2195 = vpack.c.b16 %v2143, %v2139
    %v2196 = vpack.c.b16 %v2144, %v2140
    %v2197 = vpack.c.b16 %v2145, %v2141
    %v2198 = vpack.c.b16 %v2146, %v2142
    %v2199 = vpack.c.b16 %v2151, %v2147
    %v2200 = vpack.c.b16 %v2152, %v2148
    %v2201 = vpack.c.b16 %v2153, %v2149
    %v2202 = vpack.c.b16 %v2154, %v2150
    %v2203 = vpack.c.b16 %v2159, %v2155
    %v2204 = vpack.c.b16 %v2160, %v2156
    %v2205 = vpack.c.b16 %v2161, %v2157
    %v2206 = vpack.c.b16 %v2162, %v2158
    %v2207 = vpack.c.b16 %v2167, %v2163
    %v2208 = vpack.c.b16 %v2168, %v2164
    %v2209 = vpack.c.b16 %v2169, %v2165
    %v2210 = vpack.c.b16 %v2170, %v2166
    %v2211 = vpack.c.b16 %v2175, %v2171
    %v2212 = vpack.c.b16 %v2176, %v2172
    %v2213 = vpack.c.b16 %v2177, %v2173
    %v2214 = vpack.c.b16 %v2178, %v2174
    %v2215 = vpack.c.b16 %v2183, %v2179
    %v2216 = vpack.c.b16 %v2184, %v2180
    %v2217 = vpack.c.b16 %v2185, %v2181
    %v2218 = vpack.c.b16 %v2186, %v2182
    %2251 = vmatprep.subr.bf16.mxu0 %v2216
    %2252 = vmatpush1.bf16.msra.mxu0 %v2215
    %2253 = vmatprep.subr.bf16.mxu0 %v2212
    %2254 = vmatpush1.bf16.msra.mxu0 %v2211
    %2255 = vmatprep.subr.bf16.mxu0 %v2208
    %2256 = vmatpush1.bf16.msra.mxu0 %v2207
    %2257 = vmatprep.subr.bf16.mxu0 %v2204
    %2258 = vmatpush1.bf16.msra.mxu0 %v2203
    %2259 = vmatprep.subr.bf16.mxu0 %v2200
    %2260 = vmatpush1.bf16.msra.mxu0 %v2199
    %2261 = vmatprep.subr.bf16.mxu0 %v2196
    %2262 = vmatpush1.bf16.msra.mxu0 %v2195
    %2263 = vmatprep.subr.bf16.mxu0 %v2192
    %2264 = vmatpush1.bf16.msra.mxu0 %v2191
    %2265 = vmatprep.subr.bf16.mxu0 %v2188
    %2266 = vmatpush1.bf16.msra.mxu0 %v2187
    %2267 = vmatprep.subr.bf16.mxu0 0
    %2268 = vmatpush2.bf16.msra.mxu0 0
    %2269 = vmatprep.subr.bf16.mxu0 0
    %2270 = vmatpush2.bf16.msra.mxu0 0
    %2271 = vmatprep.subr.bf16.mxu0 0
    %2272 = vmatpush2.bf16.msra.mxu0 0
    %2273 = vmatprep.subr.bf16.mxu0 0
    %2274 = vmatpush2.bf16.msra.mxu0 0
    %2275 = vmatprep.subr.bf16.mxu0 0
    %2276 = vmatpush2.bf16.msra.mxu0 0
    %2277 = vmatprep.subr.bf16.mxu0 0
    %2278 = vmatpush2.bf16.msra.mxu0 0
    %2279 = vmatprep.subr.bf16.mxu0 0
    %2280 = vmatpush2.bf16.msra.mxu0 0
    %2281 = vmatprep.subr.bf16.mxu0 0
    %2282 = vmatpush2.bf16.msra.mxu0 0
    %2283 = vmatprep.mubr.bf16.mxu0 0
    %2284 = vmatmul.mubr.bf16.gmra.mxu0 %v2049
    %v2285 = vpop.f32.mrf.mxu0
    %v2286 = vadd.f32 0.0, %v2285
    %v2287 = vpop.f32.mrf.mxu0
    %v2288 = vadd.f32 0.0, %v2287
    %v2289 = vpop.f32.mrf.mxu0
    %v2290 = vpop.f32.mrf.mxu0
    %2291 = vdwg.mxu0
    %2292 = vmatprep.subr.bf16.mxu0 %v2218
    %2293 = vmatpush1.bf16.msra.mxu0 %v2217
    %2294 = vmatprep.subr.bf16.mxu0 %v2214
    %2295 = vmatpush1.bf16.msra.mxu0 %v2213
    %2296 = vmatprep.subr.bf16.mxu0 %v2210
    %2297 = vmatpush1.bf16.msra.mxu0 %v2209
    %2298 = vmatprep.subr.bf16.mxu0 %v2206
    %2299 = vmatpush1.bf16.msra.mxu0 %v2205
    %2300 = vmatprep.subr.bf16.mxu0 %v2202
    %2301 = vmatpush1.bf16.msra.mxu0 %v2201
    %2302 = vmatprep.subr.bf16.mxu0 %v2198
    %2303 = vmatpush1.bf16.msra.mxu0 %v2197
    %2304 = vmatprep.subr.bf16.mxu0 %v2194
    %2305 = vmatpush1.bf16.msra.mxu0 %v2193
    %2306 = vmatprep.subr.bf16.mxu0 %v2190
    %2307 = vmatpush1.bf16.msra.mxu0 %v2189
    %2308 = vmatprep.subr.bf16.mxu0 0
    %2309 = vmatpush2.bf16.msra.mxu0 0
    %2310 = vmatprep.subr.bf16.mxu0 0
    %2311 = vmatpush2.bf16.msra.mxu0 0
    %2312 = vmatprep.subr.bf16.mxu0 0
    %2313 = vmatpush2.bf16.msra.mxu0 0
    %2314 = vmatprep.subr.bf16.mxu0 0
    %2315 = vmatpush2.bf16.msra.mxu0 0
    %2316 = vmatprep.subr.bf16.mxu0 0
    %2317 = vmatpush2.bf16.msra.mxu0 0
    %2318 = vmatprep.subr.bf16.mxu0 0
    %2319 = vmatpush2.bf16.msra.mxu0 0
    %2320 = vmatprep.subr.bf16.mxu0 0
    %2321 = vmatpush2.bf16.msra.mxu0 0
    %2322 = vmatprep.subr.bf16.mxu0 0
    %2323 = vmatpush2.bf16.msra.mxu0 0
    %2324 = vmatprep.mubr.bf16.mxu0 0
    %2325 = vmatmul.mubr.bf16.gmra.mxu0 %v2049
    %v2326 = vpop.f32.mrf.mxu0
    %v2327 = vadd.f32 0.0, %v2326
    %v2328 = vpop.f32.mrf.mxu0
    %v2329 = vadd.f32 0.0, %v2328
    %v2330 = vpop.f32.mrf.mxu0
    %v2331 = vpop.f32.mrf.mxu0
    %2332 = vdwg.mxu0
    %v2333 = vadd.f32 %v2055, %v2286
    %v2334 = vadd.f32 %v2056, %v2288
    %v2335 = vadd.f32 %v2057, %v2327
    %v2336 = vadd.f32 %v2058, %v2329
    %v2337 = vxor.u32 %v2333, 2147483648
    %v2338 = vmul.f32 %v2337, 1.442695
    %v2339 = vpow.pop %v2338
    %v2340 = vadd.f32 %v2339, 1.0
    %v2341 = vrcp.pop %v2340
    %v2342 = vmul.f32 1.0, %v2341
    %v2343 = vxor.u32 %v2334, 2147483648
    %v2344 = vmul.f32 %v2343, 1.442695
    %v2345 = vpow.pop %v2344
    %v2346 = vadd.f32 %v2345, 1.0
    %v2347 = vrcp.pop %v2346
    %v2348 = vmul.f32 1.0, %v2347
    %v2349 = vtanh.pop %v2335
    %v2350 = vxor.u32 %v2336, 2147483648
    %v2351 = vmul.f32 %v2350, 1.442695
    %v2352 = vpow.pop %v2351
    %v2353 = vadd.f32 %v2352, 1.0
    %v2354 = vrcp.pop %v2353
    %v2355 = vmul.f32 1.0, %v2354
    %v2356 = vmul.f32 %v2348, %v2046
    %v2357 = vmul.f32 %v2342, %v2349
    %v2358 = vadd.f32 %v2356, %v2357
    %v2359 = vtanh.pop %v2358
    %v2360 = vmul.f32 %v2355, %v2359
    %v2361 = vpack.c.bf16 %v2360, %v2360
    %s2362 = scalar_lea.vmem [#allocation11], 20
    %2363 = vst [vmem:[%s2362] sm:$0xf] %v2361
    %s2364 = smul.u32 6, 4
    %s2365 = smul.addr %s2364, 8
    %s2366 = scalar_lea.vmem [#allocation4], %s2365
    %v2367 = vld [vmem:[%s2366] sm:$0xff]
    %v2368 = vld [vmem:[%s2366 + $0x8] sm:$0xff]
    %v2369 = vld [vmem:[%s2366 + $0x10] sm:$0xff]
    %v2370 = vld [vmem:[%s2366 + $0x18] sm:$0xff]
    %v2371 = vld [vmem:[#allocation10] sm:$0xff]
    %v2372 = vld [vmem:[#allocation10 + $0x8] sm:$0xff]
    %v2373 = vld [vmem:[#allocation10 + $0x10] sm:$0xff]
    %v2374 = vld [vmem:[#allocation10 + $0x18] sm:$0xff]
    %v2375 = vld [vmem:[#allocation10 + $0x20] sm:$0xff]
    %v2376 = vld [vmem:[#allocation10 + $0x28] sm:$0xff]
    %v2377 = vld [vmem:[#allocation10 + $0x30] sm:$0xff]
    %v2378 = vld [vmem:[#allocation10 + $0x38] sm:$0xff]
    %v2379 = vld [vmem:[#allocation10 + $0x40] sm:$0xff]
    %v2380 = vld [vmem:[#allocation10 + $0x48] sm:$0xff]
    %v2381 = vld [vmem:[#allocation10 + $0x50] sm:$0xff]
    %v2382 = vld [vmem:[#allocation10 + $0x58] sm:$0xff]
    %v2383 = vld [vmem:[#allocation10 + $0x60] sm:$0xff]
    %v2384 = vld [vmem:[#allocation10 + $0x68] sm:$0xff]
    %v2385 = vld [vmem:[#allocation10 + $0x70] sm:$0xff]
    %v2386 = vld [vmem:[#allocation10 + $0x78] sm:$0xff]
    %v2387 = vld [vmem:[#allocation10 + $0x80] sm:$0xff]
    %v2388 = vld [vmem:[#allocation10 + $0x88] sm:$0xff]
    %v2389 = vld [vmem:[#allocation10 + $0x90] sm:$0xff]
    %v2390 = vld [vmem:[#allocation10 + $0x98] sm:$0xff]
    %v2391 = vld [vmem:[#allocation10 + $0xa0] sm:$0xff]
    %v2392 = vld [vmem:[#allocation10 + $0xa8] sm:$0xff]
    %v2393 = vld [vmem:[#allocation10 + $0xb0] sm:$0xff]
    %v2394 = vld [vmem:[#allocation10 + $0xb8] sm:$0xff]
    %v2395 = vld [vmem:[#allocation10 + $0xc0] sm:$0xff]
    %v2396 = vld [vmem:[#allocation10 + $0xc8] sm:$0xff]
    %v2397 = vld [vmem:[#allocation10 + $0xd0] sm:$0xff]
    %v2398 = vld [vmem:[#allocation10 + $0xd8] sm:$0xff]
    %v2399 = vld [vmem:[#allocation10 + $0xe0] sm:$0xff]
    %v2400 = vld [vmem:[#allocation10 + $0xe8] sm:$0xff]
    %v2401 = vld [vmem:[#allocation10 + $0xf0] sm:$0xff]
    %v2402 = vld [vmem:[#allocation10 + $0xf8] sm:$0xff]
    %v2435 = vunpack.c.l.b16 %v2371
    %v2436 = vunpack.c.h.b16 %v2371
    %v2437 = vunpack.c.l.b16 %v2372
    %v2438 = vunpack.c.h.b16 %v2372
    %v2439 = vunpack.c.l.b16 %v2373
    %v2440 = vunpack.c.h.b16 %v2373
    %v2441 = vunpack.c.l.b16 %v2374
    %v2442 = vunpack.c.h.b16 %v2374
    %v2443 = vunpack.c.l.b16 %v2375
    %v2444 = vunpack.c.h.b16 %v2375
    %v2445 = vunpack.c.l.b16 %v2376
    %v2446 = vunpack.c.h.b16 %v2376
    %v2447 = vunpack.c.l.b16 %v2377
    %v2448 = vunpack.c.h.b16 %v2377
    %v2449 = vunpack.c.l.b16 %v2378
    %v2450 = vunpack.c.h.b16 %v2378
    %v2451 = vunpack.c.l.b16 %v2379
    %v2452 = vunpack.c.h.b16 %v2379
    %v2453 = vunpack.c.l.b16 %v2380
    %v2454 = vunpack.c.h.b16 %v2380
    %v2455 = vunpack.c.l.b16 %v2381
    %v2456 = vunpack.c.h.b16 %v2381
    %v2457 = vunpack.c.l.b16 %v2382
    %v2458 = vunpack.c.h.b16 %v2382
    %v2459 = vunpack.c.l.b16 %v2383
    %v2460 = vunpack.c.h.b16 %v2383
    %v2461 = vunpack.c.l.b16 %v2384
    %v2462 = vunpack.c.h.b16 %v2384
    %v2463 = vunpack.c.l.b16 %v2385
    %v2464 = vunpack.c.h.b16 %v2385
    %v2465 = vunpack.c.l.b16 %v2386
    %v2466 = vunpack.c.h.b16 %v2386
    %v2467 = vunpack.c.l.b16 %v2387
    %v2468 = vunpack.c.h.b16 %v2387
    %v2469 = vunpack.c.l.b16 %v2388
    %v2470 = vunpack.c.h.b16 %v2388
    %v2471 = vunpack.c.l.b16 %v2389
    %v2472 = vunpack.c.h.b16 %v2389
    %v2473 = vunpack.c.l.b16 %v2390
    %v2474 = vunpack.c.h.b16 %v2390
    %v2475 = vunpack.c.l.b16 %v2391
    %v2476 = vunpack.c.h.b16 %v2391
    %v2477 = vunpack.c.l.b16 %v2392
    %v2478 = vunpack.c.h.b16 %v2392
    %v2479 = vunpack.c.l.b16 %v2393
    %v2480 = vunpack.c.h.b16 %v2393
    %v2481 = vunpack.c.l.b16 %v2394
    %v2482 = vunpack.c.h.b16 %v2394
    %v2483 = vunpack.c.l.b16 %v2395
    %v2484 = vunpack.c.h.b16 %v2395
    %v2485 = vunpack.c.l.b16 %v2396
    %v2486 = vunpack.c.h.b16 %v2396
    %v2487 = vunpack.c.l.b16 %v2397
    %v2488 = vunpack.c.h.b16 %v2397
    %v2489 = vunpack.c.l.b16 %v2398
    %v2490 = vunpack.c.h.b16 %v2398
    %v2491 = vunpack.c.l.b16 %v2399
    %v2492 = vunpack.c.h.b16 %v2399
    %v2493 = vunpack.c.l.b16 %v2400
    %v2494 = vunpack.c.h.b16 %v2400
    %v2495 = vunpack.c.l.b16 %v2401
    %v2496 = vunpack.c.h.b16 %v2401
    %v2497 = vunpack.c.l.b16 %v2402
    %v2498 = vunpack.c.h.b16 %v2402
    %v2499 = vpack.c.b16 %v2439, %v2435
    %v2500 = vpack.c.b16 %v2440, %v2436
    %v2501 = vpack.c.b16 %v2441, %v2437
    %v2502 = vpack.c.b16 %v2442, %v2438
    %v2503 = vpack.c.b16 %v2447, %v2443
    %v2504 = vpack.c.b16 %v2448, %v2444
    %v2505 = vpack.c.b16 %v2449, %v2445
    %v2506 = vpack.c.b16 %v2450, %v2446
    %v2507 = vpack.c.b16 %v2455, %v2451
    %v2508 = vpack.c.b16 %v2456, %v2452
    %v2509 = vpack.c.b16 %v2457, %v2453
    %v2510 = vpack.c.b16 %v2458, %v2454
    %v2511 = vpack.c.b16 %v2463, %v2459
    %v2512 = vpack.c.b16 %v2464, %v2460
    %v2513 = vpack.c.b16 %v2465, %v2461
    %v2514 = vpack.c.b16 %v2466, %v2462
    %v2515 = vpack.c.b16 %v2471, %v2467
    %v2516 = vpack.c.b16 %v2472, %v2468
    %v2517 = vpack.c.b16 %v2473, %v2469
    %v2518 = vpack.c.b16 %v2474, %v2470
    %v2519 = vpack.c.b16 %v2479, %v2475
    %v2520 = vpack.c.b16 %v2480, %v2476
    %v2521 = vpack.c.b16 %v2481, %v2477
    %v2522 = vpack.c.b16 %v2482, %v2478
    %v2523 = vpack.c.b16 %v2487, %v2483
    %v2524 = vpack.c.b16 %v2488, %v2484
    %v2525 = vpack.c.b16 %v2489, %v2485
    %v2526 = vpack.c.b16 %v2490, %v2486
    %v2527 = vpack.c.b16 %v2495, %v2491
    %v2528 = vpack.c.b16 %v2496, %v2492
    %v2529 = vpack.c.b16 %v2497, %v2493
    %v2530 = vpack.c.b16 %v2498, %v2494
    %2563 = vmatprep.subr.bf16.mxu0 %v2528
    %2564 = vmatpush1.bf16.msra.mxu0 %v2527
    %2565 = vmatprep.subr.bf16.mxu0 %v2524
    %2566 = vmatpush1.bf16.msra.mxu0 %v2523
    %2567 = vmatprep.subr.bf16.mxu0 %v2520
    %2568 = vmatpush1.bf16.msra.mxu0 %v2519
    %2569 = vmatprep.subr.bf16.mxu0 %v2516
    %2570 = vmatpush1.bf16.msra.mxu0 %v2515
    %2571 = vmatprep.subr.bf16.mxu0 %v2512
    %2572 = vmatpush1.bf16.msra.mxu0 %v2511
    %2573 = vmatprep.subr.bf16.mxu0 %v2508
    %2574 = vmatpush1.bf16.msra.mxu0 %v2507
    %2575 = vmatprep.subr.bf16.mxu0 %v2504
    %2576 = vmatpush1.bf16.msra.mxu0 %v2503
    %2577 = vmatprep.subr.bf16.mxu0 %v2500
    %2578 = vmatpush1.bf16.msra.mxu0 %v2499
    %2579 = vmatprep.subr.bf16.mxu0 0
    %2580 = vmatpush2.bf16.msra.mxu0 0
    %2581 = vmatprep.subr.bf16.mxu0 0
    %2582 = vmatpush2.bf16.msra.mxu0 0
    %2583 = vmatprep.subr.bf16.mxu0 0
    %2584 = vmatpush2.bf16.msra.mxu0 0
    %2585 = vmatprep.subr.bf16.mxu0 0
    %2586 = vmatpush2.bf16.msra.mxu0 0
    %2587 = vmatprep.subr.bf16.mxu0 0
    %2588 = vmatpush2.bf16.msra.mxu0 0
    %2589 = vmatprep.subr.bf16.mxu0 0
    %2590 = vmatpush2.bf16.msra.mxu0 0
    %2591 = vmatprep.subr.bf16.mxu0 0
    %2592 = vmatpush2.bf16.msra.mxu0 0
    %2593 = vmatprep.subr.bf16.mxu0 0
    %2594 = vmatpush2.bf16.msra.mxu0 0
    %2595 = vmatprep.mubr.bf16.mxu0 0
    %2596 = vmatmul.mubr.bf16.gmra.mxu0 %v2361
    %v2597 = vpop.f32.mrf.mxu0
    %v2598 = vadd.f32 0.0, %v2597
    %v2599 = vpop.f32.mrf.mxu0
    %v2600 = vadd.f32 0.0, %v2599
    %v2601 = vpop.f32.mrf.mxu0
    %v2602 = vpop.f32.mrf.mxu0
    %2603 = vdwg.mxu0
    %2604 = vmatprep.subr.bf16.mxu0 %v2530
    %2605 = vmatpush1.bf16.msra.mxu0 %v2529
    %2606 = vmatprep.subr.bf16.mxu0 %v2526
    %2607 = vmatpush1.bf16.msra.mxu0 %v2525
    %2608 = vmatprep.subr.bf16.mxu0 %v2522
    %2609 = vmatpush1.bf16.msra.mxu0 %v2521
    %2610 = vmatprep.subr.bf16.mxu0 %v2518
    %2611 = vmatpush1.bf16.msra.mxu0 %v2517
    %2612 = vmatprep.subr.bf16.mxu0 %v2514
    %2613 = vmatpush1.bf16.msra.mxu0 %v2513
    %2614 = vmatprep.subr.bf16.mxu0 %v2510
    %2615 = vmatpush1.bf16.msra.mxu0 %v2509
    %2616 = vmatprep.subr.bf16.mxu0 %v2506
    %2617 = vmatpush1.bf16.msra.mxu0 %v2505
    %2618 = vmatprep.subr.bf16.mxu0 %v2502
    %2619 = vmatpush1.bf16.msra.mxu0 %v2501
    %2620 = vmatprep.subr.bf16.mxu0 0
    %2621 = vmatpush2.bf16.msra.mxu0 0
    %2622 = vmatprep.subr.bf16.mxu0 0
    %2623 = vmatpush2.bf16.msra.mxu0 0
    %2624 = vmatprep.subr.bf16.mxu0 0
    %2625 = vmatpush2.bf16.msra.mxu0 0
    %2626 = vmatprep.subr.bf16.mxu0 0
    %2627 = vmatpush2.bf16.msra.mxu0 0
    %2628 = vmatprep.subr.bf16.mxu0 0
    %2629 = vmatpush2.bf16.msra.mxu0 0
    %2630 = vmatprep.subr.bf16.mxu0 0
    %2631 = vmatpush2.bf16.msra.mxu0 0
    %2632 = vmatprep.subr.bf16.mxu0 0
    %2633 = vmatpush2.bf16.msra.mxu0 0
    %2634 = vmatprep.subr.bf16.mxu0 0
    %2635 = vmatpush2.bf16.msra.mxu0 0
    %2636 = vmatprep.mubr.bf16.mxu0 0
    %2637 = vmatmul.mubr.bf16.gmra.mxu0 %v2361
    %v2638 = vpop.f32.mrf.mxu0
    %v2639 = vadd.f32 0.0, %v2638
    %v2640 = vpop.f32.mrf.mxu0
    %v2641 = vadd.f32 0.0, %v2640
    %v2642 = vpop.f32.mrf.mxu0
    %v2643 = vpop.f32.mrf.mxu0
    %2644 = vdwg.mxu0
    %v2645 = vadd.f32 %v2367, %v2598
    %v2646 = vadd.f32 %v2368, %v2600
    %v2647 = vadd.f32 %v2369, %v2639
    %v2648 = vadd.f32 %v2370, %v2641
    %v2649 = vxor.u32 %v2645, 2147483648
    %v2650 = vmul.f32 %v2649, 1.442695
    %v2651 = vpow.pop %v2650
    %v2652 = vadd.f32 %v2651, 1.0
    %v2653 = vrcp.pop %v2652
    %v2654 = vmul.f32 1.0, %v2653
    %v2655 = vxor.u32 %v2646, 2147483648
    %v2656 = vmul.f32 %v2655, 1.442695
    %v2657 = vpow.pop %v2656
    %v2658 = vadd.f32 %v2657, 1.0
    %v2659 = vrcp.pop %v2658
    %v2660 = vmul.f32 1.0, %v2659
    %v2661 = vtanh.pop %v2647
    %v2662 = vxor.u32 %v2648, 2147483648
    %v2663 = vmul.f32 %v2662, 1.442695
    %v2664 = vpow.pop %v2663
    %v2665 = vadd.f32 %v2664, 1.0
    %v2666 = vrcp.pop %v2665
    %v2667 = vmul.f32 1.0, %v2666
    %v2668 = vmul.f32 %v2660, %v2358
    %v2669 = vmul.f32 %v2654, %v2661
    %v2670 = vadd.f32 %v2668, %v2669
    %v2671 = vtanh.pop %v2670
    %v2672 = vmul.f32 %v2667, %v2671
    %v2673 = vpack.c.bf16 %v2672, %v2672
    %s2674 = scalar_lea.vmem [#allocation11], 24
    %2675 = vst [vmem:[%s2674] sm:$0xf] %v2673
    %s2676 = smul.u32 7, 4
    %s2677 = smul.addr %s2676, 8
    %s2678 = scalar_lea.vmem [#allocation4], %s2677
    %v2679 = vld [vmem:[%s2678] sm:$0xff]
    %v2680 = vld [vmem:[%s2678 + $0x8] sm:$0xff]
    %v2681 = vld [vmem:[%s2678 + $0x10] sm:$0xff]
    %v2682 = vld [vmem:[%s2678 + $0x18] sm:$0xff]
    %v2683 = vld [vmem:[#allocation10] sm:$0xff]
    %v2684 = vld [vmem:[#allocation10 + $0x8] sm:$0xff]
    %v2685 = vld [vmem:[#allocation10 + $0x10] sm:$0xff]
    %v2686 = vld [vmem:[#allocation10 + $0x18] sm:$0xff]
    %v2687 = vld [vmem:[#allocation10 + $0x20] sm:$0xff]
    %v2688 = vld [vmem:[#allocation10 + $0x28] sm:$0xff]
    %v2689 = vld [vmem:[#allocation10 + $0x30] sm:$0xff]
    %v2690 = vld [vmem:[#allocation10 + $0x38] sm:$0xff]
    %v2691 = vld [vmem:[#allocation10 + $0x40] sm:$0xff]
    %v2692 = vld [vmem:[#allocation10 + $0x48] sm:$0xff]
    %v2693 = vld [vmem:[#allocation10 + $0x50] sm:$0xff]
    %v2694 = vld [vmem:[#allocation10 + $0x58] sm:$0xff]
    %v2695 = vld [vmem:[#allocation10 + $0x60] sm:$0xff]
    %v2696 = vld [vmem:[#allocation10 + $0x68] sm:$0xff]
    %v2697 = vld [vmem:[#allocation10 + $0x70] sm:$0xff]
    %v2698 = vld [vmem:[#allocation10 + $0x78] sm:$0xff]
    %v2699 = vld [vmem:[#allocation10 + $0x80] sm:$0xff]
    %v2700 = vld [vmem:[#allocation10 + $0x88] sm:$0xff]
    %v2701 = vld [vmem:[#allocation10 + $0x90] sm:$0xff]
    %v2702 = vld [vmem:[#allocation10 + $0x98] sm:$0xff]
    %v2703 = vld [vmem:[#allocation10 + $0xa0] sm:$0xff]
    %v2704 = vld [vmem:[#allocation10 + $0xa8] sm:$0xff]
    %v2705 = vld [vmem:[#allocation10 + $0xb0] sm:$0xff]
    %v2706 = vld [vmem:[#allocation10 + $0xb8] sm:$0xff]
    %v2707 = vld [vmem:[#allocation10 + $0xc0] sm:$0xff]
    %v2708 = vld [vmem:[#allocation10 + $0xc8] sm:$0xff]
    %v2709 = vld [vmem:[#allocation10 + $0xd0] sm:$0xff]
    %v2710 = vld [vmem:[#allocation10 + $0xd8] sm:$0xff]
    %v2711 = vld [vmem:[#allocation10 + $0xe0] sm:$0xff]
    %v2712 = vld [vmem:[#allocation10 + $0xe8] sm:$0xff]
    %v2713 = vld [vmem:[#allocation10 + $0xf0] sm:$0xff]
    %v2714 = vld [vmem:[#allocation10 + $0xf8] sm:$0xff]
    %v2747 = vunpack.c.l.b16 %v2683
    %v2748 = vunpack.c.h.b16 %v2683
    %v2749 = vunpack.c.l.b16 %v2684
    %v2750 = vunpack.c.h.b16 %v2684
    %v2751 = vunpack.c.l.b16 %v2685
    %v2752 = vunpack.c.h.b16 %v2685
    %v2753 = vunpack.c.l.b16 %v2686
    %v2754 = vunpack.c.h.b16 %v2686
    %v2755 = vunpack.c.l.b16 %v2687
    %v2756 = vunpack.c.h.b16 %v2687
    %v2757 = vunpack.c.l.b16 %v2688
    %v2758 = vunpack.c.h.b16 %v2688
    %v2759 = vunpack.c.l.b16 %v2689
    %v2760 = vunpack.c.h.b16 %v2689
    %v2761 = vunpack.c.l.b16 %v2690
    %v2762 = vunpack.c.h.b16 %v2690
    %v2763 = vunpack.c.l.b16 %v2691
    %v2764 = vunpack.c.h.b16 %v2691
    %v2765 = vunpack.c.l.b16 %v2692
    %v2766 = vunpack.c.h.b16 %v2692
    %v2767 = vunpack.c.l.b16 %v2693
    %v2768 = vunpack.c.h.b16 %v2693
    %v2769 = vunpack.c.l.b16 %v2694
    %v2770 = vunpack.c.h.b16 %v2694
    %v2771 = vunpack.c.l.b16 %v2695
    %v2772 = vunpack.c.h.b16 %v2695
    %v2773 = vunpack.c.l.b16 %v2696
    %v2774 = vunpack.c.h.b16 %v2696
    %v2775 = vunpack.c.l.b16 %v2697
    %v2776 = vunpack.c.h.b16 %v2697
    %v2777 = vunpack.c.l.b16 %v2698
    %v2778 = vunpack.c.h.b16 %v2698
    %v2779 = vunpack.c.l.b16 %v2699
    %v2780 = vunpack.c.h.b16 %v2699
    %v2781 = vunpack.c.l.b16 %v2700
    %v2782 = vunpack.c.h.b16 %v2700
    %v2783 = vunpack.c.l.b16 %v2701
    %v2784 = vunpack.c.h.b16 %v2701
    %v2785 = vunpack.c.l.b16 %v2702
    %v2786 = vunpack.c.h.b16 %v2702
    %v2787 = vunpack.c.l.b16 %v2703
    %v2788 = vunpack.c.h.b16 %v2703
    %v2789 = vunpack.c.l.b16 %v2704
    %v2790 = vunpack.c.h.b16 %v2704
    %v2791 = vunpack.c.l.b16 %v2705
    %v2792 = vunpack.c.h.b16 %v2705
    %v2793 = vunpack.c.l.b16 %v2706
    %v2794 = vunpack.c.h.b16 %v2706
    %v2795 = vunpack.c.l.b16 %v2707
    %v2796 = vunpack.c.h.b16 %v2707
    %v2797 = vunpack.c.l.b16 %v2708
    %v2798 = vunpack.c.h.b16 %v2708
    %v2799 = vunpack.c.l.b16 %v2709
    %v2800 = vunpack.c.h.b16 %v2709
    %v2801 = vunpack.c.l.b16 %v2710
    %v2802 = vunpack.c.h.b16 %v2710
    %v2803 = vunpack.c.l.b16 %v2711
    %v2804 = vunpack.c.h.b16 %v2711
    %v2805 = vunpack.c.l.b16 %v2712
    %v2806 = vunpack.c.h.b16 %v2712
    %v2807 = vunpack.c.l.b16 %v2713
    %v2808 = vunpack.c.h.b16 %v2713
    %v2809 = vunpack.c.l.b16 %v2714
    %v2810 = vunpack.c.h.b16 %v2714
    %v2811 = vpack.c.b16 %v2751, %v2747
    %v2812 = vpack.c.b16 %v2752, %v2748
    %v2813 = vpack.c.b16 %v2753, %v2749
    %v2814 = vpack.c.b16 %v2754, %v2750
    %v2815 = vpack.c.b16 %v2759, %v2755
    %v2816 = vpack.c.b16 %v2760, %v2756
    %v2817 = vpack.c.b16 %v2761, %v2757
    %v2818 = vpack.c.b16 %v2762, %v2758
    %v2819 = vpack.c.b16 %v2767, %v2763
    %v2820 = vpack.c.b16 %v2768, %v2764
    %v2821 = vpack.c.b16 %v2769, %v2765
    %v2822 = vpack.c.b16 %v2770, %v2766
    %v2823 = vpack.c.b16 %v2775, %v2771
    %v2824 = vpack.c.b16 %v2776, %v2772
    %v2825 = vpack.c.b16 %v2777, %v2773
    %v2826 = vpack.c.b16 %v2778, %v2774
    %v2827 = vpack.c.b16 %v2783, %v2779
    %v2828 = vpack.c.b16 %v2784, %v2780
    %v2829 = vpack.c.b16 %v2785, %v2781
    %v2830 = vpack.c.b16 %v2786, %v2782
    %v2831 = vpack.c.b16 %v2791, %v2787
    %v2832 = vpack.c.b16 %v2792, %v2788
    %v2833 = vpack.c.b16 %v2793, %v2789
    %v2834 = vpack.c.b16 %v2794, %v2790
    %v2835 = vpack.c.b16 %v2799, %v2795
    %v2836 = vpack.c.b16 %v2800, %v2796
    %v2837 = vpack.c.b16 %v2801, %v2797
    %v2838 = vpack.c.b16 %v2802, %v2798
    %v2839 = vpack.c.b16 %v2807, %v2803
    %v2840 = vpack.c.b16 %v2808, %v2804
    %v2841 = vpack.c.b16 %v2809, %v2805
    %v2842 = vpack.c.b16 %v2810, %v2806
    %2875 = vmatprep.subr.bf16.mxu0 %v2840
    %2876 = vmatpush1.bf16.msra.mxu0 %v2839
    %2877 = vmatprep.subr.bf16.mxu0 %v2836
    %2878 = vmatpush1.bf16.msra.mxu0 %v2835
    %2879 = vmatprep.subr.bf16.mxu0 %v2832
    %2880 = vmatpush1.bf16.msra.mxu0 %v2831
    %2881 = vmatprep.subr.bf16.mxu0 %v2828
    %2882 = vmatpush1.bf16.msra.mxu0 %v2827
    %2883 = vmatprep.subr.bf16.mxu0 %v2824
    %2884 = vmatpush1.bf16.msra.mxu0 %v2823
    %2885 = vmatprep.subr.bf16.mxu0 %v2820
    %2886 = vmatpush1.bf16.msra.mxu0 %v2819
    %2887 = vmatprep.subr.bf16.mxu0 %v2816
    %2888 = vmatpush1.bf16.msra.mxu0 %v2815
    %2889 = vmatprep.subr.bf16.mxu0 %v2812
    %2890 = vmatpush1.bf16.msra.mxu0 %v2811
    %2891 = vmatprep.subr.bf16.mxu0 0
    %2892 = vmatpush2.bf16.msra.mxu0 0
    %2893 = vmatprep.subr.bf16.mxu0 0
    %2894 = vmatpush2.bf16.msra.mxu0 0
    %2895 = vmatprep.subr.bf16.mxu0 0
    %2896 = vmatpush2.bf16.msra.mxu0 0
    %2897 = vmatprep.subr.bf16.mxu0 0
    %2898 = vmatpush2.bf16.msra.mxu0 0
    %2899 = vmatprep.subr.bf16.mxu0 0
    %2900 = vmatpush2.bf16.msra.mxu0 0
    %2901 = vmatprep.subr.bf16.mxu0 0
    %2902 = vmatpush2.bf16.msra.mxu0 0
    %2903 = vmatprep.subr.bf16.mxu0 0
    %2904 = vmatpush2.bf16.msra.mxu0 0
    %2905 = vmatprep.subr.bf16.mxu0 0
    %2906 = vmatpush2.bf16.msra.mxu0 0
    %2907 = vmatprep.mubr.bf16.mxu0 0
    %2908 = vmatmul.mubr.bf16.gmra.mxu0 %v2673
    %v2909 = vpop.f32.mrf.mxu0
    %v2910 = vadd.f32 0.0, %v2909
    %v2911 = vpop.f32.mrf.mxu0
    %v2912 = vadd.f32 0.0, %v2911
    %v2913 = vpop.f32.mrf.mxu0
    %v2914 = vpop.f32.mrf.mxu0
    %2915 = vdwg.mxu0
    %2916 = vmatprep.subr.bf16.mxu0 %v2842
    %2917 = vmatpush1.bf16.msra.mxu0 %v2841
    %2918 = vmatprep.subr.bf16.mxu0 %v2838
    %2919 = vmatpush1.bf16.msra.mxu0 %v2837
    %2920 = vmatprep.subr.bf16.mxu0 %v2834
    %2921 = vmatpush1.bf16.msra.mxu0 %v2833
    %2922 = vmatprep.subr.bf16.mxu0 %v2830
    %2923 = vmatpush1.bf16.msra.mxu0 %v2829
    %2924 = vmatprep.subr.bf16.mxu0 %v2826
    %2925 = vmatpush1.bf16.msra.mxu0 %v2825
    %2926 = vmatprep.subr.bf16.mxu0 %v2822
    %2927 = vmatpush1.bf16.msra.mxu0 %v2821
    %2928 = vmatprep.subr.bf16.mxu0 %v2818
    %2929 = vmatpush1.bf16.msra.mxu0 %v2817
    %2930 = vmatprep.subr.bf16.mxu0 %v2814
    %2931 = vmatpush1.bf16.msra.mxu0 %v2813
    %2932 = vmatprep.subr.bf16.mxu0 0
    %2933 = vmatpush2.bf16.msra.mxu0 0
    %2934 = vmatprep.subr.bf16.mxu0 0
    %2935 = vmatpush2.bf16.msra.mxu0 0
    %2936 = vmatprep.subr.bf16.mxu0 0
    %2937 = vmatpush2.bf16.msra.mxu0 0
    %2938 = vmatprep.subr.bf16.mxu0 0
    %2939 = vmatpush2.bf16.msra.mxu0 0
    %2940 = vmatprep.subr.bf16.mxu0 0
    %2941 = vmatpush2.bf16.msra.mxu0 0
    %2942 = vmatprep.subr.bf16.mxu0 0
    %2943 = vmatpush2.bf16.msra.mxu0 0
    %2944 = vmatprep.subr.bf16.mxu0 0
    %2945 = vmatpush2.bf16.msra.mxu0 0
    %2946 = vmatprep.subr.bf16.mxu0 0
    %2947 = vmatpush2.bf16.msra.mxu0 0
    %2948 = vmatprep.mubr.bf16.mxu0 0
    %2949 = vmatmul.mubr.bf16.gmra.mxu0 %v2673
    %v2950 = vpop.f32.mrf.mxu0
    %v2951 = vadd.f32 0.0, %v2950
    %v2952 = vpop.f32.mrf.mxu0
    %v2953 = vadd.f32 0.0, %v2952
    %v2954 = vpop.f32.mrf.mxu0
    %v2955 = vpop.f32.mrf.mxu0
    %2956 = vdwg.mxu0
    %v2957 = vadd.f32 %v2679, %v2910
    %v2958 = vadd.f32 %v2680, %v2912
    %v2959 = vadd.f32 %v2681, %v2951
    %v2960 = vadd.f32 %v2682, %v2953
    %v2961 = vxor.u32 %v2957, 2147483648
    %v2962 = vmul.f32 %v2961, 1.442695
    %v2963 = vpow.pop %v2962
    %v2964 = vadd.f32 %v2963, 1.0
    %v2965 = vrcp.pop %v2964
    %v2966 = vmul.f32 1.0, %v2965
    %v2967 = vxor.u32 %v2958, 2147483648
    %v2968 = vmul.f32 %v2967, 1.442695
    %v2969 = vpow.pop %v2968
    %v2970 = vadd.f32 %v2969, 1.0
    %v2971 = vrcp.pop %v2970
    %v2972 = vmul.f32 1.0, %v2971
    %v2973 = vtanh.pop %v2959
    %v2974 = vxor.u32 %v2960, 2147483648
    %v2975 = vmul.f32 %v2974, 1.442695
    %v2976 = vpow.pop %v2975
    %v2977 = vadd.f32 %v2976, 1.0
    %v2978 = vrcp.pop %v2977
    %v2979 = vmul.f32 1.0, %v2978
    %v2980 = vmul.f32 %v2972, %v2670
    %v2981 = vmul.f32 %v2966, %v2973
    %v2982 = vadd.f32 %v2980, %v2981
    %v2983 = vtanh.pop %v2982
    %v2984 = vmul.f32 %v2979, %v2983
    %v2985 = vpack.c.bf16 %v2984, %v2984
    %s2986 = scalar_lea.vmem [#allocation11], 28
    %2987 = vst [vmem:[%s2986] sm:$0xf] %v2985
    %2988 = vst [vmem:[#allocation2] sm:$0xff] %v2984
    %2989 = vst [vmem:[#allocation3] sm:$0xff] %v2982
    // Predicated region
    $region34: #{tpu_custom_call.1} parent=1 // pred_check
      _
    $region35: #{tpu_custom_call.1} parent=1 // pred_check_branch
      %2991 = sbr.rel (0) target = $region37
    $region36: #{tpu_custom_call.1} parent=1 // pred_region
      %s2993 = ssub.s32 512, 512
      %2994 = vsyncadd [#allocation7], %s2993
      %s2995 = sshll.u32 [#allocation11], 4
      %s2996 = int_to_ptr.vmem [resolvable:$true] %s2995
      %3001 = dma.vmem_to_hbm [thread:$0]  %s2996, 512, %s4, [#allocation7], 64, 64, 4
    $region37: #{tpu_custom_call.1} parent=1 // pred_fallthru
      _
    // Predicated region
    $region38: #{tpu_custom_call.1} parent=1 // pred_check
      _
    $region39: #{tpu_custom_call.1} parent=1 // pred_check_branch
      %3003 = sbr.rel (0) target = $region41
    $region40: #{tpu_custom_call.1} parent=1 // pred_region
      %3004 = dma.done [#allocation7], 512
    $region41: #{tpu_custom_call.1} parent=1 // pred_fallthru
      _
    %3005 = vsyncpa [#allocation6], 1
    %3006 = vsyncpa [#allocation9], 1
    %3007 = vsyncpa [#allocation7], 1

// kernel: tpu_custom_call.1
$region0: #{tpu_custom_call.1}
  #allocation0 [shape = 'u32[]', space=smem, size = 0x4, offset = 0x4, fixed_abs, tag = 'smem constant byte address 0x4 - core index']
  #allocation1 [shape = 'u32[144,128]{1,0:T(1,128)}', space=vmem, size = 0x12000, scoped, tag = 'internal scratch']
  #allocation2 [shape = 'f32[8,128]{1,0:T(8,128)}', space=vmem, size = 0x1000, scoped, tag = 'scratch operand']
  #allocation3 [shape = 'f32[8,128]{1,0:T(8,128)}', space=vmem, size = 0x1000, scoped, tag = 'scratch operand']
  #allocation4 [shape = 'f32[64,512]{1,0:T(8,128)}', space=vmem, size = 0x20000, scoped, tag = 'scratch operand']
  %s0 = inlined_call_operand.hbm [shape: bf16[1,1,64,128], index: 0, kind: input, shape index: {}]
  %s1 = inlined_call_operand.hbm [shape: bf16[128,512], index: 1, kind: input, shape index: {}]
  %s2 = inlined_call_operand.hbm [shape: bf16[128,512], index: 2, kind: input, shape index: {}]
  %s3 = inlined_call_operand.vmem [shape: f32[1,512], index: 3, kind: input, shape index: {}]
  %s4 = inlined_call_operand.hbm [shape: bf16[1,1,8,8,128], index: 4, kind: output, shape index: {}]
  %s5 = sld [smem:[#allocation0]]
  $region42: #{tpu_custom_call.1} parent=0
    _
  %s7 = ssub.s32 1, %s5
  %s8 = scalar_select 0, %s7, %s5
  $region1: #{tpu_custom_call.1} parent=0
    #allocation5 [shape = 'u8[16384]{0}', space=vmem, size = 0x4000, scoped, tag = 'input window, operand 0, single buffered']
    #allocation6 [shape = 's32[1]{0}', space=sflag, size = 0x4, scoped, tag = 'scoped memory for tpu_custom_call.1']
    #allocation7 [shape = 's32[1]{0}', space=sflag, size = 0x4, scoped, tag = 'scoped memory for tpu_custom_call.1']
    #allocation8 [shape = 'u8[131072]{0}', space=vmem, size = 0x20000, scoped, tag = 'input window, operand 1, single buffered']
    #allocation9 [shape = 's32[1]{0}', space=sflag, size = 0x4, scoped, tag = 'scoped memory for tpu_custom_call.1']
    #allocation10 [shape = 'u8[131072]{0}', space=vmem, size = 0x20000, scoped, tag = 'input window, operand 2, single buffered']
    #allocation11 [shape = 'u8[16384]{0}', space=vmem, size = 0x4000, scoped, tag = 'output window, operand 0, single buffered']
    %9 = vsyncpa [#allocation6], 0
    %10 = vsyncpa [#allocation9], 0
    %11 = vsyncpa [#allocation7], 0
    // Predicated region
    $region2: #{tpu_custom_call.1} parent=1 // pred_check
      _
    $region3: #{tpu_custom_call.1} parent=1 // pred_check_branch
      %13 = sbr.rel (0) target = $region5
    $region4: #{tpu_custom_call.1} parent=1 // pred_region
      %s15 = ssub.s32 512, 512
      %16 = vsyncadd [#allocation6], %s15
      %s17 = sshll.u32 [#allocation5], 4
      %s18 = int_to_ptr.vmem [resolvable:$true] %s17
      %23 = dma.hbm_to_vmem [thread:$0]  %s0, 512, %s18, [#allocation6], 64, 64, 4
    $region5: #{tpu_custom_call.1} parent=1 // pred_fallthru
      _
    // Predicated region
    $region6: #{tpu_custom_call.1} parent=1 // pred_check
      _
    $region7: #{tpu_custom_call.1} parent=1 // pred_check_branch
      %25 = sbr.rel (0) target = $region9
    $region8: #{tpu_custom_call.1} parent=1 // pred_region
      %s27 = ssub.s32 4096, 4096
      %28 = vsyncadd [#allocation9], %s27
      %s29 = sshll.u32 [#allocation8], 4
      %s30 = int_to_ptr.vmem [resolvable:$true] %s29
      %35 = dma.hbm_to_vmem [thread:$0]  %s1, 4096, %s30, [#allocation9], 256, 256, 16
    $region9: #{tpu_custom_call.1} parent=1 // pred_fallthru
      _
    // Predicated region
    $region10: #{tpu_custom_call.1} parent=1 // pred_check
      _
    $region11: #{tpu_custom_call.1} parent=1 // pred_check_branch
      %37 = sbr.rel (0) target = $region13
    $region12: #{tpu_custom_call.1} parent=1 // pred_region
      %s39 = ssub.s32 4096, 4096
      %40 = vsyncadd [#allocation9], %s39
      %s41 = sshll.u32 [#allocation10], 4
      %s42 = int_to_ptr.vmem [resolvable:$true] %s41
      %47 = dma.hbm_to_vmem [thread:$0]  %s2, 4096, %s42, [#allocation9], 256, 256, 16
    $region13: #{tpu_custom_call.1} parent=1 // pred_fallthru
      _
    // Predicated region
    $region14: #{tpu_custom_call.1} parent=1 // pred_check
      _
    $region15: #{tpu_custom_call.1} parent=1 // pred_check_branch
      %49 = sbr.rel (0) target = $region17
    $region16: #{tpu_custom_call.1} parent=1 // pred_region
      _
    $region17: #{tpu_custom_call.1} parent=1 // pred_fallthru
      _
    // Predicated region
    $region18: #{tpu_custom_call.1} parent=1 // pred_check
      _
    $region19: #{tpu_custom_call.1} parent=1 // pred_check_branch
      %51 = sbr.rel (0) target = $region21
    $region20: #{tpu_custom_call.1} parent=1 // pred_region
      %52 = dma.done [#allocation6], 512
    $region21: #{tpu_custom_call.1} parent=1 // pred_fallthru
      _
    // Predicated region
    $region22: #{tpu_custom_call.1} parent=1 // pred_check
      _
    $region23: #{tpu_custom_call.1} parent=1 // pred_check_branch
      %54 = sbr.rel (0) target = $region25
    $region24: #{tpu_custom_call.1} parent=1 // pred_region
      %55 = dma.done [#allocation9], 4096
    $region25: #{tpu_custom_call.1} parent=1 // pred_fallthru
      _
    // Predicated region
    $region26: #{tpu_custom_call.1} parent=1 // pred_check
      _
    $region27: #{tpu_custom_call.1} parent=1 // pred_check_branch
      %57 = sbr.rel (0) target = $region29
    $region28: #{tpu_custom_call.1} parent=1 // pred_region
      %58 = dma.done [#allocation9], 4096
    $region29: #{tpu_custom_call.1} parent=1 // pred_fallthru
      _
    %p60 = scmp.eq.s32.totalorder 0, 0
    // Predicated region
    $region30: #{tpu_custom_call.1} parent=1 // pred_check
      %p61 = pneg %p60
    $region31: #{tpu_custom_call.1} parent=1 // pred_check_branch
      %63 = sbr.rel (%p61) target = $region33
    $region32: #{tpu_custom_call.1} parent=1 // pred_region
      %64 = vst [vmem:[#allocation2] sm:$0xff] 0.0
      %65 = vst [vmem:[#allocation3] sm:$0xff] 0.0
    $region33: #{tpu_custom_call.1} parent=1 // pred_fallthru
      _
    %v66 = vld [vmem:[#allocation5] sm:$0xf]
    %v67 = vld [vmem:[#allocation5 + $0x4] sm:$0xf]
    %v68 = vld [vmem:[#allocation5 + $0x8] sm:$0xf]
    %v69 = vld [vmem:[#allocation5 + $0xc] sm:$0xf]
    %v70 = vld [vmem:[#allocation5 + $0x10] sm:$0xf]
    %v71 = vld [vmem:[#allocation5 + $0x14] sm:$0xf]
    %v72 = vld [vmem:[#allocation5 + $0x18] sm:$0xf]
    %v73 = vld [vmem:[#allocation5 + $0x1c] sm:$0xf]
    %v74 = vld [vmem:[#allocation8] sm:$0xff]
    %v75 = vld [vmem:[#allocation8 + $0x8] sm:$0xff]
    %v76 = vld [vmem:[#allocation8 + $0x10] sm:$0xff]
    %v77 = vld [vmem:[#allocation8 + $0x18] sm:$0xff]
    %v78 = vld [vmem:[#allocation8 + $0x20] sm:$0xff]
    %v79 = vld [vmem:[#allocation8 + $0x28] sm:$0xff]
    %v80 = vld [vmem:[#allocation8 + $0x30] sm:$0xff]
    %v81 = vld [vmem:[#allocation8 + $0x38] sm:$0xff]
    %v82 = vld [vmem:[#allocation8 + $0x40] sm:$0xff]
    %v83 = vld [vmem:[#allocation8 + $0x48] sm:$0xff]
    %v84 = vld [vmem:[#allocation8 + $0x50] sm:$0xff]
    %v85 = vld [vmem:[#allocation8 + $0x58] sm:$0xff]
    %v86 = vld [vmem:[#allocation8 + $0x60] sm:$0xff]
    %v87 = vld [vmem:[#allocation8 + $0x68] sm:$0xff]
    %v88 = vld [vmem:[#allocation8 + $0x70] sm:$0xff]
    %v89 = vld [vmem:[#allocation8 + $0x78] sm:$0xff]
    %v90 = vld [vmem:[#allocation8 + $0x80] sm:$0xff]
    %v91 = vld [vmem:[#allocation8 + $0x88] sm:$0xff]
    %v92 = vld [vmem:[#allocation8 + $0x90] sm:$0xff]
    %v93 = vld [vmem:[#allocation8 + $0x98] sm:$0xff]
    %v94 = vld [vmem:[#allocation8 + $0xa0] sm:$0xff]
    %v95 = vld [vmem:[#allocation8 + $0xa8] sm:$0xff]
    %v96 = vld [vmem:[#allocation8 + $0xb0] sm:$0xff]
    %v97 = vld [vmem:[#allocation8 + $0xb8] sm:$0xff]
    %v98 = vld [vmem:[#allocation8 + $0xc0] sm:$0xff]
    %v99 = vld [vmem:[#allocation8 + $0xc8] sm:$0xff]
    %v100 = vld [vmem:[#allocation8 + $0xd0] sm:$0xff]
    %v101 = vld [vmem:[#allocation8 + $0xd8] sm:$0xff]
    %v102 = vld [vmem:[#allocation8 + $0xe0] sm:$0xff]
    %v103 = vld [vmem:[#allocation8 + $0xe8] sm:$0xff]
    %v104 = vld [vmem:[#allocation8 + $0xf0] sm:$0xff]
    %v105 = vld [vmem:[#allocation8 + $0xf8] sm:$0xff]
    %v106 = vld [vmem:[%s3] sm:$0xf]
    %v108 = vlaneseq
    %v109 = vshrl.u32 %v108, 7
    %v110 = vsub.s32 0, %v109
    %v111 = vrot.slane %v106, %v110
    %v112 = vlaneseq
    %v113 = vshrl.u32 %v112, 7
    %v114 = vsub.s32 1, %v113
    %v115 = vrot.slane %v106, %v114
    %v116 = vlaneseq
    %v117 = vshrl.u32 %v116, 7
    %v118 = vsub.s32 2, %v117
    %v119 = vrot.slane %v106, %v118
    %v120 = vlaneseq
    %v121 = vshrl.u32 %v120, 7
    %v122 = vsub.s32 3, %v121
    %v123 = vrot.slane %v106, %v122
    %v136 = vunpack.c.l.b16 %v66
    %v137 = vunpack.c.l.b16 %v67
    %v138 = vunpack.c.l.b16 %v68
    %v139 = vunpack.c.l.b16 %v69
    %v140 = vunpack.c.l.b16 %v70
    %v141 = vunpack.c.l.b16 %v71
    %v142 = vunpack.c.l.b16 %v72
    %v143 = vunpack.c.l.b16 %v73
    %v144 = vpack.c.b16 %v137, %v136
    %v145 = vpack.c.b16 %v139, %v138
    %v146 = vpack.c.b16 %v141, %v140
    %v147 = vpack.c.b16 %v143, %v142
    %v184 = vunpack.c.l.b16 %v74
    %v185 = vunpack.c.h.b16 %v74
    %v186 = vunpack.c.l.b16 %v75
    %v187 = vunpack.c.h.b16 %v75
    %v188 = vunpack.c.l.b16 %v76
    %v189 = vunpack.c.h.b16 %v76
    %v190 = vunpack.c.l.b16 %v77
    %v191 = vunpack.c.h.b16 %v77
    %v192 = vunpack.c.l.b16 %v78
    %v193 = vunpack.c.h.b16 %v78
    %v194 = vunpack.c.l.b16 %v79
    %v195 = vunpack.c.h.b16 %v79
    %v196 = vunpack.c.l.b16 %v80
    %v197 = vunpack.c.h.b16 %v80
    %v198 = vunpack.c.l.b16 %v81
    %v199 = vunpack.c.h.b16 %v81
    %v200 = vunpack.c.l.b16 %v82
    %v201 = vunpack.c.h.b16 %v82
    %v202 = vunpack.c.l.b16 %v83
    %v203 = vunpack.c.h.b16 %v83
    %v204 = vunpack.c.l.b16 %v84
    %v205 = vunpack.c.h.b16 %v84
    %v206 = vunpack.c.l.b16 %v85
    %v207 = vunpack.c.h.b16 %v85
    %v208 = vunpack.c.l.b16 %v86
    %v209 = vunpack.c.h.b16 %v86
    %v210 = vunpack.c.l.b16 %v87
    %v211 = vunpack.c.h.b16 %v87
    %v212 = vunpack.c.l.b16 %v88
    %v213 = vunpack.c.h.b16 %v88
    %v214 = vunpack.c.l.b16 %v89
    %v215 = vunpack.c.h.b16 %v89
    %v216 = vunpack.c.l.b16 %v90
    %v217 = vunpack.c.h.b16 %v90
    %v218 = vunpack.c.l.b16 %v91
    %v219 = vunpack.c.h.b16 %v91
    %v220 = vunpack.c.l.b16 %v92
    %v221 = vunpack.c.h.b16 %v92
    %v222 = vunpack.c.l.b16 %v93
    %v223 = vunpack.c.h.b16 %v93
    %v224 = vunpack.c.l.b16 %v94
    %v225 = vunpack.c.h.b16 %v94
    %v226 = vunpack.c.l.b16 %v95
    %v227 = vunpack.c.h.b16 %v95
    %v228 = vunpack.c.l.b16 %v96
    %v229 = vunpack.c.h.b16 %v96
    %v230 = vunpack.c.l.b16 %v97
    %v231 = vunpack.c.h.b16 %v97
    %v232 = vunpack.c.l.b16 %v98
    %v233 = vunpack.c.h.b16 %v98
    %v234 = vunpack.c.l.b16 %v99
    %v235 = vunpack.c.h.b16 %v99
    %v236 = vunpack.c.l.b16 %v100
    %v237 = vunpack.c.h.b16 %v100
    %v238 = vunpack.c.l.b16 %v101
    %v239 = vunpack.c.h.b16 %v101
    %v240 = vunpack.c.l.b16 %v102
    %v241 = vunpack.c.h.b16 %v102
    %v242 = vunpack.c.l.b16 %v103
    %v243 = vunpack.c.h.b16 %v103
    %v244 = vunpack.c.l.b16 %v104
    %v245 = vunpack.c.h.b16 %v104
    %v246 = vunpack.c.l.b16 %v105
    %v247 = vunpack.c.h.b16 %v105
    %v248 = vpack.c.b16 %v188, %v184
    %v249 = vpack.c.b16 %v189, %v185
    %v250 = vpack.c.b16 %v190, %v186
    %v251 = vpack.c.b16 %v191, %v187
    %v252 = vpack.c.b16 %v196, %v192
    %v253 = vpack.c.b16 %v197, %v193
    %v254 = vpack.c.b16 %v198, %v194
    %v255 = vpack.c.b16 %v199, %v195
    %v256 = vpack.c.b16 %v204, %v200
    %v257 = vpack.c.b16 %v205, %v201
    %v258 = vpack.c.b16 %v206, %v202
    %v259 = vpack.c.b16 %v207, %v203
    %v260 = vpack.c.b16 %v212, %v208
    %v261 = vpack.c.b16 %v213, %v209
    %v262 = vpack.c.b16 %v214, %v210
    %v263 = vpack.c.b16 %v215, %v211
    %v264 = vpack.c.b16 %v220, %v216
    %v265 = vpack.c.b16 %v221, %v217
    %v266 = vpack.c.b16 %v222, %v218
    %v267 = vpack.c.b16 %v223, %v219
    %v268 = vpack.c.b16 %v228, %v224
    %v269 = vpack.c.b16 %v229, %v225
    %v270 = vpack.c.b16 %v230, %v226
    %v271 = vpack.c.b16 %v231, %v227
    %v272 = vpack.c.b16 %v236, %v232
    %v273 = vpack.c.b16 %v237, %v233
    %v274 = vpack.c.b16 %v238, %v234
    %v275 = vpack.c.b16 %v239, %v235
    %v276 = vpack.c.b16 %v244, %v240
    %v277 = vpack.c.b16 %v245, %v241
    %v278 = vpack.c.b16 %v246, %v242
    %v279 = vpack.c.b16 %v247, %v243
    %312 = vmatprep.subr.bf16.mxu0 %v277
    %313 = vmatpush1.bf16.msra.mxu0 %v276
    %314 = vmatprep.subr.bf16.mxu0 %v273
    %315 = vmatpush1.bf16.msra.mxu0 %v272
    %316 = vmatprep.subr.bf16.mxu0 %v269
    %317 = vmatpush1.bf16.msra.mxu0 %v268
    %318 = vmatprep.subr.bf16.mxu0 %v265
    %319 = vmatpush1.bf16.msra.mxu0 %v264
    %320 = vmatprep.subr.bf16.mxu0 %v261
    %321 = vmatpush1.bf16.msra.mxu0 %v260
    %322 = vmatprep.subr.bf16.mxu0 %v257
    %323 = vmatpush1.bf16.msra.mxu0 %v256
    %324 = vmatprep.subr.bf16.mxu0 %v253
    %325 = vmatpush1.bf16.msra.mxu0 %v252
    %326 = vmatprep.subr.bf16.mxu0 %v249
    %327 = vmatpush1.bf16.msra.mxu0 %v248
    %328 = vmatprep.subr.bf16.mxu0 0
    %329 = vmatpush2.bf16.msra.mxu0 0
    %330 = vmatprep.subr.bf16.mxu0 0
    %331 = vmatpush2.bf16.msra.mxu0 0
    %332 = vmatprep.subr.bf16.mxu0 0
    %333 = vmatpush2.bf16.msra.mxu0 0
    %334 = vmatprep.subr.bf16.mxu0 0
    %335 = vmatpush2.bf16.msra.mxu0 0
    %336 = vmatprep.subr.bf16.mxu0 0
    %337 = vmatpush2.bf16.msra.mxu0 0
    %338 = vmatprep.subr.bf16.mxu0 0
    %339 = vmatpush2.bf16.msra.mxu0 0
    %340 = vmatprep.subr.bf16.mxu0 0
    %341 = vmatpush2.bf16.msra.mxu0 0
    %342 = vmatprep.subr.bf16.mxu0 0
    %343 = vmatpush2.bf16.msra.mxu0 0
    %344 = vmatprep.mubr.bf16.mxu0 0
    %345 = vmatmul.mubr.bf16.gmra.mxu0 %v144
    %v346 = vpop.f32.mrf.mxu0
    %v347 = vadd.f32 %v111, %v346
    %v348 = vpop.f32.mrf.mxu0
    %v349 = vadd.f32 %v115, %v348
    %v350 = vpop.f32.mrf.mxu0
    %v351 = vadd.f32 %v111, %v350
    %v352 = vpop.f32.mrf.mxu0
    %v353 = vadd.f32 %v115, %v352
    %354 = vmatprep.mubr.bf16.mxu0 0
    %355 = vmatmul.mubr.bf16.gmra.mxu0 %v145
    %v356 = vpop.f32.mrf.mxu0
    %v357 = vadd.f32 %v111, %v356
    %v358 = vpop.f32.mrf.mxu0
    %v359 = vadd.f32 %v115, %v358
    %v360 = vpop.f32.mrf.mxu0
    %v361 = vadd.f32 %v111, %v360
    %v362 = vpop.f32.mrf.mxu0
    %v363 = vadd.f32 %v115, %v362
    %364 = vmatprep.mubr.bf16.mxu0 0
    %365 = vmatmul.mubr.bf16.gmra.mxu0 %v146
    %v366 = vpop.f32.mrf.mxu0
    %v367 = vadd.f32 %v111, %v366
    %v368 = vpop.f32.mrf.mxu0
    %v369 = vadd.f32 %v115, %v368
    %v370 = vpop.f32.mrf.mxu0
    %v371 = vadd.f32 %v111, %v370
    %v372 = vpop.f32.mrf.mxu0
    %v373 = vadd.f32 %v115, %v372
    %374 = vmatprep.mubr.bf16.mxu0 0
    %375 = vmatmul.mubr.bf16.gmra.mxu0 %v147
    %v376 = vpop.f32.mrf.mxu0
    %v377 = vadd.f32 %v111, %v376
    %v378 = vpop.f32.mrf.mxu0
    %v379 = vadd.f32 %v115, %v378
    %v380 = vpop.f32.mrf.mxu0
    %v381 = vadd.f32 %v111, %v380
    %v382 = vpop.f32.mrf.mxu0
    %v383 = vadd.f32 %v115, %v382
    %384 = vdwg.mxu0
    %385 = vmatprep.subr.bf16.mxu0 %v279
    %386 = vmatpush1.bf16.msra.mxu0 %v278
    %387 = vmatprep.subr.bf16.mxu0 %v275
    %388 = vmatpush1.bf16.msra.mxu0 %v274
    %389 = vmatprep.subr.bf16.mxu0 %v271
    %390 = vmatpush1.bf16.msra.mxu0 %v270
    %391 = vmatprep.subr.bf16.mxu0 %v267
    %392 = vmatpush1.bf16.msra.mxu0 %v266
    %393 = vmatprep.subr.bf16.mxu0 %v263
    %394 = vmatpush1.bf16.msra.mxu0 %v262
    %395 = vmatprep.subr.bf16.mxu0 %v259
    %396 = vmatpush1.bf16.msra.mxu0 %v258
    %397 = vmatprep.subr.bf16.mxu0 %v255
    %398 = vmatpush1.bf16.msra.mxu0 %v254
    %399 = vmatprep.subr.bf16.mxu0 %v251
    %400 = vmatpush1.bf16.msra.mxu0 %v250
    %401 = vmatprep.subr.bf16.mxu0 0
    %402 = vmatpush2.bf16.msra.mxu0 0
    %403 = vmatprep.subr.bf16.mxu0 0
    %404 = vmatpush2.bf16.msra.mxu0 0
    %405 = vmatprep.subr.bf16.mxu0 0
    %406 = vmatpush2.bf16.msra.mxu0 0
    %407 = vmatprep.subr.bf16.mxu0 0
    %408 = vmatpush2.bf16.msra.mxu0 0
    %409 = vmatprep.subr.bf16.mxu0 0
    %410 = vmatpush2.bf16.msra.mxu0 0
    %411 = vmatprep.subr.bf16.mxu0 0
    %412 = vmatpush2.bf16.msra.mxu0 0
    %413 = vmatprep.subr.bf16.mxu0 0
    %414 = vmatpush2.bf16.msra.mxu0 0
    %415 = vmatprep.subr.bf16.mxu0 0
    %416 = vmatpush2.bf16.msra.mxu0 0
    %417 = vmatprep.mubr.bf16.mxu0 0
    %418 = vmatmul.mubr.bf16.gmra.mxu0 %v144
    %v419 = vpop.f32.mrf.mxu0
    %v420 = vadd.f32 %v119, %v419
    %v421 = vpop.f32.mrf.mxu0
    %v422 = vadd.f32 %v123, %v421
    %v423 = vpop.f32.mrf.mxu0
    %v424 = vadd.f32 %v119, %v423
    %v425 = vpop.f32.mrf.mxu0
    %v426 = vadd.f32 %v123, %v425
    %427 = vmatprep.mubr.bf16.mxu0 0
    %428 = vmatmul.mubr.bf16.gmra.mxu0 %v145
    %v429 = vpop.f32.mrf.mxu0
    %v430 = vadd.f32 %v119, %v429
    %v431 = vpop.f32.mrf.mxu0
    %v432 = vadd.f32 %v123, %v431
    %v433 = vpop.f32.mrf.mxu0
    %v434 = vadd.f32 %v119, %v433
    %v435 = vpop.f32.mrf.mxu0
    %v436 = vadd.f32 %v123, %v435
    %437 = vmatprep.mubr.bf16.mxu0 0
    %438 = vmatmul.mubr.bf16.gmra.mxu0 %v146
    %v439 = vpop.f32.mrf.mxu0
    %v440 = vadd.f32 %v119, %v439
    %v441 = vpop.f32.mrf.mxu0
    %v442 = vadd.f32 %v123, %v441
    %v443 = vpop.f32.mrf.mxu0
    %v444 = vadd.f32 %v119, %v443
    %v445 = vpop.f32.mrf.mxu0
    %v446 = vadd.f32 %v123, %v445
    %447 = vmatprep.mubr.bf16.mxu0 0
    %448 = vmatmul.mubr.bf16.gmra.mxu0 %v147
    %v449 = vpop.f32.mrf.mxu0
    %v450 = vadd.f32 %v119, %v449
    %v451 = vpop.f32.mrf.mxu0
    %v452 = vadd.f32 %v123, %v451
    %v453 = vpop.f32.mrf.mxu0
    %v454 = vadd.f32 %v119, %v453
    %v455 = vpop.f32.mrf.mxu0
    %v456 = vadd.f32 %v123, %v455
    %457 = vdwg.mxu0
    %458 = vst [vmem:[#allocation4] sm:$0xff] %v347
    %459 = vst [vmem:[#allocation4 + $0x8] sm:$0xff] %v349
    %460 = vst [vmem:[#allocation4 + $0x10] sm:$0xff] %v420
    %461 = vst [vmem:[#allocation4 + $0x18] sm:$0xff] %v422
    %462 = vst [vmem:[#allocation4 + $0x20] sm:$0xff] %v351
    %463 = vst [vmem:[#allocation4 + $0x28] sm:$0xff] %v353
    %464 = vst [vmem:[#allocation4 + $0x30] sm:$0xff] %v424
    %465 = vst [vmem:[#allocation4 + $0x38] sm:$0xff] %v426
    %466 = vst [vmem:[#allocation4 + $0x40] sm:$0xff] %v357
    %467 = vst [vmem:[#allocation4 + $0x48] sm:$0xff] %v359
    %468 = vst [vmem:[#allocation4 + $0x50] sm:$0xff] %v430
    %469 = vst [vmem:[#allocation4 + $0x58] sm:$0xff] %v432
    %470 = vst [vmem:[#allocation4 + $0x60] sm:$0xff] %v361
    %471 = vst [vmem:[#allocation4 + $0x68] sm:$0xff] %v363
    %472 = vst [vmem:[#allocation4 + $0x70] sm:$0xff] %v434
    %473 = vst [vmem:[#allocation4 + $0x78] sm:$0xff] %v436
    %474 = vst [vmem:[#allocation4 + $0x80] sm:$0xff] %v367
    %475 = vst [vmem:[#allocation4 + $0x88] sm:$0xff] %v369
    %476 = vst [vmem:[#allocation4 + $0x90] sm:$0xff] %v440
    %477 = vst [vmem:[#allocation4 + $0x98] sm:$0xff] %v442
    %478 = vst [vmem:[#allocation4 + $0xa0] sm:$0xff] %v371
    %479 = vst [vmem:[#allocation4 + $0xa8] sm:$0xff] %v373
    %480 = vst [vmem:[#allocation4 + $0xb0] sm:$0xff] %v444
    %481 = vst [vmem:[#allocation4 + $0xb8] sm:$0xff] %v446
    %482 = vst [vmem:[#allocation4 + $0xc0] sm:$0xff] %v377
    %483 = vst [vmem:[#allocation4 + $0xc8] sm:$0xff] %v379
    %484 = vst [vmem:[#allocation4 + $0xd0] sm:$0xff] %v450
    %485 = vst [vmem:[#allocation4 + $0xd8] sm:$0xff] %v452
    %486 = vst [vmem:[#allocation4 + $0xe0] sm:$0xff] %v381
    %487 = vst [vmem:[#allocation4 + $0xe8] sm:$0xff] %v383
    %488 = vst [vmem:[#allocation4 + $0xf0] sm:$0xff] %v454
    %489 = vst [vmem:[#allocation4 + $0xf8] sm:$0xff] %v456
    %v490 = vld [vmem:[#allocation2] sm:$0xff]
    %v491 = vld [vmem:[#allocation3] sm:$0xff]
    %s492 = smul.u32 0, 4
    %s493 = smul.addr %s492, 8
    %s494 = scalar_lea.vmem [#allocation4], %s493
    %v495 = vld [vmem:[%s494] sm:$0xff]
    %v496 = vld [vmem:[%s494 + $0x8] sm:$0xff]
    %v497 = vld [vmem:[%s494 + $0x10] sm:$0xff]
    %v498 = vld [vmem:[%s494 + $0x18] sm:$0xff]
    %v499 = vpack.c.bf16 %v490, %v490
    %v500 = vld [vmem:[#allocation10] sm:$0xff]
    %v501 = vld [vmem:[#allocation10 + $0x8] sm:$0xff]
    %v502 = vld [vmem:[#allocation10 + $0x10] sm:$0xff]
    %v503 = vld [vmem:[#allocation10 + $0x18] sm:$0xff]
    %v504 = vld [vmem:[#allocation10 + $0x20] sm:$0xff]
    %v505 = vld [vmem:[#allocation10 + $0x28] sm:$0xff]
    %v506 = vld [vmem:[#allocation10 + $0x30] sm:$0xff]
    %v507 = vld [vmem:[#allocation10 + $0x38] sm:$0xff]
    %v508 = vld [vmem:[#allocation10 + $0x40] sm:$0xff]
    %v509 = vld [vmem:[#allocation10 + $0x48] sm:$0xff]
    %v510 = vld [vmem:[#allocation10 + $0x50] sm:$0xff]
    %v511 = vld [vmem:[#allocation10 + $0x58] sm:$0xff]
    %v512 = vld [vmem:[#allocation10 + $0x60] sm:$0xff]
    %v513 = vld [vmem:[#allocation10 + $0x68] sm:$0xff]
    %v514 = vld [vmem:[#allocation10 + $0x70] sm:$0xff]
    %v515 = vld [vmem:[#allocation10 + $0x78] sm:$0xff]
    %v516 = vld [vmem:[#allocation10 + $0x80] sm:$0xff]
    %v517 = vld [vmem:[#allocation10 + $0x88] sm:$0xff]
    %v518 = vld [vmem:[#allocation10 + $0x90] sm:$0xff]
    %v519 = vld [vmem:[#allocation10 + $0x98] sm:$0xff]
    %v520 = vld [vmem:[#allocation10 + $0xa0] sm:$0xff]
    %v521 = vld [vmem:[#allocation10 + $0xa8] sm:$0xff]
    %v522 = vld [vmem:[#allocation10 + $0xb0] sm:$0xff]
    %v523 = vld [vmem:[#allocation10 + $0xb8] sm:$0xff]
    %v524 = vld [vmem:[#allocation10 + $0xc0] sm:$0xff]
    %v525 = vld [vmem:[#allocation10 + $0xc8] sm:$0xff]
    %v526 = vld [vmem:[#allocation10 + $0xd0] sm:$0xff]
    %v527 = vld [vmem:[#allocation10 + $0xd8] sm:$0xff]
    %v528 = vld [vmem:[#allocation10 + $0xe0] sm:$0xff]
    %v529 = vld [vmem:[#allocation10 + $0xe8] sm:$0xff]
    %v530 = vld [vmem:[#allocation10 + $0xf0] sm:$0xff]
    %v531 = vld [vmem:[#allocation10 + $0xf8] sm:$0xff]
    %v564 = vunpack.c.l.b16 %v500
    %v565 = vunpack.c.h.b16 %v500
    %v566 = vunpack.c.l.b16 %v501
    %v567 = vunpack.c.h.b16 %v501
    %v568 = vunpack.c.l.b16 %v502
    %v569 = vunpack.c.h.b16 %v502
    %v570 = vunpack.c.l.b16 %v503
    %v571 = vunpack.c.h.b16 %v503
    %v572 = vunpack.c.l.b16 %v504
    %v573 = vunpack.c.h.b16 %v504
    %v574 = vunpack.c.l.b16 %v505
    %v575 = vunpack.c.h.b16 %v505
    %v576 = vunpack.c.l.b16 %v506
    %v577 = vunpack.c.h.b16 %v506
    %v578 = vunpack.c.l.b16 %v507
    %v579 = vunpack.c.h.b16 %v507
    %v580 = vunpack.c.l.b16 %v508
    %v581 = vunpack.c.h.b16 %v508
    %v582 = vunpack.c.l.b16 %v509
    %v583 = vunpack.c.h.b16 %v509
    %v584 = vunpack.c.l.b16 %v510
    %v585 = vunpack.c.h.b16 %v510
    %v586 = vunpack.c.l.b16 %v511
    %v587 = vunpack.c.h.b16 %v511
    %v588 = vunpack.c.l.b16 %v512
    %v589 = vunpack.c.h.b16 %v512
    %v590 = vunpack.c.l.b16 %v513
    %v591 = vunpack.c.h.b16 %v513
    %v592 = vunpack.c.l.b16 %v514
    %v593 = vunpack.c.h.b16 %v514
    %v594 = vunpack.c.l.b16 %v515
    %v595 = vunpack.c.h.b16 %v515
    %v596 = vunpack.c.l.b16 %v516
    %v597 = vunpack.c.h.b16 %v516
    %v598 = vunpack.c.l.b16 %v517
    %v599 = vunpack.c.h.b16 %v517
    %v600 = vunpack.c.l.b16 %v518
    %v601 = vunpack.c.h.b16 %v518
    %v602 = vunpack.c.l.b16 %v519
    %v603 = vunpack.c.h.b16 %v519
    %v604 = vunpack.c.l.b16 %v520
    %v605 = vunpack.c.h.b16 %v520
    %v606 = vunpack.c.l.b16 %v521
    %v607 = vunpack.c.h.b16 %v521
    %v608 = vunpack.c.l.b16 %v522
    %v609 = vunpack.c.h.b16 %v522
    %v610 = vunpack.c.l.b16 %v523
    %v611 = vunpack.c.h.b16 %v523
    %v612 = vunpack.c.l.b16 %v524
    %v613 = vunpack.c.h.b16 %v524
    %v614 = vunpack.c.l.b16 %v525
    %v615 = vunpack.c.h.b16 %v525
    %v616 = vunpack.c.l.b16 %v526
    %v617 = vunpack.c.h.b16 %v526
    %v618 = vunpack.c.l.b16 %v527
    %v619 = vunpack.c.h.b16 %v527
    %v620 = vunpack.c.l.b16 %v528
    %v621 = vunpack.c.h.b16 %v528
    %v622 = vunpack.c.l.b16 %v529
    %v623 = vunpack.c.h.b16 %v529
    %v624 = vunpack.c.l.b16 %v530
    %v625 = vunpack.c.h.b16 %v530
    %v626 = vunpack.c.l.b16 %v531
    %v627 = vunpack.c.h.b16 %v531
    %v628 = vpack.c.b16 %v568, %v564
    %v629 = vpack.c.b16 %v569, %v565
    %v630 = vpack.c.b16 %v570, %v566
    %v631 = vpack.c.b16 %v571, %v567
    %v632 = vpack.c.b16 %v576, %v572
    %v633 = vpack.c.b16 %v577, %v573
    %v634 = vpack.c.b16 %v578, %v574
    %v635 = vpack.c.b16 %v579, %v575
    %v636 = vpack.c.b16 %v584, %v580
    %v637 = vpack.c.b16 %v585, %v581
    %v638 = vpack.c.b16 %v586, %v582
    %v639 = vpack.c.b16 %v587, %v583
    %v640 = vpack.c.b16 %v592, %v588
    %v641 = vpack.c.b16 %v593, %v589
    %v642 = vpack.c.b16 %v594, %v590
    %v643 = vpack.c.b16 %v595, %v591
    %v644 = vpack.c.b16 %v600, %v596
    %v645 = vpack.c.b16 %v601, %v597
    %v646 = vpack.c.b16 %v602, %v598
    %v647 = vpack.c.b16 %v603, %v599
    %v648 = vpack.c.b16 %v608, %v604
    %v649 = vpack.c.b16 %v609, %v605
    %v650 = vpack.c.b16 %v610, %v606
    %v651 = vpack.c.b16 %v611, %v607
    %v652 = vpack.c.b16 %v616, %v612
    %v653 = vpack.c.b16 %v617, %v613
    %v654 = vpack.c.b16 %v618, %v614
    %v655 = vpack.c.b16 %v619, %v615
    %v656 = vpack.c.b16 %v624, %v620
    %v657 = vpack.c.b16 %v625, %v621
    %v658 = vpack.c.b16 %v626, %v622
    %v659 = vpack.c.b16 %v627, %v623
    %692 = vmatprep.subr.bf16.mxu0 %v657
    %693 = vmatpush1.bf16.msra.mxu0 %v656
    %694 = vmatprep.subr.bf16.mxu0 %v653
    %695 = vmatpush1.bf16.msra.mxu0 %v652
    %696 = vmatprep.subr.bf16.mxu0 %v649
    %697 = vmatpush1.bf16.msra.mxu0 %v648
    %698 = vmatprep.subr.bf16.mxu0 %v645
    %699 = vmatpush1.bf16.msra.mxu0 %v644
    %700 = vmatprep.subr.bf16.mxu0 %v641
    %701 = vmatpush1.bf16.msra.mxu0 %v640
    %702 = vmatprep.subr.bf16.mxu0 %v637
    %703 = vmatpush1.bf16.msra.mxu0 %v636
    %704 = vmatprep.subr.bf16.mxu0 %v633
    %705 = vmatpush1.bf16.msra.mxu0 %v632
    %706 = vmatprep.subr.bf16.mxu0 %v629
    %707 = vmatpush1.bf16.msra.mxu0 %v628
    %708 = vmatprep.subr.bf16.mxu0 0
    %709 = vmatpush2.bf16.msra.mxu0 0
    %710 = vmatprep.subr.bf16.mxu0 0
    %711 = vmatpush2.bf16.msra.mxu0 0
    %712 = vmatprep.subr.bf16.mxu0 0
    %713 = vmatpush2.bf16.msra.mxu0 0
    %714 = vmatprep.subr.bf16.mxu0 0
    %715 = vmatpush2.bf16.msra.mxu0 0
    %716 = vmatprep.subr.bf16.mxu0 0
    %717 = vmatpush2.bf16.msra.mxu0 0
    %718 = vmatprep.subr.bf16.mxu0 0
    %719 = vmatpush2.bf16.msra.mxu0 0
    %720 = vmatprep.subr.bf16.mxu0 0
    %721 = vmatpush2.bf16.msra.mxu0 0
    %722 = vmatprep.subr.bf16.mxu0 0
    %723 = vmatpush2.bf16.msra.mxu0 0
    %724 = vmatprep.mubr.bf16.mxu0 0
    %725 = vmatmul.mubr.bf16.gmra.mxu0 %v499
    %v726 = vpop.f32.mrf.mxu0
    %v727 = vadd.f32 0.0, %v726
    %v728 = vpop.f32.mrf.mxu0
    %v729 = vadd.f32 0.0, %v728
    %v730 = vpop.f32.mrf.mxu0
    %v731 = vpop.f32.mrf.mxu0
    %732 = vdwg.mxu0
    %733 = vmatprep.subr.bf16.mxu0 %v659
    %734 = vmatpush1.bf16.msra.mxu0 %v658
    %735 = vmatprep.subr.bf16.mxu0 %v655
    %736 = vmatpush1.bf16.msra.mxu0 %v654
    %737 = vmatprep.subr.bf16.mxu0 %v651
    %738 = vmatpush1.bf16.msra.mxu0 %v650
    %739 = vmatprep.subr.bf16.mxu0 %v647
    %740 = vmatpush1.bf16.msra.mxu0 %v646
    %741 = vmatprep.subr.bf16.mxu0 %v643
    %742 = vmatpush1.bf16.msra.mxu0 %v642
    %743 = vmatprep.subr.bf16.mxu0 %v639
    %744 = vmatpush1.bf16.msra.mxu0 %v638
    %745 = vmatprep.subr.bf16.mxu0 %v635
    %746 = vmatpush1.bf16.msra.mxu0 %v634
    %747 = vmatprep.subr.bf16.mxu0 %v631
    %748 = vmatpush1.bf16.msra.mxu0 %v630
    %749 = vmatprep.subr.bf16.mxu0 0
    %750 = vmatpush2.bf16.msra.mxu0 0
    %751 = vmatprep.subr.bf16.mxu0 0
    %752 = vmatpush2.bf16.msra.mxu0 0
    %753 = vmatprep.subr.bf16.mxu0 0
    %754 = vmatpush2.bf16.msra.mxu0 0
    %755 = vmatprep.subr.bf16.mxu0 0
    %756 = vmatpush2.bf16.msra.mxu0 0
    %757 = vmatprep.subr.bf16.mxu0 0
    %758 = vmatpush2.bf16.msra.mxu0 0
    %759 = vmatprep.subr.bf16.mxu0 0
    %760 = vmatpush2.bf16.msra.mxu0 0
    %761 = vmatprep.subr.bf16.mxu0 0
    %762 = vmatpush2.bf16.msra.mxu0 0
    %763 = vmatprep.subr.bf16.mxu0 0
    %764 = vmatpush2.bf16.msra.mxu0 0
    %765 = vmatprep.mubr.bf16.mxu0 0
    %766 = vmatmul.mubr.bf16.gmra.mxu0 %v499
    %v767 = vpop.f32.mrf.mxu0
    %v768 = vadd.f32 0.0, %v767
    %v769 = vpop.f32.mrf.mxu0
    %v770 = vadd.f32 0.0, %v769
    %v771 = vpop.f32.mrf.mxu0
    %v772 = vpop.f32.mrf.mxu0
    %773 = vdwg.mxu0
    %v774 = vadd.f32 %v495, %v727
    %v775 = vadd.f32 %v496, %v729
    %v776 = vadd.f32 %v497, %v768
    %v777 = vadd.f32 %v498, %v770
    %v778 = vxor.u32 %v774, 2147483648
    %v779 = vmul.f32 %v778, 1.442695
    %v780 = vpow.pop %v779
    %v781 = vadd.f32 %v780, 1.0
    %v782 = vrcp.pop %v781
    %v783 = vmul.f32 1.0, %v782
    %v784 = vxor.u32 %v775, 2147483648
    %v785 = vmul.f32 %v784, 1.442695
    %v786 = vpow.pop %v785
    %v787 = vadd.f32 %v786, 1.0
    %v788 = vrcp.pop %v787
    %v789 = vmul.f32 1.0, %v788
    %v790 = vtanh.pop %v776
    %v791 = vxor.u32 %v777, 2147483648
    %v792 = vmul.f32 %v791, 1.442695
    %v793 = vpow.pop %v792
    %v794 = vadd.f32 %v793, 1.0
    %v795 = vrcp.pop %v794
    %v796 = vmul.f32 1.0, %v795
    %v797 = vmul.f32 %v789, %v491
    %v798 = vmul.f32 %v783, %v790
    %v799 = vadd.f32 %v797, %v798
    %v800 = vtanh.pop %v799
    %v801 = vmul.f32 %v796, %v800
    %v802 = vpack.c.bf16 %v801, %v801
    %803 = vst [vmem:[#allocation11] sm:$0xf] %v802
    %s804 = smul.u32 1, 4
    %s805 = smul.addr %s804, 8
    %s806 = scalar_lea.vmem [#allocation4], %s805
    %v807 = vld [vmem:[%s806] sm:$0xff]
    %v808 = vld [vmem:[%s806 + $0x8] sm:$0xff]
    %v809 = vld [vmem:[%s806 + $0x10] sm:$0xff]
    %v810 = vld [vmem:[%s806 + $0x18] sm:$0xff]
    %v811 = vld [vmem:[#allocation10] sm:$0xff]
    %v812 = vld [vmem:[#allocation10 + $0x8] sm:$0xff]
    %v813 = vld [vmem:[#allocation10 + $0x10] sm:$0xff]
    %v814 = vld [vmem:[#allocation10 + $0x18] sm:$0xff]
    %v815 = vld [vmem:[#allocation10 + $0x20] sm:$0xff]
    %v816 = vld [vmem:[#allocation10 + $0x28] sm:$0xff]
    %v817 = vld [vmem:[#allocation10 + $0x30] sm:$0xff]
    %v818 = vld [vmem:[#allocation10 + $0x38] sm:$0xff]
    %v819 = vld [vmem:[#allocation10 + $0x40] sm:$0xff]
    %v820 = vld [vmem:[#allocation10 + $0x48] sm:$0xff]
    %v821 = vld [vmem:[#allocation10 + $0x50] sm:$0xff]
    %v822 = vld [vmem:[#allocation10 + $0x58] sm:$0xff]
    %v823 = vld [vmem:[#allocation10 + $0x60] sm:$0xff]
    %v824 = vld [vmem:[#allocation10 + $0x68] sm:$0xff]
    %v825 = vld [vmem:[#allocation10 + $0x70] sm:$0xff]
    %v826 = vld [vmem:[#allocation10 + $0x78] sm:$0xff]
    %v827 = vld [vmem:[#allocation10 + $0x80] sm:$0xff]
    %v828 = vld [vmem:[#allocation10 + $0x88] sm:$0xff]
    %v829 = vld [vmem:[#allocation10 + $0x90] sm:$0xff]
    %v830 = vld [vmem:[#allocation10 + $0x98] sm:$0xff]
    %v831 = vld [vmem:[#allocation10 + $0xa0] sm:$0xff]
    %v832 = vld [vmem:[#allocation10 + $0xa8] sm:$0xff]
    %v833 = vld [vmem:[#allocation10 + $0xb0] sm:$0xff]
    %v834 = vld [vmem:[#allocation10 + $0xb8] sm:$0xff]
    %v835 = vld [vmem:[#allocation10 + $0xc0] sm:$0xff]
    %v836 = vld [vmem:[#allocation10 + $0xc8] sm:$0xff]
    %v837 = vld [vmem:[#allocation10 + $0xd0] sm:$0xff]
    %v838 = vld [vmem:[#allocation10 + $0xd8] sm:$0xff]
    %v839 = vld [vmem:[#allocation10 + $0xe0] sm:$0xff]
    %v840 = vld [vmem:[#allocation10 + $0xe8] sm:$0xff]
    %v841 = vld [vmem:[#allocation10 + $0xf0] sm:$0xff]
    %v842 = vld [vmem:[#allocation10 + $0xf8] sm:$0xff]
    %v875 = vunpack.c.l.b16 %v811
    %v876 = vunpack.c.h.b16 %v811
    %v877 = vunpack.c.l.b16 %v812
    %v878 = vunpack.c.h.b16 %v812
    %v879 = vunpack.c.l.b16 %v813
    %v880 = vunpack.c.h.b16 %v813
    %v881 = vunpack.c.l.b16 %v814
    %v882 = vunpack.c.h.b16 %v814
    %v883 = vunpack.c.l.b16 %v815
    %v884 = vunpack.c.h.b16 %v815
    %v885 = vunpack.c.l.b16 %v816
    %v886 = vunpack.c.h.b16 %v816
    %v887 = vunpack.c.l.b16 %v817
    %v888 = vunpack.c.h.b16 %v817
    %v889 = vunpack.c.l.b16 %v818
    %v890 = vunpack.c.h.b16 %v818
    %v891 = vunpack.c.l.b16 %v819
    %v892 = vunpack.c.h.b16 %v819
    %v893 = vunpack.c.l.b16 %v820
    %v894 = vunpack.c.h.b16 %v820
    %v895 = vunpack.c.l.b16 %v821
    %v896 = vunpack.c.h.b16 %v821
    %v897 = vunpack.c.l.b16 %v822
    %v898 = vunpack.c.h.b16 %v822
    %v899 = vunpack.c.l.b16 %v823
    %v900 = vunpack.c.h.b16 %v823
    %v901 = vunpack.c.l.b16 %v824
    %v902 = vunpack.c.h.b16 %v824
    %v903 = vunpack.c.l.b16 %v825
    %v904 = vunpack.c.h.b16 %v825
    %v905 = vunpack.c.l.b16 %v826
    %v906 = vunpack.c.h.b16 %v826
    %v907 = vunpack.c.l.b16 %v827
    %v908 = vunpack.c.h.b16 %v827
    %v909 = vunpack.c.l.b16 %v828
    %v910 = vunpack.c.h.b16 %v828
    %v911 = vunpack.c.l.b16 %v829
    %v912 = vunpack.c.h.b16 %v829
    %v913 = vunpack.c.l.b16 %v830
    %v914 = vunpack.c.h.b16 %v830
    %v915 = vunpack.c.l.b16 %v831
    %v916 = vunpack.c.h.b16 %v831
    %v917 = vunpack.c.l.b16 %v832
    %v918 = vunpack.c.h.b16 %v832
    %v919 = vunpack.c.l.b16 %v833
    %v920 = vunpack.c.h.b16 %v833
    %v921 = vunpack.c.l.b16 %v834
    %v922 = vunpack.c.h.b16 %v834
    %v923 = vunpack.c.l.b16 %v835
    %v924 = vunpack.c.h.b16 %v835
    %v925 = vunpack.c.l.b16 %v836
    %v926 = vunpack.c.h.b16 %v836
    %v927 = vunpack.c.l.b16 %v837
    %v928 = vunpack.c.h.b16 %v837
    %v929 = vunpack.c.l.b16 %v838
    %v930 = vunpack.c.h.b16 %v838
    %v931 = vunpack.c.l.b16 %v839
    %v932 = vunpack.c.h.b16 %v839
    %v933 = vunpack.c.l.b16 %v840
    %v934 = vunpack.c.h.b16 %v840
    %v935 = vunpack.c.l.b16 %v841
    %v936 = vunpack.c.h.b16 %v841
    %v937 = vunpack.c.l.b16 %v842
    %v938 = vunpack.c.h.b16 %v842
    %v939 = vpack.c.b16 %v879, %v875
    %v940 = vpack.c.b16 %v880, %v876
    %v941 = vpack.c.b16 %v881, %v877
    %v942 = vpack.c.b16 %v882, %v878
    %v943 = vpack.c.b16 %v887, %v883
    %v944 = vpack.c.b16 %v888, %v884
    %v945 = vpack.c.b16 %v889, %v885
    %v946 = vpack.c.b16 %v890, %v886
    %v947 = vpack.c.b16 %v895, %v891
    %v948 = vpack.c.b16 %v896, %v892
    %v949 = vpack.c.b16 %v897, %v893
    %v950 = vpack.c.b16 %v898, %v894
    %v951 = vpack.c.b16 %v903, %v899
    %v952 = vpack.c.b16 %v904, %v900
    %v953 = vpack.c.b16 %v905, %v901
    %v954 = vpack.c.b16 %v906, %v902
    %v955 = vpack.c.b16 %v911, %v907
    %v956 = vpack.c.b16 %v912, %v908
    %v957 = vpack.c.b16 %v913, %v909
    %v958 = vpack.c.b16 %v914, %v910
    %v959 = vpack.c.b16 %v919, %v915
    %v960 = vpack.c.b16 %v920, %v916
    %v961 = vpack.c.b16 %v921, %v917
    %v962 = vpack.c.b16 %v922, %v918
    %v963 = vpack.c.b16 %v927, %v923
    %v964 = vpack.c.b16 %v928, %v924
    %v965 = vpack.c.b16 %v929, %v925
    %v966 = vpack.c.b16 %v930, %v926
    %v967 = vpack.c.b16 %v935, %v931
    %v968 = vpack.c.b16 %v936, %v932
    %v969 = vpack.c.b16 %v937, %v933
    %v970 = vpack.c.b16 %v938, %v934
    %1003 = vmatprep.subr.bf16.mxu0 %v968
    %1004 = vmatpush1.bf16.msra.mxu0 %v967
    %1005 = vmatprep.subr.bf16.mxu0 %v964
    %1006 = vmatpush1.bf16.msra.mxu0 %v963
    %1007 = vmatprep.subr.bf16.mxu0 %v960
    %1008 = vmatpush1.bf16.msra.mxu0 %v959
    %1009 = vmatprep.subr.bf16.mxu0 %v956
    %1010 = vmatpush1.bf16.msra.mxu0 %v955
    %1011 = vmatprep.subr.bf16.mxu0 %v952
    %1012 = vmatpush1.bf16.msra.mxu0 %v951
    %1013 = vmatprep.subr.bf16.mxu0 %v948
    %1014 = vmatpush1.bf16.msra.mxu0 %v947
    %1015 = vmatprep.subr.bf16.mxu0 %v944
    %1016 = vmatpush1.bf16.msra.mxu0 %v943
    %1017 = vmatprep.subr.bf16.mxu0 %v940
    %1018 = vmatpush1.bf16.msra.mxu0 %v939
    %1019 = vmatprep.subr.bf16.mxu0 0
    %1020 = vmatpush2.bf16.msra.mxu0 0
    %1021 = vmatprep.subr.bf16.mxu0 0
    %1022 = vmatpush2.bf16.msra.mxu0 0
    %1023 = vmatprep.subr.bf16.mxu0 0
    %1024 = vmatpush2.bf16.msra.mxu0 0
    %1025 = vmatprep.subr.bf16.mxu0 0
    %1026 = vmatpush2.bf16.msra.mxu0 0
    %1027 = vmatprep.subr.bf16.mxu0 0
    %1028 = vmatpush2.bf16.msra.mxu0 0
    %1029 = vmatprep.subr.bf16.mxu0 0
    %1030 = vmatpush2.bf16.msra.mxu0 0
    %1031 = vmatprep.subr.bf16.mxu0 0
    %1032 = vmatpush2.bf16.msra.mxu0 0
    %1033 = vmatprep.subr.bf16.mxu0 0
    %1034 = vmatpush2.bf16.msra.mxu0 0
    %1035 = vmatprep.mubr.bf16.mxu0 0
    %1036 = vmatmul.mubr.bf16.gmra.mxu0 %v802
    %v1037 = vpop.f32.mrf.mxu0
    %v1038 = vadd.f32 0.0, %v1037
    %v1039 = vpop.f32.mrf.mxu0
    %v1040 = vadd.f32 0.0, %v1039
    %v1041 = vpop.f32.mrf.mxu0
    %v1042 = vpop.f32.mrf.mxu0
    %1043 = vdwg.mxu0
    %1044 = vmatprep.subr.bf16.mxu0 %v970
    %1045 = vmatpush1.bf16.msra.mxu0 %v969
    %1046 = vmatprep.subr.bf16.mxu0 %v966
    %1047 = vmatpush1.bf16.msra.mxu0 %v965
    %1048 = vmatprep.subr.bf16.mxu0 %v962
    %1049 = vmatpush1.bf16.msra.mxu0 %v961
    %1050 = vmatprep.subr.bf16.mxu0 %v958
    %1051 = vmatpush1.bf16.msra.mxu0 %v957
    %1052 = vmatprep.subr.bf16.mxu0 %v954
    %1053 = vmatpush1.bf16.msra.mxu0 %v953
    %1054 = vmatprep.subr.bf16.mxu0 %v950
    %1055 = vmatpush1.bf16.msra.mxu0 %v949
    %1056 = vmatprep.subr.bf16.mxu0 %v946
    %1057 = vmatpush1.bf16.msra.mxu0 %v945
    %1058 = vmatprep.subr.bf16.mxu0 %v942
    %1059 = vmatpush1.bf16.msra.mxu0 %v941
    %1060 = vmatprep.subr.bf16.mxu0 0
    %1061 = vmatpush2.bf16.msra.mxu0 0
    %1062 = vmatprep.subr.bf16.mxu0 0
    %1063 = vmatpush2.bf16.msra.mxu0 0
    %1064 = vmatprep.subr.bf16.mxu0 0
    %1065 = vmatpush2.bf16.msra.mxu0 0
    %1066 = vmatprep.subr.bf16.mxu0 0
    %1067 = vmatpush2.bf16.msra.mxu0 0
    %1068 = vmatprep.subr.bf16.mxu0 0
    %1069 = vmatpush2.bf16.msra.mxu0 0
    %1070 = vmatprep.subr.bf16.mxu0 0
    %1071 = vmatpush2.bf16.msra.mxu0 0
    %1072 = vmatprep.subr.bf16.mxu0 0
    %1073 = vmatpush2.bf16.msra.mxu0 0
    %1074 = vmatprep.subr.bf16.mxu0 0
    %1075 = vmatpush2.bf16.msra.mxu0 0
    %1076 = vmatprep.mubr.bf16.mxu0 0
    %1077 = vmatmul.mubr.bf16.gmra.mxu0 %v802
    %v1078 = vpop.f32.mrf.mxu0
    %v1079 = vadd.f32 0.0, %v1078
    %v1080 = vpop.f32.mrf.mxu0
    %v1081 = vadd.f32 0.0, %v1080
    %v1082 = vpop.f32.mrf.mxu0
    %v1083 = vpop.f32.mrf.mxu0
    %1084 = vdwg.mxu0
    %v1085 = vadd.f32 %v807, %v1038
    %v1086 = vadd.f32 %v808, %v1040
    %v1087 = vadd.f32 %v809, %v1079
    %v1088 = vadd.f32 %v810, %v1081
    %v1089 = vxor.u32 %v1085, 2147483648
    %v1090 = vmul.f32 %v1089, 1.442695
    %v1091 = vpow.pop %v1090
    %v1092 = vadd.f32 %v1091, 1.0
    %v1093 = vrcp.pop %v1092
    %v1094 = vmul.f32 1.0, %v1093
    %v1095 = vxor.u32 %v1086, 2147483648
    %v1096 = vmul.f32 %v1095, 1.442695
    %v1097 = vpow.pop %v1096
    %v1098 = vadd.f32 %v1097, 1.0
    %v1099 = vrcp.pop %v1098
    %v1100 = vmul.f32 1.0, %v1099
    %v1101 = vtanh.pop %v1087
    %v1102 = vxor.u32 %v1088, 2147483648
    %v1103 = vmul.f32 %v1102, 1.442695
    %v1104 = vpow.pop %v1103
    %v1105 = vadd.f32 %v1104, 1.0
    %v1106 = vrcp.pop %v1105
    %v1107 = vmul.f32 1.0, %v1106
    %v1108 = vmul.f32 %v1100, %v799
    %v1109 = vmul.f32 %v1094, %v1101
    %v1110 = vadd.f32 %v1108, %v1109
    %v1111 = vtanh.pop %v1110
    %v1112 = vmul.f32 %v1107, %v1111
    %v1113 = vpack.c.bf16 %v1112, %v1112
    %s1114 = scalar_lea.vmem [#allocation11], 4
    %1115 = vst [vmem:[%s1114] sm:$0xf] %v1113
    %s1116 = smul.u32 2, 4
    %s1117 = smul.addr %s1116, 8
    %s1118 = scalar_lea.vmem [#allocation4], %s1117
    %v1119 = vld [vmem:[%s1118] sm:$0xff]
    %v1120 = vld [vmem:[%s1118 + $0x8] sm:$0xff]
    %v1121 = vld [vmem:[%s1118 + $0x10] sm:$0xff]
    %v1122 = vld [vmem:[%s1118 + $0x18] sm:$0xff]
    %v1123 = vld [vmem:[#allocation10] sm:$0xff]
    %v1124 = vld [vmem:[#allocation10 + $0x8] sm:$0xff]
    %v1125 = vld [vmem:[#allocation10 + $0x10] sm:$0xff]
    %v1126 = vld [vmem:[#allocation10 + $0x18] sm:$0xff]
    %v1127 = vld [vmem:[#allocation10 + $0x20] sm:$0xff]
    %v1128 = vld [vmem:[#allocation10 + $0x28] sm:$0xff]
    %v1129 = vld [vmem:[#allocation10 + $0x30] sm:$0xff]
    %v1130 = vld [vmem:[#allocation10 + $0x38] sm:$0xff]
    %v1131 = vld [vmem:[#allocation10 + $0x40] sm:$0xff]
    %v1132 = vld [vmem:[#allocation10 + $0x48] sm:$0xff]
    %v1133 = vld [vmem:[#allocation10 + $0x50] sm:$0xff]
    %v1134 = vld [vmem:[#allocation10 + $0x58] sm:$0xff]
    %v1135 = vld [vmem:[#allocation10 + $0x60] sm:$0xff]
    %v1136 = vld [vmem:[#allocation10 + $0x68] sm:$0xff]
    %v1137 = vld [vmem:[#allocation10 + $0x70] sm:$0xff]
    %v1138 = vld [vmem:[#allocation10 + $0x78] sm:$0xff]
    %v1139 = vld [vmem:[#allocation10 + $0x80] sm:$0xff]
    %v1140 = vld [vmem:[#allocation10 + $0x88] sm:$0xff]
    %v1141 = vld [vmem:[#allocation10 + $0x90] sm:$0xff]
    %v1142 = vld [vmem:[#allocation10 + $0x98] sm:$0xff]
    %v1143 = vld [vmem:[#allocation10 + $0xa0] sm:$0xff]
    %v1144 = vld [vmem:[#allocation10 + $0xa8] sm:$0xff]
    %v1145 = vld [vmem:[#allocation10 + $0xb0] sm:$0xff]
    %v1146 = vld [vmem:[#allocation10 + $0xb8] sm:$0xff]
    %v1147 = vld [vmem:[#allocation10 + $0xc0] sm:$0xff]
    %v1148 = vld [vmem:[#allocation10 + $0xc8] sm:$0xff]
    %v1149 = vld [vmem:[#allocation10 + $0xd0] sm:$0xff]
    %v1150 = vld [vmem:[#allocation10 + $0xd8] sm:$0xff]
    %v1151 = vld [vmem:[#allocation10 + $0xe0] sm:$0xff]
    %v1152 = vld [vmem:[#allocation10 + $0xe8] sm:$0xff]
    %v1153 = vld [vmem:[#allocation10 + $0xf0] sm:$0xff]
    %v1154 = vld [vmem:[#allocation10 + $0xf8] sm:$0xff]
    %v1187 = vunpack.c.l.b16 %v1123
    %v1188 = vunpack.c.h.b16 %v1123
    %v1189 = vunpack.c.l.b16 %v1124
    %v1190 = vunpack.c.h.b16 %v1124
    %v1191 = vunpack.c.l.b16 %v1125
    %v1192 = vunpack.c.h.b16 %v1125
    %v1193 = vunpack.c.l.b16 %v1126
    %v1194 = vunpack.c.h.b16 %v1126
    %v1195 = vunpack.c.l.b16 %v1127
    %v1196 = vunpack.c.h.b16 %v1127
    %v1197 = vunpack.c.l.b16 %v1128
    %v1198 = vunpack.c.h.b16 %v1128
    %v1199 = vunpack.c.l.b16 %v1129
    %v1200 = vunpack.c.h.b16 %v1129
    %v1201 = vunpack.c.l.b16 %v1130
    %v1202 = vunpack.c.h.b16 %v1130
    %v1203 = vunpack.c.l.b16 %v1131
    %v1204 = vunpack.c.h.b16 %v1131
    %v1205 = vunpack.c.l.b16 %v1132
    %v1206 = vunpack.c.h.b16 %v1132
    %v1207 = vunpack.c.l.b16 %v1133
    %v1208 = vunpack.c.h.b16 %v1133
    %v1209 = vunpack.c.l.b16 %v1134
    %v1210 = vunpack.c.h.b16 %v1134
    %v1211 = vunpack.c.l.b16 %v1135
    %v1212 = vunpack.c.h.b16 %v1135
    %v1213 = vunpack.c.l.b16 %v1136
    %v1214 = vunpack.c.h.b16 %v1136
    %v1215 = vunpack.c.l.b16 %v1137
    %v1216 = vunpack.c.h.b16 %v1137
    %v1217 = vunpack.c.l.b16 %v1138
    %v1218 = vunpack.c.h.b16 %v1138
    %v1219 = vunpack.c.l.b16 %v1139
    %v1220 = vunpack.c.h.b16 %v1139
    %v1221 = vunpack.c.l.b16 %v1140
    %v1222 = vunpack.c.h.b16 %v1140
    %v1223 = vunpack.c.l.b16 %v1141
    %v1224 = vunpack.c.h.b16 %v1141
    %v1225 = vunpack.c.l.b16 %v1142
    %v1226 = vunpack.c.h.b16 %v1142
    %v1227 = vunpack.c.l.b16 %v1143
    %v1228 = vunpack.c.h.b16 %v1143
    %v1229 = vunpack.c.l.b16 %v1144
    %v1230 = vunpack.c.h.b16 %v1144
    %v1231 = vunpack.c.l.b16 %v1145
    %v1232 = vunpack.c.h.b16 %v1145
    %v1233 = vunpack.c.l.b16 %v1146
    %v1234 = vunpack.c.h.b16 %v1146
    %v1235 = vunpack.c.l.b16 %v1147
    %v1236 = vunpack.c.h.b16 %v1147
    %v1237 = vunpack.c.l.b16 %v1148
    %v1238 = vunpack.c.h.b16 %v1148
    %v1239 = vunpack.c.l.b16 %v1149
    %v1240 = vunpack.c.h.b16 %v1149
    %v1241 = vunpack.c.l.b16 %v1150
    %v1242 = vunpack.c.h.b16 %v1150
    %v1243 = vunpack.c.l.b16 %v1151
    %v1244 = vunpack.c.h.b16 %v1151
    %v1245 = vunpack.c.l.b16 %v1152
    %v1246 = vunpack.c.h.b16 %v1152
    %v1247 = vunpack.c.l.b16 %v1153
    %v1248 = vunpack.c.h.b16 %v1153
    %v1249 = vunpack.c.l.b16 %v1154
    %v1250 = vunpack.c.h.b16 %v1154
    %v1251 = vpack.c.b16 %v1191, %v1187
    %v1252 = vpack.c.b16 %v1192, %v1188
    %v1253 = vpack.c.b16 %v1193, %v1189
    %v1254 = vpack.c.b16 %v1194, %v1190
    %v1255 = vpack.c.b16 %v1199, %v1195
    %v1256 = vpack.c.b16 %v1200, %v1196
    %v1257 = vpack.c.b16 %v1201, %v1197
    %v1258 = vpack.c.b16 %v1202, %v1198
    %v1259 = vpack.c.b16 %v1207, %v1203
    %v1260 = vpack.c.b16 %v1208, %v1204
    %v1261 = vpack.c.b16 %v1209, %v1205
    %v1262 = vpack.c.b16 %v1210, %v1206
    %v1263 = vpack.c.b16 %v1215, %v1211
    %v1264 = vpack.c.b16 %v1216, %v1212
    %v1265 = vpack.c.b16 %v1217, %v1213
    %v1266 = vpack.c.b16 %v1218, %v1214
    %v1267 = vpack.c.b16 %v1223, %v1219
    %v1268 = vpack.c.b16 %v1224, %v1220
    %v1269 = vpack.c.b16 %v1225, %v1221
    %v1270 = vpack.c.b16 %v1226, %v1222
    %v1271 = vpack.c.b16 %v1231, %v1227
    %v1272 = vpack.c.b16 %v1232, %v1228
    %v1273 = vpack.c.b16 %v1233, %v1229
    %v1274 = vpack.c.b16 %v1234, %v1230
    %v1275 = vpack.c.b16 %v1239, %v1235
    %v1276 = vpack.c.b16 %v1240, %v1236
    %v1277 = vpack.c.b16 %v1241, %v1237
    %v1278 = vpack.c.b16 %v1242, %v1238
    %v1279 = vpack.c.b16 %v1247, %v1243
    %v1280 = vpack.c.b16 %v1248, %v1244
    %v1281 = vpack.c.b16 %v1249, %v1245
    %v1282 = vpack.c.b16 %v1250, %v1246
    %1315 = vmatprep.subr.bf16.mxu0 %v1280
    %1316 = vmatpush1.bf16.msra.mxu0 %v1279
    %1317 = vmatprep.subr.bf16.mxu0 %v1276
    %1318 = vmatpush1.bf16.msra.mxu0 %v1275
    %1319 = vmatprep.subr.bf16.mxu0 %v1272
    %1320 = vmatpush1.bf16.msra.mxu0 %v1271
    %1321 = vmatprep.subr.bf16.mxu0 %v1268
    %1322 = vmatpush1.bf16.msra.mxu0 %v1267
    %1323 = vmatprep.subr.bf16.mxu0 %v1264
    %1324 = vmatpush1.bf16.msra.mxu0 %v1263
    %1325 = vmatprep.subr.bf16.mxu0 %v1260
    %1326 = vmatpush1.bf16.msra.mxu0 %v1259
    %1327 = vmatprep.subr.bf16.mxu0 %v1256
    %1328 = vmatpush1.bf16.msra.mxu0 %v1255
    %1329 = vmatprep.subr.bf16.mxu0 %v1252
    %1330 = vmatpush1.bf16.msra.mxu0 %v1251
    %1331 = vmatprep.subr.bf16.mxu0 0
    %1332 = vmatpush2.bf16.msra.mxu0 0
    %1333 = vmatprep.subr.bf16.mxu0 0
    %1334 = vmatpush2.bf16.msra.mxu0 0
    %1335 = vmatprep.subr.bf16.mxu0 0
    %1336 = vmatpush2.bf16.msra.mxu0 0
    %1337 = vmatprep.subr.bf16.mxu0 0
    %1338 = vmatpush2.bf16.msra.mxu0 0
    %1339 = vmatprep.subr.bf16.mxu0 0
    %1340 = vmatpush2.bf16.msra.mxu0 0
    %1341 = vmatprep.subr.bf16.mxu0 0
    %1342 = vmatpush2.bf16.msra.mxu0 0
    %1343 = vmatprep.subr.bf16.mxu0 0
    %1344 = vmatpush2.bf16.msra.mxu0 0
    %1345 = vmatprep.subr.bf16.mxu0 0
    %1346 = vmatpush2.bf16.msra.mxu0 0
    %1347 = vmatprep.mubr.bf16.mxu0 0
    %1348 = vmatmul.mubr.bf16.gmra.mxu0 %v1113
    %v1349 = vpop.f32.mrf.mxu0
    %v1350 = vadd.f32 0.0, %v1349
    %v1351 = vpop.f32.mrf.mxu0
    %v1352 = vadd.f32 0.0, %v1351
    %v1353 = vpop.f32.mrf.mxu0
    %v1354 = vpop.f32.mrf.mxu0
    %1355 = vdwg.mxu0
    %1356 = vmatprep.subr.bf16.mxu0 %v1282
    %1357 = vmatpush1.bf16.msra.mxu0 %v1281
    %1358 = vmatprep.subr.bf16.mxu0 %v1278
    %1359 = vmatpush1.bf16.msra.mxu0 %v1277
    %1360 = vmatprep.subr.bf16.mxu0 %v1274
    %1361 = vmatpush1.bf16.msra.mxu0 %v1273
    %1362 = vmatprep.subr.bf16.mxu0 %v1270
    %1363 = vmatpush1.bf16.msra.mxu0 %v1269
    %1364 = vmatprep.subr.bf16.mxu0 %v1266
    %1365 = vmatpush1.bf16.msra.mxu0 %v1265
    %1366 = vmatprep.subr.bf16.mxu0 %v1262
    %1367 = vmatpush1.bf16.msra.mxu0 %v1261
    %1368 = vmatprep.subr.bf16.mxu0 %v1258
    %1369 = vmatpush1.bf16.msra.mxu0 %v1257
    %1370 = vmatprep.subr.bf16.mxu0 %v1254
    %1371 = vmatpush1.bf16.msra.mxu0 %v1253
    %1372 = vmatprep.subr.bf16.mxu0 0
    %1373 = vmatpush2.bf16.msra.mxu0 0
    %1374 = vmatprep.subr.bf16.mxu0 0
    %1375 = vmatpush2.bf16.msra.mxu0 0
    %1376 = vmatprep.subr.bf16.mxu0 0
    %1377 = vmatpush2.bf16.msra.mxu0 0
    %1378 = vmatprep.subr.bf16.mxu0 0
    %1379 = vmatpush2.bf16.msra.mxu0 0
    %1380 = vmatprep.subr.bf16.mxu0 0
    %1381 = vmatpush2.bf16.msra.mxu0 0
    %1382 = vmatprep.subr.bf16.mxu0 0
    %1383 = vmatpush2.bf16.msra.mxu0 0
    %1384 = vmatprep.subr.bf16.mxu0 0
    %1385 = vmatpush2.bf16.msra.mxu0 0
    %1386 = vmatprep.subr.bf16.mxu0 0
    %1387 = vmatpush2.bf16.msra.mxu0 0
    %1388 = vmatprep.mubr.bf16.mxu0 0
    %1389 = vmatmul.mubr.bf16.gmra.mxu0 %v1113
    %v1390 = vpop.f32.mrf.mxu0
    %v1391 = vadd.f32 0.0, %v1390
    %v1392 = vpop.f32.mrf.mxu0
    %v1393 = vadd.f32 0.0, %v1392
    %v1394 = vpop.f32.mrf.mxu0
    %v1395 = vpop.f32.mrf.mxu0
    %1396 = vdwg.mxu0
    %v1397 = vadd.f32 %v1119, %v1350
    %v1398 = vadd.f32 %v1120, %v1352
    %v1399 = vadd.f32 %v1121, %v1391
    %v1400 = vadd.f32 %v1122, %v1393
    %v1401 = vxor.u32 %v1397, 2147483648
    %v1402 = vmul.f32 %v1401, 1.442695
    %v1403 = vpow.pop %v1402
    %v1404 = vadd.f32 %v1403, 1.0
    %v1405 = vrcp.pop %v1404
    %v1406 = vmul.f32 1.0, %v1405
    %v1407 = vxor.u32 %v1398, 2147483648
    %v1408 = vmul.f32 %v1407, 1.442695
    %v1409 = vpow.pop %v1408
    %v1410 = vadd.f32 %v1409, 1.0
    %v1411 = vrcp.pop %v1410
    %v1412 = vmul.f32 1.0, %v1411
    %v1413 = vtanh.pop %v1399
    %v1414 = vxor.u32 %v1400, 2147483648
    %v1415 = vmul.f32 %v1414, 1.442695
    %v1416 = vpow.pop %v1415
    %v1417 = vadd.f32 %v1416, 1.0
    %v1418 = vrcp.pop %v1417
    %v1419 = vmul.f32 1.0, %v1418
    %v1420 = vmul.f32 %v1412, %v1110
    %v1421 = vmul.f32 %v1406, %v1413
    %v1422 = vadd.f32 %v1420, %v1421
    %v1423 = vtanh.pop %v1422
    %v1424 = vmul.f32 %v1419, %v1423
    %v1425 = vpack.c.bf16 %v1424, %v1424
    %s1426 = scalar_lea.vmem [#allocation11], 8
    %1427 = vst [vmem:[%s1426] sm:$0xf] %v1425
    %s1428 = smul.u32 3, 4
    %s1429 = smul.addr %s1428, 8
    %s1430 = scalar_lea.vmem [#allocation4], %s1429
    %v1431 = vld [vmem:[%s1430] sm:$0xff]
    %v1432 = vld [vmem:[%s1430 + $0x8] sm:$0xff]
    %v1433 = vld [vmem:[%s1430 + $0x10] sm:$0xff]
    %v1434 = vld [vmem:[%s1430 + $0x18] sm:$0xff]
    %v1435 = vld [vmem:[#allocation10] sm:$0xff]
    %v1436 = vld [vmem:[#allocation10 + $0x8] sm:$0xff]
    %v1437 = vld [vmem:[#allocation10 + $0x10] sm:$0xff]
    %v1438 = vld [vmem:[#allocation10 + $0x18] sm:$0xff]
    %v1439 = vld [vmem:[#allocation10 + $0x20] sm:$0xff]
    %v1440 = vld [vmem:[#allocation10 + $0x28] sm:$0xff]
    %v1441 = vld [vmem:[#allocation10 + $0x30] sm:$0xff]
    %v1442 = vld [vmem:[#allocation10 + $0x38] sm:$0xff]
    %v1443 = vld [vmem:[#allocation10 + $0x40] sm:$0xff]
    %v1444 = vld [vmem:[#allocation10 + $0x48] sm:$0xff]
    %v1445 = vld [vmem:[#allocation10 + $0x50] sm:$0xff]
    %v1446 = vld [vmem:[#allocation10 + $0x58] sm:$0xff]
    %v1447 = vld [vmem:[#allocation10 + $0x60] sm:$0xff]
    %v1448 = vld [vmem:[#allocation10 + $0x68] sm:$0xff]
    %v1449 = vld [vmem:[#allocation10 + $0x70] sm:$0xff]
    %v1450 = vld [vmem:[#allocation10 + $0x78] sm:$0xff]
    %v1451 = vld [vmem:[#allocation10 + $0x80] sm:$0xff]
    %v1452 = vld [vmem:[#allocation10 + $0x88] sm:$0xff]
    %v1453 = vld [vmem:[#allocation10 + $0x90] sm:$0xff]
    %v1454 = vld [vmem:[#allocation10 + $0x98] sm:$0xff]
    %v1455 = vld [vmem:[#allocation10 + $0xa0] sm:$0xff]
    %v1456 = vld [vmem:[#allocation10 + $0xa8] sm:$0xff]
    %v1457 = vld [vmem:[#allocation10 + $0xb0] sm:$0xff]
    %v1458 = vld [vmem:[#allocation10 + $0xb8] sm:$0xff]
    %v1459 = vld [vmem:[#allocation10 + $0xc0] sm:$0xff]
    %v1460 = vld [vmem:[#allocation10 + $0xc8] sm:$0xff]
    %v1461 = vld [vmem:[#allocation10 + $0xd0] sm:$0xff]
    %v1462 = vld [vmem:[#allocation10 + $0xd8] sm:$0xff]
    %v1463 = vld [vmem:[#allocation10 + $0xe0] sm:$0xff]
    %v1464 = vld [vmem:[#allocation10 + $0xe8] sm:$0xff]
    %v1465 = vld [vmem:[#allocation10 + $0xf0] sm:$0xff]
    %v1466 = vld [vmem:[#allocation10 + $0xf8] sm:$0xff]
    %v1499 = vunpack.c.l.b16 %v1435
    %v1500 = vunpack.c.h.b16 %v1435
    %v1501 = vunpack.c.l.b16 %v1436
    %v1502 = vunpack.c.h.b16 %v1436
    %v1503 = vunpack.c.l.b16 %v1437
    %v1504 = vunpack.c.h.b16 %v1437
    %v1505 = vunpack.c.l.b16 %v1438
    %v1506 = vunpack.c.h.b16 %v1438
    %v1507 = vunpack.c.l.b16 %v1439
    %v1508 = vunpack.c.h.b16 %v1439
    %v1509 = vunpack.c.l.b16 %v1440
    %v1510 = vunpack.c.h.b16 %v1440
    %v1511 = vunpack.c.l.b16 %v1441
    %v1512 = vunpack.c.h.b16 %v1441
    %v1513 = vunpack.c.l.b16 %v1442
    %v1514 = vunpack.c.h.b16 %v1442
    %v1515 = vunpack.c.l.b16 %v1443
    %v1516 = vunpack.c.h.b16 %v1443
    %v1517 = vunpack.c.l.b16 %v1444
    %v1518 = vunpack.c.h.b16 %v1444
    %v1519 = vunpack.c.l.b16 %v1445
    %v1520 = vunpack.c.h.b16 %v1445
    %v1521 = vunpack.c.l.b16 %v1446
    %v1522 = vunpack.c.h.b16 %v1446
    %v1523 = vunpack.c.l.b16 %v1447
    %v1524 = vunpack.c.h.b16 %v1447
    %v1525 = vunpack.c.l.b16 %v1448
    %v1526 = vunpack.c.h.b16 %v1448
    %v1527 = vunpack.c.l.b16 %v1449
    %v1528 = vunpack.c.h.b16 %v1449
    %v1529 = vunpack.c.l.b16 %v1450
    %v1530 = vunpack.c.h.b16 %v1450
    %v1531 = vunpack.c.l.b16 %v1451
    %v1532 = vunpack.c.h.b16 %v1451
    %v1533 = vunpack.c.l.b16 %v1452
    %v1534 = vunpack.c.h.b16 %v1452
    %v1535 = vunpack.c.l.b16 %v1453
    %v1536 = vunpack.c.h.b16 %v1453
    %v1537 = vunpack.c.l.b16 %v1454
    %v1538 = vunpack.c.h.b16 %v1454
    %v1539 = vunpack.c.l.b16 %v1455
    %v1540 = vunpack.c.h.b16 %v1455
    %v1541 = vunpack.c.l.b16 %v1456
    %v1542 = vunpack.c.h.b16 %v1456
    %v1543 = vunpack.c.l.b16 %v1457
    %v1544 = vunpack.c.h.b16 %v1457
    %v1545 = vunpack.c.l.b16 %v1458
    %v1546 = vunpack.c.h.b16 %v1458
    %v1547 = vunpack.c.l.b16 %v1459
    %v1548 = vunpack.c.h.b16 %v1459
    %v1549 = vunpack.c.l.b16 %v1460
    %v1550 = vunpack.c.h.b16 %v1460
    %v1551 = vunpack.c.l.b16 %v1461
    %v1552 = vunpack.c.h.b16 %v1461
    %v1553 = vunpack.c.l.b16 %v1462
    %v1554 = vunpack.c.h.b16 %v1462
    %v1555 = vunpack.c.l.b16 %v1463
    %v1556 = vunpack.c.h.b16 %v1463
    %v1557 = vunpack.c.l.b16 %v1464
    %v1558 = vunpack.c.h.b16 %v1464
    %v1559 = vunpack.c.l.b16 %v1465
    %v1560 = vunpack.c.h.b16 %v1465
    %v1561 = vunpack.c.l.b16 %v1466
    %v1562 = vunpack.c.h.b16 %v1466
    %v1563 = vpack.c.b16 %v1503, %v1499
    %v1564 = vpack.c.b16 %v1504, %v1500
    %v1565 = vpack.c.b16 %v1505, %v1501
    %v1566 = vpack.c.b16 %v1506, %v1502
    %v1567 = vpack.c.b16 %v1511, %v1507
    %v1568 = vpack.c.b16 %v1512, %v1508
    %v1569 = vpack.c.b16 %v1513, %v1509
    %v1570 = vpack.c.b16 %v1514, %v1510
    %v1571 = vpack.c.b16 %v1519, %v1515
    %v1572 = vpack.c.b16 %v1520, %v1516
    %v1573 = vpack.c.b16 %v1521, %v1517
    %v1574 = vpack.c.b16 %v1522, %v1518
    %v1575 = vpack.c.b16 %v1527, %v1523
    %v1576 = vpack.c.b16 %v1528, %v1524
    %v1577 = vpack.c.b16 %v1529, %v1525
    %v1578 = vpack.c.b16 %v1530, %v1526
    %v1579 = vpack.c.b16 %v1535, %v1531
    %v1580 = vpack.c.b16 %v1536, %v1532
    %v1581 = vpack.c.b16 %v1537, %v1533
    %v1582 = vpack.c.b16 %v1538, %v1534
    %v1583 = vpack.c.b16 %v1543, %v1539
    %v1584 = vpack.c.b16 %v1544, %v1540
    %v1585 = vpack.c.b16 %v1545, %v1541
    %v1586 = vpack.c.b16 %v1546, %v1542
    %v1587 = vpack.c.b16 %v1551, %v1547
    %v1588 = vpack.c.b16 %v1552, %v1548
    %v1589 = vpack.c.b16 %v1553, %v1549
    %v1590 = vpack.c.b16 %v1554, %v1550
    %v1591 = vpack.c.b16 %v1559, %v1555
    %v1592 = vpack.c.b16 %v1560, %v1556
    %v1593 = vpack.c.b16 %v1561, %v1557
    %v1594 = vpack.c.b16 %v1562, %v1558
    %1627 = vmatprep.subr.bf16.mxu0 %v1592
    %1628 = vmatpush1.bf16.msra.mxu0 %v1591
    %1629 = vmatprep.subr.bf16.mxu0 %v1588
    %1630 = vmatpush1.bf16.msra.mxu0 %v1587
    %1631 = vmatprep.subr.bf16.mxu0 %v1584
    %1632 = vmatpush1.bf16.msra.mxu0 %v1583
    %1633 = vmatprep.subr.bf16.mxu0 %v1580
    %1634 = vmatpush1.bf16.msra.mxu0 %v1579
    %1635 = vmatprep.subr.bf16.mxu0 %v1576
    %1636 = vmatpush1.bf16.msra.mxu0 %v1575
    %1637 = vmatprep.subr.bf16.mxu0 %v1572
    %1638 = vmatpush1.bf16.msra.mxu0 %v1571
    %1639 = vmatprep.subr.bf16.mxu0 %v1568
    %1640 = vmatpush1.bf16.msra.mxu0 %v1567
    %1641 = vmatprep.subr.bf16.mxu0 %v1564
    %1642 = vmatpush1.bf16.msra.mxu0 %v1563
    %1643 = vmatprep.subr.bf16.mxu0 0
    %1644 = vmatpush2.bf16.msra.mxu0 0
    %1645 = vmatprep.subr.bf16.mxu0 0
    %1646 = vmatpush2.bf16.msra.mxu0 0
    %1647 = vmatprep.subr.bf16.mxu0 0
    %1648 = vmatpush2.bf16.msra.mxu0 0
    %1649 = vmatprep.subr.bf16.mxu0 0
    %1650 = vmatpush2.bf16.msra.mxu0 0
    %1651 = vmatprep.subr.bf16.mxu0 0
    %1652 = vmatpush2.bf16.msra.mxu0 0
    %1653 = vmatprep.subr.bf16.mxu0 0
    %1654 = vmatpush2.bf16.msra.mxu0 0
    %1655 = vmatprep.subr.bf16.mxu0 0
    %1656 = vmatpush2.bf16.msra.mxu0 0
    %1657 = vmatprep.subr.bf16.mxu0 0
    %1658 = vmatpush2.bf16.msra.mxu0 0
    %1659 = vmatprep.mubr.bf16.mxu0 0
    %1660 = vmatmul.mubr.bf16.gmra.mxu0 %v1425
    %v1661 = vpop.f32.mrf.mxu0
    %v1662 = vadd.f32 0.0, %v1661
    %v1663 = vpop.f32.mrf.mxu0
    %v1664 = vadd.f32 0.0, %v1663
    %v1665 = vpop.f32.mrf.mxu0
    %v1666 = vpop.f32.mrf.mxu0
    %1667 = vdwg.mxu0
    %1668 = vmatprep.subr.bf16.mxu0 %v1594
    %1669 = vmatpush1.bf16.msra.mxu0 %v1593
    %1670 = vmatprep.subr.bf16.mxu0 %v1590
    %1671 = vmatpush1.bf16.msra.mxu0 %v1589
    %1672 = vmatprep.subr.bf16.mxu0 %v1586
    %1673 = vmatpush1.bf16.msra.mxu0 %v1585
    %1674 = vmatprep.subr.bf16.mxu0 %v1582
    %1675 = vmatpush1.bf16.msra.mxu0 %v1581
    %1676 = vmatprep.subr.bf16.mxu0 %v1578
    %1677 = vmatpush1.bf16.msra.mxu0 %v1577
    %1678 = vmatprep.subr.bf16.mxu0 %v1574
    %1679 = vmatpush1.bf16.msra.mxu0 %v1573
    %1680 = vmatprep.subr.bf16.mxu0 %v1570
    %1681 = vmatpush1.bf16.msra.mxu0 %v1569
    %1682 = vmatprep.subr.bf16.mxu0 %v1566
    %1683 = vmatpush1.bf16.msra.mxu0 %v1565
    %1684 = vmatprep.subr.bf16.mxu0 0
    %1685 = vmatpush2.bf16.msra.mxu0 0
    %1686 = vmatprep.subr.bf16.mxu0 0
    %1687 = vmatpush2.bf16.msra.mxu0 0
    %1688 = vmatprep.subr.bf16.mxu0 0
    %1689 = vmatpush2.bf16.msra.mxu0 0
    %1690 = vmatprep.subr.bf16.mxu0 0
    %1691 = vmatpush2.bf16.msra.mxu0 0
    %1692 = vmatprep.subr.bf16.mxu0 0
    %1693 = vmatpush2.bf16.msra.mxu0 0
    %1694 = vmatprep.subr.bf16.mxu0 0
    %1695 = vmatpush2.bf16.msra.mxu0 0
    %1696 = vmatprep.subr.bf16.mxu0 0
    %1697 = vmatpush2.bf16.msra.mxu0 0
    %1698 = vmatprep.subr.bf16.mxu0 0
    %1699 = vmatpush2.bf16.msra.mxu0 0
    %1700 = vmatprep.mubr.bf16.mxu0 0
    %1701 = vmatmul.mubr.bf16.gmra.mxu0 %v1425
    %v1702 = vpop.f32.mrf.mxu0
    %v1703 = vadd.f32 0.0, %v1702
    %v1704 = vpop.f32.mrf.mxu0
    %v1705 = vadd.f32 0.0, %v1704
    %v1706 = vpop.f32.mrf.mxu0
    %v1707 = vpop.f32.mrf.mxu0
    %1708 = vdwg.mxu0
    %v1709 = vadd.f32 %v1431, %v1662
    %v1710 = vadd.f32 %v1432, %v1664
    %v1711 = vadd.f32 %v1433, %v1703
    %v1712 = vadd.f32 %v1434, %v1705
    %v1713 = vxor.u32 %v1709, 2147483648
    %v1714 = vmul.f32 %v1713, 1.442695
    %v1715 = vpow.pop %v1714
    %v1716 = vadd.f32 %v1715, 1.0
    %v1717 = vrcp.pop %v1716
    %v1718 = vmul.f32 1.0, %v1717
    %v1719 = vxor.u32 %v1710, 2147483648
    %v1720 = vmul.f32 %v1719, 1.442695
    %v1721 = vpow.pop %v1720
    %v1722 = vadd.f32 %v1721, 1.0
    %v1723 = vrcp.pop %v1722
    %v1724 = vmul.f32 1.0, %v1723
    %v1725 = vtanh.pop %v1711
    %v1726 = vxor.u32 %v1712, 2147483648
    %v1727 = vmul.f32 %v1726, 1.442695
    %v1728 = vpow.pop %v1727
    %v1729 = vadd.f32 %v1728, 1.0
    %v1730 = vrcp.pop %v1729
    %v1731 = vmul.f32 1.0, %v1730
    %v1732 = vmul.f32 %v1724, %v1422
    %v1733 = vmul.f32 %v1718, %v1725
    %v1734 = vadd.f32 %v1732, %v1733
    %v1735 = vtanh.pop %v1734
    %v1736 = vmul.f32 %v1731, %v1735
    %v1737 = vpack.c.bf16 %v1736, %v1736
    %s1738 = scalar_lea.vmem [#allocation11], 12
    %1739 = vst [vmem:[%s1738] sm:$0xf] %v1737
    %s1740 = smul.u32 4, 4
    %s1741 = smul.addr %s1740, 8
    %s1742 = scalar_lea.vmem [#allocation4], %s1741
    %v1743 = vld [vmem:[%s1742] sm:$0xff]
    %v1744 = vld [vmem:[%s1742 + $0x8] sm:$0xff]
    %v1745 = vld [vmem:[%s1742 + $0x10] sm:$0xff]
    %v1746 = vld [vmem:[%s1742 + $0x18] sm:$0xff]
    %v1747 = vld [vmem:[#allocation10] sm:$0xff]
    %v1748 = vld [vmem:[#allocation10 + $0x8] sm:$0xff]
    %v1749 = vld [vmem:[#allocation10 + $0x10] sm:$0xff]
    %v1750 = vld [vmem:[#allocation10 + $0x18] sm:$0xff]
    %v1751 = vld [vmem:[#allocation10 + $0x20] sm:$0xff]
    %v1752 = vld [vmem:[#allocation10 + $0x28] sm:$0xff]
    %v1753 = vld [vmem:[#allocation10 + $0x30] sm:$0xff]
    %v1754 = vld [vmem:[#allocation10 + $0x38] sm:$0xff]
    %v1755 = vld [vmem:[#allocation10 + $0x40] sm:$0xff]
    %v1756 = vld [vmem:[#allocation10 + $0x48] sm:$0xff]
    %v1757 = vld [vmem:[#allocation10 + $0x50] sm:$0xff]
    %v1758 = vld [vmem:[#allocation10 + $0x58] sm:$0xff]
    %v1759 = vld [vmem:[#allocation10 + $0x60] sm:$0xff]
    %v1760 = vld [vmem:[#allocation10 + $0x68] sm:$0xff]
    %v1761 = vld [vmem:[#allocation10 + $0x70] sm:$0xff]
    %v1762 = vld [vmem:[#allocation10 + $0x78] sm:$0xff]
    %v1763 = vld [vmem:[#allocation10 + $0x80] sm:$0xff]
    %v1764 = vld [vmem:[#allocation10 + $0x88] sm:$0xff]
    %v1765 = vld [vmem:[#allocation10 + $0x90] sm:$0xff]
    %v1766 = vld [vmem:[#allocation10 + $0x98] sm:$0xff]
    %v1767 = vld [vmem:[#allocation10 + $0xa0] sm:$0xff]
    %v1768 = vld [vmem:[#allocation10 + $0xa8] sm:$0xff]
    %v1769 = vld [vmem:[#allocation10 + $0xb0] sm:$0xff]
    %v1770 = vld [vmem:[#allocation10 + $0xb8] sm:$0xff]
    %v1771 = vld [vmem:[#allocation10 + $0xc0] sm:$0xff]
    %v1772 = vld [vmem:[#allocation10 + $0xc8] sm:$0xff]
    %v1773 = vld [vmem:[#allocation10 + $0xd0] sm:$0xff]
    %v1774 = vld [vmem:[#allocation10 + $0xd8] sm:$0xff]
    %v1775 = vld [vmem:[#allocation10 + $0xe0] sm:$0xff]
    %v1776 = vld [vmem:[#allocation10 + $0xe8] sm:$0xff]
    %v1777 = vld [vmem:[#allocation10 + $0xf0] sm:$0xff]
    %v1778 = vld [vmem:[#allocation10 + $0xf8] sm:$0xff]
    %v1811 = vunpack.c.l.b16 %v1747
    %v1812 = vunpack.c.h.b16 %v1747
    %v1813 = vunpack.c.l.b16 %v1748
    %v1814 = vunpack.c.h.b16 %v1748
    %v1815 = vunpack.c.l.b16 %v1749
    %v1816 = vunpack.c.h.b16 %v1749
    %v1817 = vunpack.c.l.b16 %v1750
    %v1818 = vunpack.c.h.b16 %v1750
    %v1819 = vunpack.c.l.b16 %v1751
    %v1820 = vunpack.c.h.b16 %v1751
    %v1821 = vunpack.c.l.b16 %v1752
    %v1822 = vunpack.c.h.b16 %v1752
    %v1823 = vunpack.c.l.b16 %v1753
    %v1824 = vunpack.c.h.b16 %v1753
    %v1825 = vunpack.c.l.b16 %v1754
    %v1826 = vunpack.c.h.b16 %v1754
    %v1827 = vunpack.c.l.b16 %v1755
    %v1828 = vunpack.c.h.b16 %v1755
    %v1829 = vunpack.c.l.b16 %v1756
    %v1830 = vunpack.c.h.b16 %v1756
    %v1831 = vunpack.c.l.b16 %v1757
    %v1832 = vunpack.c.h.b16 %v1757
    %v1833 = vunpack.c.l.b16 %v1758
    %v1834 = vunpack.c.h.b16 %v1758
    %v1835 = vunpack.c.l.b16 %v1759
    %v1836 = vunpack.c.h.b16 %v1759
    %v1837 = vunpack.c.l.b16 %v1760
    %v1838 = vunpack.c.h.b16 %v1760
    %v1839 = vunpack.c.l.b16 %v1761
    %v1840 = vunpack.c.h.b16 %v1761
    %v1841 = vunpack.c.l.b16 %v1762
    %v1842 = vunpack.c.h.b16 %v1762
    %v1843 = vunpack.c.l.b16 %v1763
    %v1844 = vunpack.c.h.b16 %v1763
    %v1845 = vunpack.c.l.b16 %v1764
    %v1846 = vunpack.c.h.b16 %v1764
    %v1847 = vunpack.c.l.b16 %v1765
    %v1848 = vunpack.c.h.b16 %v1765
    %v1849 = vunpack.c.l.b16 %v1766
    %v1850 = vunpack.c.h.b16 %v1766
    %v1851 = vunpack.c.l.b16 %v1767
    %v1852 = vunpack.c.h.b16 %v1767
    %v1853 = vunpack.c.l.b16 %v1768
    %v1854 = vunpack.c.h.b16 %v1768
    %v1855 = vunpack.c.l.b16 %v1769
    %v1856 = vunpack.c.h.b16 %v1769
    %v1857 = vunpack.c.l.b16 %v1770
    %v1858 = vunpack.c.h.b16 %v1770
    %v1859 = vunpack.c.l.b16 %v1771
    %v1860 = vunpack.c.h.b16 %v1771
    %v1861 = vunpack.c.l.b16 %v1772
    %v1862 = vunpack.c.h.b16 %v1772
    %v1863 = vunpack.c.l.b16 %v1773
    %v1864 = vunpack.c.h.b16 %v1773
    %v1865 = vunpack.c.l.b16 %v1774
    %v1866 = vunpack.c.h.b16 %v1774
    %v1867 = vunpack.c.l.b16 %v1775
    %v1868 = vunpack.c.h.b16 %v1775
    %v1869 = vunpack.c.l.b16 %v1776
    %v1870 = vunpack.c.h.b16 %v1776
    %v1871 = vunpack.c.l.b16 %v1777
    %v1872 = vunpack.c.h.b16 %v1777
    %v1873 = vunpack.c.l.b16 %v1778
    %v1874 = vunpack.c.h.b16 %v1778
    %v1875 = vpack.c.b16 %v1815, %v1811
    %v1876 = vpack.c.b16 %v1816, %v1812
    %v1877 = vpack.c.b16 %v1817, %v1813
    %v1878 = vpack.c.b16 %v1818, %v1814
    %v1879 = vpack.c.b16 %v1823, %v1819
    %v1880 = vpack.c.b16 %v1824, %v1820
    %v1881 = vpack.c.b16 %v1825, %v1821
    %v1882 = vpack.c.b16 %v1826, %v1822
    %v1883 = vpack.c.b16 %v1831, %v1827
    %v1884 = vpack.c.b16 %v1832, %v1828
    %v1885 = vpack.c.b16 %v1833, %v1829
    %v1886 = vpack.c.b16 %v1834, %v1830
    %v1887 = vpack.c.b16 %v1839, %v1835
    %v1888 = vpack.c.b16 %v1840, %v1836
    %v1889 = vpack.c.b16 %v1841, %v1837
    %v1890 = vpack.c.b16 %v1842, %v1838
    %v1891 = vpack.c.b16 %v1847, %v1843
    %v1892 = vpack.c.b16 %v1848, %v1844
    %v1893 = vpack.c.b16 %v1849, %v1845
    %v1894 = vpack.c.b16 %v1850, %v1846
    %v1895 = vpack.c.b16 %v1855, %v1851
    %v1896 = vpack.c.b16 %v1856, %v1852
    %v1897 = vpack.c.b16 %v1857, %v1853
    %v1898 = vpack.c.b16 %v1858, %v1854
    %v1899 = vpack.c.b16 %v1863, %v1859
    %v1900 = vpack.c.b16 %v1864, %v1860
    %v1901 = vpack.c.b16 %v1865, %v1861
    %v1902 = vpack.c.b16 %v1866, %v1862
    %v1903 = vpack.c.b16 %v1871, %v1867
    %v1904 = vpack.c.b16 %v1872, %v1868
    %v1905 = vpack.c.b16 %v1873, %v1869
    %v1906 = vpack.c.b16 %v1874, %v1870
    %1939 = vmatprep.subr.bf16.mxu0 %v1904
    %1940 = vmatpush1.bf16.msra.mxu0 %v1903
    %1941 = vmatprep.subr.bf16.mxu0 %v1900
    %1942 = vmatpush1.bf16.msra.mxu0 %v1899
    %1943 = vmatprep.subr.bf16.mxu0 %v1896
    %1944 = vmatpush1.bf16.msra.mxu0 %v1895
    %1945 = vmatprep.subr.bf16.mxu0 %v1892
    %1946 = vmatpush1.bf16.msra.mxu0 %v1891
    %1947 = vmatprep.subr.bf16.mxu0 %v1888
    %1948 = vmatpush1.bf16.msra.mxu0 %v1887
    %1949 = vmatprep.subr.bf16.mxu0 %v1884
    %1950 = vmatpush1.bf16.msra.mxu0 %v1883
    %1951 = vmatprep.subr.bf16.mxu0 %v1880
    %1952 = vmatpush1.bf16.msra.mxu0 %v1879
    %1953 = vmatprep.subr.bf16.mxu0 %v1876
    %1954 = vmatpush1.bf16.msra.mxu0 %v1875
    %1955 = vmatprep.subr.bf16.mxu0 0
    %1956 = vmatpush2.bf16.msra.mxu0 0
    %1957 = vmatprep.subr.bf16.mxu0 0
    %1958 = vmatpush2.bf16.msra.mxu0 0
    %1959 = vmatprep.subr.bf16.mxu0 0
    %1960 = vmatpush2.bf16.msra.mxu0 0
    %1961 = vmatprep.subr.bf16.mxu0 0
    %1962 = vmatpush2.bf16.msra.mxu0 0
    %1963 = vmatprep.subr.bf16.mxu0 0
    %1964 = vmatpush2.bf16.msra.mxu0 0
    %1965 = vmatprep.subr.bf16.mxu0 0
    %1966 = vmatpush2.bf16.msra.mxu0 0
    %1967 = vmatprep.subr.bf16.mxu0 0
    %1968 = vmatpush2.bf16.msra.mxu0 0
    %1969 = vmatprep.subr.bf16.mxu0 0
    %1970 = vmatpush2.bf16.msra.mxu0 0
    %1971 = vmatprep.mubr.bf16.mxu0 0
    %1972 = vmatmul.mubr.bf16.gmra.mxu0 %v1737
    %v1973 = vpop.f32.mrf.mxu0
    %v1974 = vadd.f32 0.0, %v1973
    %v1975 = vpop.f32.mrf.mxu0
    %v1976 = vadd.f32 0.0, %v1975
    %v1977 = vpop.f32.mrf.mxu0
    %v1978 = vpop.f32.mrf.mxu0
    %1979 = vdwg.mxu0
    %1980 = vmatprep.subr.bf16.mxu0 %v1906
    %1981 = vmatpush1.bf16.msra.mxu0 %v1905
    %1982 = vmatprep.subr.bf16.mxu0 %v1902
    %1983 = vmatpush1.bf16.msra.mxu0 %v1901
    %1984 = vmatprep.subr.bf16.mxu0 %v1898
    %1985 = vmatpush1.bf16.msra.mxu0 %v1897
    %1986 = vmatprep.subr.bf16.mxu0 %v1894
    %1987 = vmatpush1.bf16.msra.mxu0 %v1893
    %1988 = vmatprep.subr.bf16.mxu0 %v1890
    %1989 = vmatpush1.bf16.msra.mxu0 %v1889
    %1990 = vmatprep.subr.bf16.mxu0 %v1886
    %1991 = vmatpush1.bf16.msra.mxu0 %v1885
    %1992 = vmatprep.subr.bf16.mxu0 %v1882
    %1993 = vmatpush1.bf16.msra.mxu0 %v1881
    %1994 = vmatprep.subr.bf16.mxu0 %v1878
    %1995 = vmatpush1.bf16.msra.mxu0 %v1877
    %1996 = vmatprep.subr.bf16.mxu0 0
    %1997 = vmatpush2.bf16.msra.mxu0 0
    %1998 = vmatprep.subr.bf16.mxu0 0
    %1999 = vmatpush2.bf16.msra.mxu0 0
    %2000 = vmatprep.subr.bf16.mxu0 0
    %2001 = vmatpush2.bf16.msra.mxu0 0
    %2002 = vmatprep.subr.bf16.mxu0 0
    %2003 = vmatpush2.bf16.msra.mxu0 0
    %2004 = vmatprep.subr.bf16.mxu0 0
    %2005 = vmatpush2.bf16.msra.mxu0 0
    %2006 = vmatprep.subr.bf16.mxu0 0
    %2007 = vmatpush2.bf16.msra.mxu0 0
    %2008 = vmatprep.subr.bf16.mxu0 0
    %2009 = vmatpush2.bf16.msra.mxu0 0
    %2010 = vmatprep.subr.bf16.mxu0 0
    %2011 = vmatpush2.bf16.msra.mxu0 0
    %2012 = vmatprep.mubr.bf16.mxu0 0
    %2013 = vmatmul.mubr.bf16.gmra.mxu0 %v1737
    %v2014 = vpop.f32.mrf.mxu0
    %v2015 = vadd.f32 0.0, %v2014
    %v2016 = vpop.f32.mrf.mxu0
    %v2017 = vadd.f32 0.0, %v2016
    %v2018 = vpop.f32.mrf.mxu0
    %v2019 = vpop.f32.mrf.mxu0
    %2020 = vdwg.mxu0
    %v2021 = vadd.f32 %v1743, %v1974
    %v2022 = vadd.f32 %v1744, %v1976
    %v2023 = vadd.f32 %v1745, %v2015
    %v2024 = vadd.f32 %v1746, %v2017
    %v2025 = vxor.u32 %v2021, 2147483648
    %v2026 = vmul.f32 %v2025, 1.442695
    %v2027 = vpow.pop %v2026
    %v2028 = vadd.f32 %v2027, 1.0
    %v2029 = vrcp.pop %v2028
    %v2030 = vmul.f32 1.0, %v2029
    %v2031 = vxor.u32 %v2022, 2147483648
    %v2032 = vmul.f32 %v2031, 1.442695
    %v2033 = vpow.pop %v2032
    %v2034 = vadd.f32 %v2033, 1.0
    %v2035 = vrcp.pop %v2034
    %v2036 = vmul.f32 1.0, %v2035
    %v2037 = vtanh.pop %v2023
    %v2038 = vxor.u32 %v2024, 2147483648
    %v2039 = vmul.f32 %v2038, 1.442695
    %v2040 = vpow.pop %v2039
    %v2041 = vadd.f32 %v2040, 1.0
    %v2042 = vrcp.pop %v2041
    %v2043 = vmul.f32 1.0, %v2042
    %v2044 = vmul.f32 %v2036, %v1734
    %v2045 = vmul.f32 %v2030, %v2037
    %v2046 = vadd.f32 %v2044, %v2045
    %v2047 = vtanh.pop %v2046
    %v2048 = vmul.f32 %v2043, %v2047
    %v2049 = vpack.c.bf16 %v2048, %v2048
    %s2050 = scalar_lea.vmem [#allocation11], 16
    %2051 = vst [vmem:[%s2050] sm:$0xf] %v2049
    %s2052 = smul.u32 5, 4
    %s2053 = smul.addr %s2052, 8
    %s2054 = scalar_lea.vmem [#allocation4], %s2053
    %v2055 = vld [vmem:[%s2054] sm:$0xff]
    %v2056 = vld [vmem:[%s2054 + $0x8] sm:$0xff]
    %v2057 = vld [vmem:[%s2054 + $0x10] sm:$0xff]
    %v2058 = vld [vmem:[%s2054 + $0x18] sm:$0xff]
    %v2059 = vld [vmem:[#allocation10] sm:$0xff]
    %v2060 = vld [vmem:[#allocation10 + $0x8] sm:$0xff]
    %v2061 = vld [vmem:[#allocation10 + $0x10] sm:$0xff]
    %v2062 = vld [vmem:[#allocation10 + $0x18] sm:$0xff]
    %v2063 = vld [vmem:[#allocation10 + $0x20] sm:$0xff]
    %v2064 = vld [vmem:[#allocation10 + $0x28] sm:$0xff]
    %v2065 = vld [vmem:[#allocation10 + $0x30] sm:$0xff]
    %v2066 = vld [vmem:[#allocation10 + $0x38] sm:$0xff]
    %v2067 = vld [vmem:[#allocation10 + $0x40] sm:$0xff]
    %v2068 = vld [vmem:[#allocation10 + $0x48] sm:$0xff]
    %v2069 = vld [vmem:[#allocation10 + $0x50] sm:$0xff]
    %v2070 = vld [vmem:[#allocation10 + $0x58] sm:$0xff]
    %v2071 = vld [vmem:[#allocation10 + $0x60] sm:$0xff]
    %v2072 = vld [vmem:[#allocation10 + $0x68] sm:$0xff]
    %v2073 = vld [vmem:[#allocation10 + $0x70] sm:$0xff]
    %v2074 = vld [vmem:[#allocation10 + $0x78] sm:$0xff]
    %v2075 = vld [vmem:[#allocation10 + $0x80] sm:$0xff]
    %v2076 = vld [vmem:[#allocation10 + $0x88] sm:$0xff]
    %v2077 = vld [vmem:[#allocation10 + $0x90] sm:$0xff]
    %v2078 = vld [vmem:[#allocation10 + $0x98] sm:$0xff]
    %v2079 = vld [vmem:[#allocation10 + $0xa0] sm:$0xff]
    %v2080 = vld [vmem:[#allocation10 + $0xa8] sm:$0xff]
    %v2081 = vld [vmem:[#allocation10 + $0xb0] sm:$0xff]
    %v2082 = vld [vmem:[#allocation10 + $0xb8] sm:$0xff]
    %v2083 = vld [vmem:[#allocation10 + $0xc0] sm:$0xff]
    %v2084 = vld [vmem:[#allocation10 + $0xc8] sm:$0xff]
    %v2085 = vld [vmem:[#allocation10 + $0xd0] sm:$0xff]
    %v2086 = vld [vmem:[#allocation10 + $0xd8] sm:$0xff]
    %v2087 = vld [vmem:[#allocation10 + $0xe0] sm:$0xff]
    %v2088 = vld [vmem:[#allocation10 + $0xe8] sm:$0xff]
    %v2089 = vld [vmem:[#allocation10 + $0xf0] sm:$0xff]
    %v2090 = vld [vmem:[#allocation10 + $0xf8] sm:$0xff]
    %v2123 = vunpack.c.l.b16 %v2059
    %v2124 = vunpack.c.h.b16 %v2059
    %v2125 = vunpack.c.l.b16 %v2060
    %v2126 = vunpack.c.h.b16 %v2060
    %v2127 = vunpack.c.l.b16 %v2061
    %v2128 = vunpack.c.h.b16 %v2061
    %v2129 = vunpack.c.l.b16 %v2062
    %v2130 = vunpack.c.h.b16 %v2062
    %v2131 = vunpack.c.l.b16 %v2063
    %v2132 = vunpack.c.h.b16 %v2063
    %v2133 = vunpack.c.l.b16 %v2064
    %v2134 = vunpack.c.h.b16 %v2064
    %v2135 = vunpack.c.l.b16 %v2065
    %v2136 = vunpack.c.h.b16 %v2065
    %v2137 = vunpack.c.l.b16 %v2066
    %v2138 = vunpack.c.h.b16 %v2066
    %v2139 = vunpack.c.l.b16 %v2067
    %v2140 = vunpack.c.h.b16 %v2067
    %v2141 = vunpack.c.l.b16 %v2068
    %v2142 = vunpack.c.h.b16 %v2068
    %v2143 = vunpack.c.l.b16 %v2069
    %v2144 = vunpack.c.h.b16 %v2069
    %v2145 = vunpack.c.l.b16 %v2070
    %v2146 = vunpack.c.h.b16 %v2070
    %v2147 = vunpack.c.l.b16 %v2071
    %v2148 = vunpack.c.h.b16 %v2071
    %v2149 = vunpack.c.l.b16 %v2072
    %v2150 = vunpack.c.h.b16 %v2072
    %v2151 = vunpack.c.l.b16 %v2073
    %v2152 = vunpack.c.h.b16 %v2073
    %v2153 = vunpack.c.l.b16 %v2074
    %v2154 = vunpack.c.h.b16 %v2074
    %v2155 = vunpack.c.l.b16 %v2075
    %v2156 = vunpack.c.h.b16 %v2075
    %v2157 = vunpack.c.l.b16 %v2076
    %v2158 = vunpack.c.h.b16 %v2076
    %v2159 = vunpack.c.l.b16 %v2077
    %v2160 = vunpack.c.h.b16 %v2077
    %v2161 = vunpack.c.l.b16 %v2078
    %v2162 = vunpack.c.h.b16 %v2078
    %v2163 = vunpack.c.l.b16 %v2079
    %v2164 = vunpack.c.h.b16 %v2079
    %v2165 = vunpack.c.l.b16 %v2080
    %v2166 = vunpack.c.h.b16 %v2080
    %v2167 = vunpack.c.l.b16 %v2081
    %v2168 = vunpack.c.h.b16 %v2081
    %v2169 = vunpack.c.l.b16 %v2082
    %v2170 = vunpack.c.h.b16 %v2082
    %v2171 = vunpack.c.l.b16 %v2083
    %v2172 = vunpack.c.h.b16 %v2083
    %v2173 = vunpack.c.l.b16 %v2084
    %v2174 = vunpack.c.h.b16 %v2084
    %v2175 = vunpack.c.l.b16 %v2085
    %v2176 = vunpack.c.h.b16 %v2085
    %v2177 = vunpack.c.l.b16 %v2086
    %v2178 = vunpack.c.h.b16 %v2086
    %v2179 = vunpack.c.l.b16 %v2087
    %v2180 = vunpack.c.h.b16 %v2087
    %v2181 = vunpack.c.l.b16 %v2088
    %v2182 = vunpack.c.h.b16 %v2088
    %v2183 = vunpack.c.l.b16 %v2089
    %v2184 = vunpack.c.h.b16 %v2089
    %v2185 = vunpack.c.l.b16 %v2090
    %v2186 = vunpack.c.h.b16 %v2090
    %v2187 = vpack.c.b16 %v2127, %v2123
    %v2188 = vpack.c.b16 %v2128, %v2124
    %v2189 = vpack.c.b16 %v2129, %v2125
    %v2190 = vpack.c.b16 %v2130, %v2126
    %v2191 = vpack.c.b16 %v2135, %v2131
    %v2192 = vpack.c.b16 %v2136, %v2132
    %v2193 = vpack.c.b16 %v2137, %v2133
    %v2194 = vpack.c.b16 %v2138, %v2134
    %v2195 = vpack.c.b16 %v2143, %v2139
    %v2196 = vpack.c.b16 %v2144, %v2140
    %v2197 = vpack.c.b16 %v2145, %v2141
    %v2198 = vpack.c.b16 %v2146, %v2142
    %v2199 = vpack.c.b16 %v2151, %v2147
    %v2200 = vpack.c.b16 %v2152, %v2148
    %v2201 = vpack.c.b16 %v2153, %v2149
    %v2202 = vpack.c.b16 %v2154, %v2150
    %v2203 = vpack.c.b16 %v2159, %v2155
    %v2204 = vpack.c.b16 %v2160, %v2156
    %v2205 = vpack.c.b16 %v2161, %v2157
    %v2206 = vpack.c.b16 %v2162, %v2158
    %v2207 = vpack.c.b16 %v2167, %v2163
    %v2208 = vpack.c.b16 %v2168, %v2164
    %v2209 = vpack.c.b16 %v2169, %v2165
    %v2210 = vpack.c.b16 %v2170, %v2166
    %v2211 = vpack.c.b16 %v2175, %v2171
    %v2212 = vpack.c.b16 %v2176, %v2172
    %v2213 = vpack.c.b16 %v2177, %v2173
    %v2214 = vpack.c.b16 %v2178, %v2174
    %v2215 = vpack.c.b16 %v2183, %v2179
    %v2216 = vpack.c.b16 %v2184, %v2180
    %v2217 = vpack.c.b16 %v2185, %v2181
    %v2218 = vpack.c.b16 %v2186, %v2182
    %2251 = vmatprep.subr.bf16.mxu0 %v2216
    %2252 = vmatpush1.bf16.msra.mxu0 %v2215
    %2253 = vmatprep.subr.bf16.mxu0 %v2212
    %2254 = vmatpush1.bf16.msra.mxu0 %v2211
    %2255 = vmatprep.subr.bf16.mxu0 %v2208
    %2256 = vmatpush1.bf16.msra.mxu0 %v2207
    %2257 = vmatprep.subr.bf16.mxu0 %v2204
    %2258 = vmatpush1.bf16.msra.mxu0 %v2203
    %2259 = vmatprep.subr.bf16.mxu0 %v2200
    %2260 = vmatpush1.bf16.msra.mxu0 %v2199
    %2261 = vmatprep.subr.bf16.mxu0 %v2196
    %2262 = vmatpush1.bf16.msra.mxu0 %v2195
    %2263 = vmatprep.subr.bf16.mxu0 %v2192
    %2264 = vmatpush1.bf16.msra.mxu0 %v2191
    %2265 = vmatprep.subr.bf16.mxu0 %v2188
    %2266 = vmatpush1.bf16.msra.mxu0 %v2187
    %2267 = vmatprep.subr.bf16.mxu0 0
    %2268 = vmatpush2.bf16.msra.mxu0 0
    %2269 = vmatprep.subr.bf16.mxu0 0
    %2270 = vmatpush2.bf16.msra.mxu0 0
    %2271 = vmatprep.subr.bf16.mxu0 0
    %2272 = vmatpush2.bf16.msra.mxu0 0
    %2273 = vmatprep.subr.bf16.mxu0 0
    %2274 = vmatpush2.bf16.msra.mxu0 0
    %2275 = vmatprep.subr.bf16.mxu0 0
    %2276 = vmatpush2.bf16.msra.mxu0 0
    %2277 = vmatprep.subr.bf16.mxu0 0
    %2278 = vmatpush2.bf16.msra.mxu0 0
    %2279 = vmatprep.subr.bf16.mxu0 0
    %2280 = vmatpush2.bf16.msra.mxu0 0
    %2281 = vmatprep.subr.bf16.mxu0 0
    %2282 = vmatpush2.bf16.msra.mxu0 0
    %2283 = vmatprep.mubr.bf16.mxu0 0
    %2284 = vmatmul.mubr.bf16.gmra.mxu0 %v2049
    %v2285 = vpop.f32.mrf.mxu0
    %v2286 = vadd.f32 0.0, %v2285
    %v2287 = vpop.f32.mrf.mxu0
    %v2288 = vadd.f32 0.0, %v2287
    %v2289 = vpop.f32.mrf.mxu0
    %v2290 = vpop.f32.mrf.mxu0
    %2291 = vdwg.mxu0
    %2292 = vmatprep.subr.bf16.mxu0 %v2218
    %2293 = vmatpush1.bf16.msra.mxu0 %v2217
    %2294 = vmatprep.subr.bf16.mxu0 %v2214
    %2295 = vmatpush1.bf16.msra.mxu0 %v2213
    %2296 = vmatprep.subr.bf16.mxu0 %v2210
    %2297 = vmatpush1.bf16.msra.mxu0 %v2209
    %2298 = vmatprep.subr.bf16.mxu0 %v2206
    %2299 = vmatpush1.bf16.msra.mxu0 %v2205
    %2300 = vmatprep.subr.bf16.mxu0 %v2202
    %2301 = vmatpush1.bf16.msra.mxu0 %v2201
    %2302 = vmatprep.subr.bf16.mxu0 %v2198
    %2303 = vmatpush1.bf16.msra.mxu0 %v2197
    %2304 = vmatprep.subr.bf16.mxu0 %v2194
    %2305 = vmatpush1.bf16.msra.mxu0 %v2193
    %2306 = vmatprep.subr.bf16.mxu0 %v2190
    %2307 = vmatpush1.bf16.msra.mxu0 %v2189
    %2308 = vmatprep.subr.bf16.mxu0 0
    %2309 = vmatpush2.bf16.msra.mxu0 0
    %2310 = vmatprep.subr.bf16.mxu0 0
    %2311 = vmatpush2.bf16.msra.mxu0 0
    %2312 = vmatprep.subr.bf16.mxu0 0
    %2313 = vmatpush2.bf16.msra.mxu0 0
    %2314 = vmatprep.subr.bf16.mxu0 0
    %2315 = vmatpush2.bf16.msra.mxu0 0
    %2316 = vmatprep.subr.bf16.mxu0 0
    %2317 = vmatpush2.bf16.msra.mxu0 0
    %2318 = vmatprep.subr.bf16.mxu0 0
    %2319 = vmatpush2.bf16.msra.mxu0 0
    %2320 = vmatprep.subr.bf16.mxu0 0
    %2321 = vmatpush2.bf16.msra.mxu0 0
    %2322 = vmatprep.subr.bf16.mxu0 0
    %2323 = vmatpush2.bf16.msra.mxu0 0
    %2324 = vmatprep.mubr.bf16.mxu0 0
    %2325 = vmatmul.mubr.bf16.gmra.mxu0 %v2049
    %v2326 = vpop.f32.mrf.mxu0
    %v2327 = vadd.f32 0.0, %v2326
    %v2328 = vpop.f32.mrf.mxu0
    %v2329 = vadd.f32 0.0, %v2328
    %v2330 = vpop.f32.mrf.mxu0
    %v2331 = vpop.f32.mrf.mxu0
    %2332 = vdwg.mxu0
    %v2333 = vadd.f32 %v2055, %v2286
    %v2334 = vadd.f32 %v2056, %v2288
    %v2335 = vadd.f32 %v2057, %v2327
    %v2336 = vadd.f32 %v2058, %v2329
    %v2337 = vxor.u32 %v2333, 2147483648
    %v2338 = vmul.f32 %v2337, 1.442695
    %v2339 = vpow.pop %v2338
    %v2340 = vadd.f32 %v2339, 1.0
    %v2341 = vrcp.pop %v2340
    %v2342 = vmul.f32 1.0, %v2341
    %v2343 = vxor.u32 %v2334, 2147483648
    %v2344 = vmul.f32 %v2343, 1.442695
    %v2345 = vpow.pop %v2344
    %v2346 = vadd.f32 %v2345, 1.0
    %v2347 = vrcp.pop %v2346
    %v2348 = vmul.f32 1.0, %v2347
    %v2349 = vtanh.pop %v2335
    %v2350 = vxor.u32 %v2336, 2147483648
    %v2351 = vmul.f32 %v2350, 1.442695
    %v2352 = vpow.pop %v2351
    %v2353 = vadd.f32 %v2352, 1.0
    %v2354 = vrcp.pop %v2353
    %v2355 = vmul.f32 1.0, %v2354
    %v2356 = vmul.f32 %v2348, %v2046
    %v2357 = vmul.f32 %v2342, %v2349
    %v2358 = vadd.f32 %v2356, %v2357
    %v2359 = vtanh.pop %v2358
    %v2360 = vmul.f32 %v2355, %v2359
    %v2361 = vpack.c.bf16 %v2360, %v2360
    %s2362 = scalar_lea.vmem [#allocation11], 20
    %2363 = vst [vmem:[%s2362] sm:$0xf] %v2361
    %s2364 = smul.u32 6, 4
    %s2365 = smul.addr %s2364, 8
    %s2366 = scalar_lea.vmem [#allocation4], %s2365
    %v2367 = vld [vmem:[%s2366] sm:$0xff]
    %v2368 = vld [vmem:[%s2366 + $0x8] sm:$0xff]
    %v2369 = vld [vmem:[%s2366 + $0x10] sm:$0xff]
    %v2370 = vld [vmem:[%s2366 + $0x18] sm:$0xff]
    %v2371 = vld [vmem:[#allocation10] sm:$0xff]
    %v2372 = vld [vmem:[#allocation10 + $0x8] sm:$0xff]
    %v2373 = vld [vmem:[#allocation10 + $0x10] sm:$0xff]
    %v2374 = vld [vmem:[#allocation10 + $0x18] sm:$0xff]
    %v2375 = vld [vmem:[#allocation10 + $0x20] sm:$0xff]
    %v2376 = vld [vmem:[#allocation10 + $0x28] sm:$0xff]
    %v2377 = vld [vmem:[#allocation10 + $0x30] sm:$0xff]
    %v2378 = vld [vmem:[#allocation10 + $0x38] sm:$0xff]
    %v2379 = vld [vmem:[#allocation10 + $0x40] sm:$0xff]
    %v2380 = vld [vmem:[#allocation10 + $0x48] sm:$0xff]
    %v2381 = vld [vmem:[#allocation10 + $0x50] sm:$0xff]
    %v2382 = vld [vmem:[#allocation10 + $0x58] sm:$0xff]
    %v2383 = vld [vmem:[#allocation10 + $0x60] sm:$0xff]
    %v2384 = vld [vmem:[#allocation10 + $0x68] sm:$0xff]
    %v2385 = vld [vmem:[#allocation10 + $0x70] sm:$0xff]
    %v2386 = vld [vmem:[#allocation10 + $0x78] sm:$0xff]
    %v2387 = vld [vmem:[#allocation10 + $0x80] sm:$0xff]
    %v2388 = vld [vmem:[#allocation10 + $0x88] sm:$0xff]
    %v2389 = vld [vmem:[#allocation10 + $0x90] sm:$0xff]
    %v2390 = vld [vmem:[#allocation10 + $0x98] sm:$0xff]
    %v2391 = vld [vmem:[#allocation10 + $0xa0] sm:$0xff]
    %v2392 = vld [vmem:[#allocation10 + $0xa8] sm:$0xff]
    %v2393 = vld [vmem:[#allocation10 + $0xb0] sm:$0xff]
    %v2394 = vld [vmem:[#allocation10 + $0xb8] sm:$0xff]
    %v2395 = vld [vmem:[#allocation10 + $0xc0] sm:$0xff]
    %v2396 = vld [vmem:[#allocation10 + $0xc8] sm:$0xff]
    %v2397 = vld [vmem:[#allocation10 + $0xd0] sm:$0xff]
    %v2398 = vld [vmem:[#allocation10 + $0xd8] sm:$0xff]
    %v2399 = vld [vmem:[#allocation10 + $0xe0] sm:$0xff]
    %v2400 = vld [vmem:[#allocation10 + $0xe8] sm:$0xff]
    %v2401 = vld [vmem:[#allocation10 + $0xf0] sm:$0xff]
    %v2402 = vld [vmem:[#allocation10 + $0xf8] sm:$0xff]
    %v2435 = vunpack.c.l.b16 %v2371
    %v2436 = vunpack.c.h.b16 %v2371
    %v2437 = vunpack.c.l.b16 %v2372
    %v2438 = vunpack.c.h.b16 %v2372
    %v2439 = vunpack.c.l.b16 %v2373
    %v2440 = vunpack.c.h.b16 %v2373
    %v2441 = vunpack.c.l.b16 %v2374
    %v2442 = vunpack.c.h.b16 %v2374
    %v2443 = vunpack.c.l.b16 %v2375
    %v2444 = vunpack.c.h.b16 %v2375
    %v2445 = vunpack.c.l.b16 %v2376
    %v2446 = vunpack.c.h.b16 %v2376
    %v2447 = vunpack.c.l.b16 %v2377
    %v2448 = vunpack.c.h.b16 %v2377
    %v2449 = vunpack.c.l.b16 %v2378
    %v2450 = vunpack.c.h.b16 %v2378
    %v2451 = vunpack.c.l.b16 %v2379
    %v2452 = vunpack.c.h.b16 %v2379
    %v2453 = vunpack.c.l.b16 %v2380
    %v2454 = vunpack.c.h.b16 %v2380
    %v2455 = vunpack.c.l.b16 %v2381
    %v2456 = vunpack.c.h.b16 %v2381
    %v2457 = vunpack.c.l.b16 %v2382
    %v2458 = vunpack.c.h.b16 %v2382
    %v2459 = vunpack.c.l.b16 %v2383
    %v2460 = vunpack.c.h.b16 %v2383
    %v2461 = vunpack.c.l.b16 %v2384
    %v2462 = vunpack.c.h.b16 %v2384
    %v2463 = vunpack.c.l.b16 %v2385
    %v2464 = vunpack.c.h.b16 %v2385
    %v2465 = vunpack.c.l.b16 %v2386
    %v2466 = vunpack.c.h.b16 %v2386
    %v2467 = vunpack.c.l.b16 %v2387
    %v2468 = vunpack.c.h.b16 %v2387
    %v2469 = vunpack.c.l.b16 %v2388
    %v2470 = vunpack.c.h.b16 %v2388
    %v2471 = vunpack.c.l.b16 %v2389
    %v2472 = vunpack.c.h.b16 %v2389
    %v2473 = vunpack.c.l.b16 %v2390
    %v2474 = vunpack.c.h.b16 %v2390
    %v2475 = vunpack.c.l.b16 %v2391
    %v2476 = vunpack.c.h.b16 %v2391
    %v2477 = vunpack.c.l.b16 %v2392
    %v2478 = vunpack.c.h.b16 %v2392
    %v2479 = vunpack.c.l.b16 %v2393
    %v2480 = vunpack.c.h.b16 %v2393
    %v2481 = vunpack.c.l.b16 %v2394
    %v2482 = vunpack.c.h.b16 %v2394
    %v2483 = vunpack.c.l.b16 %v2395
    %v2484 = vunpack.c.h.b16 %v2395
    %v2485 = vunpack.c.l.b16 %v2396
    %v2486 = vunpack.c.h.b16 %v2396
    %v2487 = vunpack.c.l.b16 %v2397
    %v2488 = vunpack.c.h.b16 %v2397
    %v2489 = vunpack.c.l.b16 %v2398
    %v2490 = vunpack.c.h.b16 %v2398
    %v2491 = vunpack.c.l.b16 %v2399
    %v2492 = vunpack.c.h.b16 %v2399
    %v2493 = vunpack.c.l.b16 %v2400
    %v2494 = vunpack.c.h.b16 %v2400
    %v2495 = vunpack.c.l.b16 %v2401
    %v2496 = vunpack.c.h.b16 %v2401
    %v2497 = vunpack.c.l.b16 %v2402
    %v2498 = vunpack.c.h.b16 %v2402
    %v2499 = vpack.c.b16 %v2439, %v2435
    %v2500 = vpack.c.b16 %v2440, %v2436
    %v2501 = vpack.c.b16 %v2441, %v2437
    %v2502 = vpack.c.b16 %v2442, %v2438
    %v2503 = vpack.c.b16 %v2447, %v2443
    %v2504 = vpack.c.b16 %v2448, %v2444
    %v2505 = vpack.c.b16 %v2449, %v2445
    %v2506 = vpack.c.b16 %v2450, %v2446
    %v2507 = vpack.c.b16 %v2455, %v2451
    %v2508 = vpack.c.b16 %v2456, %v2452
    %v2509 = vpack.c.b16 %v2457, %v2453
    %v2510 = vpack.c.b16 %v2458, %v2454
    %v2511 = vpack.c.b16 %v2463, %v2459
    %v2512 = vpack.c.b16 %v2464, %v2460
    %v2513 = vpack.c.b16 %v2465, %v2461
    %v2514 = vpack.c.b16 %v2466, %v2462
    %v2515 = vpack.c.b16 %v2471, %v2467
    %v2516 = vpack.c.b16 %v2472, %v2468
    %v2517 = vpack.c.b16 %v2473, %v2469
    %v2518 = vpack.c.b16 %v2474, %v2470
    %v2519 = vpack.c.b16 %v2479, %v2475
    %v2520 = vpack.c.b16 %v2480, %v2476
    %v2521 = vpack.c.b16 %v2481, %v2477
    %v2522 = vpack.c.b16 %v2482, %v2478
    %v2523 = vpack.c.b16 %v2487, %v2483
    %v2524 = vpack.c.b16 %v2488, %v2484
    %v2525 = vpack.c.b16 %v2489, %v2485
    %v2526 = vpack.c.b16 %v2490, %v2486
    %v2527 = vpack.c.b16 %v2495, %v2491
    %v2528 = vpack.c.b16 %v2496, %v2492
    %v2529 = vpack.c.b16 %v2497, %v2493
    %v2530 = vpack.c.b16 %v2498, %v2494
    %2563 = vmatprep.subr.bf16.mxu0 %v2528
    %2564 = vmatpush1.bf16.msra.mxu0 %v2527
    %2565 = vmatprep.subr.bf16.mxu0 %v2524
    %2566 = vmatpush1.bf16.msra.mxu0 %v2523
    %2567 = vmatprep.subr.bf16.mxu0 %v2520
    %2568 = vmatpush1.bf16.msra.mxu0 %v2519
    %2569 = vmatprep.subr.bf16.mxu0 %v2516
    %2570 = vmatpush1.bf16.msra.mxu0 %v2515
    %2571 = vmatprep.subr.bf16.mxu0 %v2512
    %2572 = vmatpush1.bf16.msra.mxu0 %v2511
    %2573 = vmatprep.subr.bf16.mxu0 %v2508
    %2574 = vmatpush1.bf16.msra.mxu0 %v2507
    %2575 = vmatprep.subr.bf16.mxu0 %v2504
    %2576 = vmatpush1.bf16.msra.mxu0 %v2503
    %2577 = vmatprep.subr.bf16.mxu0 %v2500
    %2578 = vmatpush1.bf16.msra.mxu0 %v2499
    %2579 = vmatprep.subr.bf16.mxu0 0
    %2580 = vmatpush2.bf16.msra.mxu0 0
    %2581 = vmatprep.subr.bf16.mxu0 0
    %2582 = vmatpush2.bf16.msra.mxu0 0
    %2583 = vmatprep.subr.bf16.mxu0 0
    %2584 = vmatpush2.bf16.msra.mxu0 0
    %2585 = vmatprep.subr.bf16.mxu0 0
    %2586 = vmatpush2.bf16.msra.mxu0 0
    %2587 = vmatprep.subr.bf16.mxu0 0
    %2588 = vmatpush2.bf16.msra.mxu0 0
    %2589 = vmatprep.subr.bf16.mxu0 0
    %2590 = vmatpush2.bf16.msra.mxu0 0
    %2591 = vmatprep.subr.bf16.mxu0 0
    %2592 = vmatpush2.bf16.msra.mxu0 0
    %2593 = vmatprep.subr.bf16.mxu0 0
    %2594 = vmatpush2.bf16.msra.mxu0 0
    %2595 = vmatprep.mubr.bf16.mxu0 0
    %2596 = vmatmul.mubr.bf16.gmra.mxu0 %v2361
    %v2597 = vpop.f32.mrf.mxu0
    %v2598 = vadd.f32 0.0, %v2597
    %v2599 = vpop.f32.mrf.mxu0
    %v2600 = vadd.f32 0.0, %v2599
    %v2601 = vpop.f32.mrf.mxu0
    %v2602 = vpop.f32.mrf.mxu0
    %2603 = vdwg.mxu0
    %2604 = vmatprep.subr.bf16.mxu0 %v2530
    %2605 = vmatpush1.bf16.msra.mxu0 %v2529
    %2606 = vmatprep.subr.bf16.mxu0 %v2526
    %2607 = vmatpush1.bf16.msra.mxu0 %v2525
    %2608 = vmatprep.subr.bf16.mxu0 %v2522
    %2609 = vmatpush1.bf16.msra.mxu0 %v2521
    %2610 = vmatprep.subr.bf16.mxu0 %v2518
    %2611 = vmatpush1.bf16.msra.mxu0 %v2517
    %2612 = vmatprep.subr.bf16.mxu0 %v2514
    %2613 = vmatpush1.bf16.msra.mxu0 %v2513
    %2614 = vmatprep.subr.bf16.mxu0 %v2510
    %2615 = vmatpush1.bf16.msra.mxu0 %v2509
    %2616 = vmatprep.subr.bf16.mxu0 %v2506
    %2617 = vmatpush1.bf16.msra.mxu0 %v2505
    %2618 = vmatprep.subr.bf16.mxu0 %v2502
    %2619 = vmatpush1.bf16.msra.mxu0 %v2501
    %2620 = vmatprep.subr.bf16.mxu0 0
    %2621 = vmatpush2.bf16.msra.mxu0 0
    %2622 = vmatprep.subr.bf16.mxu0 0
    %2623 = vmatpush2.bf16.msra.mxu0 0
    %2624 = vmatprep.subr.bf16.mxu0 0
    %2625 = vmatpush2.bf16.msra.mxu0 0
    %2626 = vmatprep.subr.bf16.mxu0 0
    %2627 = vmatpush2.bf16.msra.mxu0 0
    %2628 = vmatprep.subr.bf16.mxu0 0
    %2629 = vmatpush2.bf16.msra.mxu0 0
    %2630 = vmatprep.subr.bf16.mxu0 0
    %2631 = vmatpush2.bf16.msra.mxu0 0
    %2632 = vmatprep.subr.bf16.mxu0 0
    %2633 = vmatpush2.bf16.msra.mxu0 0
    %2634 = vmatprep.subr.bf16.mxu0 0
    %2635 = vmatpush2.bf16.msra.mxu0 0
    %2636 = vmatprep.mubr.bf16.mxu0 0
    %2637 = vmatmul.mubr.bf16.gmra.mxu0 %v2361
    %v2638 = vpop.f32.mrf.mxu0
    %v2639 = vadd.f32 0.0, %v2638
    %v2640 = vpop.f32.mrf.mxu0
    %v2641 = vadd.f32 0.0, %v2640
    %v2642 = vpop.f32.mrf.mxu0
    %v2643 = vpop.f32.mrf.mxu0
    %2644 = vdwg.mxu0
    %v2645 = vadd.f32 %v2367, %v2598
    %v2646 = vadd.f32 %v2368, %v2600
    %v2647 = vadd.f32 %v2369, %v2639
    %v2648 = vadd.f32 %v2370, %v2641
    %v2649 = vxor.u32 %v2645, 2147483648
    %v2650 = vmul.f32 %v2649, 1.442695
    %v2651 = vpow.pop %v2650
    %v2652 = vadd.f32 %v2651, 1.0
    %v2653 = vrcp.pop %v2652
    %v2654 = vmul.f32 1.0, %v2653
    %v2655 = vxor.u32 %v2646, 2147483648
    %v2656 = vmul.f32 %v2655, 1.442695
    %v2657 = vpow.pop %v2656
    %v2658 = vadd.f32 %v2657, 1.0
    %v2659 = vrcp.pop %v2658
    %v2660 = vmul.f32 1.0, %v2659
    %v2661 = vtanh.pop %v2647
    %v2662 = vxor.u32 %v2648, 2147483648
    %v2663 = vmul.f32 %v2662, 1.442695
    %v2664 = vpow.pop %v2663
    %v2665 = vadd.f32 %v2664, 1.0
    %v2666 = vrcp.pop %v2665
    %v2667 = vmul.f32 1.0, %v2666
    %v2668 = vmul.f32 %v2660, %v2358
    %v2669 = vmul.f32 %v2654, %v2661
    %v2670 = vadd.f32 %v2668, %v2669
    %v2671 = vtanh.pop %v2670
    %v2672 = vmul.f32 %v2667, %v2671
    %v2673 = vpack.c.bf16 %v2672, %v2672
    %s2674 = scalar_lea.vmem [#allocation11], 24
    %2675 = vst [vmem:[%s2674] sm:$0xf] %v2673
    %s2676 = smul.u32 7, 4
    %s2677 = smul.addr %s2676, 8
    %s2678 = scalar_lea.vmem [#allocation4], %s2677
    %v2679 = vld [vmem:[%s2678] sm:$0xff]
    %v2680 = vld [vmem:[%s2678 + $0x8] sm:$0xff]
    %v2681 = vld [vmem:[%s2678 + $0x10] sm:$0xff]
    %v2682 = vld [vmem:[%s2678 + $0x18] sm:$0xff]
    %v2683 = vld [vmem:[#allocation10] sm:$0xff]
    %v2684 = vld [vmem:[#allocation10 + $0x8] sm:$0xff]
    %v2685 = vld [vmem:[#allocation10 + $0x10] sm:$0xff]
    %v2686 = vld [vmem:[#allocation10 + $0x18] sm:$0xff]
    %v2687 = vld [vmem:[#allocation10 + $0x20] sm:$0xff]
    %v2688 = vld [vmem:[#allocation10 + $0x28] sm:$0xff]
    %v2689 = vld [vmem:[#allocation10 + $0x30] sm:$0xff]
    %v2690 = vld [vmem:[#allocation10 + $0x38] sm:$0xff]
    %v2691 = vld [vmem:[#allocation10 + $0x40] sm:$0xff]
    %v2692 = vld [vmem:[#allocation10 + $0x48] sm:$0xff]
    %v2693 = vld [vmem:[#allocation10 + $0x50] sm:$0xff]
    %v2694 = vld [vmem:[#allocation10 + $0x58] sm:$0xff]
    %v2695 = vld [vmem:[#allocation10 + $0x60] sm:$0xff]
    %v2696 = vld [vmem:[#allocation10 + $0x68] sm:$0xff]
    %v2697 = vld [vmem:[#allocation10 + $0x70] sm:$0xff]
    %v2698 = vld [vmem:[#allocation10 + $0x78] sm:$0xff]
    %v2699 = vld [vmem:[#allocation10 + $0x80] sm:$0xff]
    %v2700 = vld [vmem:[#allocation10 + $0x88] sm:$0xff]
    %v2701 = vld [vmem:[#allocation10 + $0x90] sm:$0xff]
    %v2702 = vld [vmem:[#allocation10 + $0x98] sm:$0xff]
    %v2703 = vld [vmem:[#allocation10 + $0xa0] sm:$0xff]
    %v2704 = vld [vmem:[#allocation10 + $0xa8] sm:$0xff]
    %v2705 = vld [vmem:[#allocation10 + $0xb0] sm:$0xff]
    %v2706 = vld [vmem:[#allocation10 + $0xb8] sm:$0xff]
    %v2707 = vld [vmem:[#allocation10 + $0xc0] sm:$0xff]
    %v2708 = vld [vmem:[#allocation10 + $0xc8] sm:$0xff]
    %v2709 = vld [vmem:[#allocation10 + $0xd0] sm:$0xff]
    %v2710 = vld [vmem:[#allocation10 + $0xd8] sm:$0xff]
    %v2711 = vld [vmem:[#allocation10 + $0xe0] sm:$0xff]
    %v2712 = vld [vmem:[#allocation10 + $0xe8] sm:$0xff]
    %v2713 = vld [vmem:[#allocation10 + $0xf0] sm:$0xff]
    %v2714 = vld [vmem:[#allocation10 + $0xf8] sm:$0xff]
    %v2747 = vunpack.c.l.b16 %v2683
    %v2748 = vunpack.c.h.b16 %v2683
    %v2749 = vunpack.c.l.b16 %v2684
    %v2750 = vunpack.c.h.b16 %v2684
    %v2751 = vunpack.c.l.b16 %v2685
    %v2752 = vunpack.c.h.b16 %v2685
    %v2753 = vunpack.c.l.b16 %v2686
    %v2754 = vunpack.c.h.b16 %v2686
    %v2755 = vunpack.c.l.b16 %v2687
    %v2756 = vunpack.c.h.b16 %v2687
    %v2757 = vunpack.c.l.b16 %v2688
    %v2758 = vunpack.c.h.b16 %v2688
    %v2759 = vunpack.c.l.b16 %v2689
    %v2760 = vunpack.c.h.b16 %v2689
    %v2761 = vunpack.c.l.b16 %v2690
    %v2762 = vunpack.c.h.b16 %v2690
    %v2763 = vunpack.c.l.b16 %v2691
    %v2764 = vunpack.c.h.b16 %v2691
    %v2765 = vunpack.c.l.b16 %v2692
    %v2766 = vunpack.c.h.b16 %v2692
    %v2767 = vunpack.c.l.b16 %v2693
    %v2768 = vunpack.c.h.b16 %v2693
    %v2769 = vunpack.c.l.b16 %v2694
    %v2770 = vunpack.c.h.b16 %v2694
    %v2771 = vunpack.c.l.b16 %v2695
    %v2772 = vunpack.c.h.b16 %v2695
    %v2773 = vunpack.c.l.b16 %v2696
    %v2774 = vunpack.c.h.b16 %v2696
    %v2775 = vunpack.c.l.b16 %v2697
    %v2776 = vunpack.c.h.b16 %v2697
    %v2777 = vunpack.c.l.b16 %v2698
    %v2778 = vunpack.c.h.b16 %v2698
    %v2779 = vunpack.c.l.b16 %v2699
    %v2780 = vunpack.c.h.b16 %v2699
    %v2781 = vunpack.c.l.b16 %v2700
    %v2782 = vunpack.c.h.b16 %v2700
    %v2783 = vunpack.c.l.b16 %v2701
    %v2784 = vunpack.c.h.b16 %v2701
    %v2785 = vunpack.c.l.b16 %v2702
    %v2786 = vunpack.c.h.b16 %v2702
    %v2787 = vunpack.c.l.b16 %v2703
    %v2788 = vunpack.c.h.b16 %v2703
    %v2789 = vunpack.c.l.b16 %v2704
    %v2790 = vunpack.c.h.b16 %v2704
    %v2791 = vunpack.c.l.b16 %v2705
    %v2792 = vunpack.c.h.b16 %v2705
    %v2793 = vunpack.c.l.b16 %v2706
    %v2794 = vunpack.c.h.b16 %v2706
    %v2795 = vunpack.c.l.b16 %v2707
    %v2796 = vunpack.c.h.b16 %v2707
    %v2797 = vunpack.c.l.b16 %v2708
    %v2798 = vunpack.c.h.b16 %v2708
    %v2799 = vunpack.c.l.b16 %v2709
    %v2800 = vunpack.c.h.b16 %v2709
    %v2801 = vunpack.c.l.b16 %v2710
    %v2802 = vunpack.c.h.b16 %v2710
    %v2803 = vunpack.c.l.b16 %v2711
    %v2804 = vunpack.c.h.b16 %v2711
    %v2805 = vunpack.c.l.b16 %v2712
    %v2806 = vunpack.c.h.b16 %v2712
    %v2807 = vunpack.c.l.b16 %v2713
    %v2808 = vunpack.c.h.b16 %v2713
    %v2809 = vunpack.c.l.b16 %v2714
    %v2810 = vunpack.c.h.b16 %v2714
    %v2811 = vpack.c.b16 %v2751, %v2747
    %v2812 = vpack.c.b16 %v2752, %v2748
    %v2813 = vpack.c.b16 %v2753, %v2749
    %v2814 = vpack.c.b16 %v2754, %v2750
    %v2815 = vpack.c.b16 %v2759, %v2755
    %v2816 = vpack.c.b16 %v2760, %v2756
    %v2817 = vpack.c.b16 %v2761, %v2757
    %v2818 = vpack.c.b16 %v2762, %v2758
    %v2819 = vpack.c.b16 %v2767, %v2763
    %v2820 = vpack.c.b16 %v2768, %v2764
    %v2821 = vpack.c.b16 %v2769, %v2765
    %v2822 = vpack.c.b16 %v2770, %v2766
    %v2823 = vpack.c.b16 %v2775, %v2771
    %v2824 = vpack.c.b16 %v2776, %v2772
    %v2825 = vpack.c.b16 %v2777, %v2773
    %v2826 = vpack.c.b16 %v2778, %v2774
    %v2827 = vpack.c.b16 %v2783, %v2779
    %v2828 = vpack.c.b16 %v2784, %v2780
    %v2829 = vpack.c.b16 %v2785, %v2781
    %v2830 = vpack.c.b16 %v2786, %v2782
    %v2831 = vpack.c.b16 %v2791, %v2787
    %v2832 = vpack.c.b16 %v2792, %v2788
    %v2833 = vpack.c.b16 %v2793, %v2789
    %v2834 = vpack.c.b16 %v2794, %v2790
    %v2835 = vpack.c.b16 %v2799, %v2795
    %v2836 = vpack.c.b16 %v2800, %v2796
    %v2837 = vpack.c.b16 %v2801, %v2797
    %v2838 = vpack.c.b16 %v2802, %v2798
    %v2839 = vpack.c.b16 %v2807, %v2803
    %v2840 = vpack.c.b16 %v2808, %v2804
    %v2841 = vpack.c.b16 %v2809, %v2805
    %v2842 = vpack.c.b16 %v2810, %v2806
    %2875 = vmatprep.subr.bf16.mxu0 %v2840
    %2876 = vmatpush1.bf16.msra.mxu0 %v2839
    %2877 = vmatprep.subr.bf16.mxu0 %v2836
    %2878 = vmatpush1.bf16.msra.mxu0 %v2835
    %2879 = vmatprep.subr.bf16.mxu0 %v2832
    %2880 = vmatpush1.bf16.msra.mxu0 %v2831
    %2881 = vmatprep.subr.bf16.mxu0 %v2828
    %2882 = vmatpush1.bf16.msra.mxu0 %v2827
    %2883 = vmatprep.subr.bf16.mxu0 %v2824
    %2884 = vmatpush1.bf16.msra.mxu0 %v2823
    %2885 = vmatprep.subr.bf16.mxu0 %v2820
    %2886 = vmatpush1.bf16.msra.mxu0 %v2819
    %2887 = vmatprep.subr.bf16.mxu0 %v2816
    %2888 = vmatpush1.bf16.msra.mxu0 %v2815
    %2889 = vmatprep.subr.bf16.mxu0 %v2812
    %2890 = vmatpush1.bf16.msra.mxu0 %v2811
    %2891 = vmatprep.subr.bf16.mxu0 0
    %2892 = vmatpush2.bf16.msra.mxu0 0
    %2893 = vmatprep.subr.bf16.mxu0 0
    %2894 = vmatpush2.bf16.msra.mxu0 0
    %2895 = vmatprep.subr.bf16.mxu0 0
    %2896 = vmatpush2.bf16.msra.mxu0 0
    %2897 = vmatprep.subr.bf16.mxu0 0
    %2898 = vmatpush2.bf16.msra.mxu0 0
    %2899 = vmatprep.subr.bf16.mxu0 0
    %2900 = vmatpush2.bf16.msra.mxu0 0
    %2901 = vmatprep.subr.bf16.mxu0 0
    %2902 = vmatpush2.bf16.msra.mxu0 0
    %2903 = vmatprep.subr.bf16.mxu0 0
    %2904 = vmatpush2.bf16.msra.mxu0 0
    %2905 = vmatprep.subr.bf16.mxu0 0
    %2906 = vmatpush2.bf16.msra.mxu0 0
    %2907 = vmatprep.mubr.bf16.mxu0 0
    %2908 = vmatmul.mubr.bf16.gmra.mxu0 %v2673
    %v2909 = vpop.f32.mrf.mxu0
    %v2910 = vadd.f32 0.0, %v2909
    %v2911 = vpop.f32.mrf.mxu0
    %v2912 = vadd.f32 0.0, %v2911
    %v2913 = vpop.f32.mrf.mxu0
    %v2914 = vpop.f32.mrf.mxu0
    %2915 = vdwg.mxu0
    %2916 = vmatprep.subr.bf16.mxu0 %v2842
    %2917 = vmatpush1.bf16.msra.mxu0 %v2841
    %2918 = vmatprep.subr.bf16.mxu0 %v2838
    %2919 = vmatpush1.bf16.msra.mxu0 %v2837
    %2920 = vmatprep.subr.bf16.mxu0 %v2834
    %2921 = vmatpush1.bf16.msra.mxu0 %v2833
    %2922 = vmatprep.subr.bf16.mxu0 %v2830
    %2923 = vmatpush1.bf16.msra.mxu0 %v2829
    %2924 = vmatprep.subr.bf16.mxu0 %v2826
    %2925 = vmatpush1.bf16.msra.mxu0 %v2825
    %2926 = vmatprep.subr.bf16.mxu0 %v2822
    %2927 = vmatpush1.bf16.msra.mxu0 %v2821
    %2928 = vmatprep.subr.bf16.mxu0 %v2818
    %2929 = vmatpush1.bf16.msra.mxu0 %v2817
    %2930 = vmatprep.subr.bf16.mxu0 %v2814
    %2931 = vmatpush1.bf16.msra.mxu0 %v2813
    %2932 = vmatprep.subr.bf16.mxu0 0
    %2933 = vmatpush2.bf16.msra.mxu0 0
    %2934 = vmatprep.subr.bf16.mxu0 0
    %2935 = vmatpush2.bf16.msra.mxu0 0
    %2936 = vmatprep.subr.bf16.mxu0 0
    %2937 = vmatpush2.bf16.msra.mxu0 0
    %2938 = vmatprep.subr.bf16.mxu0 0
    %2939 = vmatpush2.bf16.msra.mxu0 0
    %2940 = vmatprep.subr.bf16.mxu0 0
    %2941 = vmatpush2.bf16.msra.mxu0 0
    %2942 = vmatprep.subr.bf16.mxu0 0
    %2943 = vmatpush2.bf16.msra.mxu0 0
    %2944 = vmatprep.subr.bf16.mxu0 0
    %2945 = vmatpush2.bf16.msra.mxu0 0
    %2946 = vmatprep.subr.bf16.mxu0 0
    %2947 = vmatpush2.bf16.msra.mxu0 0
    %2948 = vmatprep.mubr.bf16.mxu0 0
    %2949 = vmatmul.mubr.bf16.gmra.mxu0 %v2673
    %v2950 = vpop.f32.mrf.mxu0
    %v2951 = vadd.f32 0.0, %v2950
    %v2952 = vpop.f32.mrf.mxu0
    %v2953 = vadd.f32 0.0, %v2952
    %v2954 = vpop.f32.mrf.mxu0
    %v2955 = vpop.f32.mrf.mxu0
    %2956 = vdwg.mxu0
    %v2957 = vadd.f32 %v2679, %v2910
    %v2958 = vadd.f32 %v2680, %v2912
    %v2959 = vadd.f32 %v2681, %v2951
    %v2960 = vadd.f32 %v2682, %v2953
    %v2961 = vxor.u32 %v2957, 2147483648
    %v2962 = vmul.f32 %v2961, 1.442695
    %v2963 = vpow.pop %v2962
    %v2964 = vadd.f32 %v2963, 1.0
    %v2965 = vrcp.pop %v2964
    %v2966 = vmul.f32 1.0, %v2965
    %v2967 = vxor.u32 %v2958, 2147483648
    %v2968 = vmul.f32 %v2967, 1.442695
    %v2969 = vpow.pop %v2968
    %v2970 = vadd.f32 %v2969, 1.0
    %v2971 = vrcp.pop %v2970
    %v2972 = vmul.f32 1.0, %v2971
    %v2973 = vtanh.pop %v2959
    %v2974 = vxor.u32 %v2960, 2147483648
    %v2975 = vmul.f32 %v2974, 1.442695
    %v2976 = vpow.pop %v2975
    %v2977 = vadd.f32 %v2976, 1.0
    %v2978 = vrcp.pop %v2977
    %v2979 = vmul.f32 1.0, %v2978
    %v2980 = vmul.f32 %v2972, %v2670
    %v2981 = vmul.f32 %v2966, %v2973
    %v2982 = vadd.f32 %v2980, %v2981
    %v2983 = vtanh.pop %v2982
    %v2984 = vmul.f32 %v2979, %v2983
    %v2985 = vpack.c.bf16 %v2984, %v2984
    %s2986 = scalar_lea.vmem [#allocation11], 28
    %2987 = vst [vmem:[%s2986] sm:$0xf] %v2985
    %2988 = vst [vmem:[#allocation2] sm:$0xff] %v2984
    %2989 = vst [vmem:[#allocation3] sm:$0xff] %v2982
    // Predicated region
    $region34: #{tpu_custom_call.1} parent=1 // pred_check
      _
    $region35: #{tpu_custom_call.1} parent=1 // pred_check_branch
      %2991 = sbr.rel (0) target = $region37
    $region36: #{tpu_custom_call.1} parent=1 // pred_region
      %s2993 = ssub.s32 512, 512
      %2994 = vsyncadd [#allocation7], %s2993
      %s2995 = sshll.u32 [#allocation11], 4
      %s2996 = int_to_ptr.vmem [resolvable:$true] %s2995
      %3001 = dma.vmem_to_hbm [thread:$0]  %s2996, 512, %s4, [#allocation7], 64, 64, 4
    $region37: #{tpu_custom_call.1} parent=1 // pred_fallthru
      _
    // Predicated region
    $region38: #{tpu_custom_call.1} parent=1 // pred_check
      _
    $region39: #{tpu_custom_call.1} parent=1 // pred_check_branch
      %3003 = sbr.rel (0) target = $region41
    $region40: #{tpu_custom_call.1} parent=1 // pred_region
      %3004 = dma.done [#allocation7], 512
    $region41: #{tpu_custom_call.1} parent=1 // pred_fallthru
      _
    %3005 = vsyncpa [#allocation6], 1
    %3006 = vsyncpa [#allocation9], 1
    %3007 = vsyncpa [#allocation7], 1

</llo_original>
